<compile_context>
chip_gen: v7x
topology: tpu7x:2x2x1
jax: 0.10.0
libtpu: 0.0.40
codegen_flags: <defaults>
</compile_context>

<pallas_src>
import functools
import numpy as np
import jax
import jax.numpy as jnp
from jax.experimental import pallas as pl
from jax.experimental.pallas import tpu as pltpu


def inception_aux_kernel(p_ref, x_ref, wc_ref, shift_ref, w1_ref, b1_ref,
                         w2_ref, b2_ref, out_ref, a_ref):
    tb, _, c_in = x_ref.shape
    n_pix = p_ref.shape[1]                # 16 pooled pixels (4x4)
    c_out = wc_ref.shape[1]               # 128 conv channels

    # --- AvgPool2d(5, stride=3): batched MXU contraction over H*W ----------
    # Pool entries are exact 0/1 in bf16; the 1/25 scale is folded into wc.
    pooled = jnp.einsum("bph,bhc->bpc", p_ref[...], x_ref[...],
                        preferred_element_type=jnp.float32)       # (TB,16,Cin)
    pooled = pooled.reshape(tb * n_pix, c_in).astype(jnp.bfloat16)

    # --- BasicConv2d: 1x1 conv (BN scale + 1/25 pre-folded) + shift + ReLU --
    conv = jnp.dot(pooled, wc_ref[...], preferred_element_type=jnp.float32)
    conv = jnp.maximum(conv + shift_ref[...], 0.0).astype(jnp.bfloat16)
    conv = conv.reshape(tb, n_pix, c_out)                         # (TB,16,128)

    # --- torch.flatten(1): fc1 weight is host-permuted to pixel-major columns,
    # so the flatten is 16 contiguous lane-slab stores (no strided reads, one
    # f32->bf16 cast above, no conv scratch round-trip).
    for p in range(n_pix):
        a_ref[:, p * c_out:(p + 1) * c_out] = conv[:, p, :]

    # --- fc1: single K=2048 MXU matmul + bias + ReLU -------------------------
    h1 = jnp.dot(a_ref[...], w1_ref[...], preferred_element_type=jnp.float32)
    h1 = jnp.maximum(h1 + b1_ref[...], 0.0).astype(jnp.bfloat16)

    # TODO(synk): nn.Dropout(p=0.7) is identity in eval mode; training-mode
    # dropout (random mask + 1/(1-p) rescale) is not modeled here.

    # --- fc2 (classes zero-padded to a lane-dense multiple of 128) ----------
    out_ref[...] = jnp.dot(h1, w2_ref[...],
                           preferred_element_type=jnp.float32) + b2_ref[...]


@functools.lru_cache(maxsize=None)
def _pool_matrix(H, W, k=5, s=3):
    """(OH*OW, H*W) 0/1 window-membership matrix (average scale folded into wc)."""
    OH = (H - k) // s + 1
    OW = (W - k) // s + 1
    P = np.zeros((OH * OW, H * W), np.float32)
    for oh in range(OH):
        for ow in range(OW):
            r = oh * OW + ow
            for dh in range(k):
                for dw in range(k):
                    P[r, (oh * s + dh) * W + (ow * s + dw)] = 1.0
    return P, OH, OW, k


def inception_aux_forward(x_nchw, params, *, block_batch=32):
    N, C, H, W = x_nchw.shape
    P_np, OH, OW, k = _pool_matrix(H, W)
    n_pix = OH * OW                                   # 16
    hw = H * W
    c_out = params["conv_w"].shape[0]                 # 128
    hidden = params["fc1_w"].shape[0]                 # 1024
    num_classes = params["fc2_w"].shape[0]
    assert params["fc1_w"].shape[1] == n_pix * c_out, "fc1 expects 128*4*4=2048"
    assert block_batch % 16 == 0, "block_batch must be a multiple of 16"

    # Batch tile: multiple of 16 so the conv matmul M = 16*TB stays MXU-aligned;
    # clamp for tiny batches so we do not over-pad.
    tb = min(block_batch, pl.cdiv(N, 16) * 16)
    n_pad = pl.cdiv(N, tb) * tb
    nc_pad = pl.cdiv(num_classes, 128) * 128

    # Input: cast to bf16 BEFORE the NCHW->NHWC relayout, then pad the batch.
    x3 = jnp.transpose(x_nchw.astype(jnp.bfloat16), (0, 2, 3, 1)).reshape(N, hw, C)
    if n_pad != N:
        x3 = jnp.concatenate(
            [x3, jnp.zeros((n_pad - N, hw, C), jnp.bfloat16)], axis=0)

    # Pool matrix pre-broadcast to the batch tile: kernel does a plain batched
    # matmul with no per-step broadcast; fetched once (constant index map).
    pmat = jnp.broadcast_to(jnp.asarray(P_np, jnp.bfloat16)[None],
                            (tb, n_pix, hw))

    # Eval-mode BatchNorm + the 1/(k*k) average scale folded into the conv weight.
    scale = params["bn_gamma"] / jnp.sqrt(params["bn_var"] + 1e-3)
    shift = (params["bn_beta"] - params["bn_mean"] * scale)
    shift = shift.reshape(1, c_out).astype(jnp.float32)
    wc = (params["conv_w"].reshape(c_out, C).T
          * (scale / float(k * k))[None, :]).astype(jnp.bfloat16)

    # fc1 weight: torch.flatten index is c*16 + p (channel-major); the kernel
    # packs activations pixel-major (p*128 + c), so permute rows to match.
    w1 = jnp.transpose(params["fc1_w"].T.reshape(c_out, n_pix, hidden), (1, 0, 2))
    w1 = w1.reshape(n_pix * c_out, hidden).astype(jnp.bfloat16)
    b1 = params["fc1_b"].reshape(1, hidden).astype(jnp.float32)

    # fc2: zero-pad classes up to a lane-dense multiple of 128.
    w2 = jnp.zeros((hidden, nc_pad), jnp.float32)
    w2 = w2.at[:, :num_classes].set(params["fc2_w"].T).astype(jnp.bfloat16)
    b2 = jnp.zeros((1, nc_pad), jnp.float32)
    b2 = b2.at[:, :num_classes].set(params["fc2_b"].reshape(1, -1))

    # VMEM budget: constant-index inputs single-buffered, x/out double-buffered.
    def nbytes(a):
        return int(np.prod(a.shape)) * a.dtype.itemsize
    resident = (nbytes(pmat) + nbytes(wc) + nbytes(shift) + nbytes(w1)
                + nbytes(b1) + nbytes(w2) + nbytes(b2))
    streamed = 2 * (tb * hw * C * 2) + 2 * (tb * nc_pad * 4)
    scratch = tb * n_pix * c_out * 2
    vmem_limit = int(min(max(2 * (resident + streamed + scratch), 32 << 20),
                         100 << 20))

    flops_per_row = 2 * (n_pix * hw * C + n_pix * C * c_out
                         + n_pix * c_out * hidden + hidden * nc_pad)
    cost = pl.CostEstimate(
        flops=int(flops_per_row * n_pad),
        transcendentals=0,
        bytes_accessed=int(nbytes(x3) + resident + n_pad * nc_pad * 4))

    const = dict(pipeline_mode=pl.Buffered(1))   # weights stay resident, 1 buffer
    grid = (n_pad // tb,)
    out = pl.pallas_call(
        inception_aux_kernel,
        out_shape=jax.ShapeDtypeStruct((n_pad, nc_pad), jnp.float32),
        grid_spec=pltpu.PrefetchScalarGridSpec(
            num_scalar_prefetch=0,
            grid=grid,
            in_specs=[
                pl.BlockSpec((tb, n_pix, hw), lambda i: (0, 0, 0), **const),   # pool matrix
                pl.BlockSpec((tb, hw, C), lambda i: (i, 0, 0)),                # x tile
                pl.BlockSpec((C, c_out), lambda i: (0, 0), **const),           # conv w (folded)
                pl.BlockSpec((1, c_out), lambda i: (0, 0), **const),           # BN shift
                pl.BlockSpec((n_pix * c_out, hidden), lambda i: (0, 0), **const),  # fc1 w
                pl.BlockSpec((1, hidden), lambda i: (0, 0), **const),          # fc1 b
                pl.BlockSpec((hidden, nc_pad), lambda i: (0, 0), **const),     # fc2 w (padded)
                pl.BlockSpec((1, nc_pad), lambda i: (0, 0), **const),          # fc2 b (padded)
            ],
            out_specs=pl.BlockSpec((tb, nc_pad), lambda i: (i, 0)),
            scratch_shapes=[
                pltpu.VMEM((tb, n_pix * c_out), jnp.bfloat16),                 # fc1 activations
            ],
        ),
        compiler_params=pltpu.CompilerParams(
            dimension_semantics=("parallel",),
            vmem_limit_bytes=vmem_limit),
        cost_estimate=cost,
    )(pmat, x3, wc, shift, w1, b1, w2, b2)
    return out[:N, :num_classes]


def init_params(key, in_channels, num_classes):
    ks = jax.random.split(key, 9)
    p = {}
    p["conv_w"]   = 0.1 * jax.random.normal(ks[0], (128, in_channels, 1, 1), jnp.float32)
    p["bn_gamma"] = 1.0 + 0.1 * jax.random.normal(ks[1], (128,), jnp.float32)
    p["bn_beta"]  = 0.1 * jax.random.normal(ks[2], (128,), jnp.float32)
    p["bn_mean"]  = 0.1 * jax.random.normal(ks[3], (128,), jnp.float32)
    p["bn_var"]   = jax.random.uniform(ks[4], (128,), jnp.float32, 0.5, 1.5)
    p["fc1_w"]    = 0.1 * jax.random.normal(ks[5], (1024, 2048), jnp.float32)
    p["fc1_b"]    = 0.1 * jax.random.normal(ks[6], (1024,), jnp.float32)
    p["fc2_w"]    = 0.1 * jax.random.normal(ks[7], (num_classes, 1024), jnp.float32)
    p["fc2_b"]    = 0.1 * jax.random.normal(ks[8], (num_classes,), jnp.float32)
    return p


def reference_forward(x_nchw, params):
    """Pure-JAX f32 reference matching the PyTorch forward (eval mode)."""
    N, C, H, W = x_nchw.shape
    k, s = 5, 3
    OH = (H - k) // s + 1
    OW = (W - k) // s + 1
    rows = []
    for oh in range(OH):
        cols = []
        for ow in range(OW):
            win = x_nchw[:, :, oh * s:oh * s + k, ow * s:ow * s + k]
            cols.append(jnp.mean(win, axis=(2, 3)))
        rows.append(jnp.stack(cols, axis=-1))
    pooled = jnp.stack(rows, axis=-2)                          # (N, C, OH, OW)
    conv = jnp.einsum("nchw,oc->nohw", pooled, params["conv_w"].reshape(128, C))
    scale = params["bn_gamma"] / jnp.sqrt(params["bn_var"] + 1e-3)
    shift = params["bn_beta"] - params["bn_mean"] * scale
    conv = jnp.maximum(conv * scale[None, :, None, None]
                       + shift[None, :, None, None], 0.0)
    flat = conv.reshape(N, -1)                                 # (N, 2048)
    h1 = jnp.maximum(flat @ params["fc1_w"].T + params["fc1_b"], 0.0)
    return h1 @ params["fc2_w"].T + params["fc2_b"]


if __name__ == "__main__":
    key = jax.random.PRNGKey(0)
    k_x, k_p = jax.random.split(key)
    # H=W=14 is forced by fc1's in_features=2048 (= 128 * 4 * 4 after 5/3 pool)
    N, C, H, W = 32, 16, 14, 14
    num_classes = 10
    x = jax.random.normal(k_x, (N, C, H, W), jnp.float32)
    params = init_params(k_p, C, num_classes)

    # block_batch=16 -> tb=16, grid=(2,): conv matmul M=256, both TCs usable.
    out = jax.block_until_ready(inception_aux_forward(x, params, block_batch=16))
    ref = jax.block_until_ready(reference_forward(x, params))

    # bf16 matmul operands (f32 accumulation) vs. an f32 reference.
    if not np.allclose(np.asarray(out), np.asarray(ref), rtol=4e-2, atol=4e-2):
        err = float(jnp.max(jnp.abs(out - ref)))
        raise AssertionError(f"Pallas output mismatch vs reference, max abs err = {err}")
    print("KERNEL_OK")
</pallas_src>

<mosaic_0001>
module attributes {stable_mosaic.version = 11 : i64} {
  func.func @inception_aux_kernel(%arg0: i32, %arg1: memref<16x16x196xbf16, #tpu.memory_space<vmem>>, %arg2: memref<16x196x16xbf16, #tpu.memory_space<vmem>>, %arg3: memref<16x128xbf16, #tpu.memory_space<vmem>>, %arg4: memref<1x128xf32, #tpu.memory_space<vmem>>, %arg5: memref<2048x1024xbf16, #tpu.memory_space<vmem>>, %arg6: memref<1x1024xf32, #tpu.memory_space<vmem>>, %arg7: memref<1024x128xbf16, #tpu.memory_space<vmem>>, %arg8: memref<1x128xf32, #tpu.memory_space<vmem>>, %arg9: memref<16x128xf32, #tpu.memory_space<vmem>>, %arg10: memref<16x2048xbf16, #tpu.memory_space<vmem>>) attributes {dimension_semantics = [#tpu.dimension_semantics<parallel>], iteration_bounds = array<i64: 2>, scalar_prefetch = 0 : i64, scratch_operands = 1 : i64, tpu.core_type = #tpu.core_type<tc>, window_params = [{pipeline_mode = #tpu.pipeline_mode<synchronous>, transform_indices = @transform_0, window_bounds = array<i64: 16, 16, 196>}, {transform_indices = @transform_1, window_bounds = array<i64: 16, 196, 16>}, {pipeline_mode = #tpu.pipeline_mode<synchronous>, transform_indices = @transform_2, window_bounds = array<i64: 16, 128>}, {pipeline_mode = #tpu.pipeline_mode<synchronous>, transform_indices = @transform_3, window_bounds = array<i64: 1, 128>}, {pipeline_mode = #tpu.pipeline_mode<synchronous>, transform_indices = @transform_4, window_bounds = array<i64: 2048, 1024>}, {pipeline_mode = #tpu.pipeline_mode<synchronous>, transform_indices = @transform_5, window_bounds = array<i64: 1, 1024>}, {pipeline_mode = #tpu.pipeline_mode<synchronous>, transform_indices = @transform_6, window_bounds = array<i64: 1024, 128>}, {pipeline_mode = #tpu.pipeline_mode<synchronous>, transform_indices = @transform_7, window_bounds = array<i64: 1, 128>}, {transform_indices = @transform_8, window_bounds = array<i64: 16, 128>}]} {
    %c0 = arith.constant 0 : index
    %c0_0 = arith.constant 0 : index
    %c0_1 = arith.constant 0 : index
    %0 = vector.load %arg1[%c0, %c0_0, %c0_1] : memref<16x16x196xbf16, #tpu.memory_space<vmem>>, vector<16x16x196xbf16>
    %c0_2 = arith.constant 0 : index
    %c0_3 = arith.constant 0 : index
    %c0_4 = arith.constant 0 : index
    %1 = vector.load %arg2[%c0_2, %c0_3, %c0_4] : memref<16x196x16xbf16, #tpu.memory_space<vmem>>, vector<16x196x16xbf16>
    "tpu.trace_start"() <{level = 10 : i32, message = "bph,bhc->bpc"}> : () -> ()
    %cst = arith.constant dense<0.000000e+00> : vector<16x16x16xf32>
    %2 = tpu.matmul %0, %1, %cst {dimension_numbers = #tpu.dot_dimension_numbers<[2], [1], [1], [2], [0, 0, 0, 1, 1, 2], [0], [0]>} : vector<16x16x196xbf16>, vector<16x196x16xbf16>, vector<16x16x16xf32> -> vector<16x16x16xf32>
    "tpu.trace_stop"() : () -> ()
    %3 = vector.shape_cast %2 : vector<16x16x16xf32> to vector<256x16xf32>
    %4 = arith.truncf %3 : vector<256x16xf32> to vector<256x16xbf16>
    %c0_5 = arith.constant 0 : index
    %c0_6 = arith.constant 0 : index
    %5 = vector.load %arg3[%c0_5, %c0_6] : memref<16x128xbf16, #tpu.memory_space<vmem>>, vector<16x128xbf16>
    %cst_7 = arith.constant dense<0.000000e+00> : vector<256x128xf32>
    %6 = tpu.matmul %4, %5, %cst_7 {dimension_numbers = #tpu.dot_dimension_numbers<[1], [0], [0], [1], [0, 0, 1, 1], [], []>} : vector<256x16xbf16>, vector<16x128xbf16>, vector<256x128xf32> -> vector<256x128xf32>
    %c0_8 = arith.constant 0 : index
    %c0_9 = arith.constant 0 : index
    %7 = vector.load %arg4[%c0_8, %c0_9] : memref<1x128xf32, #tpu.memory_space<vmem>>, vector<1x128xf32>
    %8 = vector.broadcast %7 : vector<1x128xf32> to vector<256x128xf32>
    %9 = arith.addf %6, %8 : vector<256x128xf32>
    %cst_10 = arith.constant 0.000000e+00 : f32
    %10 = vector.broadcast %cst_10 : f32 to vector<256x128xf32>
    %11 = arith.maximumf %9, %10 : vector<256x128xf32>
    %12 = arith.truncf %11 : vector<256x128xf32> to vector<256x128xbf16>
    %13 = vector.shape_cast %12 : vector<256x128xbf16> to vector<16x16x128xbf16>
    %14 = vector.extract_strided_slice %13 {offsets = [0, 0, 0], sizes = [16, 1, 128], strides = [1, 1, 1]} : vector<16x16x128xbf16> to vector<16x1x128xbf16>
    %15 = vector.shape_cast %14 : vector<16x1x128xbf16> to vector<16x128xbf16>
    %c0_11 = arith.constant 0 : index
    %c0_12 = arith.constant 0 : index
    %16 = vector.load %arg10[%c0_11, %c0_12] : memref<16x2048xbf16, #tpu.memory_space<vmem>>, vector<16x128xbf16>
    tpu.vector_store %arg10[%c0_11, %c0_12], %15 {strides = array<i32>} : memref<16x2048xbf16, #tpu.memory_space<vmem>>, vector<16x128xbf16>,
    %17 = vector.extract_strided_slice %13 {offsets = [0, 1, 0], sizes = [16, 1, 128], strides = [1, 1, 1]} : vector<16x16x128xbf16> to vector<16x1x128xbf16>
    %18 = vector.shape_cast %17 : vector<16x1x128xbf16> to vector<16x128xbf16>
    %c0_13 = arith.constant 0 : index
    %c128 = arith.constant 128 : index
    %19 = vector.load %arg10[%c0_13, %c128] : memref<16x2048xbf16, #tpu.memory_space<vmem>>, vector<16x128xbf16>
    tpu.vector_store %arg10[%c0_13, %c128], %18 {strides = array<i32>} : memref<16x2048xbf16, #tpu.memory_space<vmem>>, vector<16x128xbf16>,
    %20 = vector.extract_strided_slice %13 {offsets = [0, 2, 0], sizes = [16, 1, 128], strides = [1, 1, 1]} : vector<16x16x128xbf16> to vector<16x1x128xbf16>
    %21 = vector.shape_cast %20 : vector<16x1x128xbf16> to vector<16x128xbf16>
    %c0_14 = arith.constant 0 : index
    %c256 = arith.constant 256 : index
    %22 = vector.load %arg10[%c0_14, %c256] : memref<16x2048xbf16, #tpu.memory_space<vmem>>, vector<16x128xbf16>
    tpu.vector_store %arg10[%c0_14, %c256], %21 {strides = array<i32>} : memref<16x2048xbf16, #tpu.memory_space<vmem>>, vector<16x128xbf16>,
    %23 = vector.extract_strided_slice %13 {offsets = [0, 3, 0], sizes = [16, 1, 128], strides = [1, 1, 1]} : vector<16x16x128xbf16> to vector<16x1x128xbf16>
    %24 = vector.shape_cast %23 : vector<16x1x128xbf16> to vector<16x128xbf16>
    %c0_15 = arith.constant 0 : index
    %c384 = arith.constant 384 : index
    %25 = vector.load %arg10[%c0_15, %c384] : memref<16x2048xbf16, #tpu.memory_space<vmem>>, vector<16x128xbf16>
    tpu.vector_store %arg10[%c0_15, %c384], %24 {strides = array<i32>} : memref<16x2048xbf16, #tpu.memory_space<vmem>>, vector<16x128xbf16>,
    %26 = vector.extract_strided_slice %13 {offsets = [0, 4, 0], sizes = [16, 1, 128], strides = [1, 1, 1]} : vector<16x16x128xbf16> to vector<16x1x128xbf16>
    %27 = vector.shape_cast %26 : vector<16x1x128xbf16> to vector<16x128xbf16>
    %c0_16 = arith.constant 0 : index
    %c512 = arith.constant 512 : index
    %28 = vector.load %arg10[%c0_16, %c512] : memref<16x2048xbf16, #tpu.memory_space<vmem>>, vector<16x128xbf16>
    tpu.vector_store %arg10[%c0_16, %c512], %27 {strides = array<i32>} : memref<16x2048xbf16, #tpu.memory_space<vmem>>, vector<16x128xbf16>,
    %29 = vector.extract_strided_slice %13 {offsets = [0, 5, 0], sizes = [16, 1, 128], strides = [1, 1, 1]} : vector<16x16x128xbf16> to vector<16x1x128xbf16>
    %30 = vector.shape_cast %29 : vector<16x1x128xbf16> to vector<16x128xbf16>
    %c0_17 = arith.constant 0 : index
    %c640 = arith.constant 640 : index
    %31 = vector.load %arg10[%c0_17, %c640] : memref<16x2048xbf16, #tpu.memory_space<vmem>>, vector<16x128xbf16>
    tpu.vector_store %arg10[%c0_17, %c640], %30 {strides = array<i32>} : memref<16x2048xbf16, #tpu.memory_space<vmem>>, vector<16x128xbf16>,
    %32 = vector.extract_strided_slice %13 {offsets = [0, 6, 0], sizes = [16, 1, 128], strides = [1, 1, 1]} : vector<16x16x128xbf16> to vector<16x1x128xbf16>
    %33 = vector.shape_cast %32 : vector<16x1x128xbf16> to vector<16x128xbf16>
    %c0_18 = arith.constant 0 : index
    %c768 = arith.constant 768 : index
    %34 = vector.load %arg10[%c0_18, %c768] : memref<16x2048xbf16, #tpu.memory_space<vmem>>, vector<16x128xbf16>
    tpu.vector_store %arg10[%c0_18, %c768], %33 {strides = array<i32>} : memref<16x2048xbf16, #tpu.memory_space<vmem>>, vector<16x128xbf16>,
    %35 = vector.extract_strided_slice %13 {offsets = [0, 7, 0], sizes = [16, 1, 128], strides = [1, 1, 1]} : vector<16x16x128xbf16> to vector<16x1x128xbf16>
    %36 = vector.shape_cast %35 : vector<16x1x128xbf16> to vector<16x128xbf16>
    %c0_19 = arith.constant 0 : index
    %c896 = arith.constant 896 : index
    %37 = vector.load %arg10[%c0_19, %c896] : memref<16x2048xbf16, #tpu.memory_space<vmem>>, vector<16x128xbf16>
    tpu.vector_store %arg10[%c0_19, %c896], %36 {strides = array<i32>} : memref<16x2048xbf16, #tpu.memory_space<vmem>>, vector<16x128xbf16>,
    %38 = vector.extract_strided_slice %13 {offsets = [0, 8, 0], sizes = [16, 1, 128], strides = [1, 1, 1]} : vector<16x16x128xbf16> to vector<16x1x128xbf16>
    %39 = vector.shape_cast %38 : vector<16x1x128xbf16> to vector<16x128xbf16>
    %c0_20 = arith.constant 0 : index
    %c1024 = arith.constant 1024 : index
    %40 = vector.load %arg10[%c0_20, %c1024] : memref<16x2048xbf16, #tpu.memory_space<vmem>>, vector<16x128xbf16>
    tpu.vector_store %arg10[%c0_20, %c1024], %39 {strides = array<i32>} : memref<16x2048xbf16, #tpu.memory_space<vmem>>, vector<16x128xbf16>,
    %41 = vector.extract_strided_slice %13 {offsets = [0, 9, 0], sizes = [16, 1, 128], strides = [1, 1, 1]} : vector<16x16x128xbf16> to vector<16x1x128xbf16>
    %42 = vector.shape_cast %41 : vector<16x1x128xbf16> to vector<16x128xbf16>
    %c0_21 = arith.constant 0 : index
    %c1152 = arith.constant 1152 : index
    %43 = vector.load %arg10[%c0_21, %c1152] : memref<16x2048xbf16, #tpu.memory_space<vmem>>, vector<16x128xbf16>
    tpu.vector_store %arg10[%c0_21, %c1152], %42 {strides = array<i32>} : memref<16x2048xbf16, #tpu.memory_space<vmem>>, vector<16x128xbf16>,
    %44 = vector.extract_strided_slice %13 {offsets = [0, 10, 0], sizes = [16, 1, 128], strides = [1, 1, 1]} : vector<16x16x128xbf16> to vector<16x1x128xbf16>
    %45 = vector.shape_cast %44 : vector<16x1x128xbf16> to vector<16x128xbf16>
    %c0_22 = arith.constant 0 : index
    %c1280 = arith.constant 1280 : index
    %46 = vector.load %arg10[%c0_22, %c1280] : memref<16x2048xbf16, #tpu.memory_space<vmem>>, vector<16x128xbf16>
    tpu.vector_store %arg10[%c0_22, %c1280], %45 {strides = array<i32>} : memref<16x2048xbf16, #tpu.memory_space<vmem>>, vector<16x128xbf16>,
    %47 = vector.extract_strided_slice %13 {offsets = [0, 11, 0], sizes = [16, 1, 128], strides = [1, 1, 1]} : vector<16x16x128xbf16> to vector<16x1x128xbf16>
    %48 = vector.shape_cast %47 : vector<16x1x128xbf16> to vector<16x128xbf16>
    %c0_23 = arith.constant 0 : index
    %c1408 = arith.constant 1408 : index
    %49 = vector.load %arg10[%c0_23, %c1408] : memref<16x2048xbf16, #tpu.memory_space<vmem>>, vector<16x128xbf16>
    tpu.vector_store %arg10[%c0_23, %c1408], %48 {strides = array<i32>} : memref<16x2048xbf16, #tpu.memory_space<vmem>>, vector<16x128xbf16>,
    %50 = vector.extract_strided_slice %13 {offsets = [0, 12, 0], sizes = [16, 1, 128], strides = [1, 1, 1]} : vector<16x16x128xbf16> to vector<16x1x128xbf16>
    %51 = vector.shape_cast %50 : vector<16x1x128xbf16> to vector<16x128xbf16>
    %c0_24 = arith.constant 0 : index
    %c1536 = arith.constant 1536 : index
    %52 = vector.load %arg10[%c0_24, %c1536] : memref<16x2048xbf16, #tpu.memory_space<vmem>>, vector<16x128xbf16>
    tpu.vector_store %arg10[%c0_24, %c1536], %51 {strides = array<i32>} : memref<16x2048xbf16, #tpu.memory_space<vmem>>, vector<16x128xbf16>,
    %53 = vector.extract_strided_slice %13 {offsets = [0, 13, 0], sizes = [16, 1, 128], strides = [1, 1, 1]} : vector<16x16x128xbf16> to vector<16x1x128xbf16>
    %54 = vector.shape_cast %53 : vector<16x1x128xbf16> to vector<16x128xbf16>
    %c0_25 = arith.constant 0 : index
    %c1664 = arith.constant 1664 : index
    %55 = vector.load %arg10[%c0_25, %c1664] : memref<16x2048xbf16, #tpu.memory_space<vmem>>, vector<16x128xbf16>
    tpu.vector_store %arg10[%c0_25, %c1664], %54 {strides = array<i32>} : memref<16x2048xbf16, #tpu.memory_space<vmem>>, vector<16x128xbf16>,
    %56 = vector.extract_strided_slice %13 {offsets = [0, 14, 0], sizes = [16, 1, 128], strides = [1, 1, 1]} : vector<16x16x128xbf16> to vector<16x1x128xbf16>
    %57 = vector.shape_cast %56 : vector<16x1x128xbf16> to vector<16x128xbf16>
    %c0_26 = arith.constant 0 : index
    %c1792 = arith.constant 1792 : index
    %58 = vector.load %arg10[%c0_26, %c1792] : memref<16x2048xbf16, #tpu.memory_space<vmem>>, vector<16x128xbf16>
    tpu.vector_store %arg10[%c0_26, %c1792], %57 {strides = array<i32>} : memref<16x2048xbf16, #tpu.memory_space<vmem>>, vector<16x128xbf16>,
    %59 = vector.extract_strided_slice %13 {offsets = [0, 15, 0], sizes = [16, 1, 128], strides = [1, 1, 1]} : vector<16x16x128xbf16> to vector<16x1x128xbf16>
    %60 = vector.shape_cast %59 : vector<16x1x128xbf16> to vector<16x128xbf16>
    %c0_27 = arith.constant 0 : index
    %c1920 = arith.constant 1920 : index
    %61 = vector.load %arg10[%c0_27, %c1920] : memref<16x2048xbf16, #tpu.memory_space<vmem>>, vector<16x128xbf16>
    tpu.vector_store %arg10[%c0_27, %c1920], %60 {strides = array<i32>} : memref<16x2048xbf16, #tpu.memory_space<vmem>>, vector<16x128xbf16>,
    %c0_28 = arith.constant 0 : index
    %c0_29 = arith.constant 0 : index
    %62 = vector.load %arg10[%c0_28, %c0_29] : memref<16x2048xbf16, #tpu.memory_space<vmem>>, vector<16x2048xbf16>
    %c0_30 = arith.constant 0 : index
    %c0_31 = arith.constant 0 : index
    %63 = vector.load %arg5[%c0_30, %c0_31] : memref<2048x1024xbf16, #tpu.memory_space<vmem>>, vector<2048x1024xbf16>
    %cst_32 = arith.constant dense<0.000000e+00> : vector<16x1024xf32>
    %64 = tpu.matmul %62, %63, %cst_32 {dimension_numbers = #tpu.dot_dimension_numbers<[1], [0], [0], [1], [0, 0, 1, 1], [], []>} : vector<16x2048xbf16>, vector<2048x1024xbf16>, vector<16x1024xf32> -> vector<16x1024xf32>
    %c0_33 = arith.constant 0 : index
    %c0_34 = arith.constant 0 : index
    %65 = vector.load %arg6[%c0_33, %c0_34] : memref<1x1024xf32, #tpu.memory_space<vmem>>, vector<1x1024xf32>
    %66 = vector.broadcast %65 : vector<1x1024xf32> to vector<16x1024xf32>
    %67 = arith.addf %64, %66 : vector<16x1024xf32>
    %cst_35 = arith.constant 0.000000e+00 : f32
    %68 = vector.broadcast %cst_35 : f32 to vector<16x1024xf32>
    %69 = arith.maximumf %67, %68 : vector<16x1024xf32>
    %70 = arith.truncf %69 : vector<16x1024xf32> to vector<16x1024xbf16>
    %c0_36 = arith.constant 0 : index
    %c0_37 = arith.constant 0 : index
    %71 = vector.load %arg7[%c0_36, %c0_37] : memref<1024x128xbf16, #tpu.memory_space<vmem>>, vector<1024x128xbf16>
    %cst_38 = arith.constant dense<0.000000e+00> : vector<16x128xf32>
    %72 = tpu.matmul %70, %71, %cst_38 {dimension_numbers = #tpu.dot_dimension_numbers<[1], [0], [0], [1], [0, 0, 1, 1], [], []>} : vector<16x1024xbf16>, vector<1024x128xbf16>, vector<16x128xf32> -> vector<16x128xf32>
    %c0_39 = arith.constant 0 : index
    %c0_40 = arith.constant 0 : index
    %73 = vector.load %arg8[%c0_39, %c0_40] : memref<1x128xf32, #tpu.memory_space<vmem>>, vector<1x128xf32>
    %74 = vector.broadcast %73 : vector<1x128xf32> to vector<16x128xf32>
    %75 = arith.addf %72, %74 : vector<16x128xf32>
    %c0_41 = arith.constant 0 : index
    %c0_42 = arith.constant 0 : index
    %76 = vector.load %arg9[%c0_41, %c0_42] : memref<16x128xf32, #tpu.memory_space<vmem>>, vector<16x128xf32>
    tpu.vector_store %arg9[%c0_41, %c0_42], %75 {strides = array<i32>} : memref<16x128xf32, #tpu.memory_space<vmem>>, vector<16x128xf32>,
    return
  }
  func.func @transform_0(%arg0: i32) -> (i32, i32, i32) {
    %c0_i32 = arith.constant 0 : i32
    %c0_i32_0 = arith.constant 0 : i32
    %c0_i32_1 = arith.constant 0 : i32
    %c0_i32_2 = arith.constant 0 : i32
    return %c0_i32, %c0_i32_0, %c0_i32_1 : i32, i32, i32
  }
  func.func @transform_1(%arg0: i32) -> (i32, i32, i32) {
    %c0_i32 = arith.constant 0 : i32
    %c0_i32_0 = arith.constant 0 : i32
    %c0_i32_1 = arith.constant 0 : i32
    return %arg0, %c0_i32, %c0_i32_0 : i32, i32, i32
  }
  func.func @transform_2(%arg0: i32) -> (i32, i32) {
    %c0_i32 = arith.constant 0 : i32
    %c0_i32_0 = arith.constant 0 : i32
    %c0_i32_1 = arith.constant 0 : i32
    return %c0_i32, %c0_i32_0 : i32, i32
  }
  func.func @transform_3(%arg0: i32) -> (i32, i32) {
    %c0_i32 = arith.constant 0 : i32
    %c0_i32_0 = arith.constant 0 : i32
    %c0_i32_1 = arith.constant 0 : i32
    return %c0_i32, %c0_i32_0 : i32, i32
  }
  func.func @transform_4(%arg0: i32) -> (i32, i32) {
    %c0_i32 = arith.constant 0 : i32
    %c0_i32_0 = arith.constant 0 : i32
    %c0_i32_1 = arith.constant 0 : i32
    return %c0_i32, %c0_i32_0 : i32, i32
  }
  func.func @transform_5(%arg0: i32) -> (i32, i32) {
    %c0_i32 = arith.constant 0 : i32
    %c0_i32_0 = arith.constant 0 : i32
    %c0_i32_1 = arith.constant 0 : i32
    return %c0_i32, %c0_i32_0 : i32, i32
  }
  func.func @transform_6(%arg0: i32) -> (i32, i32) {
    %c0_i32 = arith.constant 0 : i32
    %c0_i32_0 = arith.constant 0 : i32
    %c0_i32_1 = arith.constant 0 : i32
    return %c0_i32, %c0_i32_0 : i32, i32
  }
  func.func @transform_7(%arg0: i32) -> (i32, i32) {
    %c0_i32 = arith.constant 0 : i32
    %c0_i32_0 = arith.constant 0 : i32
    %c0_i32_1 = arith.constant 0 : i32
    return %c0_i32, %c0_i32_0 : i32, i32
  }
  func.func @transform_8(%arg0: i32) -> (i32, i32) {
    %c0_i32 = arith.constant 0 : i32
    %c0_i32_0 = arith.constant 0 : i32
    return %arg0, %c0_i32 : i32, i32
  }
}

</mosaic_0001>

<llo_original>
// kernel: tpu_custom_call.1
$region0: #{tpu_custom_call.1}
  #allocation0 [shape = 'u32[]', space=smem, size = 0x4, offset = 0x4, fixed_abs, tag = 'smem constant byte address 0x4 - core index']
  #allocation1 [shape = 'u32[144,128]{1,0:T(1,128)}', space=vmem, size = 0x12000, scoped, tag = 'internal scratch']
  #allocation2 [shape = 'bf16[16,2048]{1,0:T(16,128)(2,1)}', space=vmem, size = 0x10000, scoped, tag = 'scratch operand']
  %s0 = inlined_call_operand.hbm [shape: bf16[16,16,196], index: 0, kind: input, shape index: {}]
  %s1 = inlined_call_operand.vmem [shape: bf16[32,196,16], index: 1, kind: input, shape index: {}]
  %s2 = inlined_call_operand.hbm [shape: bf16[16,128], index: 2, kind: input, shape index: {}]
  %s3 = inlined_call_operand.hbm [shape: f32[1,128], index: 3, kind: input, shape index: {}]
  %s4 = inlined_call_operand.hbm [shape: bf16[2048,1024], index: 4, kind: input, shape index: {}]
  %s5 = inlined_call_operand.hbm [shape: f32[1,1024], index: 5, kind: input, shape index: {}]
  %s6 = inlined_call_operand.hbm [shape: bf16[1024,128], index: 6, kind: input, shape index: {}]
  %s7 = inlined_call_operand.hbm [shape: f32[1,128], index: 7, kind: input, shape index: {}]
  %s8 = inlined_call_operand.hbm [shape: f32[32,128], index: 8, kind: output, shape index: {}]
  %s9 = sld [smem:[#allocation0]]
  $region93: #{tpu_custom_call.1} parent=0
    _
  %s11 = ssub.s32 1, %s9
  %s12 = scalar_select 0, %s11, %s9
  $region1: #{tpu_custom_call.1} parent=0
    #allocation3 [shape = 'u8[131072]{0}', space=vmem, size = 0x20000, scoped, tag = 'input window, operand 0, single buffered']
    #allocation4 [shape = 's32[2]{0}', space=sflag, size = 0x8, scoped, tag = 'scoped memory for tpu_custom_call.1']
    #allocation5 [shape = 's32[2]{0}', space=sflag, size = 0x8, scoped, tag = 'scoped memory for tpu_custom_call.1']
    #allocation6 [shape = 'u8[4096]{0}', space=vmem, size = 0x1000, scoped, tag = 'input window, operand 2, single buffered']
    #allocation7 [shape = 's32[1]{0}', space=sflag, size = 0x4, scoped, tag = 'scoped memory for tpu_custom_call.1']
    #allocation8 [shape = 'u8[512]{0}', space=vmem, size = 0x400, scoped, tag = 'input window, operand 3, single buffered']
    #allocation9 [shape = 'u8[4194304]{0}', space=vmem, size = 0x400000, scoped, tag = 'input window, operand 4, single buffered']
    #allocation10 [shape = 's32[1]{0}', space=sflag, size = 0x4, scoped, tag = 'scoped memory for tpu_custom_call.1']
    #allocation11 [shape = 'u8[4096]{0}', space=vmem, size = 0x1000, scoped, tag = 'input window, operand 5, single buffered']
    #allocation12 [shape = 'u8[262144]{0}', space=vmem, size = 0x40000, scoped, tag = 'input window, operand 6, single buffered']
    #allocation13 [shape = 's32[1]{0}', space=sflag, size = 0x4, scoped, tag = 'scoped memory for tpu_custom_call.1']
    #allocation14 [shape = 'u8[512]{0}', space=vmem, size = 0x400, scoped, tag = 'input window, operand 7, single buffered']
    #allocation15 [shape = 'u8[16384]{0}', space=vmem, size = 0x4000, scoped, tag = 'output window, operand 0']
    %13 = vsyncpa [#allocation4], 0
    %14 = vsyncpa [#allocation7], 0
    %15 = vsyncpa [#allocation10], 0
    %16 = vsyncpa [#allocation13], 0
    %17 = vsyncpa [#allocation5], 0
    %s18 = scalar_lea.sflag [#allocation5], 1
    %19 = vsyncpa %s18, 0
    loop: start=0, step=1, limit=4
    $region2: #{tpu_custom_call.1} parent=1 // loop_pre_header
      _
    $region3: #{tpu_custom_call.1} parent=1 // loop_header
      %s21 = sphi 0, %s25
      %p22 = scmp.ge.s32.totalorder %s21, 4
      %s29 = sphi 0, %s29
      %s31 = sphi 0, %s29
      %s32 = sphi 0, %s31
      %s46 = sphi 0, %s32
      %s52 = sphi 0, %s54
      %s55 = sphi 0, %s52
      %s56 = sphi 0, %s55
      %s72 = sphi 0, %s56
      %s76 = sphi 0, %s76
      %s78 = sphi 0, %s76
      %s79 = sphi 0, %s78
      %s93 = sphi 0, %s79
      %s97 = sphi 0, %s97
      %s99 = sphi 0, %s97
      %s100 = sphi 0, %s99
      %s114 = sphi 0, %s100
      %s118 = sphi 0, %s118
      %s120 = sphi 0, %s118
      %s121 = sphi 0, %s120
      %s135 = sphi 0, %s121
      %s139 = sphi 0, %s139
      %s141 = sphi 0, %s139
      %s142 = sphi 0, %s141
      %s156 = sphi 0, %s142
      %s160 = sphi 0, %s160
      %s162 = sphi 0, %s160
      %s163 = sphi 0, %s162
      %s177 = sphi 0, %s163
      %s181 = sphi 0, %s181
      %s183 = sphi 0, %s181
      %s184 = sphi 0, %s183
      %s198 = sphi 0, %s184
      %s204 = sphi 0, %s206
      %s207 = sphi 0, %s204
      %s208 = sphi 0, %s207
      %s224 = sphi 0, %s208
    $region4: #{tpu_custom_call.1} parent=1 // loop_header_branch
      %24 = sbr.rel (%p22) target = $region8
    $region5: #{tpu_custom_call.1} parent=1 // loop_body
      %s26 = ssub.s32 %s21, 1
      %s27 = ssub.s32 %s21, 2
      %s28 = sadd.s32 %s21, 1
      %s30 = sadd.s32 %s29, 1
      %p33 = scmp.eq.s32.totalorder %s21, 1
      %p34 = scmp.ne.s32.totalorder %s29, %s31
      %p35 = scmp.eq.s32.totalorder %s21, 0
      %p36 = por %p34, %p35
      %p37 = scmp.ne.s32.totalorder %s29, %s31
      %p38 = scmp.eq.s32.totalorder %s26, 1
      %p39 = por %p37, %p38
      %p40 = scmp.ne.s32.totalorder %s31, %s32
      %p41 = scmp.eq.s32.totalorder %s26, 0
      %p42 = por %p40, %p41
      %p43 = scmp.ne.s32.totalorder %s31, %s32
      %p44 = scmp.eq.s32.totalorder %s27, 1
      %p45 = por %p43, %p44
      %p47 = scmp.ne.s32.totalorder %s32, %s46
      %p48 = scmp.eq.s32.totalorder %s27, 0
      %p49 = por %p47, %p48
      %s50 = ssub.s32 %s21, %s28
      %p51 = scmp.eq.s32.totalorder %s50, 0
      %s53 = sadd.s32 %s52, 1
      %s54 = scalar_select %p51, %s52, %s53
      %p57 = pneg %p51
      %p58 = scmp.eq.s32.totalorder %s21, 1
      %p59 = por %p57, %p58
      %p60 = scmp.ne.s32.totalorder %s52, %s55
      %p61 = scmp.eq.s32.totalorder %s21, 0
      %p62 = por %p60, %p61
      %p63 = scmp.ne.s32.totalorder %s52, %s55
      %p64 = scmp.eq.s32.totalorder %s26, 1
      %p65 = por %p63, %p64
      %p66 = scmp.ne.s32.totalorder %s55, %s56
      %p67 = scmp.eq.s32.totalorder %s26, 0
      %p68 = por %p66, %p67
      %p69 = scmp.ne.s32.totalorder %s55, %s56
      %p70 = scmp.eq.s32.totalorder %s27, 1
      %p71 = por %p69, %p70
      %p73 = scmp.ne.s32.totalorder %s56, %s72
      %p74 = scmp.eq.s32.totalorder %s27, 0
      %p75 = por %p73, %p74
      %s77 = sadd.s32 %s76, 1
      %p80 = scmp.eq.s32.totalorder %s21, 1
      %p81 = scmp.ne.s32.totalorder %s76, %s78
      %p82 = scmp.eq.s32.totalorder %s21, 0
      %p83 = por %p81, %p82
      %p84 = scmp.ne.s32.totalorder %s76, %s78
      %p85 = scmp.eq.s32.totalorder %s26, 1
      %p86 = por %p84, %p85
      %p87 = scmp.ne.s32.totalorder %s78, %s79
      %p88 = scmp.eq.s32.totalorder %s26, 0
      %p89 = por %p87, %p88
      %p90 = scmp.ne.s32.totalorder %s78, %s79
      %p91 = scmp.eq.s32.totalorder %s27, 1
      %p92 = por %p90, %p91
      %p94 = scmp.ne.s32.totalorder %s79, %s93
      %p95 = scmp.eq.s32.totalorder %s27, 0
      %p96 = por %p94, %p95
      %s98 = sadd.s32 %s97, 1
      %p101 = scmp.eq.s32.totalorder %s21, 1
      %p102 = scmp.ne.s32.totalorder %s97, %s99
      %p103 = scmp.eq.s32.totalorder %s21, 0
      %p104 = por %p102, %p103
      %p105 = scmp.ne.s32.totalorder %s97, %s99
      %p106 = scmp.eq.s32.totalorder %s26, 1
      %p107 = por %p105, %p106
      %p108 = scmp.ne.s32.totalorder %s99, %s100
      %p109 = scmp.eq.s32.totalorder %s26, 0
      %p110 = por %p108, %p109
      %p111 = scmp.ne.s32.totalorder %s99, %s100
      %p112 = scmp.eq.s32.totalorder %s27, 1
      %p113 = por %p111, %p112
      %p115 = scmp.ne.s32.totalorder %s100, %s114
      %p116 = scmp.eq.s32.totalorder %s27, 0
      %p117 = por %p115, %p116
      %s119 = sadd.s32 %s118, 1
      %p122 = scmp.eq.s32.totalorder %s21, 1
      %p123 = scmp.ne.s32.totalorder %s118, %s120
      %p124 = scmp.eq.s32.totalorder %s21, 0
      %p125 = por %p123, %p124
      %p126 = scmp.ne.s32.totalorder %s118, %s120
      %p127 = scmp.eq.s32.totalorder %s26, 1
      %p128 = por %p126, %p127
      %p129 = scmp.ne.s32.totalorder %s120, %s121
      %p130 = scmp.eq.s32.totalorder %s26, 0
      %p131 = por %p129, %p130
      %p132 = scmp.ne.s32.totalorder %s120, %s121
      %p133 = scmp.eq.s32.totalorder %s27, 1
      %p134 = por %p132, %p133
      %p136 = scmp.ne.s32.totalorder %s121, %s135
      %p137 = scmp.eq.s32.totalorder %s27, 0
      %p138 = por %p136, %p137
      %s140 = sadd.s32 %s139, 1
      %p143 = scmp.eq.s32.totalorder %s21, 1
      %p144 = scmp.ne.s32.totalorder %s139, %s141
      %p145 = scmp.eq.s32.totalorder %s21, 0
      %p146 = por %p144, %p145
      %p147 = scmp.ne.s32.totalorder %s139, %s141
      %p148 = scmp.eq.s32.totalorder %s26, 1
      %p149 = por %p147, %p148
      %p150 = scmp.ne.s32.totalorder %s141, %s142
      %p151 = scmp.eq.s32.totalorder %s26, 0
      %p152 = por %p150, %p151
      %p153 = scmp.ne.s32.totalorder %s141, %s142
      %p154 = scmp.eq.s32.totalorder %s27, 1
      %p155 = por %p153, %p154
      %p157 = scmp.ne.s32.totalorder %s142, %s156
      %p158 = scmp.eq.s32.totalorder %s27, 0
      %p159 = por %p157, %p158
      %s161 = sadd.s32 %s160, 1
      %p164 = scmp.eq.s32.totalorder %s21, 1
      %p165 = scmp.ne.s32.totalorder %s160, %s162
      %p166 = scmp.eq.s32.totalorder %s21, 0
      %p167 = por %p165, %p166
      %p168 = scmp.ne.s32.totalorder %s160, %s162
      %p169 = scmp.eq.s32.totalorder %s26, 1
      %p170 = por %p168, %p169
      %p171 = scmp.ne.s32.totalorder %s162, %s163
      %p172 = scmp.eq.s32.totalorder %s26, 0
      %p173 = por %p171, %p172
      %p174 = scmp.ne.s32.totalorder %s162, %s163
      %p175 = scmp.eq.s32.totalorder %s27, 1
      %p176 = por %p174, %p175
      %p178 = scmp.ne.s32.totalorder %s163, %s177
      %p179 = scmp.eq.s32.totalorder %s27, 0
      %p180 = por %p178, %p179
      %s182 = sadd.s32 %s181, 1
      %p185 = scmp.eq.s32.totalorder %s21, 1
      %p186 = scmp.ne.s32.totalorder %s181, %s183
      %p187 = scmp.eq.s32.totalorder %s21, 0
      %p188 = por %p186, %p187
      %p189 = scmp.ne.s32.totalorder %s181, %s183
      %p190 = scmp.eq.s32.totalorder %s26, 1
      %p191 = por %p189, %p190
      %p192 = scmp.ne.s32.totalorder %s183, %s184
      %p193 = scmp.eq.s32.totalorder %s26, 0
      %p194 = por %p192, %p193
      %p195 = scmp.ne.s32.totalorder %s183, %s184
      %p196 = scmp.eq.s32.totalorder %s27, 1
      %p197 = por %p195, %p196
      %p199 = scmp.ne.s32.totalorder %s184, %s198
      %p200 = scmp.eq.s32.totalorder %s27, 0
      %p201 = por %p199, %p200
      %s202 = ssub.s32 %s21, %s28
      %p203 = scmp.eq.s32.totalorder %s202, 0
      %s205 = sadd.s32 %s204, 1
      %s206 = scalar_select %p203, %s204, %s205
      %p209 = pneg %p203
      %p210 = scmp.eq.s32.totalorder %s21, 1
      %p211 = por %p209, %p210
      %p212 = scmp.ne.s32.totalorder %s204, %s207
      %p213 = scmp.eq.s32.totalorder %s21, 0
      %p214 = por %p212, %p213
      %p215 = scmp.ne.s32.totalorder %s204, %s207
      %p216 = scmp.eq.s32.totalorder %s26, 1
      %p217 = por %p215, %p216
      %p218 = scmp.ne.s32.totalorder %s207, %s208
      %p219 = scmp.eq.s32.totalorder %s26, 0
      %p220 = por %p218, %p219
      %p221 = scmp.ne.s32.totalorder %s207, %s208
      %p222 = scmp.eq.s32.totalorder %s27, 1
      %p223 = por %p221, %p222
      %p225 = scmp.ne.s32.totalorder %s208, %s224
      %p226 = scmp.eq.s32.totalorder %s27, 0
      %p227 = por %p225, %p226
      %p228 = scmp.le.s32.totalorder 1, %s21
      %p229 = scmp.lt.s32.totalorder %s21, 3
      %p230 = pnand %p228, %p229
      %p231 = pneg %p230
      // Predicated region
      $region9: #{tpu_custom_call.1} parent=5 // pred_check
        _
      $region10: #{tpu_custom_call.1} parent=5 // pred_check_branch
        %233 = sbr.rel (%p230) target = $region12
      $region11: #{tpu_custom_call.1} parent=5 // pred_region
        %s234 = ssub.s32 %s21, 1
        // Predicated region
        $region13: #{tpu_custom_call.1} parent=11 // pred_check
          %p235 = pneg %p42
        $region14: #{tpu_custom_call.1} parent=11 // pred_check_branch
          %237 = sbr.rel (%p235) target = $region16
        $region15: #{tpu_custom_call.1} parent=11 // pred_region
          %s239 = ssub.s32 4096, 4096
          %240 = vsyncadd [#allocation4], %s239
          %s241 = sshll.u32 [#allocation3], 4
          %s242 = int_to_ptr.vmem [resolvable:$true] %s241
          %247 = dma.hbm_to_vmem [thread:$0]  %s0, 4096, %s242, [#allocation4], 128, 128, 8
        $region16: #{tpu_custom_call.1} parent=11 // pred_fallthru
          _
        // Predicated region
        $region17: #{tpu_custom_call.1} parent=11 // pred_check
          %p248 = pneg %p89
        $region18: #{tpu_custom_call.1} parent=11 // pred_check_branch
          %250 = sbr.rel (%p248) target = $region20
        $region19: #{tpu_custom_call.1} parent=11 // pred_region
          %s252 = ssub.s32 128, 128
          %253 = vsyncadd [#allocation7], %s252
          %s254 = sshll.u32 [#allocation6], 4
          %s255 = int_to_ptr.vmem [resolvable:$true] %s254
          %260 = dma.hbm_to_vmem [thread:$0]  %s2, 128, %s255, [#allocation7], 64, 64, 4
        $region20: #{tpu_custom_call.1} parent=11 // pred_fallthru
          _
        // Predicated region
        $region21: #{tpu_custom_call.1} parent=11 // pred_check
          %p261 = pneg %p110
        $region22: #{tpu_custom_call.1} parent=11 // pred_check_branch
          %263 = sbr.rel (%p261) target = $region24
        $region23: #{tpu_custom_call.1} parent=11 // pred_region
          %s265 = ssub.s32 16, 16
          %266 = vsyncadd [#allocation7], %s265
          %s268 = sshll.u32 [#allocation8], 4
          %s269 = int_to_ptr.vmem [resolvable:$true] %s268
          %271 = dma.hbm_to_vmem [thread:$0]  %s3, 16, %s269, [#allocation7]
        $region24: #{tpu_custom_call.1} parent=11 // pred_fallthru
          _
        // Predicated region
        $region25: #{tpu_custom_call.1} parent=11 // pred_check
          %p272 = pneg %p131
        $region26: #{tpu_custom_call.1} parent=11 // pred_check_branch
          %274 = sbr.rel (%p272) target = $region28
        $region27: #{tpu_custom_call.1} parent=11 // pred_region
          %s276 = ssub.s32 131072, 131072
          %277 = vsyncadd [#allocation10], %s276
          %s278 = sshll.u32 [#allocation9], 4
          %s279 = int_to_ptr.vmem [resolvable:$true] %s278
          %284 = dma.hbm_to_vmem [thread:$0]  %s4, 131072, %s279, [#allocation10], 512, 512, 32
        $region28: #{tpu_custom_call.1} parent=11 // pred_fallthru
          _
        // Predicated region
        $region29: #{tpu_custom_call.1} parent=11 // pred_check
          %p285 = pneg %p152
        $region30: #{tpu_custom_call.1} parent=11 // pred_check_branch
          %287 = sbr.rel (%p285) target = $region32
        $region31: #{tpu_custom_call.1} parent=11 // pred_region
          %s289 = ssub.s32 128, 128
          %290 = vsyncadd [#allocation10], %s289
          %s292 = sshll.u32 [#allocation11], 4
          %s293 = int_to_ptr.vmem [resolvable:$true] %s292
          %295 = dma.hbm_to_vmem [thread:$0]  %s5, 128, %s293, [#allocation10]
        $region32: #{tpu_custom_call.1} parent=11 // pred_fallthru
          _
        // Predicated region
        $region33: #{tpu_custom_call.1} parent=11 // pred_check
          %p296 = pneg %p173
        $region34: #{tpu_custom_call.1} parent=11 // pred_check_branch
          %298 = sbr.rel (%p296) target = $region36
        $region35: #{tpu_custom_call.1} parent=11 // pred_region
          %s300 = ssub.s32 8192, 8192
          %301 = vsyncadd [#allocation13], %s300
          %s302 = sshll.u32 [#allocation12], 4
          %s303 = int_to_ptr.vmem [resolvable:$true] %s302
          %308 = dma.hbm_to_vmem [thread:$0]  %s6, 8192, %s303, [#allocation13], 64, 64, 4
        $region36: #{tpu_custom_call.1} parent=11 // pred_fallthru
          _
        // Predicated region
        $region37: #{tpu_custom_call.1} parent=11 // pred_check
          %p309 = pneg %p194
        $region38: #{tpu_custom_call.1} parent=11 // pred_check_branch
          %311 = sbr.rel (%p309) target = $region40
        $region39: #{tpu_custom_call.1} parent=11 // pred_region
          %s313 = ssub.s32 16, 16
          %314 = vsyncadd [#allocation13], %s313
          %s316 = sshll.u32 [#allocation14], 4
          %s317 = int_to_ptr.vmem [resolvable:$true] %s316
          %319 = dma.hbm_to_vmem [thread:$0]  %s7, 16, %s317, [#allocation13]
        $region40: #{tpu_custom_call.1} parent=11 // pred_fallthru
          _
      $region12: #{tpu_custom_call.1} parent=5 // pred_fallthru
        _
      %p320 = scmp.lt.s32.totalorder %s21, 2
      // Predicated region
      $region41: #{tpu_custom_call.1} parent=5 // pred_check
        %p321 = pneg %p320
      $region42: #{tpu_custom_call.1} parent=5 // pred_check_branch
        %323 = sbr.rel (%p321) target = $region44
      $region43: #{tpu_custom_call.1} parent=5 // pred_region
        // Predicated region
        $region45: #{tpu_custom_call.1} parent=43 // pred_check
          %p324 = pneg %p62
        $region46: #{tpu_custom_call.1} parent=43 // pred_check_branch
          %326 = sbr.rel (%p324) target = $region48
        $region47: #{tpu_custom_call.1} parent=43 // pred_region
          %s327 = smul.u32 16, %s21
          %p328 = scmp.lt.s32.totalorder %s327, 31
          %s329 = scalar_select %p328, %s327, 31
          %s330 = smul.addr %s329, 25
          %s331 = smul.addr %s330, 4
          %s332 = scalar_lea.vmem %s1, %s331
          %s333 = smul.u32 16, %s21
        $region48: #{tpu_custom_call.1} parent=43 // pred_fallthru
          _
      $region44: #{tpu_custom_call.1} parent=5 // pred_fallthru
        _
      %p334 = scmp.le.s32.totalorder 1, %s21
      %p335 = scmp.lt.s32.totalorder %s21, 3
      %p336 = pnand %p334, %p335
      %p337 = pneg %p336
      // Predicated region
      $region49: #{tpu_custom_call.1} parent=5 // pred_check
        _
      $region50: #{tpu_custom_call.1} parent=5 // pred_check_branch
        %339 = sbr.rel (%p336) target = $region52
      $region51: #{tpu_custom_call.1} parent=5 // pred_region
        %s340 = ssub.s32 %s21, 1
        // Predicated region
        $region53: #{tpu_custom_call.1} parent=51 // pred_check
          %p341 = pneg %p42
        $region54: #{tpu_custom_call.1} parent=51 // pred_check_branch
          %343 = sbr.rel (%p341) target = $region56
        $region55: #{tpu_custom_call.1} parent=51 // pred_region
          %344 = dma.done [#allocation4], 4096
        $region56: #{tpu_custom_call.1} parent=51 // pred_fallthru
          _
        // Predicated region
        $region57: #{tpu_custom_call.1} parent=51 // pred_check
          %p345 = pneg %p89
        $region58: #{tpu_custom_call.1} parent=51 // pred_check_branch
          %347 = sbr.rel (%p345) target = $region60
        $region59: #{tpu_custom_call.1} parent=51 // pred_region
          %348 = dma.done [#allocation7], 128
        $region60: #{tpu_custom_call.1} parent=51 // pred_fallthru
          _
        // Predicated region
        $region61: #{tpu_custom_call.1} parent=51 // pred_check
          %p349 = pneg %p110
        $region62: #{tpu_custom_call.1} parent=51 // pred_check_branch
          %351 = sbr.rel (%p349) target = $region64
        $region63: #{tpu_custom_call.1} parent=51 // pred_region
          %352 = dma.done [#allocation7], 16
        $region64: #{tpu_custom_call.1} parent=51 // pred_fallthru
          _
        // Predicated region
        $region65: #{tpu_custom_call.1} parent=51 // pred_check
          %p353 = pneg %p131
        $region66: #{tpu_custom_call.1} parent=51 // pred_check_branch
          %355 = sbr.rel (%p353) target = $region68
        $region67: #{tpu_custom_call.1} parent=51 // pred_region
          %356 = dma.done [#allocation10], 131072
        $region68: #{tpu_custom_call.1} parent=51 // pred_fallthru
          _
        // Predicated region
        $region69: #{tpu_custom_call.1} parent=51 // pred_check
          %p357 = pneg %p152
        $region70: #{tpu_custom_call.1} parent=51 // pred_check_branch
          %359 = sbr.rel (%p357) target = $region72
        $region71: #{tpu_custom_call.1} parent=51 // pred_region
          %360 = dma.done [#allocation10], 128
        $region72: #{tpu_custom_call.1} parent=51 // pred_fallthru
          _
        // Predicated region
        $region73: #{tpu_custom_call.1} parent=51 // pred_check
          %p361 = pneg %p173
        $region74: #{tpu_custom_call.1} parent=51 // pred_check_branch
          %363 = sbr.rel (%p361) target = $region76
        $region75: #{tpu_custom_call.1} parent=51 // pred_region
          %364 = dma.done [#allocation13], 8192
        $region76: #{tpu_custom_call.1} parent=51 // pred_fallthru
          _
        // Predicated region
        $region77: #{tpu_custom_call.1} parent=51 // pred_check
          %p365 = pneg %p194
        $region78: #{tpu_custom_call.1} parent=51 // pred_check_branch
          %367 = sbr.rel (%p365) target = $region80
        $region79: #{tpu_custom_call.1} parent=51 // pred_region
          %368 = dma.done [#allocation13], 16
        $region80: #{tpu_custom_call.1} parent=51 // pred_fallthru
          _
        %p369 = pneg %p42
        %p370 = pneg %p39
        %s371 = smul.u32 16, %s26
        %p372 = scmp.lt.s32.totalorder %s371, 31
        %s373 = scalar_select %p372, %s371, 31
        %s374 = smul.addr %s373, 25
        %s375 = smul.addr %s374, 4
        %s376 = scalar_lea.vmem %s1, %s375
        %p377 = pneg %p68
        %p378 = pneg %p65
        %p379 = pneg %p89
        %p380 = pneg %p86
        %p381 = pneg %p110
        %p382 = pneg %p107
        %p383 = pneg %p131
        %p384 = pneg %p128
        %p385 = pneg %p152
        %p386 = pneg %p149
        %p387 = pneg %p173
        %p388 = pneg %p170
        %p389 = pneg %p194
        %p390 = pneg %p191
        %p391 = pneg %p220
        %p392 = pneg %p217
        %s393 = sand.u32 %s207, 1
        %s394 = scalar_lea.sflag [#allocation5], %s393
        %s395 = sand.u32 %s207, 1
        %s396 = smul.addr %s395, 16
        %s397 = scalar_lea.vmem [#allocation15], %s396
        %s398 = smul.u32 16, %s26
        %p399 = scmp.lt.s32.totalorder %s398, 31
        %s400 = scalar_select %p399, %s398, 31
        %s401 = smul.addr %s400, 25
        %s402 = smul.addr %s401, 4
        %s403 = scalar_lea.vmem %s1, %s402
        %s404 = smul.u32 16, %s26
        %s405 = smul.u32 2, %s26
        %v407 = vld [vmem:[#allocation3] sm:$0xff]
        %v408 = vld [vmem:[#allocation3 + $0x8] sm:$0xff]
        %v409 = vld [vmem:[#allocation3 + $0x10] sm:$0xff]
        %v410 = vld [vmem:[#allocation3 + $0x18] sm:$0xff]
        %v411 = vld [vmem:[#allocation3 + $0x20] sm:$0xff]
        %v412 = vld [vmem:[#allocation3 + $0x28] sm:$0xff]
        %v413 = vld [vmem:[#allocation3 + $0x30] sm:$0xff]
        %v414 = vld [vmem:[#allocation3 + $0x38] sm:$0xff]
        %v415 = vld [vmem:[#allocation3 + $0x40] sm:$0xff]
        %v416 = vld [vmem:[#allocation3 + $0x48] sm:$0xff]
        %v417 = vld [vmem:[#allocation3 + $0x50] sm:$0xff]
        %v418 = vld [vmem:[#allocation3 + $0x58] sm:$0xff]
        %v419 = vld [vmem:[#allocation3 + $0x60] sm:$0xff]
        %v420 = vld [vmem:[#allocation3 + $0x68] sm:$0xff]
        %v421 = vld [vmem:[#allocation3 + $0x70] sm:$0xff]
        %v422 = vld [vmem:[#allocation3 + $0x78] sm:$0xff]
        %v423 = vld [vmem:[#allocation3 + $0x80] sm:$0xff]
        %v424 = vld [vmem:[#allocation3 + $0x88] sm:$0xff]
        %v425 = vld [vmem:[#allocation3 + $0x90] sm:$0xff]
        %v426 = vld [vmem:[#allocation3 + $0x98] sm:$0xff]
        %v427 = vld [vmem:[#allocation3 + $0xa0] sm:$0xff]
        %v428 = vld [vmem:[#allocation3 + $0xa8] sm:$0xff]
        %v429 = vld [vmem:[#allocation3 + $0xb0] sm:$0xff]
        %v430 = vld [vmem:[#allocation3 + $0xb8] sm:$0xff]
        %v431 = vld [vmem:[#allocation3 + $0xc0] sm:$0xff]
        %v432 = vld [vmem:[#allocation3 + $0xc8] sm:$0xff]
        %v433 = vld [vmem:[#allocation3 + $0xd0] sm:$0xff]
        %v434 = vld [vmem:[#allocation3 + $0xd8] sm:$0xff]
        %v435 = vld [vmem:[#allocation3 + $0xe0] sm:$0xff]
        %v436 = vld [vmem:[#allocation3 + $0xe8] sm:$0xff]
        %v437 = vld [vmem:[#allocation3 + $0xf0] sm:$0xff]
        %v438 = vld [vmem:[#allocation3 + $0xf8] sm:$0xff]
        %v439 = vld [vmem:[%s403] sm:$0xf]
        %v440 = vld [vmem:[%s403 + $0x4] sm:$0xf]
        %v441 = vld [vmem:[%s403 + $0x8] sm:$0xf]
        %v442 = vld [vmem:[%s403 + $0xc] sm:$0xf]
        %v443 = vld [vmem:[%s403 + $0x10] sm:$0xf]
        %v444 = vld [vmem:[%s403 + $0x14] sm:$0xf]
        %v445 = vld [vmem:[%s403 + $0x18] sm:$0xf]
        %v446 = vld [vmem:[%s403 + $0x1c] sm:$0xf]
        %v447 = vld [vmem:[%s403 + $0x20] sm:$0xf]
        %v448 = vld [vmem:[%s403 + $0x24] sm:$0xf]
        %v449 = vld [vmem:[%s403 + $0x28] sm:$0xf]
        %v450 = vld [vmem:[%s403 + $0x2c] sm:$0xf]
        %v451 = vld [vmem:[%s403 + $0x30] sm:$0xf]
        %v452 = vld [vmem:[%s403 + $0x34] sm:$0xf]
        %v453 = vld [vmem:[%s403 + $0x38] sm:$0xf]
        %v454 = vld [vmem:[%s403 + $0x3c] sm:$0xf]
        %v455 = vld [vmem:[%s403 + $0x40] sm:$0xf]
        %v456 = vld [vmem:[%s403 + $0x44] sm:$0xf]
        %v457 = vld [vmem:[%s403 + $0x48] sm:$0xf]
        %v458 = vld [vmem:[%s403 + $0x4c] sm:$0xf]
        %v459 = vld [vmem:[%s403 + $0x50] sm:$0xf]
        %v460 = vld [vmem:[%s403 + $0x54] sm:$0xf]
        %v461 = vld [vmem:[%s403 + $0x58] sm:$0xf]
        %v462 = vld [vmem:[%s403 + $0x5c] sm:$0xf]
        %v463 = vld [vmem:[%s403 + $0x60] sm:$0x3]
        %v464 = vld [vmem:[%s403 + $0x64] sm:$0xf]
        %v465 = vld [vmem:[%s403 + $0x68] sm:$0xf]
        %v466 = vld [vmem:[%s403 + $0x6c] sm:$0xf]
        %v467 = vld [vmem:[%s403 + $0x70] sm:$0xf]
        %v468 = vld [vmem:[%s403 + $0x74] sm:$0xf]
        %v469 = vld [vmem:[%s403 + $0x78] sm:$0xf]
        %v470 = vld [vmem:[%s403 + $0x7c] sm:$0xf]
        %v471 = vld [vmem:[%s403 + $0x80] sm:$0xf]
        %v472 = vld [vmem:[%s403 + $0x84] sm:$0xf]
        %v473 = vld [vmem:[%s403 + $0x88] sm:$0xf]
        %v474 = vld [vmem:[%s403 + $0x8c] sm:$0xf]
        %v475 = vld [vmem:[%s403 + $0x90] sm:$0xf]
        %v476 = vld [vmem:[%s403 + $0x94] sm:$0xf]
        %v477 = vld [vmem:[%s403 + $0x98] sm:$0xf]
        %v478 = vld [vmem:[%s403 + $0x9c] sm:$0xf]
        %v479 = vld [vmem:[%s403 + $0xa0] sm:$0xf]
        %v480 = vld [vmem:[%s403 + $0xa4] sm:$0xf]
        %v481 = vld [vmem:[%s403 + $0xa8] sm:$0xf]
        %v482 = vld [vmem:[%s403 + $0xac] sm:$0xf]
        %v483 = vld [vmem:[%s403 + $0xb0] sm:$0xf]
        %v484 = vld [vmem:[%s403 + $0xb4] sm:$0xf]
        %v485 = vld [vmem:[%s403 + $0xb8] sm:$0xf]
        %v486 = vld [vmem:[%s403 + $0xbc] sm:$0xf]
        %v487 = vld [vmem:[%s403 + $0xc0] sm:$0xf]
        %v488 = vld [vmem:[%s403 + $0xc4] sm:$0x3]
        %v489 = vld [vmem:[%s403 + $0xc8] sm:$0xf]
        %v490 = vld [vmem:[%s403 + $0xcc] sm:$0xf]
        %v491 = vld [vmem:[%s403 + $0xd0] sm:$0xf]
        %v492 = vld [vmem:[%s403 + $0xd4] sm:$0xf]
        %v493 = vld [vmem:[%s403 + $0xd8] sm:$0xf]
        %v494 = vld [vmem:[%s403 + $0xdc] sm:$0xf]
        %v495 = vld [vmem:[%s403 + $0xe0] sm:$0xf]
        %v496 = vld [vmem:[%s403 + $0xe4] sm:$0xf]
        %v497 = vld [vmem:[%s403 + $0xe8] sm:$0xf]
        %v498 = vld [vmem:[%s403 + $0xec] sm:$0xf]
        %v499 = vld [vmem:[%s403 + $0xf0] sm:$0xf]
        %v500 = vld [vmem:[%s403 + $0xf4] sm:$0xf]
        %v501 = vld [vmem:[%s403 + $0xf8] sm:$0xf]
        %v502 = vld [vmem:[%s403 + $0xfc] sm:$0xf]
        %v503 = vld [vmem:[%s403 + $0x100] sm:$0xf]
        %v504 = vld [vmem:[%s403 + $0x104] sm:$0xf]
        %v505 = vld [vmem:[%s403 + $0x108] sm:$0xf]
        %v506 = vld [vmem:[%s403 + $0x10c] sm:$0xf]
        %v507 = vld [vmem:[%s403 + $0x110] sm:$0xf]
        %v508 = vld [vmem:[%s403 + $0x114] sm:$0xf]
        %v509 = vld [vmem:[%s403 + $0x118] sm:$0xf]
        %v510 = vld [vmem:[%s403 + $0x11c] sm:$0xf]
        %v511 = vld [vmem:[%s403 + $0x120] sm:$0xf]
        %v512 = vld [vmem:[%s403 + $0x124] sm:$0xf]
        %v513 = vld [vmem:[%s403 + $0x128] sm:$0x3]
        %v514 = vld [vmem:[%s403 + $0x12c] sm:$0xf]
        %v515 = vld [vmem:[%s403 + $0x130] sm:$0xf]
        %v516 = vld [vmem:[%s403 + $0x134] sm:$0xf]
        %v517 = vld [vmem:[%s403 + $0x138] sm:$0xf]
        %v518 = vld [vmem:[%s403 + $0x13c] sm:$0xf]
        %v519 = vld [vmem:[%s403 + $0x140] sm:$0xf]
        %v520 = vld [vmem:[%s403 + $0x144] sm:$0xf]
        %v521 = vld [vmem:[%s403 + $0x148] sm:$0xf]
        %v522 = vld [vmem:[%s403 + $0x14c] sm:$0xf]
        %v523 = vld [vmem:[%s403 + $0x150] sm:$0xf]
        %v524 = vld [vmem:[%s403 + $0x154] sm:$0xf]
        %v525 = vld [vmem:[%s403 + $0x158] sm:$0xf]
        %v526 = vld [vmem:[%s403 + $0x15c] sm:$0xf]
        %v527 = vld [vmem:[%s403 + $0x160] sm:$0xf]
        %v528 = vld [vmem:[%s403 + $0x164] sm:$0xf]
        %v529 = vld [vmem:[%s403 + $0x168] sm:$0xf]
        %v530 = vld [vmem:[%s403 + $0x16c] sm:$0xf]
        %v531 = vld [vmem:[%s403 + $0x170] sm:$0xf]
        %v532 = vld [vmem:[%s403 + $0x174] sm:$0xf]
        %v533 = vld [vmem:[%s403 + $0x178] sm:$0xf]
        %v534 = vld [vmem:[%s403 + $0x17c] sm:$0xf]
        %v535 = vld [vmem:[%s403 + $0x180] sm:$0xf]
        %v536 = vld [vmem:[%s403 + $0x184] sm:$0xf]
        %v537 = vld [vmem:[%s403 + $0x188] sm:$0xf]
        %v538 = vld [vmem:[%s403 + $0x18c] sm:$0x3]
        %v539 = vld [vmem:[%s403 + $0x190] sm:$0xf]
        %v540 = vld [vmem:[%s403 + $0x194] sm:$0xf]
        %v541 = vld [vmem:[%s403 + $0x198] sm:$0xf]
        %v542 = vld [vmem:[%s403 + $0x19c] sm:$0xf]
        %v543 = vld [vmem:[%s403 + $0x1a0] sm:$0xf]
        %v544 = vld [vmem:[%s403 + $0x1a4] sm:$0xf]
        %v545 = vld [vmem:[%s403 + $0x1a8] sm:$0xf]
        %v546 = vld [vmem:[%s403 + $0x1ac] sm:$0xf]
        %v547 = vld [vmem:[%s403 + $0x1b0] sm:$0xf]
        %v548 = vld [vmem:[%s403 + $0x1b4] sm:$0xf]
        %v549 = vld [vmem:[%s403 + $0x1b8] sm:$0xf]
        %v550 = vld [vmem:[%s403 + $0x1bc] sm:$0xf]
        %v551 = vld [vmem:[%s403 + $0x1c0] sm:$0xf]
        %v552 = vld [vmem:[%s403 + $0x1c4] sm:$0xf]
        %v553 = vld [vmem:[%s403 + $0x1c8] sm:$0xf]
        %v554 = vld [vmem:[%s403 + $0x1cc] sm:$0xf]
        %v555 = vld [vmem:[%s403 + $0x1d0] sm:$0xf]
        %v556 = vld [vmem:[%s403 + $0x1d4] sm:$0xf]
        %v557 = vld [vmem:[%s403 + $0x1d8] sm:$0xf]
        %v558 = vld [vmem:[%s403 + $0x1dc] sm:$0xf]
        %v559 = vld [vmem:[%s403 + $0x1e0] sm:$0xf]
        %v560 = vld [vmem:[%s403 + $0x1e4] sm:$0xf]
        %v561 = vld [vmem:[%s403 + $0x1e8] sm:$0xf]
        %v562 = vld [vmem:[%s403 + $0x1ec] sm:$0xf]
        %v563 = vld [vmem:[%s403 + $0x1f0] sm:$0x3]
        %v564 = vld [vmem:[%s403 + $0x1f4] sm:$0xf]
        %v565 = vld [vmem:[%s403 + $0x1f8] sm:$0xf]
        %v566 = vld [vmem:[%s403 + $0x1fc] sm:$0xf]
        %v567 = vld [vmem:[%s403 + $0x200] sm:$0xf]
        %v568 = vld [vmem:[%s403 + $0x204] sm:$0xf]
        %v569 = vld [vmem:[%s403 + $0x208] sm:$0xf]
        %v570 = vld [vmem:[%s403 + $0x20c] sm:$0xf]
        %v571 = vld [vmem:[%s403 + $0x210] sm:$0xf]
        %v572 = vld [vmem:[%s403 + $0x214] sm:$0xf]
        %v573 = vld [vmem:[%s403 + $0x218] sm:$0xf]
        %v574 = vld [vmem:[%s403 + $0x21c] sm:$0xf]
        %v575 = vld [vmem:[%s403 + $0x220] sm:$0xf]
        %v576 = vld [vmem:[%s403 + $0x224] sm:$0xf]
        %v577 = vld [vmem:[%s403 + $0x228] sm:$0xf]
        %v578 = vld [vmem:[%s403 + $0x22c] sm:$0xf]
        %v579 = vld [vmem:[%s403 + $0x230] sm:$0xf]
        %v580 = vld [vmem:[%s403 + $0x234] sm:$0xf]
        %v581 = vld [vmem:[%s403 + $0x238] sm:$0xf]
        %v582 = vld [vmem:[%s403 + $0x23c] sm:$0xf]
        %v583 = vld [vmem:[%s403 + $0x240] sm:$0xf]
        %v584 = vld [vmem:[%s403 + $0x244] sm:$0xf]
        %v585 = vld [vmem:[%s403 + $0x248] sm:$0xf]
        %v586 = vld [vmem:[%s403 + $0x24c] sm:$0xf]
        %v587 = vld [vmem:[%s403 + $0x250] sm:$0xf]
        %v588 = vld [vmem:[%s403 + $0x254] sm:$0x3]
        %v589 = vld [vmem:[%s403 + $0x258] sm:$0xf]
        %v590 = vld [vmem:[%s403 + $0x25c] sm:$0xf]
        %v591 = vld [vmem:[%s403 + $0x260] sm:$0xf]
        %v592 = vld [vmem:[%s403 + $0x264] sm:$0xf]
        %v593 = vld [vmem:[%s403 + $0x268] sm:$0xf]
        %v594 = vld [vmem:[%s403 + $0x26c] sm:$0xf]
        %v595 = vld [vmem:[%s403 + $0x270] sm:$0xf]
        %v596 = vld [vmem:[%s403 + $0x274] sm:$0xf]
        %v597 = vld [vmem:[%s403 + $0x278] sm:$0xf]
        %v598 = vld [vmem:[%s403 + $0x27c] sm:$0xf]
        %v599 = vld [vmem:[%s403 + $0x280] sm:$0xf]
        %v600 = vld [vmem:[%s403 + $0x284] sm:$0xf]
        %v601 = vld [vmem:[%s403 + $0x288] sm:$0xf]
        %v602 = vld [vmem:[%s403 + $0x28c] sm:$0xf]
        %v603 = vld [vmem:[%s403 + $0x290] sm:$0xf]
        %v604 = vld [vmem:[%s403 + $0x294] sm:$0xf]
        %v605 = vld [vmem:[%s403 + $0x298] sm:$0xf]
        %v606 = vld [vmem:[%s403 + $0x29c] sm:$0xf]
        %v607 = vld [vmem:[%s403 + $0x2a0] sm:$0xf]
        %v608 = vld [vmem:[%s403 + $0x2a4] sm:$0xf]
        %v609 = vld [vmem:[%s403 + $0x2a8] sm:$0xf]
        %v610 = vld [vmem:[%s403 + $0x2ac] sm:$0xf]
        %v611 = vld [vmem:[%s403 + $0x2b0] sm:$0xf]
        %v612 = vld [vmem:[%s403 + $0x2b4] sm:$0xf]
        %v613 = vld [vmem:[%s403 + $0x2b8] sm:$0x3]
        %v614 = vld [vmem:[%s403 + $0x2bc] sm:$0xf]
        %v615 = vld [vmem:[%s403 + $0x2c0] sm:$0xf]
        %v616 = vld [vmem:[%s403 + $0x2c4] sm:$0xf]
        %v617 = vld [vmem:[%s403 + $0x2c8] sm:$0xf]
        %v618 = vld [vmem:[%s403 + $0x2cc] sm:$0xf]
        %v619 = vld [vmem:[%s403 + $0x2d0] sm:$0xf]
        %v620 = vld [vmem:[%s403 + $0x2d4] sm:$0xf]
        %v621 = vld [vmem:[%s403 + $0x2d8] sm:$0xf]
        %v622 = vld [vmem:[%s403 + $0x2dc] sm:$0xf]
        %v623 = vld [vmem:[%s403 + $0x2e0] sm:$0xf]
        %v624 = vld [vmem:[%s403 + $0x2e4] sm:$0xf]
        %v625 = vld [vmem:[%s403 + $0x2e8] sm:$0xf]
        %v626 = vld [vmem:[%s403 + $0x2ec] sm:$0xf]
        %v627 = vld [vmem:[%s403 + $0x2f0] sm:$0xf]
        %v628 = vld [vmem:[%s403 + $0x2f4] sm:$0xf]
        %v629 = vld [vmem:[%s403 + $0x2f8] sm:$0xf]
        %v630 = vld [vmem:[%s403 + $0x2fc] sm:$0xf]
        %v631 = vld [vmem:[%s403 + $0x300] sm:$0xf]
        %v632 = vld [vmem:[%s403 + $0x304] sm:$0xf]
        %v633 = vld [vmem:[%s403 + $0x308] sm:$0xf]
        %v634 = vld [vmem:[%s403 + $0x30c] sm:$0xf]
        %v635 = vld [vmem:[%s403 + $0x310] sm:$0xf]
        %v636 = vld [vmem:[%s403 + $0x314] sm:$0xf]
        %v637 = vld [vmem:[%s403 + $0x318] sm:$0xf]
        %v638 = vld [vmem:[%s403 + $0x31c] sm:$0x3]
        %v639 = vld [vmem:[%s403 + $0x320] sm:$0xf]
        %v640 = vld [vmem:[%s403 + $0x324] sm:$0xf]
        %v641 = vld [vmem:[%s403 + $0x328] sm:$0xf]
        %v642 = vld [vmem:[%s403 + $0x32c] sm:$0xf]
        %v643 = vld [vmem:[%s403 + $0x330] sm:$0xf]
        %v644 = vld [vmem:[%s403 + $0x334] sm:$0xf]
        %v645 = vld [vmem:[%s403 + $0x338] sm:$0xf]
        %v646 = vld [vmem:[%s403 + $0x33c] sm:$0xf]
        %v647 = vld [vmem:[%s403 + $0x340] sm:$0xf]
        %v648 = vld [vmem:[%s403 + $0x344] sm:$0xf]
        %v649 = vld [vmem:[%s403 + $0x348] sm:$0xf]
        %v650 = vld [vmem:[%s403 + $0x34c] sm:$0xf]
        %v651 = vld [vmem:[%s403 + $0x350] sm:$0xf]
        %v652 = vld [vmem:[%s403 + $0x354] sm:$0xf]
        %v653 = vld [vmem:[%s403 + $0x358] sm:$0xf]
        %v654 = vld [vmem:[%s403 + $0x35c] sm:$0xf]
        %v655 = vld [vmem:[%s403 + $0x360] sm:$0xf]
        %v656 = vld [vmem:[%s403 + $0x364] sm:$0xf]
        %v657 = vld [vmem:[%s403 + $0x368] sm:$0xf]
        %v658 = vld [vmem:[%s403 + $0x36c] sm:$0xf]
        %v659 = vld [vmem:[%s403 + $0x370] sm:$0xf]
        %v660 = vld [vmem:[%s403 + $0x374] sm:$0xf]
        %v661 = vld [vmem:[%s403 + $0x378] sm:$0xf]
        %v662 = vld [vmem:[%s403 + $0x37c] sm:$0xf]
        %v663 = vld [vmem:[%s403 + $0x380] sm:$0x3]
        %v664 = vld [vmem:[%s403 + $0x384] sm:$0xf]
        %v665 = vld [vmem:[%s403 + $0x388] sm:$0xf]
        %v666 = vld [vmem:[%s403 + $0x38c] sm:$0xf]
        %v667 = vld [vmem:[%s403 + $0x390] sm:$0xf]
        %v668 = vld [vmem:[%s403 + $0x394] sm:$0xf]
        %v669 = vld [vmem:[%s403 + $0x398] sm:$0xf]
        %v670 = vld [vmem:[%s403 + $0x39c] sm:$0xf]
        %v671 = vld [vmem:[%s403 + $0x3a0] sm:$0xf]
        %v672 = vld [vmem:[%s403 + $0x3a4] sm:$0xf]
        %v673 = vld [vmem:[%s403 + $0x3a8] sm:$0xf]
        %v674 = vld [vmem:[%s403 + $0x3ac] sm:$0xf]
        %v675 = vld [vmem:[%s403 + $0x3b0] sm:$0xf]
        %v676 = vld [vmem:[%s403 + $0x3b4] sm:$0xf]
        %v677 = vld [vmem:[%s403 + $0x3b8] sm:$0xf]
        %v678 = vld [vmem:[%s403 + $0x3bc] sm:$0xf]
        %v679 = vld [vmem:[%s403 + $0x3c0] sm:$0xf]
        %v680 = vld [vmem:[%s403 + $0x3c4] sm:$0xf]
        %v681 = vld [vmem:[%s403 + $0x3c8] sm:$0xf]
        %v682 = vld [vmem:[%s403 + $0x3cc] sm:$0xf]
        %v683 = vld [vmem:[%s403 + $0x3d0] sm:$0xf]
        %v684 = vld [vmem:[%s403 + $0x3d4] sm:$0xf]
        %v685 = vld [vmem:[%s403 + $0x3d8] sm:$0xf]
        %v686 = vld [vmem:[%s403 + $0x3dc] sm:$0xf]
        %v687 = vld [vmem:[%s403 + $0x3e0] sm:$0xf]
        %v688 = vld [vmem:[%s403 + $0x3e4] sm:$0x3]
        %v689 = vld [vmem:[%s403 + $0x3e8] sm:$0xf]
        %v690 = vld [vmem:[%s403 + $0x3ec] sm:$0xf]
        %v691 = vld [vmem:[%s403 + $0x3f0] sm:$0xf]
        %v692 = vld [vmem:[%s403 + $0x3f4] sm:$0xf]
        %v693 = vld [vmem:[%s403 + $0x3f8] sm:$0xf]
        %v694 = vld [vmem:[%s403 + $0x3fc] sm:$0xf]
        %v695 = vld [vmem:[%s403 + $0x400] sm:$0xf]
        %v696 = vld [vmem:[%s403 + $0x404] sm:$0xf]
        %v697 = vld [vmem:[%s403 + $0x408] sm:$0xf]
        %v698 = vld [vmem:[%s403 + $0x40c] sm:$0xf]
        %v699 = vld [vmem:[%s403 + $0x410] sm:$0xf]
        %v700 = vld [vmem:[%s403 + $0x414] sm:$0xf]
        %v701 = vld [vmem:[%s403 + $0x418] sm:$0xf]
        %v702 = vld [vmem:[%s403 + $0x41c] sm:$0xf]
        %v703 = vld [vmem:[%s403 + $0x420] sm:$0xf]
        %v704 = vld [vmem:[%s403 + $0x424] sm:$0xf]
        %v705 = vld [vmem:[%s403 + $0x428] sm:$0xf]
        %v706 = vld [vmem:[%s403 + $0x42c] sm:$0xf]
        %v707 = vld [vmem:[%s403 + $0x430] sm:$0xf]
        %v708 = vld [vmem:[%s403 + $0x434] sm:$0xf]
        %v709 = vld [vmem:[%s403 + $0x438] sm:$0xf]
        %v710 = vld [vmem:[%s403 + $0x43c] sm:$0xf]
        %v711 = vld [vmem:[%s403 + $0x440] sm:$0xf]
        %v712 = vld [vmem:[%s403 + $0x444] sm:$0xf]
        %v713 = vld [vmem:[%s403 + $0x448] sm:$0x3]
        %v714 = vld [vmem:[%s403 + $0x44c] sm:$0xf]
        %v715 = vld [vmem:[%s403 + $0x450] sm:$0xf]
        %v716 = vld [vmem:[%s403 + $0x454] sm:$0xf]
        %v717 = vld [vmem:[%s403 + $0x458] sm:$0xf]
        %v718 = vld [vmem:[%s403 + $0x45c] sm:$0xf]
        %v719 = vld [vmem:[%s403 + $0x460] sm:$0xf]
        %v720 = vld [vmem:[%s403 + $0x464] sm:$0xf]
        %v721 = vld [vmem:[%s403 + $0x468] sm:$0xf]
        %v722 = vld [vmem:[%s403 + $0x46c] sm:$0xf]
        %v723 = vld [vmem:[%s403 + $0x470] sm:$0xf]
        %v724 = vld [vmem:[%s403 + $0x474] sm:$0xf]
        %v725 = vld [vmem:[%s403 + $0x478] sm:$0xf]
        %v726 = vld [vmem:[%s403 + $0x47c] sm:$0xf]
        %v727 = vld [vmem:[%s403 + $0x480] sm:$0xf]
        %v728 = vld [vmem:[%s403 + $0x484] sm:$0xf]
        %v729 = vld [vmem:[%s403 + $0x488] sm:$0xf]
        %v730 = vld [vmem:[%s403 + $0x48c] sm:$0xf]
        %v731 = vld [vmem:[%s403 + $0x490] sm:$0xf]
        %v732 = vld [vmem:[%s403 + $0x494] sm:$0xf]
        %v733 = vld [vmem:[%s403 + $0x498] sm:$0xf]
        %v734 = vld [vmem:[%s403 + $0x49c] sm:$0xf]
        %v735 = vld [vmem:[%s403 + $0x4a0] sm:$0xf]
        %v736 = vld [vmem:[%s403 + $0x4a4] sm:$0xf]
        %v737 = vld [vmem:[%s403 + $0x4a8] sm:$0xf]
        %v738 = vld [vmem:[%s403 + $0x4ac] sm:$0x3]
        %v739 = vld [vmem:[%s403 + $0x4b0] sm:$0xf]
        %v740 = vld [vmem:[%s403 + $0x4b4] sm:$0xf]
        %v741 = vld [vmem:[%s403 + $0x4b8] sm:$0xf]
        %v742 = vld [vmem:[%s403 + $0x4bc] sm:$0xf]
        %v743 = vld [vmem:[%s403 + $0x4c0] sm:$0xf]
        %v744 = vld [vmem:[%s403 + $0x4c4] sm:$0xf]
        %v745 = vld [vmem:[%s403 + $0x4c8] sm:$0xf]
        %v746 = vld [vmem:[%s403 + $0x4cc] sm:$0xf]
        %v747 = vld [vmem:[%s403 + $0x4d0] sm:$0xf]
        %v748 = vld [vmem:[%s403 + $0x4d4] sm:$0xf]
        %v749 = vld [vmem:[%s403 + $0x4d8] sm:$0xf]
        %v750 = vld [vmem:[%s403 + $0x4dc] sm:$0xf]
        %v751 = vld [vmem:[%s403 + $0x4e0] sm:$0xf]
        %v752 = vld [vmem:[%s403 + $0x4e4] sm:$0xf]
        %v753 = vld [vmem:[%s403 + $0x4e8] sm:$0xf]
        %v754 = vld [vmem:[%s403 + $0x4ec] sm:$0xf]
        %v755 = vld [vmem:[%s403 + $0x4f0] sm:$0xf]
        %v756 = vld [vmem:[%s403 + $0x4f4] sm:$0xf]
        %v757 = vld [vmem:[%s403 + $0x4f8] sm:$0xf]
        %v758 = vld [vmem:[%s403 + $0x4fc] sm:$0xf]
        %v759 = vld [vmem:[%s403 + $0x500] sm:$0xf]
        %v760 = vld [vmem:[%s403 + $0x504] sm:$0xf]
        %v761 = vld [vmem:[%s403 + $0x508] sm:$0xf]
        %v762 = vld [vmem:[%s403 + $0x50c] sm:$0xf]
        %v763 = vld [vmem:[%s403 + $0x510] sm:$0x3]
        %v764 = vld [vmem:[%s403 + $0x514] sm:$0xf]
        %v765 = vld [vmem:[%s403 + $0x518] sm:$0xf]
        %v766 = vld [vmem:[%s403 + $0x51c] sm:$0xf]
        %v767 = vld [vmem:[%s403 + $0x520] sm:$0xf]
        %v768 = vld [vmem:[%s403 + $0x524] sm:$0xf]
        %v769 = vld [vmem:[%s403 + $0x528] sm:$0xf]
        %v770 = vld [vmem:[%s403 + $0x52c] sm:$0xf]
        %v771 = vld [vmem:[%s403 + $0x530] sm:$0xf]
        %v772 = vld [vmem:[%s403 + $0x534] sm:$0xf]
        %v773 = vld [vmem:[%s403 + $0x538] sm:$0xf]
        %v774 = vld [vmem:[%s403 + $0x53c] sm:$0xf]
        %v775 = vld [vmem:[%s403 + $0x540] sm:$0xf]
        %v776 = vld [vmem:[%s403 + $0x544] sm:$0xf]
        %v777 = vld [vmem:[%s403 + $0x548] sm:$0xf]
        %v778 = vld [vmem:[%s403 + $0x54c] sm:$0xf]
        %v779 = vld [vmem:[%s403 + $0x550] sm:$0xf]
        %v780 = vld [vmem:[%s403 + $0x554] sm:$0xf]
        %v781 = vld [vmem:[%s403 + $0x558] sm:$0xf]
        %v782 = vld [vmem:[%s403 + $0x55c] sm:$0xf]
        %v783 = vld [vmem:[%s403 + $0x560] sm:$0xf]
        %v784 = vld [vmem:[%s403 + $0x564] sm:$0xf]
        %v785 = vld [vmem:[%s403 + $0x568] sm:$0xf]
        %v786 = vld [vmem:[%s403 + $0x56c] sm:$0xf]
        %v787 = vld [vmem:[%s403 + $0x570] sm:$0xf]
        %v788 = vld [vmem:[%s403 + $0x574] sm:$0x3]
        %v789 = vld [vmem:[%s403 + $0x578] sm:$0xf]
        %v790 = vld [vmem:[%s403 + $0x57c] sm:$0xf]
        %v791 = vld [vmem:[%s403 + $0x580] sm:$0xf]
        %v792 = vld [vmem:[%s403 + $0x584] sm:$0xf]
        %v793 = vld [vmem:[%s403 + $0x588] sm:$0xf]
        %v794 = vld [vmem:[%s403 + $0x58c] sm:$0xf]
        %v795 = vld [vmem:[%s403 + $0x590] sm:$0xf]
        %v796 = vld [vmem:[%s403 + $0x594] sm:$0xf]
        %v797 = vld [vmem:[%s403 + $0x598] sm:$0xf]
        %v798 = vld [vmem:[%s403 + $0x59c] sm:$0xf]
        %v799 = vld [vmem:[%s403 + $0x5a0] sm:$0xf]
        %v800 = vld [vmem:[%s403 + $0x5a4] sm:$0xf]
        %v801 = vld [vmem:[%s403 + $0x5a8] sm:$0xf]
        %v802 = vld [vmem:[%s403 + $0x5ac] sm:$0xf]
        %v803 = vld [vmem:[%s403 + $0x5b0] sm:$0xf]
        %v804 = vld [vmem:[%s403 + $0x5b4] sm:$0xf]
        %v805 = vld [vmem:[%s403 + $0x5b8] sm:$0xf]
        %v806 = vld [vmem:[%s403 + $0x5bc] sm:$0xf]
        %v807 = vld [vmem:[%s403 + $0x5c0] sm:$0xf]
        %v808 = vld [vmem:[%s403 + $0x5c4] sm:$0xf]
        %v809 = vld [vmem:[%s403 + $0x5c8] sm:$0xf]
        %v810 = vld [vmem:[%s403 + $0x5cc] sm:$0xf]
        %v811 = vld [vmem:[%s403 + $0x5d0] sm:$0xf]
        %v812 = vld [vmem:[%s403 + $0x5d4] sm:$0xf]
        %v813 = vld [vmem:[%s403 + $0x5d8] sm:$0x3]
        %v814 = vld [vmem:[%s403 + $0x5dc] sm:$0xf]
        %v815 = vld [vmem:[%s403 + $0x5e0] sm:$0xf]
        %v816 = vld [vmem:[%s403 + $0x5e4] sm:$0xf]
        %v817 = vld [vmem:[%s403 + $0x5e8] sm:$0xf]
        %v818 = vld [vmem:[%s403 + $0x5ec] sm:$0xf]
        %v819 = vld [vmem:[%s403 + $0x5f0] sm:$0xf]
        %v820 = vld [vmem:[%s403 + $0x5f4] sm:$0xf]
        %v821 = vld [vmem:[%s403 + $0x5f8] sm:$0xf]
        %v822 = vld [vmem:[%s403 + $0x5fc] sm:$0xf]
        %v823 = vld [vmem:[%s403 + $0x600] sm:$0xf]
        %v824 = vld [vmem:[%s403 + $0x604] sm:$0xf]
        %v825 = vld [vmem:[%s403 + $0x608] sm:$0xf]
        %v826 = vld [vmem:[%s403 + $0x60c] sm:$0xf]
        %v827 = vld [vmem:[%s403 + $0x610] sm:$0xf]
        %v828 = vld [vmem:[%s403 + $0x614] sm:$0xf]
        %v829 = vld [vmem:[%s403 + $0x618] sm:$0xf]
        %v830 = vld [vmem:[%s403 + $0x61c] sm:$0xf]
        %v831 = vld [vmem:[%s403 + $0x620] sm:$0xf]
        %v832 = vld [vmem:[%s403 + $0x624] sm:$0xf]
        %v833 = vld [vmem:[%s403 + $0x628] sm:$0xf]
        %v834 = vld [vmem:[%s403 + $0x62c] sm:$0xf]
        %v835 = vld [vmem:[%s403 + $0x630] sm:$0xf]
        %v836 = vld [vmem:[%s403 + $0x634] sm:$0xf]
        %v837 = vld [vmem:[%s403 + $0x638] sm:$0xf]
        %v838 = vld [vmem:[%s403 + $0x63c] sm:$0x3]
        %v841 = vunpack.c.l.b16 %v407
        %v842 = vunpack.c.h.b16 %v407
        %v843 = vunpack.c.l.b16 %v408
        %v844 = vunpack.c.h.b16 %v408
        %v845 = vpack.c.b16 %v843, %v841
        %v846 = vpack.c.b16 %v844, %v842
        %v873 = vunpack.c.l.b16 %v439
        %v874 = vunpack.c.l.b16 %v440
        %v875 = vunpack.c.l.b16 %v441
        %v876 = vunpack.c.l.b16 %v442
        %v877 = vunpack.c.l.b16 %v443
        %v878 = vunpack.c.l.b16 %v444
        %v879 = vunpack.c.l.b16 %v445
        %v880 = vunpack.c.l.b16 %v446
        %v881 = vunpack.c.l.b16 %v447
        %v882 = vunpack.c.l.b16 %v448
        %v883 = vunpack.c.l.b16 %v449
        %v884 = vunpack.c.l.b16 %v450
        %v885 = vunpack.c.l.b16 %v451
        %v886 = vunpack.c.l.b16 %v452
        %v887 = vunpack.c.l.b16 %v453
        %v888 = vunpack.c.l.b16 %v454
        %v889 = vunpack.c.l.b16 %v455
        %v890 = vunpack.c.l.b16 %v456
        %v891 = vunpack.c.l.b16 %v457
        %v892 = vunpack.c.l.b16 %v458
        %v893 = vunpack.c.l.b16 %v459
        %v894 = vunpack.c.l.b16 %v460
        %v895 = vunpack.c.l.b16 %v461
        %v896 = vunpack.c.l.b16 %v462
        %v897 = vunpack.c.l.b16 %v463
        %v898 = vpack.c.b16 %v874, %v873
        %v899 = vpack.c.b16 %v876, %v875
        %v900 = vpack.c.b16 %v878, %v877
        %v901 = vpack.c.b16 %v880, %v879
        %v902 = vpack.c.b16 %v882, %v881
        %v903 = vpack.c.b16 %v884, %v883
        %v904 = vpack.c.b16 %v886, %v885
        %v905 = vpack.c.b16 %v888, %v887
        %v906 = vpack.c.b16 %v890, %v889
        %v907 = vpack.c.b16 %v892, %v891
        %v908 = vpack.c.b16 %v894, %v893
        %v909 = vpack.c.b16 %v896, %v895
        %v910 = vpack.c.b16 %v897, %v897
        %vm923 = vcmask 556032
        %v925 = vsel %vm923, %v846, 0
        %vm927 = vcmask 1041408
        %v929 = vsel %vm927, %v910, 0
        %931 = vmatprep.subr.bf16.mxu0 0
        %932 = vmatpush1.bf16.msra.mxu0 %v898
        %933 = vmatprep.subr.bf16.mxu0 0
        %934 = vmatpush1.bf16.msra.mxu0 %v899
        %935 = vmatprep.subr.bf16.mxu0 0
        %936 = vmatpush1.bf16.msra.mxu0 %v900
        %937 = vmatprep.subr.bf16.mxu0 0
        %938 = vmatpush1.bf16.msra.mxu0 %v901
        %939 = vmatprep.subr.bf16.mxu0 0
        %940 = vmatpush1.bf16.msra.mxu0 %v902
        %941 = vmatprep.subr.bf16.mxu0 0
        %942 = vmatpush1.bf16.msra.mxu0 %v903
        %943 = vmatprep.subr.bf16.mxu0 0
        %944 = vmatpush1.bf16.msra.mxu0 %v904
        %945 = vmatprep.subr.bf16.mxu0 0
        %946 = vmatpush1.bf16.msra.mxu0 %v905
        %947 = vmatprep.subr.bf16.mxu0 0
        %948 = vmatpush1.bf16.msra.mxu0 %v906
        %949 = vmatprep.subr.bf16.mxu0 0
        %950 = vmatpush1.bf16.msra.mxu0 %v907
        %951 = vmatprep.subr.bf16.mxu0 0
        %952 = vmatpush1.bf16.msra.mxu0 %v908
        %953 = vmatprep.subr.bf16.mxu0 0
        %954 = vmatpush1.bf16.msra.mxu0 %v909
        %955 = vmatprep.subr.bf16.mxu0 0
        %956 = vmatpush1.bf16.msra.mxu0 %v929
        %957 = vmatprep.subr.bf16.mxu0 0
        %958 = vmatpush1.bf16.msra.mxu0 0
        %959 = vmatprep.subr.bf16.mxu0 0
        %960 = vmatpush1.bf16.msra.mxu0 0
        %961 = vmatprep.subr.bf16.mxu0 0
        %962 = vmatpush1.bf16.msra.mxu0 0
        %963 = vmatprep.mubr.bf16.mxu0 %v925
        %964 = vmatmul.mubr.bf16.gmra.mrb[0].mxu0 %v845
        %v965 = vpop.f32.mrb[0].mxu0
        %v966 = vadd.f32 0.0, %v965
        %v967 = vpop.f32.mrb[0].mxu0
        %v968 = vpop.f32.mrb[0].mxu0
        %v969 = vadd.f32 0.0, %v968
        %v970 = vpop.f32.mrb[0].mxu0
        %971 = vdwg.mxu0
        %v974 = vunpack.c.l.b16 %v409
        %v975 = vunpack.c.h.b16 %v409
        %v976 = vunpack.c.l.b16 %v410
        %v977 = vunpack.c.h.b16 %v410
        %v978 = vpack.c.b16 %v976, %v974
        %v979 = vpack.c.b16 %v977, %v975
        %v1006 = vunpack.c.l.b16 %v464
        %v1007 = vunpack.c.l.b16 %v465
        %v1008 = vunpack.c.l.b16 %v466
        %v1009 = vunpack.c.l.b16 %v467
        %v1010 = vunpack.c.l.b16 %v468
        %v1011 = vunpack.c.l.b16 %v469
        %v1012 = vunpack.c.l.b16 %v470
        %v1013 = vunpack.c.l.b16 %v471
        %v1014 = vunpack.c.l.b16 %v472
        %v1015 = vunpack.c.l.b16 %v473
        %v1016 = vunpack.c.l.b16 %v474
        %v1017 = vunpack.c.l.b16 %v475
        %v1018 = vunpack.c.l.b16 %v476
        %v1019 = vunpack.c.l.b16 %v477
        %v1020 = vunpack.c.l.b16 %v478
        %v1021 = vunpack.c.l.b16 %v479
        %v1022 = vunpack.c.l.b16 %v480
        %v1023 = vunpack.c.l.b16 %v481
        %v1024 = vunpack.c.l.b16 %v482
        %v1025 = vunpack.c.l.b16 %v483
        %v1026 = vunpack.c.l.b16 %v484
        %v1027 = vunpack.c.l.b16 %v485
        %v1028 = vunpack.c.l.b16 %v486
        %v1029 = vunpack.c.l.b16 %v487
        %v1030 = vunpack.c.l.b16 %v488
        %v1031 = vpack.c.b16 %v1007, %v1006
        %v1032 = vpack.c.b16 %v1009, %v1008
        %v1033 = vpack.c.b16 %v1011, %v1010
        %v1034 = vpack.c.b16 %v1013, %v1012
        %v1035 = vpack.c.b16 %v1015, %v1014
        %v1036 = vpack.c.b16 %v1017, %v1016
        %v1037 = vpack.c.b16 %v1019, %v1018
        %v1038 = vpack.c.b16 %v1021, %v1020
        %v1039 = vpack.c.b16 %v1023, %v1022
        %v1040 = vpack.c.b16 %v1025, %v1024
        %v1041 = vpack.c.b16 %v1027, %v1026
        %v1042 = vpack.c.b16 %v1029, %v1028
        %v1043 = vpack.c.b16 %v1030, %v1030
        %v1057 = vsel %vm923, %v979, 0
        %v1060 = vsel %vm927, %v1043, 0
        %1062 = vmatprep.subr.bf16.mxu0 0
        %1063 = vmatpush1.bf16.msra.mxu0 %v1031
        %1064 = vmatprep.subr.bf16.mxu0 0
        %1065 = vmatpush1.bf16.msra.mxu0 %v1032
        %1066 = vmatprep.subr.bf16.mxu0 0
        %1067 = vmatpush1.bf16.msra.mxu0 %v1033
        %1068 = vmatprep.subr.bf16.mxu0 0
        %1069 = vmatpush1.bf16.msra.mxu0 %v1034
        %1070 = vmatprep.subr.bf16.mxu0 0
        %1071 = vmatpush1.bf16.msra.mxu0 %v1035
        %1072 = vmatprep.subr.bf16.mxu0 0
        %1073 = vmatpush1.bf16.msra.mxu0 %v1036
        %1074 = vmatprep.subr.bf16.mxu0 0
        %1075 = vmatpush1.bf16.msra.mxu0 %v1037
        %1076 = vmatprep.subr.bf16.mxu0 0
        %1077 = vmatpush1.bf16.msra.mxu0 %v1038
        %1078 = vmatprep.subr.bf16.mxu0 0
        %1079 = vmatpush1.bf16.msra.mxu0 %v1039
        %1080 = vmatprep.subr.bf16.mxu0 0
        %1081 = vmatpush1.bf16.msra.mxu0 %v1040
        %1082 = vmatprep.subr.bf16.mxu0 0
        %1083 = vmatpush1.bf16.msra.mxu0 %v1041
        %1084 = vmatprep.subr.bf16.mxu0 0
        %1085 = vmatpush1.bf16.msra.mxu0 %v1042
        %1086 = vmatprep.subr.bf16.mxu0 0
        %1087 = vmatpush1.bf16.msra.mxu0 %v1060
        %1088 = vmatprep.subr.bf16.mxu0 0
        %1089 = vmatpush1.bf16.msra.mxu0 0
        %1090 = vmatprep.subr.bf16.mxu0 0
        %1091 = vmatpush1.bf16.msra.mxu0 0
        %1092 = vmatprep.subr.bf16.mxu0 0
        %1093 = vmatpush1.bf16.msra.mxu0 0
        %1094 = vmatprep.mubr.bf16.mxu0 %v1057
        %1095 = vmatmul.mubr.bf16.gmra.mrb[0].mxu0 %v978
        %v1096 = vpop.f32.mrb[0].mxu0
        %v1097 = vadd.f32 0.0, %v1096
        %v1098 = vpop.f32.mrb[0].mxu0
        %v1099 = vpop.f32.mrb[0].mxu0
        %v1100 = vadd.f32 0.0, %v1099
        %v1101 = vpop.f32.mrb[0].mxu0
        %1102 = vdwg.mxu0
        %v1105 = vunpack.c.l.b16 %v411
        %v1106 = vunpack.c.h.b16 %v411
        %v1107 = vunpack.c.l.b16 %v412
        %v1108 = vunpack.c.h.b16 %v412
        %v1109 = vpack.c.b16 %v1107, %v1105
        %v1110 = vpack.c.b16 %v1108, %v1106
        %v1137 = vunpack.c.l.b16 %v489
        %v1138 = vunpack.c.l.b16 %v490
        %v1139 = vunpack.c.l.b16 %v491
        %v1140 = vunpack.c.l.b16 %v492
        %v1141 = vunpack.c.l.b16 %v493
        %v1142 = vunpack.c.l.b16 %v494
        %v1143 = vunpack.c.l.b16 %v495
        %v1144 = vunpack.c.l.b16 %v496
        %v1145 = vunpack.c.l.b16 %v497
        %v1146 = vunpack.c.l.b16 %v498
        %v1147 = vunpack.c.l.b16 %v499
        %v1148 = vunpack.c.l.b16 %v500
        %v1149 = vunpack.c.l.b16 %v501
        %v1150 = vunpack.c.l.b16 %v502
        %v1151 = vunpack.c.l.b16 %v503
        %v1152 = vunpack.c.l.b16 %v504
        %v1153 = vunpack.c.l.b16 %v505
        %v1154 = vunpack.c.l.b16 %v506
        %v1155 = vunpack.c.l.b16 %v507
        %v1156 = vunpack.c.l.b16 %v508
        %v1157 = vunpack.c.l.b16 %v509
        %v1158 = vunpack.c.l.b16 %v510
        %v1159 = vunpack.c.l.b16 %v511
        %v1160 = vunpack.c.l.b16 %v512
        %v1161 = vunpack.c.l.b16 %v513
        %v1162 = vpack.c.b16 %v1138, %v1137
        %v1163 = vpack.c.b16 %v1140, %v1139
        %v1164 = vpack.c.b16 %v1142, %v1141
        %v1165 = vpack.c.b16 %v1144, %v1143
        %v1166 = vpack.c.b16 %v1146, %v1145
        %v1167 = vpack.c.b16 %v1148, %v1147
        %v1168 = vpack.c.b16 %v1150, %v1149
        %v1169 = vpack.c.b16 %v1152, %v1151
        %v1170 = vpack.c.b16 %v1154, %v1153
        %v1171 = vpack.c.b16 %v1156, %v1155
        %v1172 = vpack.c.b16 %v1158, %v1157
        %v1173 = vpack.c.b16 %v1160, %v1159
        %v1174 = vpack.c.b16 %v1161, %v1161
        %v1188 = vsel %vm923, %v1110, 0
        %v1191 = vsel %vm927, %v1174, 0
        %1193 = vmatprep.subr.bf16.mxu0 0
        %1194 = vmatpush1.bf16.msra.mxu0 %v1162
        %1195 = vmatprep.subr.bf16.mxu0 0
        %1196 = vmatpush1.bf16.msra.mxu0 %v1163
        %1197 = vmatprep.subr.bf16.mxu0 0
        %1198 = vmatpush1.bf16.msra.mxu0 %v1164
        %1199 = vmatprep.subr.bf16.mxu0 0
        %1200 = vmatpush1.bf16.msra.mxu0 %v1165
        %1201 = vmatprep.subr.bf16.mxu0 0
        %1202 = vmatpush1.bf16.msra.mxu0 %v1166
        %1203 = vmatprep.subr.bf16.mxu0 0
        %1204 = vmatpush1.bf16.msra.mxu0 %v1167
        %1205 = vmatprep.subr.bf16.mxu0 0
        %1206 = vmatpush1.bf16.msra.mxu0 %v1168
        %1207 = vmatprep.subr.bf16.mxu0 0
        %1208 = vmatpush1.bf16.msra.mxu0 %v1169
        %1209 = vmatprep.subr.bf16.mxu0 0
        %1210 = vmatpush1.bf16.msra.mxu0 %v1170
        %1211 = vmatprep.subr.bf16.mxu0 0
        %1212 = vmatpush1.bf16.msra.mxu0 %v1171
        %1213 = vmatprep.subr.bf16.mxu0 0
        %1214 = vmatpush1.bf16.msra.mxu0 %v1172
        %1215 = vmatprep.subr.bf16.mxu0 0
        %1216 = vmatpush1.bf16.msra.mxu0 %v1173
        %1217 = vmatprep.subr.bf16.mxu0 0
        %1218 = vmatpush1.bf16.msra.mxu0 %v1191
        %1219 = vmatprep.subr.bf16.mxu0 0
        %1220 = vmatpush1.bf16.msra.mxu0 0
        %1221 = vmatprep.subr.bf16.mxu0 0
        %1222 = vmatpush1.bf16.msra.mxu0 0
        %1223 = vmatprep.subr.bf16.mxu0 0
        %1224 = vmatpush1.bf16.msra.mxu0 0
        %1225 = vmatprep.mubr.bf16.mxu0 %v1188
        %1226 = vmatmul.mubr.bf16.gmra.mrb[0].mxu0 %v1109
        %v1227 = vpop.f32.mrb[0].mxu0
        %v1228 = vadd.f32 0.0, %v1227
        %v1229 = vpop.f32.mrb[0].mxu0
        %v1230 = vpop.f32.mrb[0].mxu0
        %v1231 = vadd.f32 0.0, %v1230
        %v1232 = vpop.f32.mrb[0].mxu0
        %1233 = vdwg.mxu0
        %v1236 = vunpack.c.l.b16 %v413
        %v1237 = vunpack.c.h.b16 %v413
        %v1238 = vunpack.c.l.b16 %v414
        %v1239 = vunpack.c.h.b16 %v414
        %v1240 = vpack.c.b16 %v1238, %v1236
        %v1241 = vpack.c.b16 %v1239, %v1237
        %v1268 = vunpack.c.l.b16 %v514
        %v1269 = vunpack.c.l.b16 %v515
        %v1270 = vunpack.c.l.b16 %v516
        %v1271 = vunpack.c.l.b16 %v517
        %v1272 = vunpack.c.l.b16 %v518
        %v1273 = vunpack.c.l.b16 %v519
        %v1274 = vunpack.c.l.b16 %v520
        %v1275 = vunpack.c.l.b16 %v521
        %v1276 = vunpack.c.l.b16 %v522
        %v1277 = vunpack.c.l.b16 %v523
        %v1278 = vunpack.c.l.b16 %v524
        %v1279 = vunpack.c.l.b16 %v525
        %v1280 = vunpack.c.l.b16 %v526
        %v1281 = vunpack.c.l.b16 %v527
        %v1282 = vunpack.c.l.b16 %v528
        %v1283 = vunpack.c.l.b16 %v529
        %v1284 = vunpack.c.l.b16 %v530
        %v1285 = vunpack.c.l.b16 %v531
        %v1286 = vunpack.c.l.b16 %v532
        %v1287 = vunpack.c.l.b16 %v533
        %v1288 = vunpack.c.l.b16 %v534
        %v1289 = vunpack.c.l.b16 %v535
        %v1290 = vunpack.c.l.b16 %v536
        %v1291 = vunpack.c.l.b16 %v537
        %v1292 = vunpack.c.l.b16 %v538
        %v1293 = vpack.c.b16 %v1269, %v1268
        %v1294 = vpack.c.b16 %v1271, %v1270
        %v1295 = vpack.c.b16 %v1273, %v1272
        %v1296 = vpack.c.b16 %v1275, %v1274
        %v1297 = vpack.c.b16 %v1277, %v1276
        %v1298 = vpack.c.b16 %v1279, %v1278
        %v1299 = vpack.c.b16 %v1281, %v1280
        %v1300 = vpack.c.b16 %v1283, %v1282
        %v1301 = vpack.c.b16 %v1285, %v1284
        %v1302 = vpack.c.b16 %v1287, %v1286
        %v1303 = vpack.c.b16 %v1289, %v1288
        %v1304 = vpack.c.b16 %v1291, %v1290
        %v1305 = vpack.c.b16 %v1292, %v1292
        %v1319 = vsel %vm923, %v1241, 0
        %v1322 = vsel %vm927, %v1305, 0
        %1324 = vmatprep.subr.bf16.mxu0 0
        %1325 = vmatpush1.bf16.msra.mxu0 %v1293
        %1326 = vmatprep.subr.bf16.mxu0 0
        %1327 = vmatpush1.bf16.msra.mxu0 %v1294
        %1328 = vmatprep.subr.bf16.mxu0 0
        %1329 = vmatpush1.bf16.msra.mxu0 %v1295
        %1330 = vmatprep.subr.bf16.mxu0 0
        %1331 = vmatpush1.bf16.msra.mxu0 %v1296
        %1332 = vmatprep.subr.bf16.mxu0 0
        %1333 = vmatpush1.bf16.msra.mxu0 %v1297
        %1334 = vmatprep.subr.bf16.mxu0 0
        %1335 = vmatpush1.bf16.msra.mxu0 %v1298
        %1336 = vmatprep.subr.bf16.mxu0 0
        %1337 = vmatpush1.bf16.msra.mxu0 %v1299
        %1338 = vmatprep.subr.bf16.mxu0 0
        %1339 = vmatpush1.bf16.msra.mxu0 %v1300
        %1340 = vmatprep.subr.bf16.mxu0 0
        %1341 = vmatpush1.bf16.msra.mxu0 %v1301
        %1342 = vmatprep.subr.bf16.mxu0 0
        %1343 = vmatpush1.bf16.msra.mxu0 %v1302
        %1344 = vmatprep.subr.bf16.mxu0 0
        %1345 = vmatpush1.bf16.msra.mxu0 %v1303
        %1346 = vmatprep.subr.bf16.mxu0 0
        %1347 = vmatpush1.bf16.msra.mxu0 %v1304
        %1348 = vmatprep.subr.bf16.mxu0 0
        %1349 = vmatpush1.bf16.msra.mxu0 %v1322
        %1350 = vmatprep.subr.bf16.mxu0 0
        %1351 = vmatpush1.bf16.msra.mxu0 0
        %1352 = vmatprep.subr.bf16.mxu0 0
        %1353 = vmatpush1.bf16.msra.mxu0 0
        %1354 = vmatprep.subr.bf16.mxu0 0
        %1355 = vmatpush1.bf16.msra.mxu0 0
        %1356 = vmatprep.mubr.bf16.mxu0 %v1319
        %1357 = vmatmul.mubr.bf16.gmra.mrb[0].mxu0 %v1240
        %v1358 = vpop.f32.mrb[0].mxu0
        %v1359 = vadd.f32 0.0, %v1358
        %v1360 = vpop.f32.mrb[0].mxu0
        %v1361 = vpop.f32.mrb[0].mxu0
        %v1362 = vadd.f32 0.0, %v1361
        %v1363 = vpop.f32.mrb[0].mxu0
        %1364 = vdwg.mxu0
        %v1367 = vunpack.c.l.b16 %v415
        %v1368 = vunpack.c.h.b16 %v415
        %v1369 = vunpack.c.l.b16 %v416
        %v1370 = vunpack.c.h.b16 %v416
        %v1371 = vpack.c.b16 %v1369, %v1367
        %v1372 = vpack.c.b16 %v1370, %v1368
        %v1399 = vunpack.c.l.b16 %v539
        %v1400 = vunpack.c.l.b16 %v540
        %v1401 = vunpack.c.l.b16 %v541
        %v1402 = vunpack.c.l.b16 %v542
        %v1403 = vunpack.c.l.b16 %v543
        %v1404 = vunpack.c.l.b16 %v544
        %v1405 = vunpack.c.l.b16 %v545
        %v1406 = vunpack.c.l.b16 %v546
        %v1407 = vunpack.c.l.b16 %v547
        %v1408 = vunpack.c.l.b16 %v548
        %v1409 = vunpack.c.l.b16 %v549
        %v1410 = vunpack.c.l.b16 %v550
        %v1411 = vunpack.c.l.b16 %v551
        %v1412 = vunpack.c.l.b16 %v552
        %v1413 = vunpack.c.l.b16 %v553
        %v1414 = vunpack.c.l.b16 %v554
        %v1415 = vunpack.c.l.b16 %v555
        %v1416 = vunpack.c.l.b16 %v556
        %v1417 = vunpack.c.l.b16 %v557
        %v1418 = vunpack.c.l.b16 %v558
        %v1419 = vunpack.c.l.b16 %v559
        %v1420 = vunpack.c.l.b16 %v560
        %v1421 = vunpack.c.l.b16 %v561
        %v1422 = vunpack.c.l.b16 %v562
        %v1423 = vunpack.c.l.b16 %v563
        %v1424 = vpack.c.b16 %v1400, %v1399
        %v1425 = vpack.c.b16 %v1402, %v1401
        %v1426 = vpack.c.b16 %v1404, %v1403
        %v1427 = vpack.c.b16 %v1406, %v1405
        %v1428 = vpack.c.b16 %v1408, %v1407
        %v1429 = vpack.c.b16 %v1410, %v1409
        %v1430 = vpack.c.b16 %v1412, %v1411
        %v1431 = vpack.c.b16 %v1414, %v1413
        %v1432 = vpack.c.b16 %v1416, %v1415
        %v1433 = vpack.c.b16 %v1418, %v1417
        %v1434 = vpack.c.b16 %v1420, %v1419
        %v1435 = vpack.c.b16 %v1422, %v1421
        %v1436 = vpack.c.b16 %v1423, %v1423
        %v1450 = vsel %vm923, %v1372, 0
        %v1453 = vsel %vm927, %v1436, 0
        %1455 = vmatprep.subr.bf16.mxu0 0
        %1456 = vmatpush1.bf16.msra.mxu0 %v1424
        %1457 = vmatprep.subr.bf16.mxu0 0
        %1458 = vmatpush1.bf16.msra.mxu0 %v1425
        %1459 = vmatprep.subr.bf16.mxu0 0
        %1460 = vmatpush1.bf16.msra.mxu0 %v1426
        %1461 = vmatprep.subr.bf16.mxu0 0
        %1462 = vmatpush1.bf16.msra.mxu0 %v1427
        %1463 = vmatprep.subr.bf16.mxu0 0
        %1464 = vmatpush1.bf16.msra.mxu0 %v1428
        %1465 = vmatprep.subr.bf16.mxu0 0
        %1466 = vmatpush1.bf16.msra.mxu0 %v1429
        %1467 = vmatprep.subr.bf16.mxu0 0
        %1468 = vmatpush1.bf16.msra.mxu0 %v1430
        %1469 = vmatprep.subr.bf16.mxu0 0
        %1470 = vmatpush1.bf16.msra.mxu0 %v1431
        %1471 = vmatprep.subr.bf16.mxu0 0
        %1472 = vmatpush1.bf16.msra.mxu0 %v1432
        %1473 = vmatprep.subr.bf16.mxu0 0
        %1474 = vmatpush1.bf16.msra.mxu0 %v1433
        %1475 = vmatprep.subr.bf16.mxu0 0
        %1476 = vmatpush1.bf16.msra.mxu0 %v1434
        %1477 = vmatprep.subr.bf16.mxu0 0
        %1478 = vmatpush1.bf16.msra.mxu0 %v1435
        %1479 = vmatprep.subr.bf16.mxu0 0
        %1480 = vmatpush1.bf16.msra.mxu0 %v1453
        %1481 = vmatprep.subr.bf16.mxu0 0
        %1482 = vmatpush1.bf16.msra.mxu0 0
        %1483 = vmatprep.subr.bf16.mxu0 0
        %1484 = vmatpush1.bf16.msra.mxu0 0
        %1485 = vmatprep.subr.bf16.mxu0 0
        %1486 = vmatpush1.bf16.msra.mxu0 0
        %1487 = vmatprep.mubr.bf16.mxu0 %v1450
        %1488 = vmatmul.mubr.bf16.gmra.mrb[0].mxu0 %v1371
        %v1489 = vpop.f32.mrb[0].mxu0
        %v1490 = vadd.f32 0.0, %v1489
        %v1491 = vpop.f32.mrb[0].mxu0
        %v1492 = vpop.f32.mrb[0].mxu0
        %v1493 = vadd.f32 0.0, %v1492
        %v1494 = vpop.f32.mrb[0].mxu0
        %1495 = vdwg.mxu0
        %v1498 = vunpack.c.l.b16 %v417
        %v1499 = vunpack.c.h.b16 %v417
        %v1500 = vunpack.c.l.b16 %v418
        %v1501 = vunpack.c.h.b16 %v418
        %v1502 = vpack.c.b16 %v1500, %v1498
        %v1503 = vpack.c.b16 %v1501, %v1499
        %v1530 = vunpack.c.l.b16 %v564
        %v1531 = vunpack.c.l.b16 %v565
        %v1532 = vunpack.c.l.b16 %v566
        %v1533 = vunpack.c.l.b16 %v567
        %v1534 = vunpack.c.l.b16 %v568
        %v1535 = vunpack.c.l.b16 %v569
        %v1536 = vunpack.c.l.b16 %v570
        %v1537 = vunpack.c.l.b16 %v571
        %v1538 = vunpack.c.l.b16 %v572
        %v1539 = vunpack.c.l.b16 %v573
        %v1540 = vunpack.c.l.b16 %v574
        %v1541 = vunpack.c.l.b16 %v575
        %v1542 = vunpack.c.l.b16 %v576
        %v1543 = vunpack.c.l.b16 %v577
        %v1544 = vunpack.c.l.b16 %v578
        %v1545 = vunpack.c.l.b16 %v579
        %v1546 = vunpack.c.l.b16 %v580
        %v1547 = vunpack.c.l.b16 %v581
        %v1548 = vunpack.c.l.b16 %v582
        %v1549 = vunpack.c.l.b16 %v583
        %v1550 = vunpack.c.l.b16 %v584
        %v1551 = vunpack.c.l.b16 %v585
        %v1552 = vunpack.c.l.b16 %v586
        %v1553 = vunpack.c.l.b16 %v587
        %v1554 = vunpack.c.l.b16 %v588
        %v1555 = vpack.c.b16 %v1531, %v1530
        %v1556 = vpack.c.b16 %v1533, %v1532
        %v1557 = vpack.c.b16 %v1535, %v1534
        %v1558 = vpack.c.b16 %v1537, %v1536
        %v1559 = vpack.c.b16 %v1539, %v1538
        %v1560 = vpack.c.b16 %v1541, %v1540
        %v1561 = vpack.c.b16 %v1543, %v1542
        %v1562 = vpack.c.b16 %v1545, %v1544
        %v1563 = vpack.c.b16 %v1547, %v1546
        %v1564 = vpack.c.b16 %v1549, %v1548
        %v1565 = vpack.c.b16 %v1551, %v1550
        %v1566 = vpack.c.b16 %v1553, %v1552
        %v1567 = vpack.c.b16 %v1554, %v1554
        %v1581 = vsel %vm923, %v1503, 0
        %v1584 = vsel %vm927, %v1567, 0
        %1586 = vmatprep.subr.bf16.mxu0 0
        %1587 = vmatpush1.bf16.msra.mxu0 %v1555
        %1588 = vmatprep.subr.bf16.mxu0 0
        %1589 = vmatpush1.bf16.msra.mxu0 %v1556
        %1590 = vmatprep.subr.bf16.mxu0 0
        %1591 = vmatpush1.bf16.msra.mxu0 %v1557
        %1592 = vmatprep.subr.bf16.mxu0 0
        %1593 = vmatpush1.bf16.msra.mxu0 %v1558
        %1594 = vmatprep.subr.bf16.mxu0 0
        %1595 = vmatpush1.bf16.msra.mxu0 %v1559
        %1596 = vmatprep.subr.bf16.mxu0 0
        %1597 = vmatpush1.bf16.msra.mxu0 %v1560
        %1598 = vmatprep.subr.bf16.mxu0 0
        %1599 = vmatpush1.bf16.msra.mxu0 %v1561
        %1600 = vmatprep.subr.bf16.mxu0 0
        %1601 = vmatpush1.bf16.msra.mxu0 %v1562
        %1602 = vmatprep.subr.bf16.mxu0 0
        %1603 = vmatpush1.bf16.msra.mxu0 %v1563
        %1604 = vmatprep.subr.bf16.mxu0 0
        %1605 = vmatpush1.bf16.msra.mxu0 %v1564
        %1606 = vmatprep.subr.bf16.mxu0 0
        %1607 = vmatpush1.bf16.msra.mxu0 %v1565
        %1608 = vmatprep.subr.bf16.mxu0 0
        %1609 = vmatpush1.bf16.msra.mxu0 %v1566
        %1610 = vmatprep.subr.bf16.mxu0 0
        %1611 = vmatpush1.bf16.msra.mxu0 %v1584
        %1612 = vmatprep.subr.bf16.mxu0 0
        %1613 = vmatpush1.bf16.msra.mxu0 0
        %1614 = vmatprep.subr.bf16.mxu0 0
        %1615 = vmatpush1.bf16.msra.mxu0 0
        %1616 = vmatprep.subr.bf16.mxu0 0
        %1617 = vmatpush1.bf16.msra.mxu0 0
        %1618 = vmatprep.mubr.bf16.mxu0 %v1581
        %1619 = vmatmul.mubr.bf16.gmra.mrb[0].mxu0 %v1502
        %v1620 = vpop.f32.mrb[0].mxu0
        %v1621 = vadd.f32 0.0, %v1620
        %v1622 = vpop.f32.mrb[0].mxu0
        %v1623 = vpop.f32.mrb[0].mxu0
        %v1624 = vadd.f32 0.0, %v1623
        %v1625 = vpop.f32.mrb[0].mxu0
        %1626 = vdwg.mxu0
        %v1629 = vunpack.c.l.b16 %v419
        %v1630 = vunpack.c.h.b16 %v419
        %v1631 = vunpack.c.l.b16 %v420
        %v1632 = vunpack.c.h.b16 %v420
        %v1633 = vpack.c.b16 %v1631, %v1629
        %v1634 = vpack.c.b16 %v1632, %v1630
        %v1661 = vunpack.c.l.b16 %v589
        %v1662 = vunpack.c.l.b16 %v590
        %v1663 = vunpack.c.l.b16 %v591
        %v1664 = vunpack.c.l.b16 %v592
        %v1665 = vunpack.c.l.b16 %v593
        %v1666 = vunpack.c.l.b16 %v594
        %v1667 = vunpack.c.l.b16 %v595
        %v1668 = vunpack.c.l.b16 %v596
        %v1669 = vunpack.c.l.b16 %v597
        %v1670 = vunpack.c.l.b16 %v598
        %v1671 = vunpack.c.l.b16 %v599
        %v1672 = vunpack.c.l.b16 %v600
        %v1673 = vunpack.c.l.b16 %v601
        %v1674 = vunpack.c.l.b16 %v602
        %v1675 = vunpack.c.l.b16 %v603
        %v1676 = vunpack.c.l.b16 %v604
        %v1677 = vunpack.c.l.b16 %v605
        %v1678 = vunpack.c.l.b16 %v606
        %v1679 = vunpack.c.l.b16 %v607
        %v1680 = vunpack.c.l.b16 %v608
        %v1681 = vunpack.c.l.b16 %v609
        %v1682 = vunpack.c.l.b16 %v610
        %v1683 = vunpack.c.l.b16 %v611
        %v1684 = vunpack.c.l.b16 %v612
        %v1685 = vunpack.c.l.b16 %v613
        %v1686 = vpack.c.b16 %v1662, %v1661
        %v1687 = vpack.c.b16 %v1664, %v1663
        %v1688 = vpack.c.b16 %v1666, %v1665
        %v1689 = vpack.c.b16 %v1668, %v1667
        %v1690 = vpack.c.b16 %v1670, %v1669
        %v1691 = vpack.c.b16 %v1672, %v1671
        %v1692 = vpack.c.b16 %v1674, %v1673
        %v1693 = vpack.c.b16 %v1676, %v1675
        %v1694 = vpack.c.b16 %v1678, %v1677
        %v1695 = vpack.c.b16 %v1680, %v1679
        %v1696 = vpack.c.b16 %v1682, %v1681
        %v1697 = vpack.c.b16 %v1684, %v1683
        %v1698 = vpack.c.b16 %v1685, %v1685
        %v1712 = vsel %vm923, %v1634, 0
        %v1715 = vsel %vm927, %v1698, 0
        %1717 = vmatprep.subr.bf16.mxu0 0
        %1718 = vmatpush1.bf16.msra.mxu0 %v1686
        %1719 = vmatprep.subr.bf16.mxu0 0
        %1720 = vmatpush1.bf16.msra.mxu0 %v1687
        %1721 = vmatprep.subr.bf16.mxu0 0
        %1722 = vmatpush1.bf16.msra.mxu0 %v1688
        %1723 = vmatprep.subr.bf16.mxu0 0
        %1724 = vmatpush1.bf16.msra.mxu0 %v1689
        %1725 = vmatprep.subr.bf16.mxu0 0
        %1726 = vmatpush1.bf16.msra.mxu0 %v1690
        %1727 = vmatprep.subr.bf16.mxu0 0
        %1728 = vmatpush1.bf16.msra.mxu0 %v1691
        %1729 = vmatprep.subr.bf16.mxu0 0
        %1730 = vmatpush1.bf16.msra.mxu0 %v1692
        %1731 = vmatprep.subr.bf16.mxu0 0
        %1732 = vmatpush1.bf16.msra.mxu0 %v1693
        %1733 = vmatprep.subr.bf16.mxu0 0
        %1734 = vmatpush1.bf16.msra.mxu0 %v1694
        %1735 = vmatprep.subr.bf16.mxu0 0
        %1736 = vmatpush1.bf16.msra.mxu0 %v1695
        %1737 = vmatprep.subr.bf16.mxu0 0
        %1738 = vmatpush1.bf16.msra.mxu0 %v1696
        %1739 = vmatprep.subr.bf16.mxu0 0
        %1740 = vmatpush1.bf16.msra.mxu0 %v1697
        %1741 = vmatprep.subr.bf16.mxu0 0
        %1742 = vmatpush1.bf16.msra.mxu0 %v1715
        %1743 = vmatprep.subr.bf16.mxu0 0
        %1744 = vmatpush1.bf16.msra.mxu0 0
        %1745 = vmatprep.subr.bf16.mxu0 0
        %1746 = vmatpush1.bf16.msra.mxu0 0
        %1747 = vmatprep.subr.bf16.mxu0 0
        %1748 = vmatpush1.bf16.msra.mxu0 0
        %1749 = vmatprep.mubr.bf16.mxu0 %v1712
        %1750 = vmatmul.mubr.bf16.gmra.mrb[0].mxu0 %v1633
        %v1751 = vpop.f32.mrb[0].mxu0
        %v1752 = vadd.f32 0.0, %v1751
        %v1753 = vpop.f32.mrb[0].mxu0
        %v1754 = vpop.f32.mrb[0].mxu0
        %v1755 = vadd.f32 0.0, %v1754
        %v1756 = vpop.f32.mrb[0].mxu0
        %1757 = vdwg.mxu0
        %v1760 = vunpack.c.l.b16 %v421
        %v1761 = vunpack.c.h.b16 %v421
        %v1762 = vunpack.c.l.b16 %v422
        %v1763 = vunpack.c.h.b16 %v422
        %v1764 = vpack.c.b16 %v1762, %v1760
        %v1765 = vpack.c.b16 %v1763, %v1761
        %v1792 = vunpack.c.l.b16 %v614
        %v1793 = vunpack.c.l.b16 %v615
        %v1794 = vunpack.c.l.b16 %v616
        %v1795 = vunpack.c.l.b16 %v617
        %v1796 = vunpack.c.l.b16 %v618
        %v1797 = vunpack.c.l.b16 %v619
        %v1798 = vunpack.c.l.b16 %v620
        %v1799 = vunpack.c.l.b16 %v621
        %v1800 = vunpack.c.l.b16 %v622
        %v1801 = vunpack.c.l.b16 %v623
        %v1802 = vunpack.c.l.b16 %v624
        %v1803 = vunpack.c.l.b16 %v625
        %v1804 = vunpack.c.l.b16 %v626
        %v1805 = vunpack.c.l.b16 %v627
        %v1806 = vunpack.c.l.b16 %v628
        %v1807 = vunpack.c.l.b16 %v629
        %v1808 = vunpack.c.l.b16 %v630
        %v1809 = vunpack.c.l.b16 %v631
        %v1810 = vunpack.c.l.b16 %v632
        %v1811 = vunpack.c.l.b16 %v633
        %v1812 = vunpack.c.l.b16 %v634
        %v1813 = vunpack.c.l.b16 %v635
        %v1814 = vunpack.c.l.b16 %v636
        %v1815 = vunpack.c.l.b16 %v637
        %v1816 = vunpack.c.l.b16 %v638
        %v1817 = vpack.c.b16 %v1793, %v1792
        %v1818 = vpack.c.b16 %v1795, %v1794
        %v1819 = vpack.c.b16 %v1797, %v1796
        %v1820 = vpack.c.b16 %v1799, %v1798
        %v1821 = vpack.c.b16 %v1801, %v1800
        %v1822 = vpack.c.b16 %v1803, %v1802
        %v1823 = vpack.c.b16 %v1805, %v1804
        %v1824 = vpack.c.b16 %v1807, %v1806
        %v1825 = vpack.c.b16 %v1809, %v1808
        %v1826 = vpack.c.b16 %v1811, %v1810
        %v1827 = vpack.c.b16 %v1813, %v1812
        %v1828 = vpack.c.b16 %v1815, %v1814
        %v1829 = vpack.c.b16 %v1816, %v1816
        %v1843 = vsel %vm923, %v1765, 0
        %v1846 = vsel %vm927, %v1829, 0
        %1848 = vmatprep.subr.bf16.mxu0 0
        %1849 = vmatpush1.bf16.msra.mxu0 %v1817
        %1850 = vmatprep.subr.bf16.mxu0 0
        %1851 = vmatpush1.bf16.msra.mxu0 %v1818
        %1852 = vmatprep.subr.bf16.mxu0 0
        %1853 = vmatpush1.bf16.msra.mxu0 %v1819
        %1854 = vmatprep.subr.bf16.mxu0 0
        %1855 = vmatpush1.bf16.msra.mxu0 %v1820
        %1856 = vmatprep.subr.bf16.mxu0 0
        %1857 = vmatpush1.bf16.msra.mxu0 %v1821
        %1858 = vmatprep.subr.bf16.mxu0 0
        %1859 = vmatpush1.bf16.msra.mxu0 %v1822
        %1860 = vmatprep.subr.bf16.mxu0 0
        %1861 = vmatpush1.bf16.msra.mxu0 %v1823
        %1862 = vmatprep.subr.bf16.mxu0 0
        %1863 = vmatpush1.bf16.msra.mxu0 %v1824
        %1864 = vmatprep.subr.bf16.mxu0 0
        %1865 = vmatpush1.bf16.msra.mxu0 %v1825
        %1866 = vmatprep.subr.bf16.mxu0 0
        %1867 = vmatpush1.bf16.msra.mxu0 %v1826
        %1868 = vmatprep.subr.bf16.mxu0 0
        %1869 = vmatpush1.bf16.msra.mxu0 %v1827
        %1870 = vmatprep.subr.bf16.mxu0 0
        %1871 = vmatpush1.bf16.msra.mxu0 %v1828
        %1872 = vmatprep.subr.bf16.mxu0 0
        %1873 = vmatpush1.bf16.msra.mxu0 %v1846
        %1874 = vmatprep.subr.bf16.mxu0 0
        %1875 = vmatpush1.bf16.msra.mxu0 0
        %1876 = vmatprep.subr.bf16.mxu0 0
        %1877 = vmatpush1.bf16.msra.mxu0 0
        %1878 = vmatprep.subr.bf16.mxu0 0
        %1879 = vmatpush1.bf16.msra.mxu0 0
        %1880 = vmatprep.mubr.bf16.mxu0 %v1843
        %1881 = vmatmul.mubr.bf16.gmra.mrb[0].mxu0 %v1764
        %v1882 = vpop.f32.mrb[0].mxu0
        %v1883 = vadd.f32 0.0, %v1882
        %v1884 = vpop.f32.mrb[0].mxu0
        %v1885 = vpop.f32.mrb[0].mxu0
        %v1886 = vadd.f32 0.0, %v1885
        %v1887 = vpop.f32.mrb[0].mxu0
        %1888 = vdwg.mxu0
        %v1891 = vunpack.c.l.b16 %v423
        %v1892 = vunpack.c.h.b16 %v423
        %v1893 = vunpack.c.l.b16 %v424
        %v1894 = vunpack.c.h.b16 %v424
        %v1895 = vpack.c.b16 %v1893, %v1891
        %v1896 = vpack.c.b16 %v1894, %v1892
        %v1923 = vunpack.c.l.b16 %v639
        %v1924 = vunpack.c.l.b16 %v640
        %v1925 = vunpack.c.l.b16 %v641
        %v1926 = vunpack.c.l.b16 %v642
        %v1927 = vunpack.c.l.b16 %v643
        %v1928 = vunpack.c.l.b16 %v644
        %v1929 = vunpack.c.l.b16 %v645
        %v1930 = vunpack.c.l.b16 %v646
        %v1931 = vunpack.c.l.b16 %v647
        %v1932 = vunpack.c.l.b16 %v648
        %v1933 = vunpack.c.l.b16 %v649
        %v1934 = vunpack.c.l.b16 %v650
        %v1935 = vunpack.c.l.b16 %v651
        %v1936 = vunpack.c.l.b16 %v652
        %v1937 = vunpack.c.l.b16 %v653
        %v1938 = vunpack.c.l.b16 %v654
        %v1939 = vunpack.c.l.b16 %v655
        %v1940 = vunpack.c.l.b16 %v656
        %v1941 = vunpack.c.l.b16 %v657
        %v1942 = vunpack.c.l.b16 %v658
        %v1943 = vunpack.c.l.b16 %v659
        %v1944 = vunpack.c.l.b16 %v660
        %v1945 = vunpack.c.l.b16 %v661
        %v1946 = vunpack.c.l.b16 %v662
        %v1947 = vunpack.c.l.b16 %v663
        %v1948 = vpack.c.b16 %v1924, %v1923
        %v1949 = vpack.c.b16 %v1926, %v1925
        %v1950 = vpack.c.b16 %v1928, %v1927
        %v1951 = vpack.c.b16 %v1930, %v1929
        %v1952 = vpack.c.b16 %v1932, %v1931
        %v1953 = vpack.c.b16 %v1934, %v1933
        %v1954 = vpack.c.b16 %v1936, %v1935
        %v1955 = vpack.c.b16 %v1938, %v1937
        %v1956 = vpack.c.b16 %v1940, %v1939
        %v1957 = vpack.c.b16 %v1942, %v1941
        %v1958 = vpack.c.b16 %v1944, %v1943
        %v1959 = vpack.c.b16 %v1946, %v1945
        %v1960 = vpack.c.b16 %v1947, %v1947
        %v1974 = vsel %vm923, %v1896, 0
        %v1977 = vsel %vm927, %v1960, 0
        %1979 = vmatprep.subr.bf16.mxu0 0
        %1980 = vmatpush1.bf16.msra.mxu0 %v1948
        %1981 = vmatprep.subr.bf16.mxu0 0
        %1982 = vmatpush1.bf16.msra.mxu0 %v1949
        %1983 = vmatprep.subr.bf16.mxu0 0
        %1984 = vmatpush1.bf16.msra.mxu0 %v1950
        %1985 = vmatprep.subr.bf16.mxu0 0
        %1986 = vmatpush1.bf16.msra.mxu0 %v1951
        %1987 = vmatprep.subr.bf16.mxu0 0
        %1988 = vmatpush1.bf16.msra.mxu0 %v1952
        %1989 = vmatprep.subr.bf16.mxu0 0
        %1990 = vmatpush1.bf16.msra.mxu0 %v1953
        %1991 = vmatprep.subr.bf16.mxu0 0
        %1992 = vmatpush1.bf16.msra.mxu0 %v1954
        %1993 = vmatprep.subr.bf16.mxu0 0
        %1994 = vmatpush1.bf16.msra.mxu0 %v1955
        %1995 = vmatprep.subr.bf16.mxu0 0
        %1996 = vmatpush1.bf16.msra.mxu0 %v1956
        %1997 = vmatprep.subr.bf16.mxu0 0
        %1998 = vmatpush1.bf16.msra.mxu0 %v1957
        %1999 = vmatprep.subr.bf16.mxu0 0
        %2000 = vmatpush1.bf16.msra.mxu0 %v1958
        %2001 = vmatprep.subr.bf16.mxu0 0
        %2002 = vmatpush1.bf16.msra.mxu0 %v1959
        %2003 = vmatprep.subr.bf16.mxu0 0
        %2004 = vmatpush1.bf16.msra.mxu0 %v1977
        %2005 = vmatprep.subr.bf16.mxu0 0
        %2006 = vmatpush1.bf16.msra.mxu0 0
        %2007 = vmatprep.subr.bf16.mxu0 0
        %2008 = vmatpush1.bf16.msra.mxu0 0
        %2009 = vmatprep.subr.bf16.mxu0 0
        %2010 = vmatpush1.bf16.msra.mxu0 0
        %2011 = vmatprep.mubr.bf16.mxu0 %v1974
        %2012 = vmatmul.mubr.bf16.gmra.mrb[0].mxu0 %v1895
        %v2013 = vpop.f32.mrb[0].mxu0
        %v2014 = vadd.f32 0.0, %v2013
        %v2015 = vpop.f32.mrb[0].mxu0
        %v2016 = vpop.f32.mrb[0].mxu0
        %v2017 = vadd.f32 0.0, %v2016
        %v2018 = vpop.f32.mrb[0].mxu0
        %2019 = vdwg.mxu0
        %v2022 = vunpack.c.l.b16 %v425
        %v2023 = vunpack.c.h.b16 %v425
        %v2024 = vunpack.c.l.b16 %v426
        %v2025 = vunpack.c.h.b16 %v426
        %v2026 = vpack.c.b16 %v2024, %v2022
        %v2027 = vpack.c.b16 %v2025, %v2023
        %v2054 = vunpack.c.l.b16 %v664
        %v2055 = vunpack.c.l.b16 %v665
        %v2056 = vunpack.c.l.b16 %v666
        %v2057 = vunpack.c.l.b16 %v667
        %v2058 = vunpack.c.l.b16 %v668
        %v2059 = vunpack.c.l.b16 %v669
        %v2060 = vunpack.c.l.b16 %v670
        %v2061 = vunpack.c.l.b16 %v671
        %v2062 = vunpack.c.l.b16 %v672
        %v2063 = vunpack.c.l.b16 %v673
        %v2064 = vunpack.c.l.b16 %v674
        %v2065 = vunpack.c.l.b16 %v675
        %v2066 = vunpack.c.l.b16 %v676
        %v2067 = vunpack.c.l.b16 %v677
        %v2068 = vunpack.c.l.b16 %v678
        %v2069 = vunpack.c.l.b16 %v679
        %v2070 = vunpack.c.l.b16 %v680
        %v2071 = vunpack.c.l.b16 %v681
        %v2072 = vunpack.c.l.b16 %v682
        %v2073 = vunpack.c.l.b16 %v683
        %v2074 = vunpack.c.l.b16 %v684
        %v2075 = vunpack.c.l.b16 %v685
        %v2076 = vunpack.c.l.b16 %v686
        %v2077 = vunpack.c.l.b16 %v687
        %v2078 = vunpack.c.l.b16 %v688
        %v2079 = vpack.c.b16 %v2055, %v2054
        %v2080 = vpack.c.b16 %v2057, %v2056
        %v2081 = vpack.c.b16 %v2059, %v2058
        %v2082 = vpack.c.b16 %v2061, %v2060
        %v2083 = vpack.c.b16 %v2063, %v2062
        %v2084 = vpack.c.b16 %v2065, %v2064
        %v2085 = vpack.c.b16 %v2067, %v2066
        %v2086 = vpack.c.b16 %v2069, %v2068
        %v2087 = vpack.c.b16 %v2071, %v2070
        %v2088 = vpack.c.b16 %v2073, %v2072
        %v2089 = vpack.c.b16 %v2075, %v2074
        %v2090 = vpack.c.b16 %v2077, %v2076
        %v2091 = vpack.c.b16 %v2078, %v2078
        %v2105 = vsel %vm923, %v2027, 0
        %v2108 = vsel %vm927, %v2091, 0
        %2110 = vmatprep.subr.bf16.mxu0 0
        %2111 = vmatpush1.bf16.msra.mxu0 %v2079
        %2112 = vmatprep.subr.bf16.mxu0 0
        %2113 = vmatpush1.bf16.msra.mxu0 %v2080
        %2114 = vmatprep.subr.bf16.mxu0 0
        %2115 = vmatpush1.bf16.msra.mxu0 %v2081
        %2116 = vmatprep.subr.bf16.mxu0 0
        %2117 = vmatpush1.bf16.msra.mxu0 %v2082
        %2118 = vmatprep.subr.bf16.mxu0 0
        %2119 = vmatpush1.bf16.msra.mxu0 %v2083
        %2120 = vmatprep.subr.bf16.mxu0 0
        %2121 = vmatpush1.bf16.msra.mxu0 %v2084
        %2122 = vmatprep.subr.bf16.mxu0 0
        %2123 = vmatpush1.bf16.msra.mxu0 %v2085
        %2124 = vmatprep.subr.bf16.mxu0 0
        %2125 = vmatpush1.bf16.msra.mxu0 %v2086
        %2126 = vmatprep.subr.bf16.mxu0 0
        %2127 = vmatpush1.bf16.msra.mxu0 %v2087
        %2128 = vmatprep.subr.bf16.mxu0 0
        %2129 = vmatpush1.bf16.msra.mxu0 %v2088
        %2130 = vmatprep.subr.bf16.mxu0 0
        %2131 = vmatpush1.bf16.msra.mxu0 %v2089
        %2132 = vmatprep.subr.bf16.mxu0 0
        %2133 = vmatpush1.bf16.msra.mxu0 %v2090
        %2134 = vmatprep.subr.bf16.mxu0 0
        %2135 = vmatpush1.bf16.msra.mxu0 %v2108
        %2136 = vmatprep.subr.bf16.mxu0 0
        %2137 = vmatpush1.bf16.msra.mxu0 0
        %2138 = vmatprep.subr.bf16.mxu0 0
        %2139 = vmatpush1.bf16.msra.mxu0 0
        %2140 = vmatprep.subr.bf16.mxu0 0
        %2141 = vmatpush1.bf16.msra.mxu0 0
        %2142 = vmatprep.mubr.bf16.mxu0 %v2105
        %2143 = vmatmul.mubr.bf16.gmra.mrb[0].mxu0 %v2026
        %v2144 = vpop.f32.mrb[0].mxu0
        %v2145 = vadd.f32 0.0, %v2144
        %v2146 = vpop.f32.mrb[0].mxu0
        %v2147 = vpop.f32.mrb[0].mxu0
        %v2148 = vadd.f32 0.0, %v2147
        %v2149 = vpop.f32.mrb[0].mxu0
        %2150 = vdwg.mxu0
        %v2153 = vunpack.c.l.b16 %v427
        %v2154 = vunpack.c.h.b16 %v427
        %v2155 = vunpack.c.l.b16 %v428
        %v2156 = vunpack.c.h.b16 %v428
        %v2157 = vpack.c.b16 %v2155, %v2153
        %v2158 = vpack.c.b16 %v2156, %v2154
        %v2185 = vunpack.c.l.b16 %v689
        %v2186 = vunpack.c.l.b16 %v690
        %v2187 = vunpack.c.l.b16 %v691
        %v2188 = vunpack.c.l.b16 %v692
        %v2189 = vunpack.c.l.b16 %v693
        %v2190 = vunpack.c.l.b16 %v694
        %v2191 = vunpack.c.l.b16 %v695
        %v2192 = vunpack.c.l.b16 %v696
        %v2193 = vunpack.c.l.b16 %v697
        %v2194 = vunpack.c.l.b16 %v698
        %v2195 = vunpack.c.l.b16 %v699
        %v2196 = vunpack.c.l.b16 %v700
        %v2197 = vunpack.c.l.b16 %v701
        %v2198 = vunpack.c.l.b16 %v702
        %v2199 = vunpack.c.l.b16 %v703
        %v2200 = vunpack.c.l.b16 %v704
        %v2201 = vunpack.c.l.b16 %v705
        %v2202 = vunpack.c.l.b16 %v706
        %v2203 = vunpack.c.l.b16 %v707
        %v2204 = vunpack.c.l.b16 %v708
        %v2205 = vunpack.c.l.b16 %v709
        %v2206 = vunpack.c.l.b16 %v710
        %v2207 = vunpack.c.l.b16 %v711
        %v2208 = vunpack.c.l.b16 %v712
        %v2209 = vunpack.c.l.b16 %v713
        %v2210 = vpack.c.b16 %v2186, %v2185
        %v2211 = vpack.c.b16 %v2188, %v2187
        %v2212 = vpack.c.b16 %v2190, %v2189
        %v2213 = vpack.c.b16 %v2192, %v2191
        %v2214 = vpack.c.b16 %v2194, %v2193
        %v2215 = vpack.c.b16 %v2196, %v2195
        %v2216 = vpack.c.b16 %v2198, %v2197
        %v2217 = vpack.c.b16 %v2200, %v2199
        %v2218 = vpack.c.b16 %v2202, %v2201
        %v2219 = vpack.c.b16 %v2204, %v2203
        %v2220 = vpack.c.b16 %v2206, %v2205
        %v2221 = vpack.c.b16 %v2208, %v2207
        %v2222 = vpack.c.b16 %v2209, %v2209
        %v2236 = vsel %vm923, %v2158, 0
        %v2239 = vsel %vm927, %v2222, 0
        %2241 = vmatprep.subr.bf16.mxu0 0
        %2242 = vmatpush1.bf16.msra.mxu0 %v2210
        %2243 = vmatprep.subr.bf16.mxu0 0
        %2244 = vmatpush1.bf16.msra.mxu0 %v2211
        %2245 = vmatprep.subr.bf16.mxu0 0
        %2246 = vmatpush1.bf16.msra.mxu0 %v2212
        %2247 = vmatprep.subr.bf16.mxu0 0
        %2248 = vmatpush1.bf16.msra.mxu0 %v2213
        %2249 = vmatprep.subr.bf16.mxu0 0
        %2250 = vmatpush1.bf16.msra.mxu0 %v2214
        %2251 = vmatprep.subr.bf16.mxu0 0
        %2252 = vmatpush1.bf16.msra.mxu0 %v2215
        %2253 = vmatprep.subr.bf16.mxu0 0
        %2254 = vmatpush1.bf16.msra.mxu0 %v2216
        %2255 = vmatprep.subr.bf16.mxu0 0
        %2256 = vmatpush1.bf16.msra.mxu0 %v2217
        %2257 = vmatprep.subr.bf16.mxu0 0
        %2258 = vmatpush1.bf16.msra.mxu0 %v2218
        %2259 = vmatprep.subr.bf16.mxu0 0
        %2260 = vmatpush1.bf16.msra.mxu0 %v2219
        %2261 = vmatprep.subr.bf16.mxu0 0
        %2262 = vmatpush1.bf16.msra.mxu0 %v2220
        %2263 = vmatprep.subr.bf16.mxu0 0
        %2264 = vmatpush1.bf16.msra.mxu0 %v2221
        %2265 = vmatprep.subr.bf16.mxu0 0
        %2266 = vmatpush1.bf16.msra.mxu0 %v2239
        %2267 = vmatprep.subr.bf16.mxu0 0
        %2268 = vmatpush1.bf16.msra.mxu0 0
        %2269 = vmatprep.subr.bf16.mxu0 0
        %2270 = vmatpush1.bf16.msra.mxu0 0
        %2271 = vmatprep.subr.bf16.mxu0 0
        %2272 = vmatpush1.bf16.msra.mxu0 0
        %2273 = vmatprep.mubr.bf16.mxu0 %v2236
        %2274 = vmatmul.mubr.bf16.gmra.mrb[0].mxu0 %v2157
        %v2275 = vpop.f32.mrb[0].mxu0
        %v2276 = vadd.f32 0.0, %v2275
        %v2277 = vpop.f32.mrb[0].mxu0
        %v2278 = vpop.f32.mrb[0].mxu0
        %v2279 = vadd.f32 0.0, %v2278
        %v2280 = vpop.f32.mrb[0].mxu0
        %2281 = vdwg.mxu0
        %v2284 = vunpack.c.l.b16 %v429
        %v2285 = vunpack.c.h.b16 %v429
        %v2286 = vunpack.c.l.b16 %v430
        %v2287 = vunpack.c.h.b16 %v430
        %v2288 = vpack.c.b16 %v2286, %v2284
        %v2289 = vpack.c.b16 %v2287, %v2285
        %v2316 = vunpack.c.l.b16 %v714
        %v2317 = vunpack.c.l.b16 %v715
        %v2318 = vunpack.c.l.b16 %v716
        %v2319 = vunpack.c.l.b16 %v717
        %v2320 = vunpack.c.l.b16 %v718
        %v2321 = vunpack.c.l.b16 %v719
        %v2322 = vunpack.c.l.b16 %v720
        %v2323 = vunpack.c.l.b16 %v721
        %v2324 = vunpack.c.l.b16 %v722
        %v2325 = vunpack.c.l.b16 %v723
        %v2326 = vunpack.c.l.b16 %v724
        %v2327 = vunpack.c.l.b16 %v725
        %v2328 = vunpack.c.l.b16 %v726
        %v2329 = vunpack.c.l.b16 %v727
        %v2330 = vunpack.c.l.b16 %v728
        %v2331 = vunpack.c.l.b16 %v729
        %v2332 = vunpack.c.l.b16 %v730
        %v2333 = vunpack.c.l.b16 %v731
        %v2334 = vunpack.c.l.b16 %v732
        %v2335 = vunpack.c.l.b16 %v733
        %v2336 = vunpack.c.l.b16 %v734
        %v2337 = vunpack.c.l.b16 %v735
        %v2338 = vunpack.c.l.b16 %v736
        %v2339 = vunpack.c.l.b16 %v737
        %v2340 = vunpack.c.l.b16 %v738
        %v2341 = vpack.c.b16 %v2317, %v2316
        %v2342 = vpack.c.b16 %v2319, %v2318
        %v2343 = vpack.c.b16 %v2321, %v2320
        %v2344 = vpack.c.b16 %v2323, %v2322
        %v2345 = vpack.c.b16 %v2325, %v2324
        %v2346 = vpack.c.b16 %v2327, %v2326
        %v2347 = vpack.c.b16 %v2329, %v2328
        %v2348 = vpack.c.b16 %v2331, %v2330
        %v2349 = vpack.c.b16 %v2333, %v2332
        %v2350 = vpack.c.b16 %v2335, %v2334
        %v2351 = vpack.c.b16 %v2337, %v2336
        %v2352 = vpack.c.b16 %v2339, %v2338
        %v2353 = vpack.c.b16 %v2340, %v2340
        %v2367 = vsel %vm923, %v2289, 0
        %v2370 = vsel %vm927, %v2353, 0
        %2372 = vmatprep.subr.bf16.mxu0 0
        %2373 = vmatpush1.bf16.msra.mxu0 %v2341
        %2374 = vmatprep.subr.bf16.mxu0 0
        %2375 = vmatpush1.bf16.msra.mxu0 %v2342
        %2376 = vmatprep.subr.bf16.mxu0 0
        %2377 = vmatpush1.bf16.msra.mxu0 %v2343
        %2378 = vmatprep.subr.bf16.mxu0 0
        %2379 = vmatpush1.bf16.msra.mxu0 %v2344
        %2380 = vmatprep.subr.bf16.mxu0 0
        %2381 = vmatpush1.bf16.msra.mxu0 %v2345
        %2382 = vmatprep.subr.bf16.mxu0 0
        %2383 = vmatpush1.bf16.msra.mxu0 %v2346
        %2384 = vmatprep.subr.bf16.mxu0 0
        %2385 = vmatpush1.bf16.msra.mxu0 %v2347
        %2386 = vmatprep.subr.bf16.mxu0 0
        %2387 = vmatpush1.bf16.msra.mxu0 %v2348
        %2388 = vmatprep.subr.bf16.mxu0 0
        %2389 = vmatpush1.bf16.msra.mxu0 %v2349
        %2390 = vmatprep.subr.bf16.mxu0 0
        %2391 = vmatpush1.bf16.msra.mxu0 %v2350
        %2392 = vmatprep.subr.bf16.mxu0 0
        %2393 = vmatpush1.bf16.msra.mxu0 %v2351
        %2394 = vmatprep.subr.bf16.mxu0 0
        %2395 = vmatpush1.bf16.msra.mxu0 %v2352
        %2396 = vmatprep.subr.bf16.mxu0 0
        %2397 = vmatpush1.bf16.msra.mxu0 %v2370
        %2398 = vmatprep.subr.bf16.mxu0 0
        %2399 = vmatpush1.bf16.msra.mxu0 0
        %2400 = vmatprep.subr.bf16.mxu0 0
        %2401 = vmatpush1.bf16.msra.mxu0 0
        %2402 = vmatprep.subr.bf16.mxu0 0
        %2403 = vmatpush1.bf16.msra.mxu0 0
        %2404 = vmatprep.mubr.bf16.mxu0 %v2367
        %2405 = vmatmul.mubr.bf16.gmra.mrb[0].mxu0 %v2288
        %v2406 = vpop.f32.mrb[0].mxu0
        %v2407 = vadd.f32 0.0, %v2406
        %v2408 = vpop.f32.mrb[0].mxu0
        %v2409 = vpop.f32.mrb[0].mxu0
        %v2410 = vadd.f32 0.0, %v2409
        %v2411 = vpop.f32.mrb[0].mxu0
        %2412 = vdwg.mxu0
        %v2415 = vunpack.c.l.b16 %v431
        %v2416 = vunpack.c.h.b16 %v431
        %v2417 = vunpack.c.l.b16 %v432
        %v2418 = vunpack.c.h.b16 %v432
        %v2419 = vpack.c.b16 %v2417, %v2415
        %v2420 = vpack.c.b16 %v2418, %v2416
        %v2447 = vunpack.c.l.b16 %v739
        %v2448 = vunpack.c.l.b16 %v740
        %v2449 = vunpack.c.l.b16 %v741
        %v2450 = vunpack.c.l.b16 %v742
        %v2451 = vunpack.c.l.b16 %v743
        %v2452 = vunpack.c.l.b16 %v744
        %v2453 = vunpack.c.l.b16 %v745
        %v2454 = vunpack.c.l.b16 %v746
        %v2455 = vunpack.c.l.b16 %v747
        %v2456 = vunpack.c.l.b16 %v748
        %v2457 = vunpack.c.l.b16 %v749
        %v2458 = vunpack.c.l.b16 %v750
        %v2459 = vunpack.c.l.b16 %v751
        %v2460 = vunpack.c.l.b16 %v752
        %v2461 = vunpack.c.l.b16 %v753
        %v2462 = vunpack.c.l.b16 %v754
        %v2463 = vunpack.c.l.b16 %v755
        %v2464 = vunpack.c.l.b16 %v756
        %v2465 = vunpack.c.l.b16 %v757
        %v2466 = vunpack.c.l.b16 %v758
        %v2467 = vunpack.c.l.b16 %v759
        %v2468 = vunpack.c.l.b16 %v760
        %v2469 = vunpack.c.l.b16 %v761
        %v2470 = vunpack.c.l.b16 %v762
        %v2471 = vunpack.c.l.b16 %v763
        %v2472 = vpack.c.b16 %v2448, %v2447
        %v2473 = vpack.c.b16 %v2450, %v2449
        %v2474 = vpack.c.b16 %v2452, %v2451
        %v2475 = vpack.c.b16 %v2454, %v2453
        %v2476 = vpack.c.b16 %v2456, %v2455
        %v2477 = vpack.c.b16 %v2458, %v2457
        %v2478 = vpack.c.b16 %v2460, %v2459
        %v2479 = vpack.c.b16 %v2462, %v2461
        %v2480 = vpack.c.b16 %v2464, %v2463
        %v2481 = vpack.c.b16 %v2466, %v2465
        %v2482 = vpack.c.b16 %v2468, %v2467
        %v2483 = vpack.c.b16 %v2470, %v2469
        %v2484 = vpack.c.b16 %v2471, %v2471
        %v2498 = vsel %vm923, %v2420, 0
        %v2501 = vsel %vm927, %v2484, 0
        %2503 = vmatprep.subr.bf16.mxu0 0
        %2504 = vmatpush1.bf16.msra.mxu0 %v2472
        %2505 = vmatprep.subr.bf16.mxu0 0
        %2506 = vmatpush1.bf16.msra.mxu0 %v2473
        %2507 = vmatprep.subr.bf16.mxu0 0
        %2508 = vmatpush1.bf16.msra.mxu0 %v2474
        %2509 = vmatprep.subr.bf16.mxu0 0
        %2510 = vmatpush1.bf16.msra.mxu0 %v2475
        %2511 = vmatprep.subr.bf16.mxu0 0
        %2512 = vmatpush1.bf16.msra.mxu0 %v2476
        %2513 = vmatprep.subr.bf16.mxu0 0
        %2514 = vmatpush1.bf16.msra.mxu0 %v2477
        %2515 = vmatprep.subr.bf16.mxu0 0
        %2516 = vmatpush1.bf16.msra.mxu0 %v2478
        %2517 = vmatprep.subr.bf16.mxu0 0
        %2518 = vmatpush1.bf16.msra.mxu0 %v2479
        %2519 = vmatprep.subr.bf16.mxu0 0
        %2520 = vmatpush1.bf16.msra.mxu0 %v2480
        %2521 = vmatprep.subr.bf16.mxu0 0
        %2522 = vmatpush1.bf16.msra.mxu0 %v2481
        %2523 = vmatprep.subr.bf16.mxu0 0
        %2524 = vmatpush1.bf16.msra.mxu0 %v2482
        %2525 = vmatprep.subr.bf16.mxu0 0
        %2526 = vmatpush1.bf16.msra.mxu0 %v2483
        %2527 = vmatprep.subr.bf16.mxu0 0
        %2528 = vmatpush1.bf16.msra.mxu0 %v2501
        %2529 = vmatprep.subr.bf16.mxu0 0
        %2530 = vmatpush1.bf16.msra.mxu0 0
        %2531 = vmatprep.subr.bf16.mxu0 0
        %2532 = vmatpush1.bf16.msra.mxu0 0
        %2533 = vmatprep.subr.bf16.mxu0 0
        %2534 = vmatpush1.bf16.msra.mxu0 0
        %2535 = vmatprep.mubr.bf16.mxu0 %v2498
        %2536 = vmatmul.mubr.bf16.gmra.mrb[0].mxu0 %v2419
        %v2537 = vpop.f32.mrb[0].mxu0
        %v2538 = vadd.f32 0.0, %v2537
        %v2539 = vpop.f32.mrb[0].mxu0
        %v2540 = vpop.f32.mrb[0].mxu0
        %v2541 = vadd.f32 0.0, %v2540
        %v2542 = vpop.f32.mrb[0].mxu0
        %2543 = vdwg.mxu0
        %v2546 = vunpack.c.l.b16 %v433
        %v2547 = vunpack.c.h.b16 %v433
        %v2548 = vunpack.c.l.b16 %v434
        %v2549 = vunpack.c.h.b16 %v434
        %v2550 = vpack.c.b16 %v2548, %v2546
        %v2551 = vpack.c.b16 %v2549, %v2547
        %v2578 = vunpack.c.l.b16 %v764
        %v2579 = vunpack.c.l.b16 %v765
        %v2580 = vunpack.c.l.b16 %v766
        %v2581 = vunpack.c.l.b16 %v767
        %v2582 = vunpack.c.l.b16 %v768
        %v2583 = vunpack.c.l.b16 %v769
        %v2584 = vunpack.c.l.b16 %v770
        %v2585 = vunpack.c.l.b16 %v771
        %v2586 = vunpack.c.l.b16 %v772
        %v2587 = vunpack.c.l.b16 %v773
        %v2588 = vunpack.c.l.b16 %v774
        %v2589 = vunpack.c.l.b16 %v775
        %v2590 = vunpack.c.l.b16 %v776
        %v2591 = vunpack.c.l.b16 %v777
        %v2592 = vunpack.c.l.b16 %v778
        %v2593 = vunpack.c.l.b16 %v779
        %v2594 = vunpack.c.l.b16 %v780
        %v2595 = vunpack.c.l.b16 %v781
        %v2596 = vunpack.c.l.b16 %v782
        %v2597 = vunpack.c.l.b16 %v783
        %v2598 = vunpack.c.l.b16 %v784
        %v2599 = vunpack.c.l.b16 %v785
        %v2600 = vunpack.c.l.b16 %v786
        %v2601 = vunpack.c.l.b16 %v787
        %v2602 = vunpack.c.l.b16 %v788
        %v2603 = vpack.c.b16 %v2579, %v2578
        %v2604 = vpack.c.b16 %v2581, %v2580
        %v2605 = vpack.c.b16 %v2583, %v2582
        %v2606 = vpack.c.b16 %v2585, %v2584
        %v2607 = vpack.c.b16 %v2587, %v2586
        %v2608 = vpack.c.b16 %v2589, %v2588
        %v2609 = vpack.c.b16 %v2591, %v2590
        %v2610 = vpack.c.b16 %v2593, %v2592
        %v2611 = vpack.c.b16 %v2595, %v2594
        %v2612 = vpack.c.b16 %v2597, %v2596
        %v2613 = vpack.c.b16 %v2599, %v2598
        %v2614 = vpack.c.b16 %v2601, %v2600
        %v2615 = vpack.c.b16 %v2602, %v2602
        %v2629 = vsel %vm923, %v2551, 0
        %v2632 = vsel %vm927, %v2615, 0
        %2634 = vmatprep.subr.bf16.mxu0 0
        %2635 = vmatpush1.bf16.msra.mxu0 %v2603
        %2636 = vmatprep.subr.bf16.mxu0 0
        %2637 = vmatpush1.bf16.msra.mxu0 %v2604
        %2638 = vmatprep.subr.bf16.mxu0 0
        %2639 = vmatpush1.bf16.msra.mxu0 %v2605
        %2640 = vmatprep.subr.bf16.mxu0 0
        %2641 = vmatpush1.bf16.msra.mxu0 %v2606
        %2642 = vmatprep.subr.bf16.mxu0 0
        %2643 = vmatpush1.bf16.msra.mxu0 %v2607
        %2644 = vmatprep.subr.bf16.mxu0 0
        %2645 = vmatpush1.bf16.msra.mxu0 %v2608
        %2646 = vmatprep.subr.bf16.mxu0 0
        %2647 = vmatpush1.bf16.msra.mxu0 %v2609
        %2648 = vmatprep.subr.bf16.mxu0 0
        %2649 = vmatpush1.bf16.msra.mxu0 %v2610
        %2650 = vmatprep.subr.bf16.mxu0 0
        %2651 = vmatpush1.bf16.msra.mxu0 %v2611
        %2652 = vmatprep.subr.bf16.mxu0 0
        %2653 = vmatpush1.bf16.msra.mxu0 %v2612
        %2654 = vmatprep.subr.bf16.mxu0 0
        %2655 = vmatpush1.bf16.msra.mxu0 %v2613
        %2656 = vmatprep.subr.bf16.mxu0 0
        %2657 = vmatpush1.bf16.msra.mxu0 %v2614
        %2658 = vmatprep.subr.bf16.mxu0 0
        %2659 = vmatpush1.bf16.msra.mxu0 %v2632
        %2660 = vmatprep.subr.bf16.mxu0 0
        %2661 = vmatpush1.bf16.msra.mxu0 0
        %2662 = vmatprep.subr.bf16.mxu0 0
        %2663 = vmatpush1.bf16.msra.mxu0 0
        %2664 = vmatprep.subr.bf16.mxu0 0
        %2665 = vmatpush1.bf16.msra.mxu0 0
        %2666 = vmatprep.mubr.bf16.mxu0 %v2629
        %2667 = vmatmul.mubr.bf16.gmra.mrb[0].mxu0 %v2550
        %v2668 = vpop.f32.mrb[0].mxu0
        %v2669 = vadd.f32 0.0, %v2668
        %v2670 = vpop.f32.mrb[0].mxu0
        %v2671 = vpop.f32.mrb[0].mxu0
        %v2672 = vadd.f32 0.0, %v2671
        %v2673 = vpop.f32.mrb[0].mxu0
        %2674 = vdwg.mxu0
        %v2677 = vunpack.c.l.b16 %v435
        %v2678 = vunpack.c.h.b16 %v435
        %v2679 = vunpack.c.l.b16 %v436
        %v2680 = vunpack.c.h.b16 %v436
        %v2681 = vpack.c.b16 %v2679, %v2677
        %v2682 = vpack.c.b16 %v2680, %v2678
        %v2709 = vunpack.c.l.b16 %v789
        %v2710 = vunpack.c.l.b16 %v790
        %v2711 = vunpack.c.l.b16 %v791
        %v2712 = vunpack.c.l.b16 %v792
        %v2713 = vunpack.c.l.b16 %v793
        %v2714 = vunpack.c.l.b16 %v794
        %v2715 = vunpack.c.l.b16 %v795
        %v2716 = vunpack.c.l.b16 %v796
        %v2717 = vunpack.c.l.b16 %v797
        %v2718 = vunpack.c.l.b16 %v798
        %v2719 = vunpack.c.l.b16 %v799
        %v2720 = vunpack.c.l.b16 %v800
        %v2721 = vunpack.c.l.b16 %v801
        %v2722 = vunpack.c.l.b16 %v802
        %v2723 = vunpack.c.l.b16 %v803
        %v2724 = vunpack.c.l.b16 %v804
        %v2725 = vunpack.c.l.b16 %v805
        %v2726 = vunpack.c.l.b16 %v806
        %v2727 = vunpack.c.l.b16 %v807
        %v2728 = vunpack.c.l.b16 %v808
        %v2729 = vunpack.c.l.b16 %v809
        %v2730 = vunpack.c.l.b16 %v810
        %v2731 = vunpack.c.l.b16 %v811
        %v2732 = vunpack.c.l.b16 %v812
        %v2733 = vunpack.c.l.b16 %v813
        %v2734 = vpack.c.b16 %v2710, %v2709
        %v2735 = vpack.c.b16 %v2712, %v2711
        %v2736 = vpack.c.b16 %v2714, %v2713
        %v2737 = vpack.c.b16 %v2716, %v2715
        %v2738 = vpack.c.b16 %v2718, %v2717
        %v2739 = vpack.c.b16 %v2720, %v2719
        %v2740 = vpack.c.b16 %v2722, %v2721
        %v2741 = vpack.c.b16 %v2724, %v2723
        %v2742 = vpack.c.b16 %v2726, %v2725
        %v2743 = vpack.c.b16 %v2728, %v2727
        %v2744 = vpack.c.b16 %v2730, %v2729
        %v2745 = vpack.c.b16 %v2732, %v2731
        %v2746 = vpack.c.b16 %v2733, %v2733
        %v2760 = vsel %vm923, %v2682, 0
        %v2763 = vsel %vm927, %v2746, 0
        %2765 = vmatprep.subr.bf16.mxu0 0
        %2766 = vmatpush1.bf16.msra.mxu0 %v2734
        %2767 = vmatprep.subr.bf16.mxu0 0
        %2768 = vmatpush1.bf16.msra.mxu0 %v2735
        %2769 = vmatprep.subr.bf16.mxu0 0
        %2770 = vmatpush1.bf16.msra.mxu0 %v2736
        %2771 = vmatprep.subr.bf16.mxu0 0
        %2772 = vmatpush1.bf16.msra.mxu0 %v2737
        %2773 = vmatprep.subr.bf16.mxu0 0
        %2774 = vmatpush1.bf16.msra.mxu0 %v2738
        %2775 = vmatprep.subr.bf16.mxu0 0
        %2776 = vmatpush1.bf16.msra.mxu0 %v2739
        %2777 = vmatprep.subr.bf16.mxu0 0
        %2778 = vmatpush1.bf16.msra.mxu0 %v2740
        %2779 = vmatprep.subr.bf16.mxu0 0
        %2780 = vmatpush1.bf16.msra.mxu0 %v2741
        %2781 = vmatprep.subr.bf16.mxu0 0
        %2782 = vmatpush1.bf16.msra.mxu0 %v2742
        %2783 = vmatprep.subr.bf16.mxu0 0
        %2784 = vmatpush1.bf16.msra.mxu0 %v2743
        %2785 = vmatprep.subr.bf16.mxu0 0
        %2786 = vmatpush1.bf16.msra.mxu0 %v2744
        %2787 = vmatprep.subr.bf16.mxu0 0
        %2788 = vmatpush1.bf16.msra.mxu0 %v2745
        %2789 = vmatprep.subr.bf16.mxu0 0
        %2790 = vmatpush1.bf16.msra.mxu0 %v2763
        %2791 = vmatprep.subr.bf16.mxu0 0
        %2792 = vmatpush1.bf16.msra.mxu0 0
        %2793 = vmatprep.subr.bf16.mxu0 0
        %2794 = vmatpush1.bf16.msra.mxu0 0
        %2795 = vmatprep.subr.bf16.mxu0 0
        %2796 = vmatpush1.bf16.msra.mxu0 0
        %2797 = vmatprep.mubr.bf16.mxu0 %v2760
        %2798 = vmatmul.mubr.bf16.gmra.mrb[0].mxu0 %v2681
        %v2799 = vpop.f32.mrb[0].mxu0
        %v2800 = vadd.f32 0.0, %v2799
        %v2801 = vpop.f32.mrb[0].mxu0
        %v2802 = vpop.f32.mrb[0].mxu0
        %v2803 = vadd.f32 0.0, %v2802
        %v2804 = vpop.f32.mrb[0].mxu0
        %2805 = vdwg.mxu0
        %v2808 = vunpack.c.l.b16 %v437
        %v2809 = vunpack.c.h.b16 %v437
        %v2810 = vunpack.c.l.b16 %v438
        %v2811 = vunpack.c.h.b16 %v438
        %v2812 = vpack.c.b16 %v2810, %v2808
        %v2813 = vpack.c.b16 %v2811, %v2809
        %v2840 = vunpack.c.l.b16 %v814
        %v2841 = vunpack.c.l.b16 %v815
        %v2842 = vunpack.c.l.b16 %v816
        %v2843 = vunpack.c.l.b16 %v817
        %v2844 = vunpack.c.l.b16 %v818
        %v2845 = vunpack.c.l.b16 %v819
        %v2846 = vunpack.c.l.b16 %v820
        %v2847 = vunpack.c.l.b16 %v821
        %v2848 = vunpack.c.l.b16 %v822
        %v2849 = vunpack.c.l.b16 %v823
        %v2850 = vunpack.c.l.b16 %v824
        %v2851 = vunpack.c.l.b16 %v825
        %v2852 = vunpack.c.l.b16 %v826
        %v2853 = vunpack.c.l.b16 %v827
        %v2854 = vunpack.c.l.b16 %v828
        %v2855 = vunpack.c.l.b16 %v829
        %v2856 = vunpack.c.l.b16 %v830
        %v2857 = vunpack.c.l.b16 %v831
        %v2858 = vunpack.c.l.b16 %v832
        %v2859 = vunpack.c.l.b16 %v833
        %v2860 = vunpack.c.l.b16 %v834
        %v2861 = vunpack.c.l.b16 %v835
        %v2862 = vunpack.c.l.b16 %v836
        %v2863 = vunpack.c.l.b16 %v837
        %v2864 = vunpack.c.l.b16 %v838
        %v2865 = vpack.c.b16 %v2841, %v2840
        %v2866 = vpack.c.b16 %v2843, %v2842
        %v2867 = vpack.c.b16 %v2845, %v2844
        %v2868 = vpack.c.b16 %v2847, %v2846
        %v2869 = vpack.c.b16 %v2849, %v2848
        %v2870 = vpack.c.b16 %v2851, %v2850
        %v2871 = vpack.c.b16 %v2853, %v2852
        %v2872 = vpack.c.b16 %v2855, %v2854
        %v2873 = vpack.c.b16 %v2857, %v2856
        %v2874 = vpack.c.b16 %v2859, %v2858
        %v2875 = vpack.c.b16 %v2861, %v2860
        %v2876 = vpack.c.b16 %v2863, %v2862
        %v2877 = vpack.c.b16 %v2864, %v2864
        %v2891 = vsel %vm923, %v2813, 0
        %v2894 = vsel %vm927, %v2877, 0
        %2896 = vmatprep.subr.bf16.mxu0 0
        %2897 = vmatpush1.bf16.msra.mxu0 %v2865
        %2898 = vmatprep.subr.bf16.mxu0 0
        %2899 = vmatpush1.bf16.msra.mxu0 %v2866
        %2900 = vmatprep.subr.bf16.mxu0 0
        %2901 = vmatpush1.bf16.msra.mxu0 %v2867
        %2902 = vmatprep.subr.bf16.mxu0 0
        %2903 = vmatpush1.bf16.msra.mxu0 %v2868
        %2904 = vmatprep.subr.bf16.mxu0 0
        %2905 = vmatpush1.bf16.msra.mxu0 %v2869
        %2906 = vmatprep.subr.bf16.mxu0 0
        %2907 = vmatpush1.bf16.msra.mxu0 %v2870
        %2908 = vmatprep.subr.bf16.mxu0 0
        %2909 = vmatpush1.bf16.msra.mxu0 %v2871
        %2910 = vmatprep.subr.bf16.mxu0 0
        %2911 = vmatpush1.bf16.msra.mxu0 %v2872
        %2912 = vmatprep.subr.bf16.mxu0 0
        %2913 = vmatpush1.bf16.msra.mxu0 %v2873
        %2914 = vmatprep.subr.bf16.mxu0 0
        %2915 = vmatpush1.bf16.msra.mxu0 %v2874
        %2916 = vmatprep.subr.bf16.mxu0 0
        %2917 = vmatpush1.bf16.msra.mxu0 %v2875
        %2918 = vmatprep.subr.bf16.mxu0 0
        %2919 = vmatpush1.bf16.msra.mxu0 %v2876
        %2920 = vmatprep.subr.bf16.mxu0 0
        %2921 = vmatpush1.bf16.msra.mxu0 %v2894
        %2922 = vmatprep.subr.bf16.mxu0 0
        %2923 = vmatpush1.bf16.msra.mxu0 0
        %2924 = vmatprep.subr.bf16.mxu0 0
        %2925 = vmatpush1.bf16.msra.mxu0 0
        %2926 = vmatprep.subr.bf16.mxu0 0
        %2927 = vmatpush1.bf16.msra.mxu0 0
        %2928 = vmatprep.mubr.bf16.mxu0 %v2891
        %2929 = vmatmul.mubr.bf16.gmra.mrb[0].mxu0 %v2812
        %v2930 = vpop.f32.mrb[0].mxu0
        %v2931 = vadd.f32 0.0, %v2930
        %v2932 = vpop.f32.mrb[0].mxu0
        %v2933 = vpop.f32.mrb[0].mxu0
        %v2934 = vadd.f32 0.0, %v2933
        %v2935 = vpop.f32.mrb[0].mxu0
        %2936 = vdwg.mxu0
        %v2937 = vpack.c.bf16 %v969, %v966
        %v2938 = vpack.c.bf16 %v1100, %v1097
        %v2939 = vpack.c.bf16 %v1231, %v1228
        %v2940 = vpack.c.bf16 %v1362, %v1359
        %v2941 = vpack.c.bf16 %v1493, %v1490
        %v2942 = vpack.c.bf16 %v1624, %v1621
        %v2943 = vpack.c.bf16 %v1755, %v1752
        %v2944 = vpack.c.bf16 %v1886, %v1883
        %v2945 = vpack.c.bf16 %v2017, %v2014
        %v2946 = vpack.c.bf16 %v2148, %v2145
        %v2947 = vpack.c.bf16 %v2279, %v2276
        %v2948 = vpack.c.bf16 %v2410, %v2407
        %v2949 = vpack.c.bf16 %v2541, %v2538
        %v2950 = vpack.c.bf16 %v2672, %v2669
        %v2951 = vpack.c.bf16 %v2803, %v2800
        %v2952 = vpack.c.bf16 %v2934, %v2931
        %v2953 = vld [vmem:[#allocation6] sm:$0xf]
        %v2954 = vld [vmem:[#allocation6 + $0x4] sm:$0xf]
        %v2955 = vld [vmem:[#allocation8] sm:$0x1]
        %v2957 = vlaneseq
        %v2958 = vshrl.u32 %v2957, 7
        %v2959 = vsub.s32 0, %v2958
        %v2960 = vrot.slane %v2955, %v2959
        %v2964 = vunpack.c.l.b16 %v2953
        %v2965 = vunpack.c.l.b16 %v2954
        %v2966 = vpack.c.b16 %v2965, %v2964
        %vm2968 = vcmask 130048
        %v2970 = vsel %vm2968, %v2937, 0
        %v2973 = vsel %vm2968, %v2938, 0
        %v2976 = vsel %vm2968, %v2939, 0
        %v2979 = vsel %vm2968, %v2940, 0
        %v2982 = vsel %vm2968, %v2941, 0
        %v2985 = vsel %vm2968, %v2942, 0
        %v2988 = vsel %vm2968, %v2943, 0
        %v2991 = vsel %vm2968, %v2944, 0
        %v2994 = vsel %vm2968, %v2945, 0
        %v2997 = vsel %vm2968, %v2946, 0
        %v3000 = vsel %vm2968, %v2947, 0
        %v3003 = vsel %vm2968, %v2948, 0
        %v3006 = vsel %vm2968, %v2949, 0
        %v3009 = vsel %vm2968, %v2950, 0
        %v3012 = vsel %vm2968, %v2951, 0
        %v3015 = vsel %vm2968, %v2952, 0
        %3017 = vmatprep.subr.bf16.mxu0 0
        %3018 = vmatpush1.bf16.msra.mxu0 %v2966
        %3019 = vmatprep.subr.bf16.mxu0 0
        %3020 = vmatpush1.bf16.msra.mxu0 0
        %3021 = vmatprep.subr.bf16.mxu0 0
        %3022 = vmatpush1.bf16.msra.mxu0 0
        %3023 = vmatprep.subr.bf16.mxu0 0
        %3024 = vmatpush1.bf16.msra.mxu0 0
        %3025 = vmatprep.subr.bf16.mxu0 0
        %3026 = vmatpush1.bf16.msra.mxu0 0
        %3027 = vmatprep.subr.bf16.mxu0 0
        %3028 = vmatpush1.bf16.msra.mxu0 0
        %3029 = vmatprep.subr.bf16.mxu0 0
        %3030 = vmatpush1.bf16.msra.mxu0 0
        %3031 = vmatprep.subr.bf16.mxu0 0
        %3032 = vmatpush1.bf16.msra.mxu0 0
        %3033 = vmatprep.subr.bf16.mxu0 0
        %3034 = vmatpush1.bf16.msra.mxu0 0
        %3035 = vmatprep.subr.bf16.mxu0 0
        %3036 = vmatpush1.bf16.msra.mxu0 0
        %3037 = vmatprep.subr.bf16.mxu0 0
        %3038 = vmatpush1.bf16.msra.mxu0 0
        %3039 = vmatprep.subr.bf16.mxu0 0
        %3040 = vmatpush1.bf16.msra.mxu0 0
        %3041 = vmatprep.subr.bf16.mxu0 0
        %3042 = vmatpush1.bf16.msra.mxu0 0
        %3043 = vmatprep.subr.bf16.mxu0 0
        %3044 = vmatpush1.bf16.msra.mxu0 0
        %3045 = vmatprep.subr.bf16.mxu0 0
        %3046 = vmatpush1.bf16.msra.mxu0 0
        %3047 = vmatprep.subr.bf16.mxu0 0
        %3048 = vmatpush1.bf16.msra.mxu0 0
        %3049 = vmatprep.mubr.bf16.mxu0 0
        %3050 = vmatmul.mubr.bf16.gmra.mrb[0].mxu0 %v2970
        %v3051 = vpop.f32.mrb[0].mxu0
        %v3052 = vadd.f32 %v2960, %v3051
        %v3053 = vpop.f32.mrb[0].mxu0
        %v3054 = vpop.f32.mrb[0].mxu0
        %v3055 = vadd.f32 %v2960, %v3054
        %v3056 = vpop.f32.mrb[0].mxu0
        %3057 = vmatprep.mubr.bf16.mxu0 0
        %3058 = vmatmul.mubr.bf16.gmra.mrb[0].mxu0 %v2973
        %v3059 = vpop.f32.mrb[0].mxu0
        %v3060 = vadd.f32 %v2960, %v3059
        %v3061 = vpop.f32.mrb[0].mxu0
        %v3062 = vpop.f32.mrb[0].mxu0
        %v3063 = vadd.f32 %v2960, %v3062
        %v3064 = vpop.f32.mrb[0].mxu0
        %3065 = vmatprep.mubr.bf16.mxu0 0
        %3066 = vmatmul.mubr.bf16.gmra.mrb[0].mxu0 %v2976
        %v3067 = vpop.f32.mrb[0].mxu0
        %v3068 = vadd.f32 %v2960, %v3067
        %v3069 = vpop.f32.mrb[0].mxu0
        %v3070 = vpop.f32.mrb[0].mxu0
        %v3071 = vadd.f32 %v2960, %v3070
        %v3072 = vpop.f32.mrb[0].mxu0
        %3073 = vmatprep.mubr.bf16.mxu0 0
        %3074 = vmatmul.mubr.bf16.gmra.mrb[0].mxu0 %v2979
        %v3075 = vpop.f32.mrb[0].mxu0
        %v3076 = vadd.f32 %v2960, %v3075
        %v3077 = vpop.f32.mrb[0].mxu0
        %v3078 = vpop.f32.mrb[0].mxu0
        %v3079 = vadd.f32 %v2960, %v3078
        %v3080 = vpop.f32.mrb[0].mxu0
        %3081 = vmatprep.mubr.bf16.mxu0 0
        %3082 = vmatmul.mubr.bf16.gmra.mrb[0].mxu0 %v2982
        %v3083 = vpop.f32.mrb[0].mxu0
        %v3084 = vadd.f32 %v2960, %v3083
        %v3085 = vpop.f32.mrb[0].mxu0
        %v3086 = vpop.f32.mrb[0].mxu0
        %v3087 = vadd.f32 %v2960, %v3086
        %v3088 = vpop.f32.mrb[0].mxu0
        %3089 = vmatprep.mubr.bf16.mxu0 0
        %3090 = vmatmul.mubr.bf16.gmra.mrb[0].mxu0 %v2985
        %v3091 = vpop.f32.mrb[0].mxu0
        %v3092 = vadd.f32 %v2960, %v3091
        %v3093 = vpop.f32.mrb[0].mxu0
        %v3094 = vpop.f32.mrb[0].mxu0
        %v3095 = vadd.f32 %v2960, %v3094
        %v3096 = vpop.f32.mrb[0].mxu0
        %3097 = vmatprep.mubr.bf16.mxu0 0
        %3098 = vmatmul.mubr.bf16.gmra.mrb[0].mxu0 %v2988
        %v3099 = vpop.f32.mrb[0].mxu0
        %v3100 = vadd.f32 %v2960, %v3099
        %v3101 = vpop.f32.mrb[0].mxu0
        %v3102 = vpop.f32.mrb[0].mxu0
        %v3103 = vadd.f32 %v2960, %v3102
        %v3104 = vpop.f32.mrb[0].mxu0
        %3105 = vmatprep.mubr.bf16.mxu0 0
        %3106 = vmatmul.mubr.bf16.gmra.mrb[0].mxu0 %v2991
        %v3107 = vpop.f32.mrb[0].mxu0
        %v3108 = vadd.f32 %v2960, %v3107
        %v3109 = vpop.f32.mrb[0].mxu0
        %v3110 = vpop.f32.mrb[0].mxu0
        %v3111 = vadd.f32 %v2960, %v3110
        %v3112 = vpop.f32.mrb[0].mxu0
        %3113 = vmatprep.mubr.bf16.mxu0 0
        %3114 = vmatmul.mubr.bf16.gmra.mrb[0].mxu0 %v2994
        %v3115 = vpop.f32.mrb[0].mxu0
        %v3116 = vadd.f32 %v2960, %v3115
        %v3117 = vpop.f32.mrb[0].mxu0
        %v3118 = vpop.f32.mrb[0].mxu0
        %v3119 = vadd.f32 %v2960, %v3118
        %v3120 = vpop.f32.mrb[0].mxu0
        %3121 = vmatprep.mubr.bf16.mxu0 0
        %3122 = vmatmul.mubr.bf16.gmra.mrb[0].mxu0 %v2997
        %v3123 = vpop.f32.mrb[0].mxu0
        %v3124 = vadd.f32 %v2960, %v3123
        %v3125 = vpop.f32.mrb[0].mxu0
        %v3126 = vpop.f32.mrb[0].mxu0
        %v3127 = vadd.f32 %v2960, %v3126
        %v3128 = vpop.f32.mrb[0].mxu0
        %3129 = vmatprep.mubr.bf16.mxu0 0
        %3130 = vmatmul.mubr.bf16.gmra.mrb[0].mxu0 %v3000
        %v3131 = vpop.f32.mrb[0].mxu0
        %v3132 = vadd.f32 %v2960, %v3131
        %v3133 = vpop.f32.mrb[0].mxu0
        %v3134 = vpop.f32.mrb[0].mxu0
        %v3135 = vadd.f32 %v2960, %v3134
        %v3136 = vpop.f32.mrb[0].mxu0
        %3137 = vmatprep.mubr.bf16.mxu0 0
        %3138 = vmatmul.mubr.bf16.gmra.mrb[0].mxu0 %v3003
        %v3139 = vpop.f32.mrb[0].mxu0
        %v3140 = vadd.f32 %v2960, %v3139
        %v3141 = vpop.f32.mrb[0].mxu0
        %v3142 = vpop.f32.mrb[0].mxu0
        %v3143 = vadd.f32 %v2960, %v3142
        %v3144 = vpop.f32.mrb[0].mxu0
        %3145 = vmatprep.mubr.bf16.mxu0 0
        %3146 = vmatmul.mubr.bf16.gmra.mrb[0].mxu0 %v3006
        %v3147 = vpop.f32.mrb[0].mxu0
        %v3148 = vadd.f32 %v2960, %v3147
        %v3149 = vpop.f32.mrb[0].mxu0
        %v3150 = vpop.f32.mrb[0].mxu0
        %v3151 = vadd.f32 %v2960, %v3150
        %v3152 = vpop.f32.mrb[0].mxu0
        %3153 = vmatprep.mubr.bf16.mxu0 0
        %3154 = vmatmul.mubr.bf16.gmra.mrb[0].mxu0 %v3009
        %v3155 = vpop.f32.mrb[0].mxu0
        %v3156 = vadd.f32 %v2960, %v3155
        %v3157 = vpop.f32.mrb[0].mxu0
        %v3158 = vpop.f32.mrb[0].mxu0
        %v3159 = vadd.f32 %v2960, %v3158
        %v3160 = vpop.f32.mrb[0].mxu0
        %3161 = vmatprep.mubr.bf16.mxu0 0
        %3162 = vmatmul.mubr.bf16.gmra.mrb[0].mxu0 %v3012
        %v3163 = vpop.f32.mrb[0].mxu0
        %v3164 = vadd.f32 %v2960, %v3163
        %v3165 = vpop.f32.mrb[0].mxu0
        %v3166 = vpop.f32.mrb[0].mxu0
        %v3167 = vadd.f32 %v2960, %v3166
        %v3168 = vpop.f32.mrb[0].mxu0
        %3169 = vmatprep.mubr.bf16.mxu0 0
        %3170 = vmatmul.mubr.bf16.gmra.mrb[0].mxu0 %v3015
        %v3171 = vpop.f32.mrb[0].mxu0
        %v3172 = vadd.f32 %v2960, %v3171
        %v3173 = vpop.f32.mrb[0].mxu0
        %v3174 = vpop.f32.mrb[0].mxu0
        %v3175 = vadd.f32 %v2960, %v3174
        %v3176 = vpop.f32.mrb[0].mxu0
        %3177 = vdwg.mxu0
        %v3178 = vmax.f32 %v3052, 0.0
        %v3179 = vmax.f32 %v3055, 0.0
        %v3180 = vmax.f32 %v3060, 0.0
        %v3181 = vmax.f32 %v3063, 0.0
        %v3182 = vmax.f32 %v3068, 0.0
        %v3183 = vmax.f32 %v3071, 0.0
        %v3184 = vmax.f32 %v3076, 0.0
        %v3185 = vmax.f32 %v3079, 0.0
        %v3186 = vmax.f32 %v3084, 0.0
        %v3187 = vmax.f32 %v3087, 0.0
        %v3188 = vmax.f32 %v3092, 0.0
        %v3189 = vmax.f32 %v3095, 0.0
        %v3190 = vmax.f32 %v3100, 0.0
        %v3191 = vmax.f32 %v3103, 0.0
        %v3192 = vmax.f32 %v3108, 0.0
        %v3193 = vmax.f32 %v3111, 0.0
        %v3194 = vmax.f32 %v3116, 0.0
        %v3195 = vmax.f32 %v3119, 0.0
        %v3196 = vmax.f32 %v3124, 0.0
        %v3197 = vmax.f32 %v3127, 0.0
        %v3198 = vmax.f32 %v3132, 0.0
        %v3199 = vmax.f32 %v3135, 0.0
        %v3200 = vmax.f32 %v3140, 0.0
        %v3201 = vmax.f32 %v3143, 0.0
        %v3202 = vmax.f32 %v3148, 0.0
        %v3203 = vmax.f32 %v3151, 0.0
        %v3204 = vmax.f32 %v3156, 0.0
        %v3205 = vmax.f32 %v3159, 0.0
        %v3206 = vmax.f32 %v3164, 0.0
        %v3207 = vmax.f32 %v3167, 0.0
        %v3208 = vmax.f32 %v3172, 0.0
        %v3209 = vmax.f32 %v3175, 0.0
        %v3210 = vpack.c.bf16 %v3179, %v3178
        %v3211 = vpack.c.bf16 %v3181, %v3180
        %v3212 = vpack.c.bf16 %v3183, %v3182
        %v3213 = vpack.c.bf16 %v3185, %v3184
        %v3214 = vpack.c.bf16 %v3187, %v3186
        %v3215 = vpack.c.bf16 %v3189, %v3188
        %v3216 = vpack.c.bf16 %v3191, %v3190
        %v3217 = vpack.c.bf16 %v3193, %v3192
        %v3218 = vpack.c.bf16 %v3195, %v3194
        %v3219 = vpack.c.bf16 %v3197, %v3196
        %v3220 = vpack.c.bf16 %v3199, %v3198
        %v3221 = vpack.c.bf16 %v3201, %v3200
        %v3222 = vpack.c.bf16 %v3203, %v3202
        %v3223 = vpack.c.bf16 %v3205, %v3204
        %v3224 = vpack.c.bf16 %v3207, %v3206
        %v3225 = vpack.c.bf16 %v3209, %v3208
        %v3242 = vunpack.c.l.b16 %v3210
        %v3243 = vunpack.c.l.b16 %v3211
        %v3244 = vunpack.c.l.b16 %v3212
        %v3245 = vunpack.c.l.b16 %v3213
        %v3246 = vunpack.c.l.b16 %v3214
        %v3247 = vunpack.c.l.b16 %v3215
        %v3248 = vunpack.c.l.b16 %v3216
        %v3249 = vunpack.c.l.b16 %v3217
        %v3250 = vunpack.c.l.b16 %v3218
        %v3251 = vunpack.c.l.b16 %v3219
        %v3252 = vunpack.c.l.b16 %v3220
        %v3253 = vunpack.c.l.b16 %v3221
        %v3254 = vunpack.c.l.b16 %v3222
        %v3255 = vunpack.c.l.b16 %v3223
        %v3256 = vunpack.c.l.b16 %v3224
        %v3257 = vunpack.c.l.b16 %v3225
        %v3258 = vrot.slane %v3243, 7
        %vm3259 = vcmask 1041409
        %v3260 = vsel %vm3259, %v3258, %v3242
        %v3261 = vrot.slane %v3244, 6
        %vm3262 = vcmask 1042434
        %v3263 = vsel %vm3262, %v3261, %v3260
        %v3264 = vrot.slane %v3245, 5
        %vm3265 = vcmask 1043459
        %v3266 = vsel %vm3265, %v3264, %v3263
        %v3267 = vrot.slane %v3246, 4
        %vm3268 = vcmask 1044484
        %v3269 = vsel %vm3268, %v3267, %v3266
        %v3270 = vrot.slane %v3247, 3
        %vm3271 = vcmask 1045509
        %v3272 = vsel %vm3271, %v3270, %v3269
        %v3273 = vrot.slane %v3248, 2
        %vm3274 = vcmask 1046534
        %v3275 = vsel %vm3274, %v3273, %v3272
        %v3276 = vrot.slane %v3249, 1
        %vm3277 = vcmask 1047559
        %v3278 = vsel %vm3277, %v3276, %v3275
        %v3279 = vrot.slane %v3251, 7
        %v3280 = vsel %vm3259, %v3279, %v3250
        %v3281 = vrot.slane %v3252, 6
        %v3282 = vsel %vm3262, %v3281, %v3280
        %v3283 = vrot.slane %v3253, 5
        %v3284 = vsel %vm3265, %v3283, %v3282
        %v3285 = vrot.slane %v3254, 4
        %v3286 = vsel %vm3268, %v3285, %v3284
        %v3287 = vrot.slane %v3255, 3
        %v3288 = vsel %vm3271, %v3287, %v3286
        %v3289 = vrot.slane %v3256, 2
        %v3290 = vsel %vm3274, %v3289, %v3288
        %v3291 = vrot.slane %v3257, 1
        %v3292 = vsel %vm3277, %v3291, %v3290
        %v3293 = vpack.c.b16 %v3292, %v3278
        %3295 = vst [vmem:[#allocation2] sm:$0xff] %v3293
        %v3296 = vrot.slane %v3242, 1
        %v3297 = vsel %vm3259, %v3243, %v3296
        %v3298 = vrot.slane %v3244, 7
        %v3299 = vsel %vm3262, %v3298, %v3297
        %v3300 = vrot.slane %v3245, 6
        %v3301 = vsel %vm3265, %v3300, %v3299
        %v3302 = vrot.slane %v3246, 5
        %v3303 = vsel %vm3268, %v3302, %v3301
        %v3304 = vrot.slane %v3247, 4
        %v3305 = vsel %vm3271, %v3304, %v3303
        %v3306 = vrot.slane %v3248, 3
        %v3307 = vsel %vm3274, %v3306, %v3305
        %v3308 = vrot.slane %v3249, 2
        %v3309 = vsel %vm3277, %v3308, %v3307
        %v3310 = vrot.slane %v3250, 1
        %v3311 = vsel %vm3259, %v3251, %v3310
        %v3312 = vrot.slane %v3252, 7
        %v3313 = vsel %vm3262, %v3312, %v3311
        %v3314 = vrot.slane %v3253, 6
        %v3315 = vsel %vm3265, %v3314, %v3313
        %v3316 = vrot.slane %v3254, 5
        %v3317 = vsel %vm3268, %v3316, %v3315
        %v3318 = vrot.slane %v3255, 4
        %v3319 = vsel %vm3271, %v3318, %v3317
        %v3320 = vrot.slane %v3256, 3
        %v3321 = vsel %vm3274, %v3320, %v3319
        %v3322 = vrot.slane %v3257, 2
        %v3323 = vsel %vm3277, %v3322, %v3321
        %v3324 = vpack.c.b16 %v3323, %v3309
        %3326 = vst [vmem:[#allocation2 + $0x8] sm:$0xff] %v3324
        %v3327 = vrot.slane %v3242, 2
        %v3328 = vrot.slane %v3243, 1
        %v3329 = vsel %vm3259, %v3328, %v3327
        %v3330 = vsel %vm3262, %v3244, %v3329
        %v3331 = vrot.slane %v3245, 7
        %v3332 = vsel %vm3265, %v3331, %v3330
        %v3333 = vrot.slane %v3246, 6
        %v3334 = vsel %vm3268, %v3333, %v3332
        %v3335 = vrot.slane %v3247, 5
        %v3336 = vsel %vm3271, %v3335, %v3334
        %v3337 = vrot.slane %v3248, 4
        %v3338 = vsel %vm3274, %v3337, %v3336
        %v3339 = vrot.slane %v3249, 3
        %v3340 = vsel %vm3277, %v3339, %v3338
        %v3341 = vrot.slane %v3250, 2
        %v3342 = vrot.slane %v3251, 1
        %v3343 = vsel %vm3259, %v3342, %v3341
        %v3344 = vsel %vm3262, %v3252, %v3343
        %v3345 = vrot.slane %v3253, 7
        %v3346 = vsel %vm3265, %v3345, %v3344
        %v3347 = vrot.slane %v3254, 6
        %v3348 = vsel %vm3268, %v3347, %v3346
        %v3349 = vrot.slane %v3255, 5
        %v3350 = vsel %vm3271, %v3349, %v3348
        %v3351 = vrot.slane %v3256, 4
        %v3352 = vsel %vm3274, %v3351, %v3350
        %v3353 = vrot.slane %v3257, 3
        %v3354 = vsel %vm3277, %v3353, %v3352
        %v3355 = vpack.c.b16 %v3354, %v3340
        %3357 = vst [vmem:[#allocation2 + $0x10] sm:$0xff] %v3355
        %v3358 = vrot.slane %v3242, 3
        %v3359 = vrot.slane %v3243, 2
        %v3360 = vsel %vm3259, %v3359, %v3358
        %v3361 = vrot.slane %v3244, 1
        %v3362 = vsel %vm3262, %v3361, %v3360
        %v3363 = vsel %vm3265, %v3245, %v3362
        %v3364 = vrot.slane %v3246, 7
        %v3365 = vsel %vm3268, %v3364, %v3363
        %v3366 = vrot.slane %v3247, 6
        %v3367 = vsel %vm3271, %v3366, %v3365
        %v3368 = vrot.slane %v3248, 5
        %v3369 = vsel %vm3274, %v3368, %v3367
        %v3370 = vrot.slane %v3249, 4
        %v3371 = vsel %vm3277, %v3370, %v3369
        %v3372 = vrot.slane %v3250, 3
        %v3373 = vrot.slane %v3251, 2
        %v3374 = vsel %vm3259, %v3373, %v3372
        %v3375 = vrot.slane %v3252, 1
        %v3376 = vsel %vm3262, %v3375, %v3374
        %v3377 = vsel %vm3265, %v3253, %v3376
        %v3378 = vrot.slane %v3254, 7
        %v3379 = vsel %vm3268, %v3378, %v3377
        %v3380 = vrot.slane %v3255, 6
        %v3381 = vsel %vm3271, %v3380, %v3379
        %v3382 = vrot.slane %v3256, 5
        %v3383 = vsel %vm3274, %v3382, %v3381
        %v3384 = vrot.slane %v3257, 4
        %v3385 = vsel %vm3277, %v3384, %v3383
        %v3386 = vpack.c.b16 %v3385, %v3371
        %3388 = vst [vmem:[#allocation2 + $0x18] sm:$0xff] %v3386
        %v3389 = vrot.slane %v3242, 4
        %v3390 = vrot.slane %v3243, 3
        %v3391 = vsel %vm3259, %v3390, %v3389
        %v3392 = vrot.slane %v3244, 2
        %v3393 = vsel %vm3262, %v3392, %v3391
        %v3394 = vrot.slane %v3245, 1
        %v3395 = vsel %vm3265, %v3394, %v3393
        %v3396 = vsel %vm3268, %v3246, %v3395
        %v3397 = vrot.slane %v3247, 7
        %v3398 = vsel %vm3271, %v3397, %v3396
        %v3399 = vrot.slane %v3248, 6
        %v3400 = vsel %vm3274, %v3399, %v3398
        %v3401 = vrot.slane %v3249, 5
        %v3402 = vsel %vm3277, %v3401, %v3400
        %v3403 = vrot.slane %v3250, 4
        %v3404 = vrot.slane %v3251, 3
        %v3405 = vsel %vm3259, %v3404, %v3403
        %v3406 = vrot.slane %v3252, 2
        %v3407 = vsel %vm3262, %v3406, %v3405
        %v3408 = vrot.slane %v3253, 1
        %v3409 = vsel %vm3265, %v3408, %v3407
        %v3410 = vsel %vm3268, %v3254, %v3409
        %v3411 = vrot.slane %v3255, 7
        %v3412 = vsel %vm3271, %v3411, %v3410
        %v3413 = vrot.slane %v3256, 6
        %v3414 = vsel %vm3274, %v3413, %v3412
        %v3415 = vrot.slane %v3257, 5
        %v3416 = vsel %vm3277, %v3415, %v3414
        %v3417 = vpack.c.b16 %v3416, %v3402
        %3419 = vst [vmem:[#allocation2 + $0x20] sm:$0xff] %v3417
        %v3420 = vrot.slane %v3242, 5
        %v3421 = vrot.slane %v3243, 4
        %v3422 = vsel %vm3259, %v3421, %v3420
        %v3423 = vrot.slane %v3244, 3
        %v3424 = vsel %vm3262, %v3423, %v3422
        %v3425 = vrot.slane %v3245, 2
        %v3426 = vsel %vm3265, %v3425, %v3424
        %v3427 = vrot.slane %v3246, 1
        %v3428 = vsel %vm3268, %v3427, %v3426
        %v3429 = vsel %vm3271, %v3247, %v3428
        %v3430 = vrot.slane %v3248, 7
        %v3431 = vsel %vm3274, %v3430, %v3429
        %v3432 = vrot.slane %v3249, 6
        %v3433 = vsel %vm3277, %v3432, %v3431
        %v3434 = vrot.slane %v3250, 5
        %v3435 = vrot.slane %v3251, 4
        %v3436 = vsel %vm3259, %v3435, %v3434
        %v3437 = vrot.slane %v3252, 3
        %v3438 = vsel %vm3262, %v3437, %v3436
        %v3439 = vrot.slane %v3253, 2
        %v3440 = vsel %vm3265, %v3439, %v3438
        %v3441 = vrot.slane %v3254, 1
        %v3442 = vsel %vm3268, %v3441, %v3440
        %v3443 = vsel %vm3271, %v3255, %v3442
        %v3444 = vrot.slane %v3256, 7
        %v3445 = vsel %vm3274, %v3444, %v3443
        %v3446 = vrot.slane %v3257, 6
        %v3447 = vsel %vm3277, %v3446, %v3445
        %v3448 = vpack.c.b16 %v3447, %v3433
        %3450 = vst [vmem:[#allocation2 + $0x28] sm:$0xff] %v3448
        %v3451 = vrot.slane %v3242, 6
        %v3452 = vrot.slane %v3243, 5
        %v3453 = vsel %vm3259, %v3452, %v3451
        %v3454 = vrot.slane %v3244, 4
        %v3455 = vsel %vm3262, %v3454, %v3453
        %v3456 = vrot.slane %v3245, 3
        %v3457 = vsel %vm3265, %v3456, %v3455
        %v3458 = vrot.slane %v3246, 2
        %v3459 = vsel %vm3268, %v3458, %v3457
        %v3460 = vrot.slane %v3247, 1
        %v3461 = vsel %vm3271, %v3460, %v3459
        %v3462 = vsel %vm3274, %v3248, %v3461
        %v3463 = vrot.slane %v3249, 7
        %v3464 = vsel %vm3277, %v3463, %v3462
        %v3465 = vrot.slane %v3250, 6
        %v3466 = vrot.slane %v3251, 5
        %v3467 = vsel %vm3259, %v3466, %v3465
        %v3468 = vrot.slane %v3252, 4
        %v3469 = vsel %vm3262, %v3468, %v3467
        %v3470 = vrot.slane %v3253, 3
        %v3471 = vsel %vm3265, %v3470, %v3469
        %v3472 = vrot.slane %v3254, 2
        %v3473 = vsel %vm3268, %v3472, %v3471
        %v3474 = vrot.slane %v3255, 1
        %v3475 = vsel %vm3271, %v3474, %v3473
        %v3476 = vsel %vm3274, %v3256, %v3475
        %v3477 = vrot.slane %v3257, 7
        %v3478 = vsel %vm3277, %v3477, %v3476
        %v3479 = vpack.c.b16 %v3478, %v3464
        %3481 = vst [vmem:[#allocation2 + $0x30] sm:$0xff] %v3479
        %v3482 = vrot.slane %v3242, 7
        %v3483 = vrot.slane %v3243, 6
        %v3484 = vsel %vm3259, %v3483, %v3482
        %v3485 = vrot.slane %v3244, 5
        %v3486 = vsel %vm3262, %v3485, %v3484
        %v3487 = vrot.slane %v3245, 4
        %v3488 = vsel %vm3265, %v3487, %v3486
        %v3489 = vrot.slane %v3246, 3
        %v3490 = vsel %vm3268, %v3489, %v3488
        %v3491 = vrot.slane %v3247, 2
        %v3492 = vsel %vm3271, %v3491, %v3490
        %v3493 = vrot.slane %v3248, 1
        %v3494 = vsel %vm3274, %v3493, %v3492
        %v3495 = vsel %vm3277, %v3249, %v3494
        %v3496 = vrot.slane %v3250, 7
        %v3497 = vrot.slane %v3251, 6
        %v3498 = vsel %vm3259, %v3497, %v3496
        %v3499 = vrot.slane %v3252, 5
        %v3500 = vsel %vm3262, %v3499, %v3498
        %v3501 = vrot.slane %v3253, 4
        %v3502 = vsel %vm3265, %v3501, %v3500
        %v3503 = vrot.slane %v3254, 3
        %v3504 = vsel %vm3268, %v3503, %v3502
        %v3505 = vrot.slane %v3255, 2
        %v3506 = vsel %vm3271, %v3505, %v3504
        %v3507 = vrot.slane %v3256, 1
        %v3508 = vsel %vm3274, %v3507, %v3506
        %v3509 = vsel %vm3277, %v3257, %v3508
        %v3510 = vpack.c.b16 %v3509, %v3495
        %3512 = vst [vmem:[#allocation2 + $0x38] sm:$0xff] %v3510
        %v3513 = vunpack.c.h.b16 %v3210
        %v3514 = vunpack.c.h.b16 %v3211
        %v3515 = vunpack.c.h.b16 %v3212
        %v3516 = vunpack.c.h.b16 %v3213
        %v3517 = vunpack.c.h.b16 %v3214
        %v3518 = vunpack.c.h.b16 %v3215
        %v3519 = vunpack.c.h.b16 %v3216
        %v3520 = vunpack.c.h.b16 %v3217
        %v3521 = vunpack.c.h.b16 %v3218
        %v3522 = vunpack.c.h.b16 %v3219
        %v3523 = vunpack.c.h.b16 %v3220
        %v3524 = vunpack.c.h.b16 %v3221
        %v3525 = vunpack.c.h.b16 %v3222
        %v3526 = vunpack.c.h.b16 %v3223
        %v3527 = vunpack.c.h.b16 %v3224
        %v3528 = vunpack.c.h.b16 %v3225
        %v3529 = vrot.slane %v3514, 7
        %v3530 = vsel %vm3259, %v3529, %v3513
        %v3531 = vrot.slane %v3515, 6
        %v3532 = vsel %vm3262, %v3531, %v3530
        %v3533 = vrot.slane %v3516, 5
        %v3534 = vsel %vm3265, %v3533, %v3532
        %v3535 = vrot.slane %v3517, 4
        %v3536 = vsel %vm3268, %v3535, %v3534
        %v3537 = vrot.slane %v3518, 3
        %v3538 = vsel %vm3271, %v3537, %v3536
        %v3539 = vrot.slane %v3519, 2
        %v3540 = vsel %vm3274, %v3539, %v3538
        %v3541 = vrot.slane %v3520, 1
        %v3542 = vsel %vm3277, %v3541, %v3540
        %v3543 = vrot.slane %v3522, 7
        %v3544 = vsel %vm3259, %v3543, %v3521
        %v3545 = vrot.slane %v3523, 6
        %v3546 = vsel %vm3262, %v3545, %v3544
        %v3547 = vrot.slane %v3524, 5
        %v3548 = vsel %vm3265, %v3547, %v3546
        %v3549 = vrot.slane %v3525, 4
        %v3550 = vsel %vm3268, %v3549, %v3548
        %v3551 = vrot.slane %v3526, 3
        %v3552 = vsel %vm3271, %v3551, %v3550
        %v3553 = vrot.slane %v3527, 2
        %v3554 = vsel %vm3274, %v3553, %v3552
        %v3555 = vrot.slane %v3528, 1
        %v3556 = vsel %vm3277, %v3555, %v3554
        %v3557 = vpack.c.b16 %v3556, %v3542
        %3559 = vst [vmem:[#allocation2 + $0x40] sm:$0xff] %v3557
        %v3560 = vrot.slane %v3513, 1
        %v3561 = vsel %vm3259, %v3514, %v3560
        %v3562 = vrot.slane %v3515, 7
        %v3563 = vsel %vm3262, %v3562, %v3561
        %v3564 = vrot.slane %v3516, 6
        %v3565 = vsel %vm3265, %v3564, %v3563
        %v3566 = vrot.slane %v3517, 5
        %v3567 = vsel %vm3268, %v3566, %v3565
        %v3568 = vrot.slane %v3518, 4
        %v3569 = vsel %vm3271, %v3568, %v3567
        %v3570 = vrot.slane %v3519, 3
        %v3571 = vsel %vm3274, %v3570, %v3569
        %v3572 = vrot.slane %v3520, 2
        %v3573 = vsel %vm3277, %v3572, %v3571
        %v3574 = vrot.slane %v3521, 1
        %v3575 = vsel %vm3259, %v3522, %v3574
        %v3576 = vrot.slane %v3523, 7
        %v3577 = vsel %vm3262, %v3576, %v3575
        %v3578 = vrot.slane %v3524, 6
        %v3579 = vsel %vm3265, %v3578, %v3577
        %v3580 = vrot.slane %v3525, 5
        %v3581 = vsel %vm3268, %v3580, %v3579
        %v3582 = vrot.slane %v3526, 4
        %v3583 = vsel %vm3271, %v3582, %v3581
        %v3584 = vrot.slane %v3527, 3
        %v3585 = vsel %vm3274, %v3584, %v3583
        %v3586 = vrot.slane %v3528, 2
        %v3587 = vsel %vm3277, %v3586, %v3585
        %v3588 = vpack.c.b16 %v3587, %v3573
        %3590 = vst [vmem:[#allocation2 + $0x48] sm:$0xff] %v3588
        %v3591 = vrot.slane %v3513, 2
        %v3592 = vrot.slane %v3514, 1
        %v3593 = vsel %vm3259, %v3592, %v3591
        %v3594 = vsel %vm3262, %v3515, %v3593
        %v3595 = vrot.slane %v3516, 7
        %v3596 = vsel %vm3265, %v3595, %v3594
        %v3597 = vrot.slane %v3517, 6
        %v3598 = vsel %vm3268, %v3597, %v3596
        %v3599 = vrot.slane %v3518, 5
        %v3600 = vsel %vm3271, %v3599, %v3598
        %v3601 = vrot.slane %v3519, 4
        %v3602 = vsel %vm3274, %v3601, %v3600
        %v3603 = vrot.slane %v3520, 3
        %v3604 = vsel %vm3277, %v3603, %v3602
        %v3605 = vrot.slane %v3521, 2
        %v3606 = vrot.slane %v3522, 1
        %v3607 = vsel %vm3259, %v3606, %v3605
        %v3608 = vsel %vm3262, %v3523, %v3607
        %v3609 = vrot.slane %v3524, 7
        %v3610 = vsel %vm3265, %v3609, %v3608
        %v3611 = vrot.slane %v3525, 6
        %v3612 = vsel %vm3268, %v3611, %v3610
        %v3613 = vrot.slane %v3526, 5
        %v3614 = vsel %vm3271, %v3613, %v3612
        %v3615 = vrot.slane %v3527, 4
        %v3616 = vsel %vm3274, %v3615, %v3614
        %v3617 = vrot.slane %v3528, 3
        %v3618 = vsel %vm3277, %v3617, %v3616
        %v3619 = vpack.c.b16 %v3618, %v3604
        %3621 = vst [vmem:[#allocation2 + $0x50] sm:$0xff] %v3619
        %v3622 = vrot.slane %v3513, 3
        %v3623 = vrot.slane %v3514, 2
        %v3624 = vsel %vm3259, %v3623, %v3622
        %v3625 = vrot.slane %v3515, 1
        %v3626 = vsel %vm3262, %v3625, %v3624
        %v3627 = vsel %vm3265, %v3516, %v3626
        %v3628 = vrot.slane %v3517, 7
        %v3629 = vsel %vm3268, %v3628, %v3627
        %v3630 = vrot.slane %v3518, 6
        %v3631 = vsel %vm3271, %v3630, %v3629
        %v3632 = vrot.slane %v3519, 5
        %v3633 = vsel %vm3274, %v3632, %v3631
        %v3634 = vrot.slane %v3520, 4
        %v3635 = vsel %vm3277, %v3634, %v3633
        %v3636 = vrot.slane %v3521, 3
        %v3637 = vrot.slane %v3522, 2
        %v3638 = vsel %vm3259, %v3637, %v3636
        %v3639 = vrot.slane %v3523, 1
        %v3640 = vsel %vm3262, %v3639, %v3638
        %v3641 = vsel %vm3265, %v3524, %v3640
        %v3642 = vrot.slane %v3525, 7
        %v3643 = vsel %vm3268, %v3642, %v3641
        %v3644 = vrot.slane %v3526, 6
        %v3645 = vsel %vm3271, %v3644, %v3643
        %v3646 = vrot.slane %v3527, 5
        %v3647 = vsel %vm3274, %v3646, %v3645
        %v3648 = vrot.slane %v3528, 4
        %v3649 = vsel %vm3277, %v3648, %v3647
        %v3650 = vpack.c.b16 %v3649, %v3635
        %3652 = vst [vmem:[#allocation2 + $0x58] sm:$0xff] %v3650
        %v3653 = vrot.slane %v3513, 4
        %v3654 = vrot.slane %v3514, 3
        %v3655 = vsel %vm3259, %v3654, %v3653
        %v3656 = vrot.slane %v3515, 2
        %v3657 = vsel %vm3262, %v3656, %v3655
        %v3658 = vrot.slane %v3516, 1
        %v3659 = vsel %vm3265, %v3658, %v3657
        %v3660 = vsel %vm3268, %v3517, %v3659
        %v3661 = vrot.slane %v3518, 7
        %v3662 = vsel %vm3271, %v3661, %v3660
        %v3663 = vrot.slane %v3519, 6
        %v3664 = vsel %vm3274, %v3663, %v3662
        %v3665 = vrot.slane %v3520, 5
        %v3666 = vsel %vm3277, %v3665, %v3664
        %v3667 = vrot.slane %v3521, 4
        %v3668 = vrot.slane %v3522, 3
        %v3669 = vsel %vm3259, %v3668, %v3667
        %v3670 = vrot.slane %v3523, 2
        %v3671 = vsel %vm3262, %v3670, %v3669
        %v3672 = vrot.slane %v3524, 1
        %v3673 = vsel %vm3265, %v3672, %v3671
        %v3674 = vsel %vm3268, %v3525, %v3673
        %v3675 = vrot.slane %v3526, 7
        %v3676 = vsel %vm3271, %v3675, %v3674
        %v3677 = vrot.slane %v3527, 6
        %v3678 = vsel %vm3274, %v3677, %v3676
        %v3679 = vrot.slane %v3528, 5
        %v3680 = vsel %vm3277, %v3679, %v3678
        %v3681 = vpack.c.b16 %v3680, %v3666
        %3683 = vst [vmem:[#allocation2 + $0x60] sm:$0xff] %v3681
        %v3684 = vrot.slane %v3513, 5
        %v3685 = vrot.slane %v3514, 4
        %v3686 = vsel %vm3259, %v3685, %v3684
        %v3687 = vrot.slane %v3515, 3
        %v3688 = vsel %vm3262, %v3687, %v3686
        %v3689 = vrot.slane %v3516, 2
        %v3690 = vsel %vm3265, %v3689, %v3688
        %v3691 = vrot.slane %v3517, 1
        %v3692 = vsel %vm3268, %v3691, %v3690
        %v3693 = vsel %vm3271, %v3518, %v3692
        %v3694 = vrot.slane %v3519, 7
        %v3695 = vsel %vm3274, %v3694, %v3693
        %v3696 = vrot.slane %v3520, 6
        %v3697 = vsel %vm3277, %v3696, %v3695
        %v3698 = vrot.slane %v3521, 5
        %v3699 = vrot.slane %v3522, 4
        %v3700 = vsel %vm3259, %v3699, %v3698
        %v3701 = vrot.slane %v3523, 3
        %v3702 = vsel %vm3262, %v3701, %v3700
        %v3703 = vrot.slane %v3524, 2
        %v3704 = vsel %vm3265, %v3703, %v3702
        %v3705 = vrot.slane %v3525, 1
        %v3706 = vsel %vm3268, %v3705, %v3704
        %v3707 = vsel %vm3271, %v3526, %v3706
        %v3708 = vrot.slane %v3527, 7
        %v3709 = vsel %vm3274, %v3708, %v3707
        %v3710 = vrot.slane %v3528, 6
        %v3711 = vsel %vm3277, %v3710, %v3709
        %v3712 = vpack.c.b16 %v3711, %v3697
        %3714 = vst [vmem:[#allocation2 + $0x68] sm:$0xff] %v3712
        %v3715 = vrot.slane %v3513, 6
        %v3716 = vrot.slane %v3514, 5
        %v3717 = vsel %vm3259, %v3716, %v3715
        %v3718 = vrot.slane %v3515, 4
        %v3719 = vsel %vm3262, %v3718, %v3717
        %v3720 = vrot.slane %v3516, 3
        %v3721 = vsel %vm3265, %v3720, %v3719
        %v3722 = vrot.slane %v3517, 2
        %v3723 = vsel %vm3268, %v3722, %v3721
        %v3724 = vrot.slane %v3518, 1
        %v3725 = vsel %vm3271, %v3724, %v3723
        %v3726 = vsel %vm3274, %v3519, %v3725
        %v3727 = vrot.slane %v3520, 7
        %v3728 = vsel %vm3277, %v3727, %v3726
        %v3729 = vrot.slane %v3521, 6
        %v3730 = vrot.slane %v3522, 5
        %v3731 = vsel %vm3259, %v3730, %v3729
        %v3732 = vrot.slane %v3523, 4
        %v3733 = vsel %vm3262, %v3732, %v3731
        %v3734 = vrot.slane %v3524, 3
        %v3735 = vsel %vm3265, %v3734, %v3733
        %v3736 = vrot.slane %v3525, 2
        %v3737 = vsel %vm3268, %v3736, %v3735
        %v3738 = vrot.slane %v3526, 1
        %v3739 = vsel %vm3271, %v3738, %v3737
        %v3740 = vsel %vm3274, %v3527, %v3739
        %v3741 = vrot.slane %v3528, 7
        %v3742 = vsel %vm3277, %v3741, %v3740
        %v3743 = vpack.c.b16 %v3742, %v3728
        %3745 = vst [vmem:[#allocation2 + $0x70] sm:$0xff] %v3743
        %v3746 = vrot.slane %v3513, 7
        %v3747 = vrot.slane %v3514, 6
        %v3748 = vsel %vm3259, %v3747, %v3746
        %v3749 = vrot.slane %v3515, 5
        %v3750 = vsel %vm3262, %v3749, %v3748
        %v3751 = vrot.slane %v3516, 4
        %v3752 = vsel %vm3265, %v3751, %v3750
        %v3753 = vrot.slane %v3517, 3
        %v3754 = vsel %vm3268, %v3753, %v3752
        %v3755 = vrot.slane %v3518, 2
        %v3756 = vsel %vm3271, %v3755, %v3754
        %v3757 = vrot.slane %v3519, 1
        %v3758 = vsel %vm3274, %v3757, %v3756
        %v3759 = vsel %vm3277, %v3520, %v3758
        %v3760 = vrot.slane %v3521, 7
        %v3761 = vrot.slane %v3522, 6
        %v3762 = vsel %vm3259, %v3761, %v3760
        %v3763 = vrot.slane %v3523, 5
        %v3764 = vsel %vm3262, %v3763, %v3762
        %v3765 = vrot.slane %v3524, 4
        %v3766 = vsel %vm3265, %v3765, %v3764
        %v3767 = vrot.slane %v3525, 3
        %v3768 = vsel %vm3268, %v3767, %v3766
        %v3769 = vrot.slane %v3526, 2
        %v3770 = vsel %vm3271, %v3769, %v3768
        %v3771 = vrot.slane %v3527, 1
        %v3772 = vsel %vm3274, %v3771, %v3770
        %v3773 = vsel %vm3277, %v3528, %v3772
        %v3774 = vpack.c.b16 %v3773, %v3759
        %3776 = vst [vmem:[#allocation2 + $0x78] sm:$0xff] %v3774
        %v3777 = vld [vmem:[#allocation2] sm:$0xff]
        %v3778 = vld [vmem:[#allocation2 + $0x8] sm:$0xff]
        %v3779 = vld [vmem:[#allocation2 + $0x10] sm:$0xff]
        %v3780 = vld [vmem:[#allocation2 + $0x18] sm:$0xff]
        %v3781 = vld [vmem:[#allocation2 + $0x20] sm:$0xff]
        %v3782 = vld [vmem:[#allocation2 + $0x28] sm:$0xff]
        %v3783 = vld [vmem:[#allocation2 + $0x30] sm:$0xff]
        %v3784 = vld [vmem:[#allocation2 + $0x38] sm:$0xff]
        %v3785 = vld [vmem:[#allocation2 + $0x40] sm:$0xff]
        %v3786 = vld [vmem:[#allocation2 + $0x48] sm:$0xff]
        %v3787 = vld [vmem:[#allocation2 + $0x50] sm:$0xff]
        %v3788 = vld [vmem:[#allocation2 + $0x58] sm:$0xff]
        %v3789 = vld [vmem:[#allocation2 + $0x60] sm:$0xff]
        %v3790 = vld [vmem:[#allocation2 + $0x68] sm:$0xff]
        %v3791 = vld [vmem:[#allocation2 + $0x70] sm:$0xff]
        %v3792 = vld [vmem:[#allocation2 + $0x78] sm:$0xff]
        %v3793 = vld [vmem:[#allocation9] sm:$0xff]
        %v3794 = vld [vmem:[#allocation9 + $0x8] sm:$0xff]
        %v3795 = vld [vmem:[#allocation9 + $0x10] sm:$0xff]
        %v3796 = vld [vmem:[#allocation9 + $0x18] sm:$0xff]
        %v3797 = vld [vmem:[#allocation9 + $0x20] sm:$0xff]
        %v3798 = vld [vmem:[#allocation9 + $0x28] sm:$0xff]
        %v3799 = vld [vmem:[#allocation9 + $0x30] sm:$0xff]
        %v3800 = vld [vmem:[#allocation9 + $0x38] sm:$0xff]
        %v3801 = vld [vmem:[#allocation9 + $0x40] sm:$0xff]
        %v3802 = vld [vmem:[#allocation9 + $0x48] sm:$0xff]
        %v3803 = vld [vmem:[#allocation9 + $0x50] sm:$0xff]
        %v3804 = vld [vmem:[#allocation9 + $0x58] sm:$0xff]
        %v3805 = vld [vmem:[#allocation9 + $0x60] sm:$0xff]
        %v3806 = vld [vmem:[#allocation9 + $0x68] sm:$0xff]
        %v3807 = vld [vmem:[#allocation9 + $0x70] sm:$0xff]
        %v3808 = vld [vmem:[#allocation9 + $0x78] sm:$0xff]
        %v3809 = vld [vmem:[#allocation9 + $0x80] sm:$0xff]
        %v3810 = vld [vmem:[#allocation9 + $0x88] sm:$0xff]
        %v3811 = vld [vmem:[#allocation9 + $0x90] sm:$0xff]
        %v3812 = vld [vmem:[#allocation9 + $0x98] sm:$0xff]
        %v3813 = vld [vmem:[#allocation9 + $0xa0] sm:$0xff]
        %v3814 = vld [vmem:[#allocation9 + $0xa8] sm:$0xff]
        %v3815 = vld [vmem:[#allocation9 + $0xb0] sm:$0xff]
        %v3816 = vld [vmem:[#allocation9 + $0xb8] sm:$0xff]
        %v3817 = vld [vmem:[#allocation9 + $0xc0] sm:$0xff]
        %v3818 = vld [vmem:[#allocation9 + $0xc8] sm:$0xff]
        %v3819 = vld [vmem:[#allocation9 + $0xd0] sm:$0xff]
        %v3820 = vld [vmem:[#allocation9 + $0xd8] sm:$0xff]
        %v3821 = vld [vmem:[#allocation9 + $0xe0] sm:$0xff]
        %v3822 = vld [vmem:[#allocation9 + $0xe8] sm:$0xff]
        %v3823 = vld [vmem:[#allocation9 + $0xf0] sm:$0xff]
        %v3824 = vld [vmem:[#allocation9 + $0xf8] sm:$0xff]
        %v3825 = vld [vmem:[#allocation9 + $0x100] sm:$0xff]
        %v3826 = vld [vmem:[#allocation9 + $0x108] sm:$0xff]
        %v3827 = vld [vmem:[#allocation9 + $0x110] sm:$0xff]
        %v3828 = vld [vmem:[#allocation9 + $0x118] sm:$0xff]
        %v3829 = vld [vmem:[#allocation9 + $0x120] sm:$0xff]
        %v3830 = vld [vmem:[#allocation9 + $0x128] sm:$0xff]
        %v3831 = vld [vmem:[#allocation9 + $0x130] sm:$0xff]
        %v3832 = vld [vmem:[#allocation9 + $0x138] sm:$0xff]
        %v3833 = vld [vmem:[#allocation9 + $0x140] sm:$0xff]
        %v3834 = vld [vmem:[#allocation9 + $0x148] sm:$0xff]
        %v3835 = vld [vmem:[#allocation9 + $0x150] sm:$0xff]
        %v3836 = vld [vmem:[#allocation9 + $0x158] sm:$0xff]
        %v3837 = vld [vmem:[#allocation9 + $0x160] sm:$0xff]
        %v3838 = vld [vmem:[#allocation9 + $0x168] sm:$0xff]
        %v3839 = vld [vmem:[#allocation9 + $0x170] sm:$0xff]
        %v3840 = vld [vmem:[#allocation9 + $0x178] sm:$0xff]
        %v3841 = vld [vmem:[#allocation9 + $0x180] sm:$0xff]
        %v3842 = vld [vmem:[#allocation9 + $0x188] sm:$0xff]
        %v3843 = vld [vmem:[#allocation9 + $0x190] sm:$0xff]
        %v3844 = vld [vmem:[#allocation9 + $0x198] sm:$0xff]
        %v3845 = vld [vmem:[#allocation9 + $0x1a0] sm:$0xff]
        %v3846 = vld [vmem:[#allocation9 + $0x1a8] sm:$0xff]
        %v3847 = vld [vmem:[#allocation9 + $0x1b0] sm:$0xff]
        %v3848 = vld [vmem:[#allocation9 + $0x1b8] sm:$0xff]
        %v3849 = vld [vmem:[#allocation9 + $0x1c0] sm:$0xff]
        %v3850 = vld [vmem:[#allocation9 + $0x1c8] sm:$0xff]
        %v3851 = vld [vmem:[#allocation9 + $0x1d0] sm:$0xff]
        %v3852 = vld [vmem:[#allocation9 + $0x1d8] sm:$0xff]
        %v3853 = vld [vmem:[#allocation9 + $0x1e0] sm:$0xff]
        %v3854 = vld [vmem:[#allocation9 + $0x1e8] sm:$0xff]
        %v3855 = vld [vmem:[#allocation9 + $0x1f0] sm:$0xff]
        %v3856 = vld [vmem:[#allocation9 + $0x1f8] sm:$0xff]
        %v3857 = vld [vmem:[#allocation9 + $0x200] sm:$0xff]
        %v3858 = vld [vmem:[#allocation9 + $0x208] sm:$0xff]
        %v3859 = vld [vmem:[#allocation9 + $0x210] sm:$0xff]
        %v3860 = vld [vmem:[#allocation9 + $0x218] sm:$0xff]
        %v3861 = vld [vmem:[#allocation9 + $0x220] sm:$0xff]
        %v3862 = vld [vmem:[#allocation9 + $0x228] sm:$0xff]
        %v3863 = vld [vmem:[#allocation9 + $0x230] sm:$0xff]
        %v3864 = vld [vmem:[#allocation9 + $0x238] sm:$0xff]
        %v3865 = vld [vmem:[#allocation9 + $0x240] sm:$0xff]
        %v3866 = vld [vmem:[#allocation9 + $0x248] sm:$0xff]
        %v3867 = vld [vmem:[#allocation9 + $0x250] sm:$0xff]
        %v3868 = vld [vmem:[#allocation9 + $0x258] sm:$0xff]
        %v3869 = vld [vmem:[#allocation9 + $0x260] sm:$0xff]
        %v3870 = vld [vmem:[#allocation9 + $0x268] sm:$0xff]
        %v3871 = vld [vmem:[#allocation9 + $0x270] sm:$0xff]
        %v3872 = vld [vmem:[#allocation9 + $0x278] sm:$0xff]
        %v3873 = vld [vmem:[#allocation9 + $0x280] sm:$0xff]
        %v3874 = vld [vmem:[#allocation9 + $0x288] sm:$0xff]
        %v3875 = vld [vmem:[#allocation9 + $0x290] sm:$0xff]
        %v3876 = vld [vmem:[#allocation9 + $0x298] sm:$0xff]
        %v3877 = vld [vmem:[#allocation9 + $0x2a0] sm:$0xff]
        %v3878 = vld [vmem:[#allocation9 + $0x2a8] sm:$0xff]
        %v3879 = vld [vmem:[#allocation9 + $0x2b0] sm:$0xff]
        %v3880 = vld [vmem:[#allocation9 + $0x2b8] sm:$0xff]
        %v3881 = vld [vmem:[#allocation9 + $0x2c0] sm:$0xff]
        %v3882 = vld [vmem:[#allocation9 + $0x2c8] sm:$0xff]
        %v3883 = vld [vmem:[#allocation9 + $0x2d0] sm:$0xff]
        %v3884 = vld [vmem:[#allocation9 + $0x2d8] sm:$0xff]
        %v3885 = vld [vmem:[#allocation9 + $0x2e0] sm:$0xff]
        %v3886 = vld [vmem:[#allocation9 + $0x2e8] sm:$0xff]
        %v3887 = vld [vmem:[#allocation9 + $0x2f0] sm:$0xff]
        %v3888 = vld [vmem:[#allocation9 + $0x2f8] sm:$0xff]
        %v3889 = vld [vmem:[#allocation9 + $0x300] sm:$0xff]
        %v3890 = vld [vmem:[#allocation9 + $0x308] sm:$0xff]
        %v3891 = vld [vmem:[#allocation9 + $0x310] sm:$0xff]
        %v3892 = vld [vmem:[#allocation9 + $0x318] sm:$0xff]
        %v3893 = vld [vmem:[#allocation9 + $0x320] sm:$0xff]
        %v3894 = vld [vmem:[#allocation9 + $0x328] sm:$0xff]
        %v3895 = vld [vmem:[#allocation9 + $0x330] sm:$0xff]
        %v3896 = vld [vmem:[#allocation9 + $0x338] sm:$0xff]
        %v3897 = vld [vmem:[#allocation9 + $0x340] sm:$0xff]
        %v3898 = vld [vmem:[#allocation9 + $0x348] sm:$0xff]
        %v3899 = vld [vmem:[#allocation9 + $0x350] sm:$0xff]
        %v3900 = vld [vmem:[#allocation9 + $0x358] sm:$0xff]
        %v3901 = vld [vmem:[#allocation9 + $0x360] sm:$0xff]
        %v3902 = vld [vmem:[#allocation9 + $0x368] sm:$0xff]
        %v3903 = vld [vmem:[#allocation9 + $0x370] sm:$0xff]
        %v3904 = vld [vmem:[#allocation9 + $0x378] sm:$0xff]
        %v3905 = vld [vmem:[#allocation9 + $0x380] sm:$0xff]
        %v3906 = vld [vmem:[#allocation9 + $0x388] sm:$0xff]
        %v3907 = vld [vmem:[#allocation9 + $0x390] sm:$0xff]
        %v3908 = vld [vmem:[#allocation9 + $0x398] sm:$0xff]
        %v3909 = vld [vmem:[#allocation9 + $0x3a0] sm:$0xff]
        %v3910 = vld [vmem:[#allocation9 + $0x3a8] sm:$0xff]
        %v3911 = vld [vmem:[#allocation9 + $0x3b0] sm:$0xff]
        %v3912 = vld [vmem:[#allocation9 + $0x3b8] sm:$0xff]
        %v3913 = vld [vmem:[#allocation9 + $0x3c0] sm:$0xff]
        %v3914 = vld [vmem:[#allocation9 + $0x3c8] sm:$0xff]
        %v3915 = vld [vmem:[#allocation9 + $0x3d0] sm:$0xff]
        %v3916 = vld [vmem:[#allocation9 + $0x3d8] sm:$0xff]
        %v3917 = vld [vmem:[#allocation9 + $0x3e0] sm:$0xff]
        %v3918 = vld [vmem:[#allocation9 + $0x3e8] sm:$0xff]
        %v3919 = vld [vmem:[#allocation9 + $0x3f0] sm:$0xff]
        %v3920 = vld [vmem:[#allocation9 + $0x3f8] sm:$0xff]
        %v3921 = vld [vmem:[#allocation9 + $0x400] sm:$0xff]
        %v3922 = vld [vmem:[#allocation9 + $0x408] sm:$0xff]
        %v3923 = vld [vmem:[#allocation9 + $0x410] sm:$0xff]
        %v3924 = vld [vmem:[#allocation9 + $0x418] sm:$0xff]
        %v3925 = vld [vmem:[#allocation9 + $0x420] sm:$0xff]
        %v3926 = vld [vmem:[#allocation9 + $0x428] sm:$0xff]
        %v3927 = vld [vmem:[#allocation9 + $0x430] sm:$0xff]
        %v3928 = vld [vmem:[#allocation9 + $0x438] sm:$0xff]
        %v3929 = vld [vmem:[#allocation9 + $0x440] sm:$0xff]
        %v3930 = vld [vmem:[#allocation9 + $0x448] sm:$0xff]
        %v3931 = vld [vmem:[#allocation9 + $0x450] sm:$0xff]
        %v3932 = vld [vmem:[#allocation9 + $0x458] sm:$0xff]
        %v3933 = vld [vmem:[#allocation9 + $0x460] sm:$0xff]
        %v3934 = vld [vmem:[#allocation9 + $0x468] sm:$0xff]
        %v3935 = vld [vmem:[#allocation9 + $0x470] sm:$0xff]
        %v3936 = vld [vmem:[#allocation9 + $0x478] sm:$0xff]
        %v3937 = vld [vmem:[#allocation9 + $0x480] sm:$0xff]
        %v3938 = vld [vmem:[#allocation9 + $0x488] sm:$0xff]
        %v3939 = vld [vmem:[#allocation9 + $0x490] sm:$0xff]
        %v3940 = vld [vmem:[#allocation9 + $0x498] sm:$0xff]
        %v3941 = vld [vmem:[#allocation9 + $0x4a0] sm:$0xff]
        %v3942 = vld [vmem:[#allocation9 + $0x4a8] sm:$0xff]
        %v3943 = vld [vmem:[#allocation9 + $0x4b0] sm:$0xff]
        %v3944 = vld [vmem:[#allocation9 + $0x4b8] sm:$0xff]
        %v3945 = vld [vmem:[#allocation9 + $0x4c0] sm:$0xff]
        %v3946 = vld [vmem:[#allocation9 + $0x4c8] sm:$0xff]
        %v3947 = vld [vmem:[#allocation9 + $0x4d0] sm:$0xff]
        %v3948 = vld [vmem:[#allocation9 + $0x4d8] sm:$0xff]
        %v3949 = vld [vmem:[#allocation9 + $0x4e0] sm:$0xff]
        %v3950 = vld [vmem:[#allocation9 + $0x4e8] sm:$0xff]
        %v3951 = vld [vmem:[#allocation9 + $0x4f0] sm:$0xff]
        %v3952 = vld [vmem:[#allocation9 + $0x4f8] sm:$0xff]
        %v3953 = vld [vmem:[#allocation9 + $0x500] sm:$0xff]
        %v3954 = vld [vmem:[#allocation9 + $0x508] sm:$0xff]
        %v3955 = vld [vmem:[#allocation9 + $0x510] sm:$0xff]
        %v3956 = vld [vmem:[#allocation9 + $0x518] sm:$0xff]
        %v3957 = vld [vmem:[#allocation9 + $0x520] sm:$0xff]
        %v3958 = vld [vmem:[#allocation9 + $0x528] sm:$0xff]
        %v3959 = vld [vmem:[#allocation9 + $0x530] sm:$0xff]
        %v3960 = vld [vmem:[#allocation9 + $0x538] sm:$0xff]
        %v3961 = vld [vmem:[#allocation9 + $0x540] sm:$0xff]
        %v3962 = vld [vmem:[#allocation9 + $0x548] sm:$0xff]
        %v3963 = vld [vmem:[#allocation9 + $0x550] sm:$0xff]
        %v3964 = vld [vmem:[#allocation9 + $0x558] sm:$0xff]
        %v3965 = vld [vmem:[#allocation9 + $0x560] sm:$0xff]
        %v3966 = vld [vmem:[#allocation9 + $0x568] sm:$0xff]
        %v3967 = vld [vmem:[#allocation9 + $0x570] sm:$0xff]
        %v3968 = vld [vmem:[#allocation9 + $0x578] sm:$0xff]
        %v3969 = vld [vmem:[#allocation9 + $0x580] sm:$0xff]
        %v3970 = vld [vmem:[#allocation9 + $0x588] sm:$0xff]
        %v3971 = vld [vmem:[#allocation9 + $0x590] sm:$0xff]
        %v3972 = vld [vmem:[#allocation9 + $0x598] sm:$0xff]
        %v3973 = vld [vmem:[#allocation9 + $0x5a0] sm:$0xff]
        %v3974 = vld [vmem:[#allocation9 + $0x5a8] sm:$0xff]
        %v3975 = vld [vmem:[#allocation9 + $0x5b0] sm:$0xff]
        %v3976 = vld [vmem:[#allocation9 + $0x5b8] sm:$0xff]
        %v3977 = vld [vmem:[#allocation9 + $0x5c0] sm:$0xff]
        %v3978 = vld [vmem:[#allocation9 + $0x5c8] sm:$0xff]
        %v3979 = vld [vmem:[#allocation9 + $0x5d0] sm:$0xff]
        %v3980 = vld [vmem:[#allocation9 + $0x5d8] sm:$0xff]
        %v3981 = vld [vmem:[#allocation9 + $0x5e0] sm:$0xff]
        %v3982 = vld [vmem:[#allocation9 + $0x5e8] sm:$0xff]
        %v3983 = vld [vmem:[#allocation9 + $0x5f0] sm:$0xff]
        %v3984 = vld [vmem:[#allocation9 + $0x5f8] sm:$0xff]
        %v3985 = vld [vmem:[#allocation9 + $0x600] sm:$0xff]
        %v3986 = vld [vmem:[#allocation9 + $0x608] sm:$0xff]
        %v3987 = vld [vmem:[#allocation9 + $0x610] sm:$0xff]
        %v3988 = vld [vmem:[#allocation9 + $0x618] sm:$0xff]
        %v3989 = vld [vmem:[#allocation9 + $0x620] sm:$0xff]
        %v3990 = vld [vmem:[#allocation9 + $0x628] sm:$0xff]
        %v3991 = vld [vmem:[#allocation9 + $0x630] sm:$0xff]
        %v3992 = vld [vmem:[#allocation9 + $0x638] sm:$0xff]
        %v3993 = vld [vmem:[#allocation9 + $0x640] sm:$0xff]
        %v3994 = vld [vmem:[#allocation9 + $0x648] sm:$0xff]
        %v3995 = vld [vmem:[#allocation9 + $0x650] sm:$0xff]
        %v3996 = vld [vmem:[#allocation9 + $0x658] sm:$0xff]
        %v3997 = vld [vmem:[#allocation9 + $0x660] sm:$0xff]
        %v3998 = vld [vmem:[#allocation9 + $0x668] sm:$0xff]
        %v3999 = vld [vmem:[#allocation9 + $0x670] sm:$0xff]
        %v4000 = vld [vmem:[#allocation9 + $0x678] sm:$0xff]
        %v4001 = vld [vmem:[#allocation9 + $0x680] sm:$0xff]
        %v4002 = vld [vmem:[#allocation9 + $0x688] sm:$0xff]
        %v4003 = vld [vmem:[#allocation9 + $0x690] sm:$0xff]
        %v4004 = vld [vmem:[#allocation9 + $0x698] sm:$0xff]
        %v4005 = vld [vmem:[#allocation9 + $0x6a0] sm:$0xff]
        %v4006 = vld [vmem:[#allocation9 + $0x6a8] sm:$0xff]
        %v4007 = vld [vmem:[#allocation9 + $0x6b0] sm:$0xff]
        %v4008 = vld [vmem:[#allocation9 + $0x6b8] sm:$0xff]
        %v4009 = vld [vmem:[#allocation9 + $0x6c0] sm:$0xff]
        %v4010 = vld [vmem:[#allocation9 + $0x6c8] sm:$0xff]
        %v4011 = vld [vmem:[#allocation9 + $0x6d0] sm:$0xff]
        %v4012 = vld [vmem:[#allocation9 + $0x6d8] sm:$0xff]
        %v4013 = vld [vmem:[#allocation9 + $0x6e0] sm:$0xff]
        %v4014 = vld [vmem:[#allocation9 + $0x6e8] sm:$0xff]
        %v4015 = vld [vmem:[#allocation9 + $0x6f0] sm:$0xff]
        %v4016 = vld [vmem:[#allocation9 + $0x6f8] sm:$0xff]
        %v4017 = vld [vmem:[#allocation9 + $0x700] sm:$0xff]
        %v4018 = vld [vmem:[#allocation9 + $0x708] sm:$0xff]
        %v4019 = vld [vmem:[#allocation9 + $0x710] sm:$0xff]
        %v4020 = vld [vmem:[#allocation9 + $0x718] sm:$0xff]
        %v4021 = vld [vmem:[#allocation9 + $0x720] sm:$0xff]
        %v4022 = vld [vmem:[#allocation9 + $0x728] sm:$0xff]
        %v4023 = vld [vmem:[#allocation9 + $0x730] sm:$0xff]
        %v4024 = vld [vmem:[#allocation9 + $0x738] sm:$0xff]
        %v4025 = vld [vmem:[#allocation9 + $0x740] sm:$0xff]
        %v4026 = vld [vmem:[#allocation9 + $0x748] sm:$0xff]
        %v4027 = vld [vmem:[#allocation9 + $0x750] sm:$0xff]
        %v4028 = vld [vmem:[#allocation9 + $0x758] sm:$0xff]
        %v4029 = vld [vmem:[#allocation9 + $0x760] sm:$0xff]
        %v4030 = vld [vmem:[#allocation9 + $0x768] sm:$0xff]
        %v4031 = vld [vmem:[#allocation9 + $0x770] sm:$0xff]
        %v4032 = vld [vmem:[#allocation9 + $0x778] sm:$0xff]
        %v4033 = vld [vmem:[#allocation9 + $0x780] sm:$0xff]
        %v4034 = vld [vmem:[#allocation9 + $0x788] sm:$0xff]
        %v4035 = vld [vmem:[#allocation9 + $0x790] sm:$0xff]
        %v4036 = vld [vmem:[#allocation9 + $0x798] sm:$0xff]
        %v4037 = vld [vmem:[#allocation9 + $0x7a0] sm:$0xff]
        %v4038 = vld [vmem:[#allocation9 + $0x7a8] sm:$0xff]
        %v4039 = vld [vmem:[#allocation9 + $0x7b0] sm:$0xff]
        %v4040 = vld [vmem:[#allocation9 + $0x7b8] sm:$0xff]
        %v4041 = vld [vmem:[#allocation9 + $0x7c0] sm:$0xff]
        %v4042 = vld [vmem:[#allocation9 + $0x7c8] sm:$0xff]
        %v4043 = vld [vmem:[#allocation9 + $0x7d0] sm:$0xff]
        %v4044 = vld [vmem:[#allocation9 + $0x7d8] sm:$0xff]
        %v4045 = vld [vmem:[#allocation9 + $0x7e0] sm:$0xff]
        %v4046 = vld [vmem:[#allocation9 + $0x7e8] sm:$0xff]
        %v4047 = vld [vmem:[#allocation9 + $0x7f0] sm:$0xff]
        %v4048 = vld [vmem:[#allocation9 + $0x7f8] sm:$0xff]
        %v4049 = vld [vmem:[#allocation9 + $0x800] sm:$0xff]
        %v4050 = vld [vmem:[#allocation9 + $0x808] sm:$0xff]
        %v4051 = vld [vmem:[#allocation9 + $0x810] sm:$0xff]
        %v4052 = vld [vmem:[#allocation9 + $0x818] sm:$0xff]
        %v4053 = vld [vmem:[#allocation9 + $0x820] sm:$0xff]
        %v4054 = vld [vmem:[#allocation9 + $0x828] sm:$0xff]
        %v4055 = vld [vmem:[#allocation9 + $0x830] sm:$0xff]
        %v4056 = vld [vmem:[#allocation9 + $0x838] sm:$0xff]
        %v4057 = vld [vmem:[#allocation9 + $0x840] sm:$0xff]
        %v4058 = vld [vmem:[#allocation9 + $0x848] sm:$0xff]
        %v4059 = vld [vmem:[#allocation9 + $0x850] sm:$0xff]
        %v4060 = vld [vmem:[#allocation9 + $0x858] sm:$0xff]
        %v4061 = vld [vmem:[#allocation9 + $0x860] sm:$0xff]
        %v4062 = vld [vmem:[#allocation9 + $0x868] sm:$0xff]
        %v4063 = vld [vmem:[#allocation9 + $0x870] sm:$0xff]
        %v4064 = vld [vmem:[#allocation9 + $0x878] sm:$0xff]
        %v4065 = vld [vmem:[#allocation9 + $0x880] sm:$0xff]
        %v4066 = vld [vmem:[#allocation9 + $0x888] sm:$0xff]
        %v4067 = vld [vmem:[#allocation9 + $0x890] sm:$0xff]
        %v4068 = vld [vmem:[#allocation9 + $0x898] sm:$0xff]
        %v4069 = vld [vmem:[#allocation9 + $0x8a0] sm:$0xff]
        %v4070 = vld [vmem:[#allocation9 + $0x8a8] sm:$0xff]
        %v4071 = vld [vmem:[#allocation9 + $0x8b0] sm:$0xff]
        %v4072 = vld [vmem:[#allocation9 + $0x8b8] sm:$0xff]
        %v4073 = vld [vmem:[#allocation9 + $0x8c0] sm:$0xff]
        %v4074 = vld [vmem:[#allocation9 + $0x8c8] sm:$0xff]
        %v4075 = vld [vmem:[#allocation9 + $0x8d0] sm:$0xff]
        %v4076 = vld [vmem:[#allocation9 + $0x8d8] sm:$0xff]
        %v4077 = vld [vmem:[#allocation9 + $0x8e0] sm:$0xff]
        %v4078 = vld [vmem:[#allocation9 + $0x8e8] sm:$0xff]
        %v4079 = vld [vmem:[#allocation9 + $0x8f0] sm:$0xff]
        %v4080 = vld [vmem:[#allocation9 + $0x8f8] sm:$0xff]
        %v4081 = vld [vmem:[#allocation9 + $0x900] sm:$0xff]
        %v4082 = vld [vmem:[#allocation9 + $0x908] sm:$0xff]
        %v4083 = vld [vmem:[#allocation9 + $0x910] sm:$0xff]
        %v4084 = vld [vmem:[#allocation9 + $0x918] sm:$0xff]
        %v4085 = vld [vmem:[#allocation9 + $0x920] sm:$0xff]
        %v4086 = vld [vmem:[#allocation9 + $0x928] sm:$0xff]
        %v4087 = vld [vmem:[#allocation9 + $0x930] sm:$0xff]
        %v4088 = vld [vmem:[#allocation9 + $0x938] sm:$0xff]
        %v4089 = vld [vmem:[#allocation9 + $0x940] sm:$0xff]
        %v4090 = vld [vmem:[#allocation9 + $0x948] sm:$0xff]
        %v4091 = vld [vmem:[#allocation9 + $0x950] sm:$0xff]
        %v4092 = vld [vmem:[#allocation9 + $0x958] sm:$0xff]
        %v4093 = vld [vmem:[#allocation9 + $0x960] sm:$0xff]
        %v4094 = vld [vmem:[#allocation9 + $0x968] sm:$0xff]
        %v4095 = vld [vmem:[#allocation9 + $0x970] sm:$0xff]
        %v4096 = vld [vmem:[#allocation9 + $0x978] sm:$0xff]
        %v4097 = vld [vmem:[#allocation9 + $0x980] sm:$0xff]
        %v4098 = vld [vmem:[#allocation9 + $0x988] sm:$0xff]
        %v4099 = vld [vmem:[#allocation9 + $0x990] sm:$0xff]
        %v4100 = vld [vmem:[#allocation9 + $0x998] sm:$0xff]
        %v4101 = vld [vmem:[#allocation9 + $0x9a0] sm:$0xff]
        %v4102 = vld [vmem:[#allocation9 + $0x9a8] sm:$0xff]
        %v4103 = vld [vmem:[#allocation9 + $0x9b0] sm:$0xff]
        %v4104 = vld [vmem:[#allocation9 + $0x9b8] sm:$0xff]
        %v4105 = vld [vmem:[#allocation9 + $0x9c0] sm:$0xff]
        %v4106 = vld [vmem:[#allocation9 + $0x9c8] sm:$0xff]
        %v4107 = vld [vmem:[#allocation9 + $0x9d0] sm:$0xff]
        %v4108 = vld [vmem:[#allocation9 + $0x9d8] sm:$0xff]
        %v4109 = vld [vmem:[#allocation9 + $0x9e0] sm:$0xff]
        %v4110 = vld [vmem:[#allocation9 + $0x9e8] sm:$0xff]
        %v4111 = vld [vmem:[#allocation9 + $0x9f0] sm:$0xff]
        %v4112 = vld [vmem:[#allocation9 + $0x9f8] sm:$0xff]
        %v4113 = vld [vmem:[#allocation9 + $0xa00] sm:$0xff]
        %v4114 = vld [vmem:[#allocation9 + $0xa08] sm:$0xff]
        %v4115 = vld [vmem:[#allocation9 + $0xa10] sm:$0xff]
        %v4116 = vld [vmem:[#allocation9 + $0xa18] sm:$0xff]
        %v4117 = vld [vmem:[#allocation9 + $0xa20] sm:$0xff]
        %v4118 = vld [vmem:[#allocation9 + $0xa28] sm:$0xff]
        %v4119 = vld [vmem:[#allocation9 + $0xa30] sm:$0xff]
        %v4120 = vld [vmem:[#allocation9 + $0xa38] sm:$0xff]
        %v4121 = vld [vmem:[#allocation9 + $0xa40] sm:$0xff]
        %v4122 = vld [vmem:[#allocation9 + $0xa48] sm:$0xff]
        %v4123 = vld [vmem:[#allocation9 + $0xa50] sm:$0xff]
        %v4124 = vld [vmem:[#allocation9 + $0xa58] sm:$0xff]
        %v4125 = vld [vmem:[#allocation9 + $0xa60] sm:$0xff]
        %v4126 = vld [vmem:[#allocation9 + $0xa68] sm:$0xff]
        %v4127 = vld [vmem:[#allocation9 + $0xa70] sm:$0xff]
        %v4128 = vld [vmem:[#allocation9 + $0xa78] sm:$0xff]
        %v4129 = vld [vmem:[#allocation9 + $0xa80] sm:$0xff]
        %v4130 = vld [vmem:[#allocation9 + $0xa88] sm:$0xff]
        %v4131 = vld [vmem:[#allocation9 + $0xa90] sm:$0xff]
        %v4132 = vld [vmem:[#allocation9 + $0xa98] sm:$0xff]
        %v4133 = vld [vmem:[#allocation9 + $0xaa0] sm:$0xff]
        %v4134 = vld [vmem:[#allocation9 + $0xaa8] sm:$0xff]
        %v4135 = vld [vmem:[#allocation9 + $0xab0] sm:$0xff]
        %v4136 = vld [vmem:[#allocation9 + $0xab8] sm:$0xff]
        %v4137 = vld [vmem:[#allocation9 + $0xac0] sm:$0xff]
        %v4138 = vld [vmem:[#allocation9 + $0xac8] sm:$0xff]
        %v4139 = vld [vmem:[#allocation9 + $0xad0] sm:$0xff]
        %v4140 = vld [vmem:[#allocation9 + $0xad8] sm:$0xff]
        %v4141 = vld [vmem:[#allocation9 + $0xae0] sm:$0xff]
        %v4142 = vld [vmem:[#allocation9 + $0xae8] sm:$0xff]
        %v4143 = vld [vmem:[#allocation9 + $0xaf0] sm:$0xff]
        %v4144 = vld [vmem:[#allocation9 + $0xaf8] sm:$0xff]
        %v4145 = vld [vmem:[#allocation9 + $0xb00] sm:$0xff]
        %v4146 = vld [vmem:[#allocation9 + $0xb08] sm:$0xff]
        %v4147 = vld [vmem:[#allocation9 + $0xb10] sm:$0xff]
        %v4148 = vld [vmem:[#allocation9 + $0xb18] sm:$0xff]
        %v4149 = vld [vmem:[#allocation9 + $0xb20] sm:$0xff]
        %v4150 = vld [vmem:[#allocation9 + $0xb28] sm:$0xff]
        %v4151 = vld [vmem:[#allocation9 + $0xb30] sm:$0xff]
        %v4152 = vld [vmem:[#allocation9 + $0xb38] sm:$0xff]
        %v4153 = vld [vmem:[#allocation9 + $0xb40] sm:$0xff]
        %v4154 = vld [vmem:[#allocation9 + $0xb48] sm:$0xff]
        %v4155 = vld [vmem:[#allocation9 + $0xb50] sm:$0xff]
        %v4156 = vld [vmem:[#allocation9 + $0xb58] sm:$0xff]
        %v4157 = vld [vmem:[#allocation9 + $0xb60] sm:$0xff]
        %v4158 = vld [vmem:[#allocation9 + $0xb68] sm:$0xff]
        %v4159 = vld [vmem:[#allocation9 + $0xb70] sm:$0xff]
        %v4160 = vld [vmem:[#allocation9 + $0xb78] sm:$0xff]
        %v4161 = vld [vmem:[#allocation9 + $0xb80] sm:$0xff]
        %v4162 = vld [vmem:[#allocation9 + $0xb88] sm:$0xff]
        %v4163 = vld [vmem:[#allocation9 + $0xb90] sm:$0xff]
        %v4164 = vld [vmem:[#allocation9 + $0xb98] sm:$0xff]
        %v4165 = vld [vmem:[#allocation9 + $0xba0] sm:$0xff]
        %v4166 = vld [vmem:[#allocation9 + $0xba8] sm:$0xff]
        %v4167 = vld [vmem:[#allocation9 + $0xbb0] sm:$0xff]
        %v4168 = vld [vmem:[#allocation9 + $0xbb8] sm:$0xff]
        %v4169 = vld [vmem:[#allocation9 + $0xbc0] sm:$0xff]
        %v4170 = vld [vmem:[#allocation9 + $0xbc8] sm:$0xff]
        %v4171 = vld [vmem:[#allocation9 + $0xbd0] sm:$0xff]
        %v4172 = vld [vmem:[#allocation9 + $0xbd8] sm:$0xff]
        %v4173 = vld [vmem:[#allocation9 + $0xbe0] sm:$0xff]
        %v4174 = vld [vmem:[#allocation9 + $0xbe8] sm:$0xff]
        %v4175 = vld [vmem:[#allocation9 + $0xbf0] sm:$0xff]
        %v4176 = vld [vmem:[#allocation9 + $0xbf8] sm:$0xff]
        %v4177 = vld [vmem:[#allocation9 + $0xc00] sm:$0xff]
        %v4178 = vld [vmem:[#allocation9 + $0xc08] sm:$0xff]
        %v4179 = vld [vmem:[#allocation9 + $0xc10] sm:$0xff]
        %v4180 = vld [vmem:[#allocation9 + $0xc18] sm:$0xff]
        %v4181 = vld [vmem:[#allocation9 + $0xc20] sm:$0xff]
        %v4182 = vld [vmem:[#allocation9 + $0xc28] sm:$0xff]
        %v4183 = vld [vmem:[#allocation9 + $0xc30] sm:$0xff]
        %v4184 = vld [vmem:[#allocation9 + $0xc38] sm:$0xff]
        %v4185 = vld [vmem:[#allocation9 + $0xc40] sm:$0xff]
        %v4186 = vld [vmem:[#allocation9 + $0xc48] sm:$0xff]
        %v4187 = vld [vmem:[#allocation9 + $0xc50] sm:$0xff]
        %v4188 = vld [vmem:[#allocation9 + $0xc58] sm:$0xff]
        %v4189 = vld [vmem:[#allocation9 + $0xc60] sm:$0xff]
        %v4190 = vld [vmem:[#allocation9 + $0xc68] sm:$0xff]
        %v4191 = vld [vmem:[#allocation9 + $0xc70] sm:$0xff]
        %v4192 = vld [vmem:[#allocation9 + $0xc78] sm:$0xff]
        %v4193 = vld [vmem:[#allocation9 + $0xc80] sm:$0xff]
        %v4194 = vld [vmem:[#allocation9 + $0xc88] sm:$0xff]
        %v4195 = vld [vmem:[#allocation9 + $0xc90] sm:$0xff]
        %v4196 = vld [vmem:[#allocation9 + $0xc98] sm:$0xff]
        %v4197 = vld [vmem:[#allocation9 + $0xca0] sm:$0xff]
        %v4198 = vld [vmem:[#allocation9 + $0xca8] sm:$0xff]
        %v4199 = vld [vmem:[#allocation9 + $0xcb0] sm:$0xff]
        %v4200 = vld [vmem:[#allocation9 + $0xcb8] sm:$0xff]
        %v4201 = vld [vmem:[#allocation9 + $0xcc0] sm:$0xff]
        %v4202 = vld [vmem:[#allocation9 + $0xcc8] sm:$0xff]
        %v4203 = vld [vmem:[#allocation9 + $0xcd0] sm:$0xff]
        %v4204 = vld [vmem:[#allocation9 + $0xcd8] sm:$0xff]
        %v4205 = vld [vmem:[#allocation9 + $0xce0] sm:$0xff]
        %v4206 = vld [vmem:[#allocation9 + $0xce8] sm:$0xff]
        %v4207 = vld [vmem:[#allocation9 + $0xcf0] sm:$0xff]
        %v4208 = vld [vmem:[#allocation9 + $0xcf8] sm:$0xff]
        %v4209 = vld [vmem:[#allocation9 + $0xd00] sm:$0xff]
        %v4210 = vld [vmem:[#allocation9 + $0xd08] sm:$0xff]
        %v4211 = vld [vmem:[#allocation9 + $0xd10] sm:$0xff]
        %v4212 = vld [vmem:[#allocation9 + $0xd18] sm:$0xff]
        %v4213 = vld [vmem:[#allocation9 + $0xd20] sm:$0xff]
        %v4214 = vld [vmem:[#allocation9 + $0xd28] sm:$0xff]
        %v4215 = vld [vmem:[#allocation9 + $0xd30] sm:$0xff]
        %v4216 = vld [vmem:[#allocation9 + $0xd38] sm:$0xff]
        %v4217 = vld [vmem:[#allocation9 + $0xd40] sm:$0xff]
        %v4218 = vld [vmem:[#allocation9 + $0xd48] sm:$0xff]
        %v4219 = vld [vmem:[#allocation9 + $0xd50] sm:$0xff]
        %v4220 = vld [vmem:[#allocation9 + $0xd58] sm:$0xff]
        %v4221 = vld [vmem:[#allocation9 + $0xd60] sm:$0xff]
        %v4222 = vld [vmem:[#allocation9 + $0xd68] sm:$0xff]
        %v4223 = vld [vmem:[#allocation9 + $0xd70] sm:$0xff]
        %v4224 = vld [vmem:[#allocation9 + $0xd78] sm:$0xff]
        %v4225 = vld [vmem:[#allocation9 + $0xd80] sm:$0xff]
        %v4226 = vld [vmem:[#allocation9 + $0xd88] sm:$0xff]
        %v4227 = vld [vmem:[#allocation9 + $0xd90] sm:$0xff]
        %v4228 = vld [vmem:[#allocation9 + $0xd98] sm:$0xff]
        %v4229 = vld [vmem:[#allocation9 + $0xda0] sm:$0xff]
        %v4230 = vld [vmem:[#allocation9 + $0xda8] sm:$0xff]
        %v4231 = vld [vmem:[#allocation9 + $0xdb0] sm:$0xff]
        %v4232 = vld [vmem:[#allocation9 + $0xdb8] sm:$0xff]
        %v4233 = vld [vmem:[#allocation9 + $0xdc0] sm:$0xff]
        %v4234 = vld [vmem:[#allocation9 + $0xdc8] sm:$0xff]
        %v4235 = vld [vmem:[#allocation9 + $0xdd0] sm:$0xff]
        %v4236 = vld [vmem:[#allocation9 + $0xdd8] sm:$0xff]
        %v4237 = vld [vmem:[#allocation9 + $0xde0] sm:$0xff]
        %v4238 = vld [vmem:[#allocation9 + $0xde8] sm:$0xff]
        %v4239 = vld [vmem:[#allocation9 + $0xdf0] sm:$0xff]
        %v4240 = vld [vmem:[#allocation9 + $0xdf8] sm:$0xff]
        %v4241 = vld [vmem:[#allocation9 + $0xe00] sm:$0xff]
        %v4242 = vld [vmem:[#allocation9 + $0xe08] sm:$0xff]
        %v4243 = vld [vmem:[#allocation9 + $0xe10] sm:$0xff]
        %v4244 = vld [vmem:[#allocation9 + $0xe18] sm:$0xff]
        %v4245 = vld [vmem:[#allocation9 + $0xe20] sm:$0xff]
        %v4246 = vld [vmem:[#allocation9 + $0xe28] sm:$0xff]
        %v4247 = vld [vmem:[#allocation9 + $0xe30] sm:$0xff]
        %v4248 = vld [vmem:[#allocation9 + $0xe38] sm:$0xff]
        %v4249 = vld [vmem:[#allocation9 + $0xe40] sm:$0xff]
        %v4250 = vld [vmem:[#allocation9 + $0xe48] sm:$0xff]
        %v4251 = vld [vmem:[#allocation9 + $0xe50] sm:$0xff]
        %v4252 = vld [vmem:[#allocation9 + $0xe58] sm:$0xff]
        %v4253 = vld [vmem:[#allocation9 + $0xe60] sm:$0xff]
        %v4254 = vld [vmem:[#allocation9 + $0xe68] sm:$0xff]
        %v4255 = vld [vmem:[#allocation9 + $0xe70] sm:$0xff]
        %v4256 = vld [vmem:[#allocation9 + $0xe78] sm:$0xff]
        %v4257 = vld [vmem:[#allocation9 + $0xe80] sm:$0xff]
        %v4258 = vld [vmem:[#allocation9 + $0xe88] sm:$0xff]
        %v4259 = vld [vmem:[#allocation9 + $0xe90] sm:$0xff]
        %v4260 = vld [vmem:[#allocation9 + $0xe98] sm:$0xff]
        %v4261 = vld [vmem:[#allocation9 + $0xea0] sm:$0xff]
        %v4262 = vld [vmem:[#allocation9 + $0xea8] sm:$0xff]
        %v4263 = vld [vmem:[#allocation9 + $0xeb0] sm:$0xff]
        %v4264 = vld [vmem:[#allocation9 + $0xeb8] sm:$0xff]
        %v4265 = vld [vmem:[#allocation9 + $0xec0] sm:$0xff]
        %v4266 = vld [vmem:[#allocation9 + $0xec8] sm:$0xff]
        %v4267 = vld [vmem:[#allocation9 + $0xed0] sm:$0xff]
        %v4268 = vld [vmem:[#allocation9 + $0xed8] sm:$0xff]
        %v4269 = vld [vmem:[#allocation9 + $0xee0] sm:$0xff]
        %v4270 = vld [vmem:[#allocation9 + $0xee8] sm:$0xff]
        %v4271 = vld [vmem:[#allocation9 + $0xef0] sm:$0xff]
        %v4272 = vld [vmem:[#allocation9 + $0xef8] sm:$0xff]
        %v4273 = vld [vmem:[#allocation9 + $0xf00] sm:$0xff]
        %v4274 = vld [vmem:[#allocation9 + $0xf08] sm:$0xff]
        %v4275 = vld [vmem:[#allocation9 + $0xf10] sm:$0xff]
        %v4276 = vld [vmem:[#allocation9 + $0xf18] sm:$0xff]
        %v4277 = vld [vmem:[#allocation9 + $0xf20] sm:$0xff]
        %v4278 = vld [vmem:[#allocation9 + $0xf28] sm:$0xff]
        %v4279 = vld [vmem:[#allocation9 + $0xf30] sm:$0xff]
        %v4280 = vld [vmem:[#allocation9 + $0xf38] sm:$0xff]
        %v4281 = vld [vmem:[#allocation9 + $0xf40] sm:$0xff]
        %v4282 = vld [vmem:[#allocation9 + $0xf48] sm:$0xff]
        %v4283 = vld [vmem:[#allocation9 + $0xf50] sm:$0xff]
        %v4284 = vld [vmem:[#allocation9 + $0xf58] sm:$0xff]
        %v4285 = vld [vmem:[#allocation9 + $0xf60] sm:$0xff]
        %v4286 = vld [vmem:[#allocation9 + $0xf68] sm:$0xff]
        %v4287 = vld [vmem:[#allocation9 + $0xf70] sm:$0xff]
        %v4288 = vld [vmem:[#allocation9 + $0xf78] sm:$0xff]
        %v4289 = vld [vmem:[#allocation9 + $0xf80] sm:$0xff]
        %v4290 = vld [vmem:[#allocation9 + $0xf88] sm:$0xff]
        %v4291 = vld [vmem:[#allocation9 + $0xf90] sm:$0xff]
        %v4292 = vld [vmem:[#allocation9 + $0xf98] sm:$0xff]
        %v4293 = vld [vmem:[#allocation9 + $0xfa0] sm:$0xff]
        %v4294 = vld [vmem:[#allocation9 + $0xfa8] sm:$0xff]
        %v4295 = vld [vmem:[#allocation9 + $0xfb0] sm:$0xff]
        %v4296 = vld [vmem:[#allocation9 + $0xfb8] sm:$0xff]
        %v4297 = vld [vmem:[#allocation9 + $0xfc0] sm:$0xff]
        %v4298 = vld [vmem:[#allocation9 + $0xfc8] sm:$0xff]
        %v4299 = vld [vmem:[#allocation9 + $0xfd0] sm:$0xff]
        %v4300 = vld [vmem:[#allocation9 + $0xfd8] sm:$0xff]
        %v4301 = vld [vmem:[#allocation9 + $0xfe0] sm:$0xff]
        %v4302 = vld [vmem:[#allocation9 + $0xfe8] sm:$0xff]
        %v4303 = vld [vmem:[#allocation9 + $0xff0] sm:$0xff]
        %v4304 = vld [vmem:[#allocation9 + $0xff8] sm:$0xff]
        %v4305 = vld [vmem:[#allocation9 + $0x1000] sm:$0xff]
        %v4306 = vld [vmem:[#allocation9 + $0x1008] sm:$0xff]
        %v4307 = vld [vmem:[#allocation9 + $0x1010] sm:$0xff]
        %v4308 = vld [vmem:[#allocation9 + $0x1018] sm:$0xff]
        %v4309 = vld [vmem:[#allocation9 + $0x1020] sm:$0xff]
        %v4310 = vld [vmem:[#allocation9 + $0x1028] sm:$0xff]
        %v4311 = vld [vmem:[#allocation9 + $0x1030] sm:$0xff]
        %v4312 = vld [vmem:[#allocation9 + $0x1038] sm:$0xff]
        %v4313 = vld [vmem:[#allocation9 + $0x1040] sm:$0xff]
        %v4314 = vld [vmem:[#allocation9 + $0x1048] sm:$0xff]
        %v4315 = vld [vmem:[#allocation9 + $0x1050] sm:$0xff]
        %v4316 = vld [vmem:[#allocation9 + $0x1058] sm:$0xff]
        %v4317 = vld [vmem:[#allocation9 + $0x1060] sm:$0xff]
        %v4318 = vld [vmem:[#allocation9 + $0x1068] sm:$0xff]
        %v4319 = vld [vmem:[#allocation9 + $0x1070] sm:$0xff]
        %v4320 = vld [vmem:[#allocation9 + $0x1078] sm:$0xff]
        %v4321 = vld [vmem:[#allocation9 + $0x1080] sm:$0xff]
        %v4322 = vld [vmem:[#allocation9 + $0x1088] sm:$0xff]
        %v4323 = vld [vmem:[#allocation9 + $0x1090] sm:$0xff]
        %v4324 = vld [vmem:[#allocation9 + $0x1098] sm:$0xff]
        %v4325 = vld [vmem:[#allocation9 + $0x10a0] sm:$0xff]
        %v4326 = vld [vmem:[#allocation9 + $0x10a8] sm:$0xff]
        %v4327 = vld [vmem:[#allocation9 + $0x10b0] sm:$0xff]
        %v4328 = vld [vmem:[#allocation9 + $0x10b8] sm:$0xff]
        %v4329 = vld [vmem:[#allocation9 + $0x10c0] sm:$0xff]
        %v4330 = vld [vmem:[#allocation9 + $0x10c8] sm:$0xff]
        %v4331 = vld [vmem:[#allocation9 + $0x10d0] sm:$0xff]
        %v4332 = vld [vmem:[#allocation9 + $0x10d8] sm:$0xff]
        %v4333 = vld [vmem:[#allocation9 + $0x10e0] sm:$0xff]
        %v4334 = vld [vmem:[#allocation9 + $0x10e8] sm:$0xff]
        %v4335 = vld [vmem:[#allocation9 + $0x10f0] sm:$0xff]
        %v4336 = vld [vmem:[#allocation9 + $0x10f8] sm:$0xff]
        %v4337 = vld [vmem:[#allocation9 + $0x1100] sm:$0xff]
        %v4338 = vld [vmem:[#allocation9 + $0x1108] sm:$0xff]
        %v4339 = vld [vmem:[#allocation9 + $0x1110] sm:$0xff]
        %v4340 = vld [vmem:[#allocation9 + $0x1118] sm:$0xff]
        %v4341 = vld [vmem:[#allocation9 + $0x1120] sm:$0xff]
        %v4342 = vld [vmem:[#allocation9 + $0x1128] sm:$0xff]
        %v4343 = vld [vmem:[#allocation9 + $0x1130] sm:$0xff]
        %v4344 = vld [vmem:[#allocation9 + $0x1138] sm:$0xff]
        %v4345 = vld [vmem:[#allocation9 + $0x1140] sm:$0xff]
        %v4346 = vld [vmem:[#allocation9 + $0x1148] sm:$0xff]
        %v4347 = vld [vmem:[#allocation9 + $0x1150] sm:$0xff]
        %v4348 = vld [vmem:[#allocation9 + $0x1158] sm:$0xff]
        %v4349 = vld [vmem:[#allocation9 + $0x1160] sm:$0xff]
        %v4350 = vld [vmem:[#allocation9 + $0x1168] sm:$0xff]
        %v4351 = vld [vmem:[#allocation9 + $0x1170] sm:$0xff]
        %v4352 = vld [vmem:[#allocation9 + $0x1178] sm:$0xff]
        %v4353 = vld [vmem:[#allocation9 + $0x1180] sm:$0xff]
        %v4354 = vld [vmem:[#allocation9 + $0x1188] sm:$0xff]
        %v4355 = vld [vmem:[#allocation9 + $0x1190] sm:$0xff]
        %v4356 = vld [vmem:[#allocation9 + $0x1198] sm:$0xff]
        %v4357 = vld [vmem:[#allocation9 + $0x11a0] sm:$0xff]
        %v4358 = vld [vmem:[#allocation9 + $0x11a8] sm:$0xff]
        %v4359 = vld [vmem:[#allocation9 + $0x11b0] sm:$0xff]
        %v4360 = vld [vmem:[#allocation9 + $0x11b8] sm:$0xff]
        %v4361 = vld [vmem:[#allocation9 + $0x11c0] sm:$0xff]
        %v4362 = vld [vmem:[#allocation9 + $0x11c8] sm:$0xff]
        %v4363 = vld [vmem:[#allocation9 + $0x11d0] sm:$0xff]
        %v4364 = vld [vmem:[#allocation9 + $0x11d8] sm:$0xff]
        %v4365 = vld [vmem:[#allocation9 + $0x11e0] sm:$0xff]
        %v4366 = vld [vmem:[#allocation9 + $0x11e8] sm:$0xff]
        %v4367 = vld [vmem:[#allocation9 + $0x11f0] sm:$0xff]
        %v4368 = vld [vmem:[#allocation9 + $0x11f8] sm:$0xff]
        %v4369 = vld [vmem:[#allocation9 + $0x1200] sm:$0xff]
        %v4370 = vld [vmem:[#allocation9 + $0x1208] sm:$0xff]
        %v4371 = vld [vmem:[#allocation9 + $0x1210] sm:$0xff]
        %v4372 = vld [vmem:[#allocation9 + $0x1218] sm:$0xff]
        %v4373 = vld [vmem:[#allocation9 + $0x1220] sm:$0xff]
        %v4374 = vld [vmem:[#allocation9 + $0x1228] sm:$0xff]
        %v4375 = vld [vmem:[#allocation9 + $0x1230] sm:$0xff]
        %v4376 = vld [vmem:[#allocation9 + $0x1238] sm:$0xff]
        %v4377 = vld [vmem:[#allocation9 + $0x1240] sm:$0xff]
        %v4378 = vld [vmem:[#allocation9 + $0x1248] sm:$0xff]
        %v4379 = vld [vmem:[#allocation9 + $0x1250] sm:$0xff]
        %v4380 = vld [vmem:[#allocation9 + $0x1258] sm:$0xff]
        %v4381 = vld [vmem:[#allocation9 + $0x1260] sm:$0xff]
        %v4382 = vld [vmem:[#allocation9 + $0x1268] sm:$0xff]
        %v4383 = vld [vmem:[#allocation9 + $0x1270] sm:$0xff]
        %v4384 = vld [vmem:[#allocation9 + $0x1278] sm:$0xff]
        %v4385 = vld [vmem:[#allocation9 + $0x1280] sm:$0xff]
        %v4386 = vld [vmem:[#allocation9 + $0x1288] sm:$0xff]
        %v4387 = vld [vmem:[#allocation9 + $0x1290] sm:$0xff]
        %v4388 = vld [vmem:[#allocation9 + $0x1298] sm:$0xff]
        %v4389 = vld [vmem:[#allocation9 + $0x12a0] sm:$0xff]
        %v4390 = vld [vmem:[#allocation9 + $0x12a8] sm:$0xff]
        %v4391 = vld [vmem:[#allocation9 + $0x12b0] sm:$0xff]
        %v4392 = vld [vmem:[#allocation9 + $0x12b8] sm:$0xff]
        %v4393 = vld [vmem:[#allocation9 + $0x12c0] sm:$0xff]
        %v4394 = vld [vmem:[#allocation9 + $0x12c8] sm:$0xff]
        %v4395 = vld [vmem:[#allocation9 + $0x12d0] sm:$0xff]
        %v4396 = vld [vmem:[#allocation9 + $0x12d8] sm:$0xff]
        %v4397 = vld [vmem:[#allocation9 + $0x12e0] sm:$0xff]
        %v4398 = vld [vmem:[#allocation9 + $0x12e8] sm:$0xff]
        %v4399 = vld [vmem:[#allocation9 + $0x12f0] sm:$0xff]
        %v4400 = vld [vmem:[#allocation9 + $0x12f8] sm:$0xff]
        %v4401 = vld [vmem:[#allocation9 + $0x1300] sm:$0xff]
        %v4402 = vld [vmem:[#allocation9 + $0x1308] sm:$0xff]
        %v4403 = vld [vmem:[#allocation9 + $0x1310] sm:$0xff]
        %v4404 = vld [vmem:[#allocation9 + $0x1318] sm:$0xff]
        %v4405 = vld [vmem:[#allocation9 + $0x1320] sm:$0xff]
        %v4406 = vld [vmem:[#allocation9 + $0x1328] sm:$0xff]
        %v4407 = vld [vmem:[#allocation9 + $0x1330] sm:$0xff]
        %v4408 = vld [vmem:[#allocation9 + $0x1338] sm:$0xff]
        %v4409 = vld [vmem:[#allocation9 + $0x1340] sm:$0xff]
        %v4410 = vld [vmem:[#allocation9 + $0x1348] sm:$0xff]
        %v4411 = vld [vmem:[#allocation9 + $0x1350] sm:$0xff]
        %v4412 = vld [vmem:[#allocation9 + $0x1358] sm:$0xff]
        %v4413 = vld [vmem:[#allocation9 + $0x1360] sm:$0xff]
        %v4414 = vld [vmem:[#allocation9 + $0x1368] sm:$0xff]
        %v4415 = vld [vmem:[#allocation9 + $0x1370] sm:$0xff]
        %v4416 = vld [vmem:[#allocation9 + $0x1378] sm:$0xff]
        %v4417 = vld [vmem:[#allocation9 + $0x1380] sm:$0xff]
        %v4418 = vld [vmem:[#allocation9 + $0x1388] sm:$0xff]
        %v4419 = vld [vmem:[#allocation9 + $0x1390] sm:$0xff]
        %v4420 = vld [vmem:[#allocation9 + $0x1398] sm:$0xff]
        %v4421 = vld [vmem:[#allocation9 + $0x13a0] sm:$0xff]
        %v4422 = vld [vmem:[#allocation9 + $0x13a8] sm:$0xff]
        %v4423 = vld [vmem:[#allocation9 + $0x13b0] sm:$0xff]
        %v4424 = vld [vmem:[#allocation9 + $0x13b8] sm:$0xff]
        %v4425 = vld [vmem:[#allocation9 + $0x13c0] sm:$0xff]
        %v4426 = vld [vmem:[#allocation9 + $0x13c8] sm:$0xff]
        %v4427 = vld [vmem:[#allocation9 + $0x13d0] sm:$0xff]
        %v4428 = vld [vmem:[#allocation9 + $0x13d8] sm:$0xff]
        %v4429 = vld [vmem:[#allocation9 + $0x13e0] sm:$0xff]
        %v4430 = vld [vmem:[#allocation9 + $0x13e8] sm:$0xff]
        %v4431 = vld [vmem:[#allocation9 + $0x13f0] sm:$0xff]
        %v4432 = vld [vmem:[#allocation9 + $0x13f8] sm:$0xff]
        %v4433 = vld [vmem:[#allocation9 + $0x1400] sm:$0xff]
        %v4434 = vld [vmem:[#allocation9 + $0x1408] sm:$0xff]
        %v4435 = vld [vmem:[#allocation9 + $0x1410] sm:$0xff]
        %v4436 = vld [vmem:[#allocation9 + $0x1418] sm:$0xff]
        %v4437 = vld [vmem:[#allocation9 + $0x1420] sm:$0xff]
        %v4438 = vld [vmem:[#allocation9 + $0x1428] sm:$0xff]
        %v4439 = vld [vmem:[#allocation9 + $0x1430] sm:$0xff]
        %v4440 = vld [vmem:[#allocation9 + $0x1438] sm:$0xff]
        %v4441 = vld [vmem:[#allocation9 + $0x1440] sm:$0xff]
        %v4442 = vld [vmem:[#allocation9 + $0x1448] sm:$0xff]
        %v4443 = vld [vmem:[#allocation9 + $0x1450] sm:$0xff]
        %v4444 = vld [vmem:[#allocation9 + $0x1458] sm:$0xff]
        %v4445 = vld [vmem:[#allocation9 + $0x1460] sm:$0xff]
        %v4446 = vld [vmem:[#allocation9 + $0x1468] sm:$0xff]
        %v4447 = vld [vmem:[#allocation9 + $0x1470] sm:$0xff]
        %v4448 = vld [vmem:[#allocation9 + $0x1478] sm:$0xff]
        %v4449 = vld [vmem:[#allocation9 + $0x1480] sm:$0xff]
        %v4450 = vld [vmem:[#allocation9 + $0x1488] sm:$0xff]
        %v4451 = vld [vmem:[#allocation9 + $0x1490] sm:$0xff]
        %v4452 = vld [vmem:[#allocation9 + $0x1498] sm:$0xff]
        %v4453 = vld [vmem:[#allocation9 + $0x14a0] sm:$0xff]
        %v4454 = vld [vmem:[#allocation9 + $0x14a8] sm:$0xff]
        %v4455 = vld [vmem:[#allocation9 + $0x14b0] sm:$0xff]
        %v4456 = vld [vmem:[#allocation9 + $0x14b8] sm:$0xff]
        %v4457 = vld [vmem:[#allocation9 + $0x14c0] sm:$0xff]
        %v4458 = vld [vmem:[#allocation9 + $0x14c8] sm:$0xff]
        %v4459 = vld [vmem:[#allocation9 + $0x14d0] sm:$0xff]
        %v4460 = vld [vmem:[#allocation9 + $0x14d8] sm:$0xff]
        %v4461 = vld [vmem:[#allocation9 + $0x14e0] sm:$0xff]
        %v4462 = vld [vmem:[#allocation9 + $0x14e8] sm:$0xff]
        %v4463 = vld [vmem:[#allocation9 + $0x14f0] sm:$0xff]
        %v4464 = vld [vmem:[#allocation9 + $0x14f8] sm:$0xff]
        %v4465 = vld [vmem:[#allocation9 + $0x1500] sm:$0xff]
        %v4466 = vld [vmem:[#allocation9 + $0x1508] sm:$0xff]
        %v4467 = vld [vmem:[#allocation9 + $0x1510] sm:$0xff]
        %v4468 = vld [vmem:[#allocation9 + $0x1518] sm:$0xff]
        %v4469 = vld [vmem:[#allocation9 + $0x1520] sm:$0xff]
        %v4470 = vld [vmem:[#allocation9 + $0x1528] sm:$0xff]
        %v4471 = vld [vmem:[#allocation9 + $0x1530] sm:$0xff]
        %v4472 = vld [vmem:[#allocation9 + $0x1538] sm:$0xff]
        %v4473 = vld [vmem:[#allocation9 + $0x1540] sm:$0xff]
        %v4474 = vld [vmem:[#allocation9 + $0x1548] sm:$0xff]
        %v4475 = vld [vmem:[#allocation9 + $0x1550] sm:$0xff]
        %v4476 = vld [vmem:[#allocation9 + $0x1558] sm:$0xff]
        %v4477 = vld [vmem:[#allocation9 + $0x1560] sm:$0xff]
        %v4478 = vld [vmem:[#allocation9 + $0x1568] sm:$0xff]
        %v4479 = vld [vmem:[#allocation9 + $0x1570] sm:$0xff]
        %v4480 = vld [vmem:[#allocation9 + $0x1578] sm:$0xff]
        %v4481 = vld [vmem:[#allocation9 + $0x1580] sm:$0xff]
        %v4482 = vld [vmem:[#allocation9 + $0x1588] sm:$0xff]
        %v4483 = vld [vmem:[#allocation9 + $0x1590] sm:$0xff]
        %v4484 = vld [vmem:[#allocation9 + $0x1598] sm:$0xff]
        %v4485 = vld [vmem:[#allocation9 + $0x15a0] sm:$0xff]
        %v4486 = vld [vmem:[#allocation9 + $0x15a8] sm:$0xff]
        %v4487 = vld [vmem:[#allocation9 + $0x15b0] sm:$0xff]
        %v4488 = vld [vmem:[#allocation9 + $0x15b8] sm:$0xff]
        %v4489 = vld [vmem:[#allocation9 + $0x15c0] sm:$0xff]
        %v4490 = vld [vmem:[#allocation9 + $0x15c8] sm:$0xff]
        %v4491 = vld [vmem:[#allocation9 + $0x15d0] sm:$0xff]
        %v4492 = vld [vmem:[#allocation9 + $0x15d8] sm:$0xff]
        %v4493 = vld [vmem:[#allocation9 + $0x15e0] sm:$0xff]
        %v4494 = vld [vmem:[#allocation9 + $0x15e8] sm:$0xff]
        %v4495 = vld [vmem:[#allocation9 + $0x15f0] sm:$0xff]
        %v4496 = vld [vmem:[#allocation9 + $0x15f8] sm:$0xff]
        %v4497 = vld [vmem:[#allocation9 + $0x1600] sm:$0xff]
        %v4498 = vld [vmem:[#allocation9 + $0x1608] sm:$0xff]
        %v4499 = vld [vmem:[#allocation9 + $0x1610] sm:$0xff]
        %v4500 = vld [vmem:[#allocation9 + $0x1618] sm:$0xff]
        %v4501 = vld [vmem:[#allocation9 + $0x1620] sm:$0xff]
        %v4502 = vld [vmem:[#allocation9 + $0x1628] sm:$0xff]
        %v4503 = vld [vmem:[#allocation9 + $0x1630] sm:$0xff]
        %v4504 = vld [vmem:[#allocation9 + $0x1638] sm:$0xff]
        %v4505 = vld [vmem:[#allocation9 + $0x1640] sm:$0xff]
        %v4506 = vld [vmem:[#allocation9 + $0x1648] sm:$0xff]
        %v4507 = vld [vmem:[#allocation9 + $0x1650] sm:$0xff]
        %v4508 = vld [vmem:[#allocation9 + $0x1658] sm:$0xff]
        %v4509 = vld [vmem:[#allocation9 + $0x1660] sm:$0xff]
        %v4510 = vld [vmem:[#allocation9 + $0x1668] sm:$0xff]
        %v4511 = vld [vmem:[#allocation9 + $0x1670] sm:$0xff]
        %v4512 = vld [vmem:[#allocation9 + $0x1678] sm:$0xff]
        %v4513 = vld [vmem:[#allocation9 + $0x1680] sm:$0xff]
        %v4514 = vld [vmem:[#allocation9 + $0x1688] sm:$0xff]
        %v4515 = vld [vmem:[#allocation9 + $0x1690] sm:$0xff]
        %v4516 = vld [vmem:[#allocation9 + $0x1698] sm:$0xff]
        %v4517 = vld [vmem:[#allocation9 + $0x16a0] sm:$0xff]
        %v4518 = vld [vmem:[#allocation9 + $0x16a8] sm:$0xff]
        %v4519 = vld [vmem:[#allocation9 + $0x16b0] sm:$0xff]
        %v4520 = vld [vmem:[#allocation9 + $0x16b8] sm:$0xff]
        %v4521 = vld [vmem:[#allocation9 + $0x16c0] sm:$0xff]
        %v4522 = vld [vmem:[#allocation9 + $0x16c8] sm:$0xff]
        %v4523 = vld [vmem:[#allocation9 + $0x16d0] sm:$0xff]
        %v4524 = vld [vmem:[#allocation9 + $0x16d8] sm:$0xff]
        %v4525 = vld [vmem:[#allocation9 + $0x16e0] sm:$0xff]
        %v4526 = vld [vmem:[#allocation9 + $0x16e8] sm:$0xff]
        %v4527 = vld [vmem:[#allocation9 + $0x16f0] sm:$0xff]
        %v4528 = vld [vmem:[#allocation9 + $0x16f8] sm:$0xff]
        %v4529 = vld [vmem:[#allocation9 + $0x1700] sm:$0xff]
        %v4530 = vld [vmem:[#allocation9 + $0x1708] sm:$0xff]
        %v4531 = vld [vmem:[#allocation9 + $0x1710] sm:$0xff]
        %v4532 = vld [vmem:[#allocation9 + $0x1718] sm:$0xff]
        %v4533 = vld [vmem:[#allocation9 + $0x1720] sm:$0xff]
        %v4534 = vld [vmem:[#allocation9 + $0x1728] sm:$0xff]
        %v4535 = vld [vmem:[#allocation9 + $0x1730] sm:$0xff]
        %v4536 = vld [vmem:[#allocation9 + $0x1738] sm:$0xff]
        %v4537 = vld [vmem:[#allocation9 + $0x1740] sm:$0xff]
        %v4538 = vld [vmem:[#allocation9 + $0x1748] sm:$0xff]
        %v4539 = vld [vmem:[#allocation9 + $0x1750] sm:$0xff]
        %v4540 = vld [vmem:[#allocation9 + $0x1758] sm:$0xff]
        %v4541 = vld [vmem:[#allocation9 + $0x1760] sm:$0xff]
        %v4542 = vld [vmem:[#allocation9 + $0x1768] sm:$0xff]
        %v4543 = vld [vmem:[#allocation9 + $0x1770] sm:$0xff]
        %v4544 = vld [vmem:[#allocation9 + $0x1778] sm:$0xff]
        %v4545 = vld [vmem:[#allocation9 + $0x1780] sm:$0xff]
        %v4546 = vld [vmem:[#allocation9 + $0x1788] sm:$0xff]
        %v4547 = vld [vmem:[#allocation9 + $0x1790] sm:$0xff]
        %v4548 = vld [vmem:[#allocation9 + $0x1798] sm:$0xff]
        %v4549 = vld [vmem:[#allocation9 + $0x17a0] sm:$0xff]
        %v4550 = vld [vmem:[#allocation9 + $0x17a8] sm:$0xff]
        %v4551 = vld [vmem:[#allocation9 + $0x17b0] sm:$0xff]
        %v4552 = vld [vmem:[#allocation9 + $0x17b8] sm:$0xff]
        %v4553 = vld [vmem:[#allocation9 + $0x17c0] sm:$0xff]
        %v4554 = vld [vmem:[#allocation9 + $0x17c8] sm:$0xff]
        %v4555 = vld [vmem:[#allocation9 + $0x17d0] sm:$0xff]
        %v4556 = vld [vmem:[#allocation9 + $0x17d8] sm:$0xff]
        %v4557 = vld [vmem:[#allocation9 + $0x17e0] sm:$0xff]
        %v4558 = vld [vmem:[#allocation9 + $0x17e8] sm:$0xff]
        %v4559 = vld [vmem:[#allocation9 + $0x17f0] sm:$0xff]
        %v4560 = vld [vmem:[#allocation9 + $0x17f8] sm:$0xff]
        %v4561 = vld [vmem:[#allocation9 + $0x1800] sm:$0xff]
        %v4562 = vld [vmem:[#allocation9 + $0x1808] sm:$0xff]
        %v4563 = vld [vmem:[#allocation9 + $0x1810] sm:$0xff]
        %v4564 = vld [vmem:[#allocation9 + $0x1818] sm:$0xff]
        %v4565 = vld [vmem:[#allocation9 + $0x1820] sm:$0xff]
        %v4566 = vld [vmem:[#allocation9 + $0x1828] sm:$0xff]
        %v4567 = vld [vmem:[#allocation9 + $0x1830] sm:$0xff]
        %v4568 = vld [vmem:[#allocation9 + $0x1838] sm:$0xff]
        %v4569 = vld [vmem:[#allocation9 + $0x1840] sm:$0xff]
        %v4570 = vld [vmem:[#allocation9 + $0x1848] sm:$0xff]
        %v4571 = vld [vmem:[#allocation9 + $0x1850] sm:$0xff]
        %v4572 = vld [vmem:[#allocation9 + $0x1858] sm:$0xff]
        %v4573 = vld [vmem:[#allocation9 + $0x1860] sm:$0xff]
        %v4574 = vld [vmem:[#allocation9 + $0x1868] sm:$0xff]
        %v4575 = vld [vmem:[#allocation9 + $0x1870] sm:$0xff]
        %v4576 = vld [vmem:[#allocation9 + $0x1878] sm:$0xff]
        %v4577 = vld [vmem:[#allocation9 + $0x1880] sm:$0xff]
        %v4578 = vld [vmem:[#allocation9 + $0x1888] sm:$0xff]
        %v4579 = vld [vmem:[#allocation9 + $0x1890] sm:$0xff]
        %v4580 = vld [vmem:[#allocation9 + $0x1898] sm:$0xff]
        %v4581 = vld [vmem:[#allocation9 + $0x18a0] sm:$0xff]
        %v4582 = vld [vmem:[#allocation9 + $0x18a8] sm:$0xff]
        %v4583 = vld [vmem:[#allocation9 + $0x18b0] sm:$0xff]
        %v4584 = vld [vmem:[#allocation9 + $0x18b8] sm:$0xff]
        %v4585 = vld [vmem:[#allocation9 + $0x18c0] sm:$0xff]
        %v4586 = vld [vmem:[#allocation9 + $0x18c8] sm:$0xff]
        %v4587 = vld [vmem:[#allocation9 + $0x18d0] sm:$0xff]
        %v4588 = vld [vmem:[#allocation9 + $0x18d8] sm:$0xff]
        %v4589 = vld [vmem:[#allocation9 + $0x18e0] sm:$0xff]
        %v4590 = vld [vmem:[#allocation9 + $0x18e8] sm:$0xff]
        %v4591 = vld [vmem:[#allocation9 + $0x18f0] sm:$0xff]
        %v4592 = vld [vmem:[#allocation9 + $0x18f8] sm:$0xff]
        %v4593 = vld [vmem:[#allocation9 + $0x1900] sm:$0xff]
        %v4594 = vld [vmem:[#allocation9 + $0x1908] sm:$0xff]
        %v4595 = vld [vmem:[#allocation9 + $0x1910] sm:$0xff]
        %v4596 = vld [vmem:[#allocation9 + $0x1918] sm:$0xff]
        %v4597 = vld [vmem:[#allocation9 + $0x1920] sm:$0xff]
        %v4598 = vld [vmem:[#allocation9 + $0x1928] sm:$0xff]
        %v4599 = vld [vmem:[#allocation9 + $0x1930] sm:$0xff]
        %v4600 = vld [vmem:[#allocation9 + $0x1938] sm:$0xff]
        %v4601 = vld [vmem:[#allocation9 + $0x1940] sm:$0xff]
        %v4602 = vld [vmem:[#allocation9 + $0x1948] sm:$0xff]
        %v4603 = vld [vmem:[#allocation9 + $0x1950] sm:$0xff]
        %v4604 = vld [vmem:[#allocation9 + $0x1958] sm:$0xff]
        %v4605 = vld [vmem:[#allocation9 + $0x1960] sm:$0xff]
        %v4606 = vld [vmem:[#allocation9 + $0x1968] sm:$0xff]
        %v4607 = vld [vmem:[#allocation9 + $0x1970] sm:$0xff]
        %v4608 = vld [vmem:[#allocation9 + $0x1978] sm:$0xff]
        %v4609 = vld [vmem:[#allocation9 + $0x1980] sm:$0xff]
        %v4610 = vld [vmem:[#allocation9 + $0x1988] sm:$0xff]
        %v4611 = vld [vmem:[#allocation9 + $0x1990] sm:$0xff]
        %v4612 = vld [vmem:[#allocation9 + $0x1998] sm:$0xff]
        %v4613 = vld [vmem:[#allocation9 + $0x19a0] sm:$0xff]
        %v4614 = vld [vmem:[#allocation9 + $0x19a8] sm:$0xff]
        %v4615 = vld [vmem:[#allocation9 + $0x19b0] sm:$0xff]
        %v4616 = vld [vmem:[#allocation9 + $0x19b8] sm:$0xff]
        %v4617 = vld [vmem:[#allocation9 + $0x19c0] sm:$0xff]
        %v4618 = vld [vmem:[#allocation9 + $0x19c8] sm:$0xff]
        %v4619 = vld [vmem:[#allocation9 + $0x19d0] sm:$0xff]
        %v4620 = vld [vmem:[#allocation9 + $0x19d8] sm:$0xff]
        %v4621 = vld [vmem:[#allocation9 + $0x19e0] sm:$0xff]
        %v4622 = vld [vmem:[#allocation9 + $0x19e8] sm:$0xff]
        %v4623 = vld [vmem:[#allocation9 + $0x19f0] sm:$0xff]
        %v4624 = vld [vmem:[#allocation9 + $0x19f8] sm:$0xff]
        %v4625 = vld [vmem:[#allocation9 + $0x1a00] sm:$0xff]
        %v4626 = vld [vmem:[#allocation9 + $0x1a08] sm:$0xff]
        %v4627 = vld [vmem:[#allocation9 + $0x1a10] sm:$0xff]
        %v4628 = vld [vmem:[#allocation9 + $0x1a18] sm:$0xff]
        %v4629 = vld [vmem:[#allocation9 + $0x1a20] sm:$0xff]
        %v4630 = vld [vmem:[#allocation9 + $0x1a28] sm:$0xff]
        %v4631 = vld [vmem:[#allocation9 + $0x1a30] sm:$0xff]
        %v4632 = vld [vmem:[#allocation9 + $0x1a38] sm:$0xff]
        %v4633 = vld [vmem:[#allocation9 + $0x1a40] sm:$0xff]
        %v4634 = vld [vmem:[#allocation9 + $0x1a48] sm:$0xff]
        %v4635 = vld [vmem:[#allocation9 + $0x1a50] sm:$0xff]
        %v4636 = vld [vmem:[#allocation9 + $0x1a58] sm:$0xff]
        %v4637 = vld [vmem:[#allocation9 + $0x1a60] sm:$0xff]
        %v4638 = vld [vmem:[#allocation9 + $0x1a68] sm:$0xff]
        %v4639 = vld [vmem:[#allocation9 + $0x1a70] sm:$0xff]
        %v4640 = vld [vmem:[#allocation9 + $0x1a78] sm:$0xff]
        %v4641 = vld [vmem:[#allocation9 + $0x1a80] sm:$0xff]
        %v4642 = vld [vmem:[#allocation9 + $0x1a88] sm:$0xff]
        %v4643 = vld [vmem:[#allocation9 + $0x1a90] sm:$0xff]
        %v4644 = vld [vmem:[#allocation9 + $0x1a98] sm:$0xff]
        %v4645 = vld [vmem:[#allocation9 + $0x1aa0] sm:$0xff]
        %v4646 = vld [vmem:[#allocation9 + $0x1aa8] sm:$0xff]
        %v4647 = vld [vmem:[#allocation9 + $0x1ab0] sm:$0xff]
        %v4648 = vld [vmem:[#allocation9 + $0x1ab8] sm:$0xff]
        %v4649 = vld [vmem:[#allocation9 + $0x1ac0] sm:$0xff]
        %v4650 = vld [vmem:[#allocation9 + $0x1ac8] sm:$0xff]
        %v4651 = vld [vmem:[#allocation9 + $0x1ad0] sm:$0xff]
        %v4652 = vld [vmem:[#allocation9 + $0x1ad8] sm:$0xff]
        %v4653 = vld [vmem:[#allocation9 + $0x1ae0] sm:$0xff]
        %v4654 = vld [vmem:[#allocation9 + $0x1ae8] sm:$0xff]
        %v4655 = vld [vmem:[#allocation9 + $0x1af0] sm:$0xff]
        %v4656 = vld [vmem:[#allocation9 + $0x1af8] sm:$0xff]
        %v4657 = vld [vmem:[#allocation9 + $0x1b00] sm:$0xff]
        %v4658 = vld [vmem:[#allocation9 + $0x1b08] sm:$0xff]
        %v4659 = vld [vmem:[#allocation9 + $0x1b10] sm:$0xff]
        %v4660 = vld [vmem:[#allocation9 + $0x1b18] sm:$0xff]
        %v4661 = vld [vmem:[#allocation9 + $0x1b20] sm:$0xff]
        %v4662 = vld [vmem:[#allocation9 + $0x1b28] sm:$0xff]
        %v4663 = vld [vmem:[#allocation9 + $0x1b30] sm:$0xff]
        %v4664 = vld [vmem:[#allocation9 + $0x1b38] sm:$0xff]
        %v4665 = vld [vmem:[#allocation9 + $0x1b40] sm:$0xff]
        %v4666 = vld [vmem:[#allocation9 + $0x1b48] sm:$0xff]
        %v4667 = vld [vmem:[#allocation9 + $0x1b50] sm:$0xff]
        %v4668 = vld [vmem:[#allocation9 + $0x1b58] sm:$0xff]
        %v4669 = vld [vmem:[#allocation9 + $0x1b60] sm:$0xff]
        %v4670 = vld [vmem:[#allocation9 + $0x1b68] sm:$0xff]
        %v4671 = vld [vmem:[#allocation9 + $0x1b70] sm:$0xff]
        %v4672 = vld [vmem:[#allocation9 + $0x1b78] sm:$0xff]
        %v4673 = vld [vmem:[#allocation9 + $0x1b80] sm:$0xff]
        %v4674 = vld [vmem:[#allocation9 + $0x1b88] sm:$0xff]
        %v4675 = vld [vmem:[#allocation9 + $0x1b90] sm:$0xff]
        %v4676 = vld [vmem:[#allocation9 + $0x1b98] sm:$0xff]
        %v4677 = vld [vmem:[#allocation9 + $0x1ba0] sm:$0xff]
        %v4678 = vld [vmem:[#allocation9 + $0x1ba8] sm:$0xff]
        %v4679 = vld [vmem:[#allocation9 + $0x1bb0] sm:$0xff]
        %v4680 = vld [vmem:[#allocation9 + $0x1bb8] sm:$0xff]
        %v4681 = vld [vmem:[#allocation9 + $0x1bc0] sm:$0xff]
        %v4682 = vld [vmem:[#allocation9 + $0x1bc8] sm:$0xff]
        %v4683 = vld [vmem:[#allocation9 + $0x1bd0] sm:$0xff]
        %v4684 = vld [vmem:[#allocation9 + $0x1bd8] sm:$0xff]
        %v4685 = vld [vmem:[#allocation9 + $0x1be0] sm:$0xff]
        %v4686 = vld [vmem:[#allocation9 + $0x1be8] sm:$0xff]
        %v4687 = vld [vmem:[#allocation9 + $0x1bf0] sm:$0xff]
        %v4688 = vld [vmem:[#allocation9 + $0x1bf8] sm:$0xff]
        %v4689 = vld [vmem:[#allocation9 + $0x1c00] sm:$0xff]
        %v4690 = vld [vmem:[#allocation9 + $0x1c08] sm:$0xff]
        %v4691 = vld [vmem:[#allocation9 + $0x1c10] sm:$0xff]
        %v4692 = vld [vmem:[#allocation9 + $0x1c18] sm:$0xff]
        %v4693 = vld [vmem:[#allocation9 + $0x1c20] sm:$0xff]
        %v4694 = vld [vmem:[#allocation9 + $0x1c28] sm:$0xff]
        %v4695 = vld [vmem:[#allocation9 + $0x1c30] sm:$0xff]
        %v4696 = vld [vmem:[#allocation9 + $0x1c38] sm:$0xff]
        %v4697 = vld [vmem:[#allocation9 + $0x1c40] sm:$0xff]
        %v4698 = vld [vmem:[#allocation9 + $0x1c48] sm:$0xff]
        %v4699 = vld [vmem:[#allocation9 + $0x1c50] sm:$0xff]
        %v4700 = vld [vmem:[#allocation9 + $0x1c58] sm:$0xff]
        %v4701 = vld [vmem:[#allocation9 + $0x1c60] sm:$0xff]
        %v4702 = vld [vmem:[#allocation9 + $0x1c68] sm:$0xff]
        %v4703 = vld [vmem:[#allocation9 + $0x1c70] sm:$0xff]
        %v4704 = vld [vmem:[#allocation9 + $0x1c78] sm:$0xff]
        %v4705 = vld [vmem:[#allocation9 + $0x1c80] sm:$0xff]
        %v4706 = vld [vmem:[#allocation9 + $0x1c88] sm:$0xff]
        %v4707 = vld [vmem:[#allocation9 + $0x1c90] sm:$0xff]
        %v4708 = vld [vmem:[#allocation9 + $0x1c98] sm:$0xff]
        %v4709 = vld [vmem:[#allocation9 + $0x1ca0] sm:$0xff]
        %v4710 = vld [vmem:[#allocation9 + $0x1ca8] sm:$0xff]
        %v4711 = vld [vmem:[#allocation9 + $0x1cb0] sm:$0xff]
        %v4712 = vld [vmem:[#allocation9 + $0x1cb8] sm:$0xff]
        %v4713 = vld [vmem:[#allocation9 + $0x1cc0] sm:$0xff]
        %v4714 = vld [vmem:[#allocation9 + $0x1cc8] sm:$0xff]
        %v4715 = vld [vmem:[#allocation9 + $0x1cd0] sm:$0xff]
        %v4716 = vld [vmem:[#allocation9 + $0x1cd8] sm:$0xff]
        %v4717 = vld [vmem:[#allocation9 + $0x1ce0] sm:$0xff]
        %v4718 = vld [vmem:[#allocation9 + $0x1ce8] sm:$0xff]
        %v4719 = vld [vmem:[#allocation9 + $0x1cf0] sm:$0xff]
        %v4720 = vld [vmem:[#allocation9 + $0x1cf8] sm:$0xff]
        %v4721 = vld [vmem:[#allocation9 + $0x1d00] sm:$0xff]
        %v4722 = vld [vmem:[#allocation9 + $0x1d08] sm:$0xff]
        %v4723 = vld [vmem:[#allocation9 + $0x1d10] sm:$0xff]
        %v4724 = vld [vmem:[#allocation9 + $0x1d18] sm:$0xff]
        %v4725 = vld [vmem:[#allocation9 + $0x1d20] sm:$0xff]
        %v4726 = vld [vmem:[#allocation9 + $0x1d28] sm:$0xff]
        %v4727 = vld [vmem:[#allocation9 + $0x1d30] sm:$0xff]
        %v4728 = vld [vmem:[#allocation9 + $0x1d38] sm:$0xff]
        %v4729 = vld [vmem:[#allocation9 + $0x1d40] sm:$0xff]
        %v4730 = vld [vmem:[#allocation9 + $0x1d48] sm:$0xff]
        %v4731 = vld [vmem:[#allocation9 + $0x1d50] sm:$0xff]
        %v4732 = vld [vmem:[#allocation9 + $0x1d58] sm:$0xff]
        %v4733 = vld [vmem:[#allocation9 + $0x1d60] sm:$0xff]
        %v4734 = vld [vmem:[#allocation9 + $0x1d68] sm:$0xff]
        %v4735 = vld [vmem:[#allocation9 + $0x1d70] sm:$0xff]
        %v4736 = vld [vmem:[#allocation9 + $0x1d78] sm:$0xff]
        %v4737 = vld [vmem:[#allocation9 + $0x1d80] sm:$0xff]
        %v4738 = vld [vmem:[#allocation9 + $0x1d88] sm:$0xff]
        %v4739 = vld [vmem:[#allocation9 + $0x1d90] sm:$0xff]
        %v4740 = vld [vmem:[#allocation9 + $0x1d98] sm:$0xff]
        %v4741 = vld [vmem:[#allocation9 + $0x1da0] sm:$0xff]
        %v4742 = vld [vmem:[#allocation9 + $0x1da8] sm:$0xff]
        %v4743 = vld [vmem:[#allocation9 + $0x1db0] sm:$0xff]
        %v4744 = vld [vmem:[#allocation9 + $0x1db8] sm:$0xff]
        %v4745 = vld [vmem:[#allocation9 + $0x1dc0] sm:$0xff]
        %v4746 = vld [vmem:[#allocation9 + $0x1dc8] sm:$0xff]
        %v4747 = vld [vmem:[#allocation9 + $0x1dd0] sm:$0xff]
        %v4748 = vld [vmem:[#allocation9 + $0x1dd8] sm:$0xff]
        %v4749 = vld [vmem:[#allocation9 + $0x1de0] sm:$0xff]
        %v4750 = vld [vmem:[#allocation9 + $0x1de8] sm:$0xff]
        %v4751 = vld [vmem:[#allocation9 + $0x1df0] sm:$0xff]
        %v4752 = vld [vmem:[#allocation9 + $0x1df8] sm:$0xff]
        %v4753 = vld [vmem:[#allocation9 + $0x1e00] sm:$0xff]
        %v4754 = vld [vmem:[#allocation9 + $0x1e08] sm:$0xff]
        %v4755 = vld [vmem:[#allocation9 + $0x1e10] sm:$0xff]
        %v4756 = vld [vmem:[#allocation9 + $0x1e18] sm:$0xff]
        %v4757 = vld [vmem:[#allocation9 + $0x1e20] sm:$0xff]
        %v4758 = vld [vmem:[#allocation9 + $0x1e28] sm:$0xff]
        %v4759 = vld [vmem:[#allocation9 + $0x1e30] sm:$0xff]
        %v4760 = vld [vmem:[#allocation9 + $0x1e38] sm:$0xff]
        %v4761 = vld [vmem:[#allocation9 + $0x1e40] sm:$0xff]
        %v4762 = vld [vmem:[#allocation9 + $0x1e48] sm:$0xff]
        %v4763 = vld [vmem:[#allocation9 + $0x1e50] sm:$0xff]
        %v4764 = vld [vmem:[#allocation9 + $0x1e58] sm:$0xff]
        %v4765 = vld [vmem:[#allocation9 + $0x1e60] sm:$0xff]
        %v4766 = vld [vmem:[#allocation9 + $0x1e68] sm:$0xff]
        %v4767 = vld [vmem:[#allocation9 + $0x1e70] sm:$0xff]
        %v4768 = vld [vmem:[#allocation9 + $0x1e78] sm:$0xff]
        %v4769 = vld [vmem:[#allocation9 + $0x1e80] sm:$0xff]
        %v4770 = vld [vmem:[#allocation9 + $0x1e88] sm:$0xff]
        %v4771 = vld [vmem:[#allocation9 + $0x1e90] sm:$0xff]
        %v4772 = vld [vmem:[#allocation9 + $0x1e98] sm:$0xff]
        %v4773 = vld [vmem:[#allocation9 + $0x1ea0] sm:$0xff]
        %v4774 = vld [vmem:[#allocation9 + $0x1ea8] sm:$0xff]
        %v4775 = vld [vmem:[#allocation9 + $0x1eb0] sm:$0xff]
        %v4776 = vld [vmem:[#allocation9 + $0x1eb8] sm:$0xff]
        %v4777 = vld [vmem:[#allocation9 + $0x1ec0] sm:$0xff]
        %v4778 = vld [vmem:[#allocation9 + $0x1ec8] sm:$0xff]
        %v4779 = vld [vmem:[#allocation9 + $0x1ed0] sm:$0xff]
        %v4780 = vld [vmem:[#allocation9 + $0x1ed8] sm:$0xff]
        %v4781 = vld [vmem:[#allocation9 + $0x1ee0] sm:$0xff]
        %v4782 = vld [vmem:[#allocation9 + $0x1ee8] sm:$0xff]
        %v4783 = vld [vmem:[#allocation9 + $0x1ef0] sm:$0xff]
        %v4784 = vld [vmem:[#allocation9 + $0x1ef8] sm:$0xff]
        %v4785 = vld [vmem:[#allocation9 + $0x1f00] sm:$0xff]
        %v4786 = vld [vmem:[#allocation9 + $0x1f08] sm:$0xff]
        %v4787 = vld [vmem:[#allocation9 + $0x1f10] sm:$0xff]
        %v4788 = vld [vmem:[#allocation9 + $0x1f18] sm:$0xff]
        %v4789 = vld [vmem:[#allocation9 + $0x1f20] sm:$0xff]
        %v4790 = vld [vmem:[#allocation9 + $0x1f28] sm:$0xff]
        %v4791 = vld [vmem:[#allocation9 + $0x1f30] sm:$0xff]
        %v4792 = vld [vmem:[#allocation9 + $0x1f38] sm:$0xff]
        %v4793 = vld [vmem:[#allocation9 + $0x1f40] sm:$0xff]
        %v4794 = vld [vmem:[#allocation9 + $0x1f48] sm:$0xff]
        %v4795 = vld [vmem:[#allocation9 + $0x1f50] sm:$0xff]
        %v4796 = vld [vmem:[#allocation9 + $0x1f58] sm:$0xff]
        %v4797 = vld [vmem:[#allocation9 + $0x1f60] sm:$0xff]
        %v4798 = vld [vmem:[#allocation9 + $0x1f68] sm:$0xff]
        %v4799 = vld [vmem:[#allocation9 + $0x1f70] sm:$0xff]
        %v4800 = vld [vmem:[#allocation9 + $0x1f78] sm:$0xff]
        %v4801 = vld [vmem:[#allocation9 + $0x1f80] sm:$0xff]
        %v4802 = vld [vmem:[#allocation9 + $0x1f88] sm:$0xff]
        %v4803 = vld [vmem:[#allocation9 + $0x1f90] sm:$0xff]
        %v4804 = vld [vmem:[#allocation9 + $0x1f98] sm:$0xff]
        %v4805 = vld [vmem:[#allocation9 + $0x1fa0] sm:$0xff]
        %v4806 = vld [vmem:[#allocation9 + $0x1fa8] sm:$0xff]
        %v4807 = vld [vmem:[#allocation9 + $0x1fb0] sm:$0xff]
        %v4808 = vld [vmem:[#allocation9 + $0x1fb8] sm:$0xff]
        %v4809 = vld [vmem:[#allocation9 + $0x1fc0] sm:$0xff]
        %v4810 = vld [vmem:[#allocation9 + $0x1fc8] sm:$0xff]
        %v4811 = vld [vmem:[#allocation9 + $0x1fd0] sm:$0xff]
        %v4812 = vld [vmem:[#allocation9 + $0x1fd8] sm:$0xff]
        %v4813 = vld [vmem:[#allocation9 + $0x1fe0] sm:$0xff]
        %v4814 = vld [vmem:[#allocation9 + $0x1fe8] sm:$0xff]
        %v4815 = vld [vmem:[#allocation9 + $0x1ff0] sm:$0xff]
        %v4816 = vld [vmem:[#allocation9 + $0x1ff8] sm:$0xff]
        %v4817 = vld [vmem:[#allocation11] sm:$0xff]
        %v4819 = vlaneseq
        %v4820 = vshrl.u32 %v4819, 7
        %v4821 = vsub.s32 0, %v4820
        %v4822 = vrot.slane %v4817, %v4821
        %v4823 = vlaneseq
        %v4824 = vshrl.u32 %v4823, 7
        %v4825 = vsub.s32 1, %v4824
        %v4826 = vrot.slane %v4817, %v4825
        %v4827 = vlaneseq
        %v4828 = vshrl.u32 %v4827, 7
        %v4829 = vsub.s32 2, %v4828
        %v4830 = vrot.slane %v4817, %v4829
        %v4831 = vlaneseq
        %v4832 = vshrl.u32 %v4831, 7
        %v4833 = vsub.s32 3, %v4832
        %v4834 = vrot.slane %v4817, %v4833
        %v4835 = vlaneseq
        %v4836 = vshrl.u32 %v4835, 7
        %v4837 = vsub.s32 4, %v4836
        %v4838 = vrot.slane %v4817, %v4837
        %v4839 = vlaneseq
        %v4840 = vshrl.u32 %v4839, 7
        %v4841 = vsub.s32 5, %v4840
        %v4842 = vrot.slane %v4817, %v4841
        %v4843 = vlaneseq
        %v4844 = vshrl.u32 %v4843, 7
        %v4845 = vsub.s32 6, %v4844
        %v4846 = vrot.slane %v4817, %v4845
        %v4847 = vlaneseq
        %v4848 = vshrl.u32 %v4847, 7
        %v4849 = vsub.s32 7, %v4848
        %v4850 = vrot.slane %v4817, %v4849
        %v5883 = vunpack.c.l.b16 %v3793
        %v5884 = vunpack.c.h.b16 %v3793
        %v5885 = vunpack.c.l.b16 %v3794
        %v5886 = vunpack.c.h.b16 %v3794
        %v5887 = vunpack.c.l.b16 %v3795
        %v5888 = vunpack.c.h.b16 %v3795
        %v5889 = vunpack.c.l.b16 %v3796
        %v5890 = vunpack.c.h.b16 %v3796
        %v5891 = vunpack.c.l.b16 %v3797
        %v5892 = vunpack.c.h.b16 %v3797
        %v5893 = vunpack.c.l.b16 %v3798
        %v5894 = vunpack.c.h.b16 %v3798
        %v5895 = vunpack.c.l.b16 %v3799
        %v5896 = vunpack.c.h.b16 %v3799
        %v5897 = vunpack.c.l.b16 %v3800
        %v5898 = vunpack.c.h.b16 %v3800
        %v5899 = vunpack.c.l.b16 %v3801
        %v5900 = vunpack.c.h.b16 %v3801
        %v5901 = vunpack.c.l.b16 %v3802
        %v5902 = vunpack.c.h.b16 %v3802
        %v5903 = vunpack.c.l.b16 %v3803
        %v5904 = vunpack.c.h.b16 %v3803
        %v5905 = vunpack.c.l.b16 %v3804
        %v5906 = vunpack.c.h.b16 %v3804
        %v5907 = vunpack.c.l.b16 %v3805
        %v5908 = vunpack.c.h.b16 %v3805
        %v5909 = vunpack.c.l.b16 %v3806
        %v5910 = vunpack.c.h.b16 %v3806
        %v5911 = vunpack.c.l.b16 %v3807
        %v5912 = vunpack.c.h.b16 %v3807
        %v5913 = vunpack.c.l.b16 %v3808
        %v5914 = vunpack.c.h.b16 %v3808
        %v5915 = vunpack.c.l.b16 %v3809
        %v5916 = vunpack.c.h.b16 %v3809
        %v5917 = vunpack.c.l.b16 %v3810
        %v5918 = vunpack.c.h.b16 %v3810
        %v5919 = vunpack.c.l.b16 %v3811
        %v5920 = vunpack.c.h.b16 %v3811
        %v5921 = vunpack.c.l.b16 %v3812
        %v5922 = vunpack.c.h.b16 %v3812
        %v5923 = vunpack.c.l.b16 %v3813
        %v5924 = vunpack.c.h.b16 %v3813
        %v5925 = vunpack.c.l.b16 %v3814
        %v5926 = vunpack.c.h.b16 %v3814
        %v5927 = vunpack.c.l.b16 %v3815
        %v5928 = vunpack.c.h.b16 %v3815
        %v5929 = vunpack.c.l.b16 %v3816
        %v5930 = vunpack.c.h.b16 %v3816
        %v5931 = vunpack.c.l.b16 %v3817
        %v5932 = vunpack.c.h.b16 %v3817
        %v5933 = vunpack.c.l.b16 %v3818
        %v5934 = vunpack.c.h.b16 %v3818
        %v5935 = vunpack.c.l.b16 %v3819
        %v5936 = vunpack.c.h.b16 %v3819
        %v5937 = vunpack.c.l.b16 %v3820
        %v5938 = vunpack.c.h.b16 %v3820
        %v5939 = vunpack.c.l.b16 %v3821
        %v5940 = vunpack.c.h.b16 %v3821
        %v5941 = vunpack.c.l.b16 %v3822
        %v5942 = vunpack.c.h.b16 %v3822
        %v5943 = vunpack.c.l.b16 %v3823
        %v5944 = vunpack.c.h.b16 %v3823
        %v5945 = vunpack.c.l.b16 %v3824
        %v5946 = vunpack.c.h.b16 %v3824
        %v5947 = vunpack.c.l.b16 %v3825
        %v5948 = vunpack.c.h.b16 %v3825
        %v5949 = vunpack.c.l.b16 %v3826
        %v5950 = vunpack.c.h.b16 %v3826
        %v5951 = vunpack.c.l.b16 %v3827
        %v5952 = vunpack.c.h.b16 %v3827
        %v5953 = vunpack.c.l.b16 %v3828
        %v5954 = vunpack.c.h.b16 %v3828
        %v5955 = vunpack.c.l.b16 %v3829
        %v5956 = vunpack.c.h.b16 %v3829
        %v5957 = vunpack.c.l.b16 %v3830
        %v5958 = vunpack.c.h.b16 %v3830
        %v5959 = vunpack.c.l.b16 %v3831
        %v5960 = vunpack.c.h.b16 %v3831
        %v5961 = vunpack.c.l.b16 %v3832
        %v5962 = vunpack.c.h.b16 %v3832
        %v5963 = vunpack.c.l.b16 %v3833
        %v5964 = vunpack.c.h.b16 %v3833
        %v5965 = vunpack.c.l.b16 %v3834
        %v5966 = vunpack.c.h.b16 %v3834
        %v5967 = vunpack.c.l.b16 %v3835
        %v5968 = vunpack.c.h.b16 %v3835
        %v5969 = vunpack.c.l.b16 %v3836
        %v5970 = vunpack.c.h.b16 %v3836
        %v5971 = vunpack.c.l.b16 %v3837
        %v5972 = vunpack.c.h.b16 %v3837
        %v5973 = vunpack.c.l.b16 %v3838
        %v5974 = vunpack.c.h.b16 %v3838
        %v5975 = vunpack.c.l.b16 %v3839
        %v5976 = vunpack.c.h.b16 %v3839
        %v5977 = vunpack.c.l.b16 %v3840
        %v5978 = vunpack.c.h.b16 %v3840
        %v5979 = vunpack.c.l.b16 %v3841
        %v5980 = vunpack.c.h.b16 %v3841
        %v5981 = vunpack.c.l.b16 %v3842
        %v5982 = vunpack.c.h.b16 %v3842
        %v5983 = vunpack.c.l.b16 %v3843
        %v5984 = vunpack.c.h.b16 %v3843
        %v5985 = vunpack.c.l.b16 %v3844
        %v5986 = vunpack.c.h.b16 %v3844
        %v5987 = vunpack.c.l.b16 %v3845
        %v5988 = vunpack.c.h.b16 %v3845
        %v5989 = vunpack.c.l.b16 %v3846
        %v5990 = vunpack.c.h.b16 %v3846
        %v5991 = vunpack.c.l.b16 %v3847
        %v5992 = vunpack.c.h.b16 %v3847
        %v5993 = vunpack.c.l.b16 %v3848
        %v5994 = vunpack.c.h.b16 %v3848
        %v5995 = vunpack.c.l.b16 %v3849
        %v5996 = vunpack.c.h.b16 %v3849
        %v5997 = vunpack.c.l.b16 %v3850
        %v5998 = vunpack.c.h.b16 %v3850
        %v5999 = vunpack.c.l.b16 %v3851
        %v6000 = vunpack.c.h.b16 %v3851
        %v6001 = vunpack.c.l.b16 %v3852
        %v6002 = vunpack.c.h.b16 %v3852
        %v6003 = vunpack.c.l.b16 %v3853
        %v6004 = vunpack.c.h.b16 %v3853
        %v6005 = vunpack.c.l.b16 %v3854
        %v6006 = vunpack.c.h.b16 %v3854
        %v6007 = vunpack.c.l.b16 %v3855
        %v6008 = vunpack.c.h.b16 %v3855
        %v6009 = vunpack.c.l.b16 %v3856
        %v6010 = vunpack.c.h.b16 %v3856
        %v6011 = vunpack.c.l.b16 %v3857
        %v6012 = vunpack.c.h.b16 %v3857
        %v6013 = vunpack.c.l.b16 %v3858
        %v6014 = vunpack.c.h.b16 %v3858
        %v6015 = vunpack.c.l.b16 %v3859
        %v6016 = vunpack.c.h.b16 %v3859
        %v6017 = vunpack.c.l.b16 %v3860
        %v6018 = vunpack.c.h.b16 %v3860
        %v6019 = vunpack.c.l.b16 %v3861
        %v6020 = vunpack.c.h.b16 %v3861
        %v6021 = vunpack.c.l.b16 %v3862
        %v6022 = vunpack.c.h.b16 %v3862
        %v6023 = vunpack.c.l.b16 %v3863
        %v6024 = vunpack.c.h.b16 %v3863
        %v6025 = vunpack.c.l.b16 %v3864
        %v6026 = vunpack.c.h.b16 %v3864
        %v6027 = vunpack.c.l.b16 %v3865
        %v6028 = vunpack.c.h.b16 %v3865
        %v6029 = vunpack.c.l.b16 %v3866
        %v6030 = vunpack.c.h.b16 %v3866
        %v6031 = vunpack.c.l.b16 %v3867
        %v6032 = vunpack.c.h.b16 %v3867
        %v6033 = vunpack.c.l.b16 %v3868
        %v6034 = vunpack.c.h.b16 %v3868
        %v6035 = vunpack.c.l.b16 %v3869
        %v6036 = vunpack.c.h.b16 %v3869
        %v6037 = vunpack.c.l.b16 %v3870
        %v6038 = vunpack.c.h.b16 %v3870
        %v6039 = vunpack.c.l.b16 %v3871
        %v6040 = vunpack.c.h.b16 %v3871
        %v6041 = vunpack.c.l.b16 %v3872
        %v6042 = vunpack.c.h.b16 %v3872
        %v6043 = vunpack.c.l.b16 %v3873
        %v6044 = vunpack.c.h.b16 %v3873
        %v6045 = vunpack.c.l.b16 %v3874
        %v6046 = vunpack.c.h.b16 %v3874
        %v6047 = vunpack.c.l.b16 %v3875
        %v6048 = vunpack.c.h.b16 %v3875
        %v6049 = vunpack.c.l.b16 %v3876
        %v6050 = vunpack.c.h.b16 %v3876
        %v6051 = vunpack.c.l.b16 %v3877
        %v6052 = vunpack.c.h.b16 %v3877
        %v6053 = vunpack.c.l.b16 %v3878
        %v6054 = vunpack.c.h.b16 %v3878
        %v6055 = vunpack.c.l.b16 %v3879
        %v6056 = vunpack.c.h.b16 %v3879
        %v6057 = vunpack.c.l.b16 %v3880
        %v6058 = vunpack.c.h.b16 %v3880
        %v6059 = vunpack.c.l.b16 %v3881
        %v6060 = vunpack.c.h.b16 %v3881
        %v6061 = vunpack.c.l.b16 %v3882
        %v6062 = vunpack.c.h.b16 %v3882
        %v6063 = vunpack.c.l.b16 %v3883
        %v6064 = vunpack.c.h.b16 %v3883
        %v6065 = vunpack.c.l.b16 %v3884
        %v6066 = vunpack.c.h.b16 %v3884
        %v6067 = vunpack.c.l.b16 %v3885
        %v6068 = vunpack.c.h.b16 %v3885
        %v6069 = vunpack.c.l.b16 %v3886
        %v6070 = vunpack.c.h.b16 %v3886
        %v6071 = vunpack.c.l.b16 %v3887
        %v6072 = vunpack.c.h.b16 %v3887
        %v6073 = vunpack.c.l.b16 %v3888
        %v6074 = vunpack.c.h.b16 %v3888
        %v6075 = vunpack.c.l.b16 %v3889
        %v6076 = vunpack.c.h.b16 %v3889
        %v6077 = vunpack.c.l.b16 %v3890
        %v6078 = vunpack.c.h.b16 %v3890
        %v6079 = vunpack.c.l.b16 %v3891
        %v6080 = vunpack.c.h.b16 %v3891
        %v6081 = vunpack.c.l.b16 %v3892
        %v6082 = vunpack.c.h.b16 %v3892
        %v6083 = vunpack.c.l.b16 %v3893
        %v6084 = vunpack.c.h.b16 %v3893
        %v6085 = vunpack.c.l.b16 %v3894
        %v6086 = vunpack.c.h.b16 %v3894
        %v6087 = vunpack.c.l.b16 %v3895
        %v6088 = vunpack.c.h.b16 %v3895
        %v6089 = vunpack.c.l.b16 %v3896
        %v6090 = vunpack.c.h.b16 %v3896
        %v6091 = vunpack.c.l.b16 %v3897
        %v6092 = vunpack.c.h.b16 %v3897
        %v6093 = vunpack.c.l.b16 %v3898
        %v6094 = vunpack.c.h.b16 %v3898
        %v6095 = vunpack.c.l.b16 %v3899
        %v6096 = vunpack.c.h.b16 %v3899
        %v6097 = vunpack.c.l.b16 %v3900
        %v6098 = vunpack.c.h.b16 %v3900
        %v6099 = vunpack.c.l.b16 %v3901
        %v6100 = vunpack.c.h.b16 %v3901
        %v6101 = vunpack.c.l.b16 %v3902
        %v6102 = vunpack.c.h.b16 %v3902
        %v6103 = vunpack.c.l.b16 %v3903
        %v6104 = vunpack.c.h.b16 %v3903
        %v6105 = vunpack.c.l.b16 %v3904
        %v6106 = vunpack.c.h.b16 %v3904
        %v6107 = vunpack.c.l.b16 %v3905
        %v6108 = vunpack.c.h.b16 %v3905
        %v6109 = vunpack.c.l.b16 %v3906
        %v6110 = vunpack.c.h.b16 %v3906
        %v6111 = vunpack.c.l.b16 %v3907
        %v6112 = vunpack.c.h.b16 %v3907
        %v6113 = vunpack.c.l.b16 %v3908
        %v6114 = vunpack.c.h.b16 %v3908
        %v6115 = vunpack.c.l.b16 %v3909
        %v6116 = vunpack.c.h.b16 %v3909
        %v6117 = vunpack.c.l.b16 %v3910
        %v6118 = vunpack.c.h.b16 %v3910
        %v6119 = vunpack.c.l.b16 %v3911
        %v6120 = vunpack.c.h.b16 %v3911
        %v6121 = vunpack.c.l.b16 %v3912
        %v6122 = vunpack.c.h.b16 %v3912
        %v6123 = vunpack.c.l.b16 %v3913
        %v6124 = vunpack.c.h.b16 %v3913
        %v6125 = vunpack.c.l.b16 %v3914
        %v6126 = vunpack.c.h.b16 %v3914
        %v6127 = vunpack.c.l.b16 %v3915
        %v6128 = vunpack.c.h.b16 %v3915
        %v6129 = vunpack.c.l.b16 %v3916
        %v6130 = vunpack.c.h.b16 %v3916
        %v6131 = vunpack.c.l.b16 %v3917
        %v6132 = vunpack.c.h.b16 %v3917
        %v6133 = vunpack.c.l.b16 %v3918
        %v6134 = vunpack.c.h.b16 %v3918
        %v6135 = vunpack.c.l.b16 %v3919
        %v6136 = vunpack.c.h.b16 %v3919
        %v6137 = vunpack.c.l.b16 %v3920
        %v6138 = vunpack.c.h.b16 %v3920
        %v6139 = vunpack.c.l.b16 %v3921
        %v6140 = vunpack.c.h.b16 %v3921
        %v6141 = vunpack.c.l.b16 %v3922
        %v6142 = vunpack.c.h.b16 %v3922
        %v6143 = vunpack.c.l.b16 %v3923
        %v6144 = vunpack.c.h.b16 %v3923
        %v6145 = vunpack.c.l.b16 %v3924
        %v6146 = vunpack.c.h.b16 %v3924
        %v6147 = vunpack.c.l.b16 %v3925
        %v6148 = vunpack.c.h.b16 %v3925
        %v6149 = vunpack.c.l.b16 %v3926
        %v6150 = vunpack.c.h.b16 %v3926
        %v6151 = vunpack.c.l.b16 %v3927
        %v6152 = vunpack.c.h.b16 %v3927
        %v6153 = vunpack.c.l.b16 %v3928
        %v6154 = vunpack.c.h.b16 %v3928
        %v6155 = vunpack.c.l.b16 %v3929
        %v6156 = vunpack.c.h.b16 %v3929
        %v6157 = vunpack.c.l.b16 %v3930
        %v6158 = vunpack.c.h.b16 %v3930
        %v6159 = vunpack.c.l.b16 %v3931
        %v6160 = vunpack.c.h.b16 %v3931
        %v6161 = vunpack.c.l.b16 %v3932
        %v6162 = vunpack.c.h.b16 %v3932
        %v6163 = vunpack.c.l.b16 %v3933
        %v6164 = vunpack.c.h.b16 %v3933
        %v6165 = vunpack.c.l.b16 %v3934
        %v6166 = vunpack.c.h.b16 %v3934
        %v6167 = vunpack.c.l.b16 %v3935
        %v6168 = vunpack.c.h.b16 %v3935
        %v6169 = vunpack.c.l.b16 %v3936
        %v6170 = vunpack.c.h.b16 %v3936
        %v6171 = vunpack.c.l.b16 %v3937
        %v6172 = vunpack.c.h.b16 %v3937
        %v6173 = vunpack.c.l.b16 %v3938
        %v6174 = vunpack.c.h.b16 %v3938
        %v6175 = vunpack.c.l.b16 %v3939
        %v6176 = vunpack.c.h.b16 %v3939
        %v6177 = vunpack.c.l.b16 %v3940
        %v6178 = vunpack.c.h.b16 %v3940
        %v6179 = vunpack.c.l.b16 %v3941
        %v6180 = vunpack.c.h.b16 %v3941
        %v6181 = vunpack.c.l.b16 %v3942
        %v6182 = vunpack.c.h.b16 %v3942
        %v6183 = vunpack.c.l.b16 %v3943
        %v6184 = vunpack.c.h.b16 %v3943
        %v6185 = vunpack.c.l.b16 %v3944
        %v6186 = vunpack.c.h.b16 %v3944
        %v6187 = vunpack.c.l.b16 %v3945
        %v6188 = vunpack.c.h.b16 %v3945
        %v6189 = vunpack.c.l.b16 %v3946
        %v6190 = vunpack.c.h.b16 %v3946
        %v6191 = vunpack.c.l.b16 %v3947
        %v6192 = vunpack.c.h.b16 %v3947
        %v6193 = vunpack.c.l.b16 %v3948
        %v6194 = vunpack.c.h.b16 %v3948
        %v6195 = vunpack.c.l.b16 %v3949
        %v6196 = vunpack.c.h.b16 %v3949
        %v6197 = vunpack.c.l.b16 %v3950
        %v6198 = vunpack.c.h.b16 %v3950
        %v6199 = vunpack.c.l.b16 %v3951
        %v6200 = vunpack.c.h.b16 %v3951
        %v6201 = vunpack.c.l.b16 %v3952
        %v6202 = vunpack.c.h.b16 %v3952
        %v6203 = vunpack.c.l.b16 %v3953
        %v6204 = vunpack.c.h.b16 %v3953
        %v6205 = vunpack.c.l.b16 %v3954
        %v6206 = vunpack.c.h.b16 %v3954
        %v6207 = vunpack.c.l.b16 %v3955
        %v6208 = vunpack.c.h.b16 %v3955
        %v6209 = vunpack.c.l.b16 %v3956
        %v6210 = vunpack.c.h.b16 %v3956
        %v6211 = vunpack.c.l.b16 %v3957
        %v6212 = vunpack.c.h.b16 %v3957
        %v6213 = vunpack.c.l.b16 %v3958
        %v6214 = vunpack.c.h.b16 %v3958
        %v6215 = vunpack.c.l.b16 %v3959
        %v6216 = vunpack.c.h.b16 %v3959
        %v6217 = vunpack.c.l.b16 %v3960
        %v6218 = vunpack.c.h.b16 %v3960
        %v6219 = vunpack.c.l.b16 %v3961
        %v6220 = vunpack.c.h.b16 %v3961
        %v6221 = vunpack.c.l.b16 %v3962
        %v6222 = vunpack.c.h.b16 %v3962
        %v6223 = vunpack.c.l.b16 %v3963
        %v6224 = vunpack.c.h.b16 %v3963
        %v6225 = vunpack.c.l.b16 %v3964
        %v6226 = vunpack.c.h.b16 %v3964
        %v6227 = vunpack.c.l.b16 %v3965
        %v6228 = vunpack.c.h.b16 %v3965
        %v6229 = vunpack.c.l.b16 %v3966
        %v6230 = vunpack.c.h.b16 %v3966
        %v6231 = vunpack.c.l.b16 %v3967
        %v6232 = vunpack.c.h.b16 %v3967
        %v6233 = vunpack.c.l.b16 %v3968
        %v6234 = vunpack.c.h.b16 %v3968
        %v6235 = vunpack.c.l.b16 %v3969
        %v6236 = vunpack.c.h.b16 %v3969
        %v6237 = vunpack.c.l.b16 %v3970
        %v6238 = vunpack.c.h.b16 %v3970
        %v6239 = vunpack.c.l.b16 %v3971
        %v6240 = vunpack.c.h.b16 %v3971
        %v6241 = vunpack.c.l.b16 %v3972
        %v6242 = vunpack.c.h.b16 %v3972
        %v6243 = vunpack.c.l.b16 %v3973
        %v6244 = vunpack.c.h.b16 %v3973
        %v6245 = vunpack.c.l.b16 %v3974
        %v6246 = vunpack.c.h.b16 %v3974
        %v6247 = vunpack.c.l.b16 %v3975
        %v6248 = vunpack.c.h.b16 %v3975
        %v6249 = vunpack.c.l.b16 %v3976
        %v6250 = vunpack.c.h.b16 %v3976
        %v6251 = vunpack.c.l.b16 %v3977
        %v6252 = vunpack.c.h.b16 %v3977
        %v6253 = vunpack.c.l.b16 %v3978
        %v6254 = vunpack.c.h.b16 %v3978
        %v6255 = vunpack.c.l.b16 %v3979
        %v6256 = vunpack.c.h.b16 %v3979
        %v6257 = vunpack.c.l.b16 %v3980
        %v6258 = vunpack.c.h.b16 %v3980
        %v6259 = vunpack.c.l.b16 %v3981
        %v6260 = vunpack.c.h.b16 %v3981
        %v6261 = vunpack.c.l.b16 %v3982
        %v6262 = vunpack.c.h.b16 %v3982
        %v6263 = vunpack.c.l.b16 %v3983
        %v6264 = vunpack.c.h.b16 %v3983
        %v6265 = vunpack.c.l.b16 %v3984
        %v6266 = vunpack.c.h.b16 %v3984
        %v6267 = vunpack.c.l.b16 %v3985
        %v6268 = vunpack.c.h.b16 %v3985
        %v6269 = vunpack.c.l.b16 %v3986
        %v6270 = vunpack.c.h.b16 %v3986
        %v6271 = vunpack.c.l.b16 %v3987
        %v6272 = vunpack.c.h.b16 %v3987
        %v6273 = vunpack.c.l.b16 %v3988
        %v6274 = vunpack.c.h.b16 %v3988
        %v6275 = vunpack.c.l.b16 %v3989
        %v6276 = vunpack.c.h.b16 %v3989
        %v6277 = vunpack.c.l.b16 %v3990
        %v6278 = vunpack.c.h.b16 %v3990
        %v6279 = vunpack.c.l.b16 %v3991
        %v6280 = vunpack.c.h.b16 %v3991
        %v6281 = vunpack.c.l.b16 %v3992
        %v6282 = vunpack.c.h.b16 %v3992
        %v6283 = vunpack.c.l.b16 %v3993
        %v6284 = vunpack.c.h.b16 %v3993
        %v6285 = vunpack.c.l.b16 %v3994
        %v6286 = vunpack.c.h.b16 %v3994
        %v6287 = vunpack.c.l.b16 %v3995
        %v6288 = vunpack.c.h.b16 %v3995
        %v6289 = vunpack.c.l.b16 %v3996
        %v6290 = vunpack.c.h.b16 %v3996
        %v6291 = vunpack.c.l.b16 %v3997
        %v6292 = vunpack.c.h.b16 %v3997
        %v6293 = vunpack.c.l.b16 %v3998
        %v6294 = vunpack.c.h.b16 %v3998
        %v6295 = vunpack.c.l.b16 %v3999
        %v6296 = vunpack.c.h.b16 %v3999
        %v6297 = vunpack.c.l.b16 %v4000
        %v6298 = vunpack.c.h.b16 %v4000
        %v6299 = vunpack.c.l.b16 %v4001
        %v6300 = vunpack.c.h.b16 %v4001
        %v6301 = vunpack.c.l.b16 %v4002
        %v6302 = vunpack.c.h.b16 %v4002
        %v6303 = vunpack.c.l.b16 %v4003
        %v6304 = vunpack.c.h.b16 %v4003
        %v6305 = vunpack.c.l.b16 %v4004
        %v6306 = vunpack.c.h.b16 %v4004
        %v6307 = vunpack.c.l.b16 %v4005
        %v6308 = vunpack.c.h.b16 %v4005
        %v6309 = vunpack.c.l.b16 %v4006
        %v6310 = vunpack.c.h.b16 %v4006
        %v6311 = vunpack.c.l.b16 %v4007
        %v6312 = vunpack.c.h.b16 %v4007
        %v6313 = vunpack.c.l.b16 %v4008
        %v6314 = vunpack.c.h.b16 %v4008
        %v6315 = vunpack.c.l.b16 %v4009
        %v6316 = vunpack.c.h.b16 %v4009
        %v6317 = vunpack.c.l.b16 %v4010
        %v6318 = vunpack.c.h.b16 %v4010
        %v6319 = vunpack.c.l.b16 %v4011
        %v6320 = vunpack.c.h.b16 %v4011
        %v6321 = vunpack.c.l.b16 %v4012
        %v6322 = vunpack.c.h.b16 %v4012
        %v6323 = vunpack.c.l.b16 %v4013
        %v6324 = vunpack.c.h.b16 %v4013
        %v6325 = vunpack.c.l.b16 %v4014
        %v6326 = vunpack.c.h.b16 %v4014
        %v6327 = vunpack.c.l.b16 %v4015
        %v6328 = vunpack.c.h.b16 %v4015
        %v6329 = vunpack.c.l.b16 %v4016
        %v6330 = vunpack.c.h.b16 %v4016
        %v6331 = vunpack.c.l.b16 %v4017
        %v6332 = vunpack.c.h.b16 %v4017
        %v6333 = vunpack.c.l.b16 %v4018
        %v6334 = vunpack.c.h.b16 %v4018
        %v6335 = vunpack.c.l.b16 %v4019
        %v6336 = vunpack.c.h.b16 %v4019
        %v6337 = vunpack.c.l.b16 %v4020
        %v6338 = vunpack.c.h.b16 %v4020
        %v6339 = vunpack.c.l.b16 %v4021
        %v6340 = vunpack.c.h.b16 %v4021
        %v6341 = vunpack.c.l.b16 %v4022
        %v6342 = vunpack.c.h.b16 %v4022
        %v6343 = vunpack.c.l.b16 %v4023
        %v6344 = vunpack.c.h.b16 %v4023
        %v6345 = vunpack.c.l.b16 %v4024
        %v6346 = vunpack.c.h.b16 %v4024
        %v6347 = vunpack.c.l.b16 %v4025
        %v6348 = vunpack.c.h.b16 %v4025
        %v6349 = vunpack.c.l.b16 %v4026
        %v6350 = vunpack.c.h.b16 %v4026
        %v6351 = vunpack.c.l.b16 %v4027
        %v6352 = vunpack.c.h.b16 %v4027
        %v6353 = vunpack.c.l.b16 %v4028
        %v6354 = vunpack.c.h.b16 %v4028
        %v6355 = vunpack.c.l.b16 %v4029
        %v6356 = vunpack.c.h.b16 %v4029
        %v6357 = vunpack.c.l.b16 %v4030
        %v6358 = vunpack.c.h.b16 %v4030
        %v6359 = vunpack.c.l.b16 %v4031
        %v6360 = vunpack.c.h.b16 %v4031
        %v6361 = vunpack.c.l.b16 %v4032
        %v6362 = vunpack.c.h.b16 %v4032
        %v6363 = vunpack.c.l.b16 %v4033
        %v6364 = vunpack.c.h.b16 %v4033
        %v6365 = vunpack.c.l.b16 %v4034
        %v6366 = vunpack.c.h.b16 %v4034
        %v6367 = vunpack.c.l.b16 %v4035
        %v6368 = vunpack.c.h.b16 %v4035
        %v6369 = vunpack.c.l.b16 %v4036
        %v6370 = vunpack.c.h.b16 %v4036
        %v6371 = vunpack.c.l.b16 %v4037
        %v6372 = vunpack.c.h.b16 %v4037
        %v6373 = vunpack.c.l.b16 %v4038
        %v6374 = vunpack.c.h.b16 %v4038
        %v6375 = vunpack.c.l.b16 %v4039
        %v6376 = vunpack.c.h.b16 %v4039
        %v6377 = vunpack.c.l.b16 %v4040
        %v6378 = vunpack.c.h.b16 %v4040
        %v6379 = vunpack.c.l.b16 %v4041
        %v6380 = vunpack.c.h.b16 %v4041
        %v6381 = vunpack.c.l.b16 %v4042
        %v6382 = vunpack.c.h.b16 %v4042
        %v6383 = vunpack.c.l.b16 %v4043
        %v6384 = vunpack.c.h.b16 %v4043
        %v6385 = vunpack.c.l.b16 %v4044
        %v6386 = vunpack.c.h.b16 %v4044
        %v6387 = vunpack.c.l.b16 %v4045
        %v6388 = vunpack.c.h.b16 %v4045
        %v6389 = vunpack.c.l.b16 %v4046
        %v6390 = vunpack.c.h.b16 %v4046
        %v6391 = vunpack.c.l.b16 %v4047
        %v6392 = vunpack.c.h.b16 %v4047
        %v6393 = vunpack.c.l.b16 %v4048
        %v6394 = vunpack.c.h.b16 %v4048
        %v6395 = vunpack.c.l.b16 %v4049
        %v6396 = vunpack.c.h.b16 %v4049
        %v6397 = vunpack.c.l.b16 %v4050
        %v6398 = vunpack.c.h.b16 %v4050
        %v6399 = vunpack.c.l.b16 %v4051
        %v6400 = vunpack.c.h.b16 %v4051
        %v6401 = vunpack.c.l.b16 %v4052
        %v6402 = vunpack.c.h.b16 %v4052
        %v6403 = vunpack.c.l.b16 %v4053
        %v6404 = vunpack.c.h.b16 %v4053
        %v6405 = vunpack.c.l.b16 %v4054
        %v6406 = vunpack.c.h.b16 %v4054
        %v6407 = vunpack.c.l.b16 %v4055
        %v6408 = vunpack.c.h.b16 %v4055
        %v6409 = vunpack.c.l.b16 %v4056
        %v6410 = vunpack.c.h.b16 %v4056
        %v6411 = vunpack.c.l.b16 %v4057
        %v6412 = vunpack.c.h.b16 %v4057
        %v6413 = vunpack.c.l.b16 %v4058
        %v6414 = vunpack.c.h.b16 %v4058
        %v6415 = vunpack.c.l.b16 %v4059
        %v6416 = vunpack.c.h.b16 %v4059
        %v6417 = vunpack.c.l.b16 %v4060
        %v6418 = vunpack.c.h.b16 %v4060
        %v6419 = vunpack.c.l.b16 %v4061
        %v6420 = vunpack.c.h.b16 %v4061
        %v6421 = vunpack.c.l.b16 %v4062
        %v6422 = vunpack.c.h.b16 %v4062
        %v6423 = vunpack.c.l.b16 %v4063
        %v6424 = vunpack.c.h.b16 %v4063
        %v6425 = vunpack.c.l.b16 %v4064
        %v6426 = vunpack.c.h.b16 %v4064
        %v6427 = vunpack.c.l.b16 %v4065
        %v6428 = vunpack.c.h.b16 %v4065
        %v6429 = vunpack.c.l.b16 %v4066
        %v6430 = vunpack.c.h.b16 %v4066
        %v6431 = vunpack.c.l.b16 %v4067
        %v6432 = vunpack.c.h.b16 %v4067
        %v6433 = vunpack.c.l.b16 %v4068
        %v6434 = vunpack.c.h.b16 %v4068
        %v6435 = vunpack.c.l.b16 %v4069
        %v6436 = vunpack.c.h.b16 %v4069
        %v6437 = vunpack.c.l.b16 %v4070
        %v6438 = vunpack.c.h.b16 %v4070
        %v6439 = vunpack.c.l.b16 %v4071
        %v6440 = vunpack.c.h.b16 %v4071
        %v6441 = vunpack.c.l.b16 %v4072
        %v6442 = vunpack.c.h.b16 %v4072
        %v6443 = vunpack.c.l.b16 %v4073
        %v6444 = vunpack.c.h.b16 %v4073
        %v6445 = vunpack.c.l.b16 %v4074
        %v6446 = vunpack.c.h.b16 %v4074
        %v6447 = vunpack.c.l.b16 %v4075
        %v6448 = vunpack.c.h.b16 %v4075
        %v6449 = vunpack.c.l.b16 %v4076
        %v6450 = vunpack.c.h.b16 %v4076
        %v6451 = vunpack.c.l.b16 %v4077
        %v6452 = vunpack.c.h.b16 %v4077
        %v6453 = vunpack.c.l.b16 %v4078
        %v6454 = vunpack.c.h.b16 %v4078
        %v6455 = vunpack.c.l.b16 %v4079
        %v6456 = vunpack.c.h.b16 %v4079
        %v6457 = vunpack.c.l.b16 %v4080
        %v6458 = vunpack.c.h.b16 %v4080
        %v6459 = vunpack.c.l.b16 %v4081
        %v6460 = vunpack.c.h.b16 %v4081
        %v6461 = vunpack.c.l.b16 %v4082
        %v6462 = vunpack.c.h.b16 %v4082
        %v6463 = vunpack.c.l.b16 %v4083
        %v6464 = vunpack.c.h.b16 %v4083
        %v6465 = vunpack.c.l.b16 %v4084
        %v6466 = vunpack.c.h.b16 %v4084
        %v6467 = vunpack.c.l.b16 %v4085
        %v6468 = vunpack.c.h.b16 %v4085
        %v6469 = vunpack.c.l.b16 %v4086
        %v6470 = vunpack.c.h.b16 %v4086
        %v6471 = vunpack.c.l.b16 %v4087
        %v6472 = vunpack.c.h.b16 %v4087
        %v6473 = vunpack.c.l.b16 %v4088
        %v6474 = vunpack.c.h.b16 %v4088
        %v6475 = vunpack.c.l.b16 %v4089
        %v6476 = vunpack.c.h.b16 %v4089
        %v6477 = vunpack.c.l.b16 %v4090
        %v6478 = vunpack.c.h.b16 %v4090
        %v6479 = vunpack.c.l.b16 %v4091
        %v6480 = vunpack.c.h.b16 %v4091
        %v6481 = vunpack.c.l.b16 %v4092
        %v6482 = vunpack.c.h.b16 %v4092
        %v6483 = vunpack.c.l.b16 %v4093
        %v6484 = vunpack.c.h.b16 %v4093
        %v6485 = vunpack.c.l.b16 %v4094
        %v6486 = vunpack.c.h.b16 %v4094
        %v6487 = vunpack.c.l.b16 %v4095
        %v6488 = vunpack.c.h.b16 %v4095
        %v6489 = vunpack.c.l.b16 %v4096
        %v6490 = vunpack.c.h.b16 %v4096
        %v6491 = vunpack.c.l.b16 %v4097
        %v6492 = vunpack.c.h.b16 %v4097
        %v6493 = vunpack.c.l.b16 %v4098
        %v6494 = vunpack.c.h.b16 %v4098
        %v6495 = vunpack.c.l.b16 %v4099
        %v6496 = vunpack.c.h.b16 %v4099
        %v6497 = vunpack.c.l.b16 %v4100
        %v6498 = vunpack.c.h.b16 %v4100
        %v6499 = vunpack.c.l.b16 %v4101
        %v6500 = vunpack.c.h.b16 %v4101
        %v6501 = vunpack.c.l.b16 %v4102
        %v6502 = vunpack.c.h.b16 %v4102
        %v6503 = vunpack.c.l.b16 %v4103
        %v6504 = vunpack.c.h.b16 %v4103
        %v6505 = vunpack.c.l.b16 %v4104
        %v6506 = vunpack.c.h.b16 %v4104
        %v6507 = vunpack.c.l.b16 %v4105
        %v6508 = vunpack.c.h.b16 %v4105
        %v6509 = vunpack.c.l.b16 %v4106
        %v6510 = vunpack.c.h.b16 %v4106
        %v6511 = vunpack.c.l.b16 %v4107
        %v6512 = vunpack.c.h.b16 %v4107
        %v6513 = vunpack.c.l.b16 %v4108
        %v6514 = vunpack.c.h.b16 %v4108
        %v6515 = vunpack.c.l.b16 %v4109
        %v6516 = vunpack.c.h.b16 %v4109
        %v6517 = vunpack.c.l.b16 %v4110
        %v6518 = vunpack.c.h.b16 %v4110
        %v6519 = vunpack.c.l.b16 %v4111
        %v6520 = vunpack.c.h.b16 %v4111
        %v6521 = vunpack.c.l.b16 %v4112
        %v6522 = vunpack.c.h.b16 %v4112
        %v6523 = vunpack.c.l.b16 %v4113
        %v6524 = vunpack.c.h.b16 %v4113
        %v6525 = vunpack.c.l.b16 %v4114
        %v6526 = vunpack.c.h.b16 %v4114
        %v6527 = vunpack.c.l.b16 %v4115
        %v6528 = vunpack.c.h.b16 %v4115
        %v6529 = vunpack.c.l.b16 %v4116
        %v6530 = vunpack.c.h.b16 %v4116
        %v6531 = vunpack.c.l.b16 %v4117
        %v6532 = vunpack.c.h.b16 %v4117
        %v6533 = vunpack.c.l.b16 %v4118
        %v6534 = vunpack.c.h.b16 %v4118
        %v6535 = vunpack.c.l.b16 %v4119
        %v6536 = vunpack.c.h.b16 %v4119
        %v6537 = vunpack.c.l.b16 %v4120
        %v6538 = vunpack.c.h.b16 %v4120
        %v6539 = vunpack.c.l.b16 %v4121
        %v6540 = vunpack.c.h.b16 %v4121
        %v6541 = vunpack.c.l.b16 %v4122
        %v6542 = vunpack.c.h.b16 %v4122
        %v6543 = vunpack.c.l.b16 %v4123
        %v6544 = vunpack.c.h.b16 %v4123
        %v6545 = vunpack.c.l.b16 %v4124
        %v6546 = vunpack.c.h.b16 %v4124
        %v6547 = vunpack.c.l.b16 %v4125
        %v6548 = vunpack.c.h.b16 %v4125
        %v6549 = vunpack.c.l.b16 %v4126
        %v6550 = vunpack.c.h.b16 %v4126
        %v6551 = vunpack.c.l.b16 %v4127
        %v6552 = vunpack.c.h.b16 %v4127
        %v6553 = vunpack.c.l.b16 %v4128
        %v6554 = vunpack.c.h.b16 %v4128
        %v6555 = vunpack.c.l.b16 %v4129
        %v6556 = vunpack.c.h.b16 %v4129
        %v6557 = vunpack.c.l.b16 %v4130
        %v6558 = vunpack.c.h.b16 %v4130
        %v6559 = vunpack.c.l.b16 %v4131
        %v6560 = vunpack.c.h.b16 %v4131
        %v6561 = vunpack.c.l.b16 %v4132
        %v6562 = vunpack.c.h.b16 %v4132
        %v6563 = vunpack.c.l.b16 %v4133
        %v6564 = vunpack.c.h.b16 %v4133
        %v6565 = vunpack.c.l.b16 %v4134
        %v6566 = vunpack.c.h.b16 %v4134
        %v6567 = vunpack.c.l.b16 %v4135
        %v6568 = vunpack.c.h.b16 %v4135
        %v6569 = vunpack.c.l.b16 %v4136
        %v6570 = vunpack.c.h.b16 %v4136
        %v6571 = vunpack.c.l.b16 %v4137
        %v6572 = vunpack.c.h.b16 %v4137
        %v6573 = vunpack.c.l.b16 %v4138
        %v6574 = vunpack.c.h.b16 %v4138
        %v6575 = vunpack.c.l.b16 %v4139
        %v6576 = vunpack.c.h.b16 %v4139
        %v6577 = vunpack.c.l.b16 %v4140
        %v6578 = vunpack.c.h.b16 %v4140
        %v6579 = vunpack.c.l.b16 %v4141
        %v6580 = vunpack.c.h.b16 %v4141
        %v6581 = vunpack.c.l.b16 %v4142
        %v6582 = vunpack.c.h.b16 %v4142
        %v6583 = vunpack.c.l.b16 %v4143
        %v6584 = vunpack.c.h.b16 %v4143
        %v6585 = vunpack.c.l.b16 %v4144
        %v6586 = vunpack.c.h.b16 %v4144
        %v6587 = vunpack.c.l.b16 %v4145
        %v6588 = vunpack.c.h.b16 %v4145
        %v6589 = vunpack.c.l.b16 %v4146
        %v6590 = vunpack.c.h.b16 %v4146
        %v6591 = vunpack.c.l.b16 %v4147
        %v6592 = vunpack.c.h.b16 %v4147
        %v6593 = vunpack.c.l.b16 %v4148
        %v6594 = vunpack.c.h.b16 %v4148
        %v6595 = vunpack.c.l.b16 %v4149
        %v6596 = vunpack.c.h.b16 %v4149
        %v6597 = vunpack.c.l.b16 %v4150
        %v6598 = vunpack.c.h.b16 %v4150
        %v6599 = vunpack.c.l.b16 %v4151
        %v6600 = vunpack.c.h.b16 %v4151
        %v6601 = vunpack.c.l.b16 %v4152
        %v6602 = vunpack.c.h.b16 %v4152
        %v6603 = vunpack.c.l.b16 %v4153
        %v6604 = vunpack.c.h.b16 %v4153
        %v6605 = vunpack.c.l.b16 %v4154
        %v6606 = vunpack.c.h.b16 %v4154
        %v6607 = vunpack.c.l.b16 %v4155
        %v6608 = vunpack.c.h.b16 %v4155
        %v6609 = vunpack.c.l.b16 %v4156
        %v6610 = vunpack.c.h.b16 %v4156
        %v6611 = vunpack.c.l.b16 %v4157
        %v6612 = vunpack.c.h.b16 %v4157
        %v6613 = vunpack.c.l.b16 %v4158
        %v6614 = vunpack.c.h.b16 %v4158
        %v6615 = vunpack.c.l.b16 %v4159
        %v6616 = vunpack.c.h.b16 %v4159
        %v6617 = vunpack.c.l.b16 %v4160
        %v6618 = vunpack.c.h.b16 %v4160
        %v6619 = vunpack.c.l.b16 %v4161
        %v6620 = vunpack.c.h.b16 %v4161
        %v6621 = vunpack.c.l.b16 %v4162
        %v6622 = vunpack.c.h.b16 %v4162
        %v6623 = vunpack.c.l.b16 %v4163
        %v6624 = vunpack.c.h.b16 %v4163
        %v6625 = vunpack.c.l.b16 %v4164
        %v6626 = vunpack.c.h.b16 %v4164
        %v6627 = vunpack.c.l.b16 %v4165
        %v6628 = vunpack.c.h.b16 %v4165
        %v6629 = vunpack.c.l.b16 %v4166
        %v6630 = vunpack.c.h.b16 %v4166
        %v6631 = vunpack.c.l.b16 %v4167
        %v6632 = vunpack.c.h.b16 %v4167
        %v6633 = vunpack.c.l.b16 %v4168
        %v6634 = vunpack.c.h.b16 %v4168
        %v6635 = vunpack.c.l.b16 %v4169
        %v6636 = vunpack.c.h.b16 %v4169
        %v6637 = vunpack.c.l.b16 %v4170
        %v6638 = vunpack.c.h.b16 %v4170
        %v6639 = vunpack.c.l.b16 %v4171
        %v6640 = vunpack.c.h.b16 %v4171
        %v6641 = vunpack.c.l.b16 %v4172
        %v6642 = vunpack.c.h.b16 %v4172
        %v6643 = vunpack.c.l.b16 %v4173
        %v6644 = vunpack.c.h.b16 %v4173
        %v6645 = vunpack.c.l.b16 %v4174
        %v6646 = vunpack.c.h.b16 %v4174
        %v6647 = vunpack.c.l.b16 %v4175
        %v6648 = vunpack.c.h.b16 %v4175
        %v6649 = vunpack.c.l.b16 %v4176
        %v6650 = vunpack.c.h.b16 %v4176
        %v6651 = vunpack.c.l.b16 %v4177
        %v6652 = vunpack.c.h.b16 %v4177
        %v6653 = vunpack.c.l.b16 %v4178
        %v6654 = vunpack.c.h.b16 %v4178
        %v6655 = vunpack.c.l.b16 %v4179
        %v6656 = vunpack.c.h.b16 %v4179
        %v6657 = vunpack.c.l.b16 %v4180
        %v6658 = vunpack.c.h.b16 %v4180
        %v6659 = vunpack.c.l.b16 %v4181
        %v6660 = vunpack.c.h.b16 %v4181
        %v6661 = vunpack.c.l.b16 %v4182
        %v6662 = vunpack.c.h.b16 %v4182
        %v6663 = vunpack.c.l.b16 %v4183
        %v6664 = vunpack.c.h.b16 %v4183
        %v6665 = vunpack.c.l.b16 %v4184
        %v6666 = vunpack.c.h.b16 %v4184
        %v6667 = vunpack.c.l.b16 %v4185
        %v6668 = vunpack.c.h.b16 %v4185
        %v6669 = vunpack.c.l.b16 %v4186
        %v6670 = vunpack.c.h.b16 %v4186
        %v6671 = vunpack.c.l.b16 %v4187
        %v6672 = vunpack.c.h.b16 %v4187
        %v6673 = vunpack.c.l.b16 %v4188
        %v6674 = vunpack.c.h.b16 %v4188
        %v6675 = vunpack.c.l.b16 %v4189
        %v6676 = vunpack.c.h.b16 %v4189
        %v6677 = vunpack.c.l.b16 %v4190
        %v6678 = vunpack.c.h.b16 %v4190
        %v6679 = vunpack.c.l.b16 %v4191
        %v6680 = vunpack.c.h.b16 %v4191
        %v6681 = vunpack.c.l.b16 %v4192
        %v6682 = vunpack.c.h.b16 %v4192
        %v6683 = vunpack.c.l.b16 %v4193
        %v6684 = vunpack.c.h.b16 %v4193
        %v6685 = vunpack.c.l.b16 %v4194
        %v6686 = vunpack.c.h.b16 %v4194
        %v6687 = vunpack.c.l.b16 %v4195
        %v6688 = vunpack.c.h.b16 %v4195
        %v6689 = vunpack.c.l.b16 %v4196
        %v6690 = vunpack.c.h.b16 %v4196
        %v6691 = vunpack.c.l.b16 %v4197
        %v6692 = vunpack.c.h.b16 %v4197
        %v6693 = vunpack.c.l.b16 %v4198
        %v6694 = vunpack.c.h.b16 %v4198
        %v6695 = vunpack.c.l.b16 %v4199
        %v6696 = vunpack.c.h.b16 %v4199
        %v6697 = vunpack.c.l.b16 %v4200
        %v6698 = vunpack.c.h.b16 %v4200
        %v6699 = vunpack.c.l.b16 %v4201
        %v6700 = vunpack.c.h.b16 %v4201
        %v6701 = vunpack.c.l.b16 %v4202
        %v6702 = vunpack.c.h.b16 %v4202
        %v6703 = vunpack.c.l.b16 %v4203
        %v6704 = vunpack.c.h.b16 %v4203
        %v6705 = vunpack.c.l.b16 %v4204
        %v6706 = vunpack.c.h.b16 %v4204
        %v6707 = vunpack.c.l.b16 %v4205
        %v6708 = vunpack.c.h.b16 %v4205
        %v6709 = vunpack.c.l.b16 %v4206
        %v6710 = vunpack.c.h.b16 %v4206
        %v6711 = vunpack.c.l.b16 %v4207
        %v6712 = vunpack.c.h.b16 %v4207
        %v6713 = vunpack.c.l.b16 %v4208
        %v6714 = vunpack.c.h.b16 %v4208
        %v6715 = vunpack.c.l.b16 %v4209
        %v6716 = vunpack.c.h.b16 %v4209
        %v6717 = vunpack.c.l.b16 %v4210
        %v6718 = vunpack.c.h.b16 %v4210
        %v6719 = vunpack.c.l.b16 %v4211
        %v6720 = vunpack.c.h.b16 %v4211
        %v6721 = vunpack.c.l.b16 %v4212
        %v6722 = vunpack.c.h.b16 %v4212
        %v6723 = vunpack.c.l.b16 %v4213
        %v6724 = vunpack.c.h.b16 %v4213
        %v6725 = vunpack.c.l.b16 %v4214
        %v6726 = vunpack.c.h.b16 %v4214
        %v6727 = vunpack.c.l.b16 %v4215
        %v6728 = vunpack.c.h.b16 %v4215
        %v6729 = vunpack.c.l.b16 %v4216
        %v6730 = vunpack.c.h.b16 %v4216
        %v6731 = vunpack.c.l.b16 %v4217
        %v6732 = vunpack.c.h.b16 %v4217
        %v6733 = vunpack.c.l.b16 %v4218
        %v6734 = vunpack.c.h.b16 %v4218
        %v6735 = vunpack.c.l.b16 %v4219
        %v6736 = vunpack.c.h.b16 %v4219
        %v6737 = vunpack.c.l.b16 %v4220
        %v6738 = vunpack.c.h.b16 %v4220
        %v6739 = vunpack.c.l.b16 %v4221
        %v6740 = vunpack.c.h.b16 %v4221
        %v6741 = vunpack.c.l.b16 %v4222
        %v6742 = vunpack.c.h.b16 %v4222
        %v6743 = vunpack.c.l.b16 %v4223
        %v6744 = vunpack.c.h.b16 %v4223
        %v6745 = vunpack.c.l.b16 %v4224
        %v6746 = vunpack.c.h.b16 %v4224
        %v6747 = vunpack.c.l.b16 %v4225
        %v6748 = vunpack.c.h.b16 %v4225
        %v6749 = vunpack.c.l.b16 %v4226
        %v6750 = vunpack.c.h.b16 %v4226
        %v6751 = vunpack.c.l.b16 %v4227
        %v6752 = vunpack.c.h.b16 %v4227
        %v6753 = vunpack.c.l.b16 %v4228
        %v6754 = vunpack.c.h.b16 %v4228
        %v6755 = vunpack.c.l.b16 %v4229
        %v6756 = vunpack.c.h.b16 %v4229
        %v6757 = vunpack.c.l.b16 %v4230
        %v6758 = vunpack.c.h.b16 %v4230
        %v6759 = vunpack.c.l.b16 %v4231
        %v6760 = vunpack.c.h.b16 %v4231
        %v6761 = vunpack.c.l.b16 %v4232
        %v6762 = vunpack.c.h.b16 %v4232
        %v6763 = vunpack.c.l.b16 %v4233
        %v6764 = vunpack.c.h.b16 %v4233
        %v6765 = vunpack.c.l.b16 %v4234
        %v6766 = vunpack.c.h.b16 %v4234
        %v6767 = vunpack.c.l.b16 %v4235
        %v6768 = vunpack.c.h.b16 %v4235
        %v6769 = vunpack.c.l.b16 %v4236
        %v6770 = vunpack.c.h.b16 %v4236
        %v6771 = vunpack.c.l.b16 %v4237
        %v6772 = vunpack.c.h.b16 %v4237
        %v6773 = vunpack.c.l.b16 %v4238
        %v6774 = vunpack.c.h.b16 %v4238
        %v6775 = vunpack.c.l.b16 %v4239
        %v6776 = vunpack.c.h.b16 %v4239
        %v6777 = vunpack.c.l.b16 %v4240
        %v6778 = vunpack.c.h.b16 %v4240
        %v6779 = vunpack.c.l.b16 %v4241
        %v6780 = vunpack.c.h.b16 %v4241
        %v6781 = vunpack.c.l.b16 %v4242
        %v6782 = vunpack.c.h.b16 %v4242
        %v6783 = vunpack.c.l.b16 %v4243
        %v6784 = vunpack.c.h.b16 %v4243
        %v6785 = vunpack.c.l.b16 %v4244
        %v6786 = vunpack.c.h.b16 %v4244
        %v6787 = vunpack.c.l.b16 %v4245
        %v6788 = vunpack.c.h.b16 %v4245
        %v6789 = vunpack.c.l.b16 %v4246
        %v6790 = vunpack.c.h.b16 %v4246
        %v6791 = vunpack.c.l.b16 %v4247
        %v6792 = vunpack.c.h.b16 %v4247
        %v6793 = vunpack.c.l.b16 %v4248
        %v6794 = vunpack.c.h.b16 %v4248
        %v6795 = vunpack.c.l.b16 %v4249
        %v6796 = vunpack.c.h.b16 %v4249
        %v6797 = vunpack.c.l.b16 %v4250
        %v6798 = vunpack.c.h.b16 %v4250
        %v6799 = vunpack.c.l.b16 %v4251
        %v6800 = vunpack.c.h.b16 %v4251
        %v6801 = vunpack.c.l.b16 %v4252
        %v6802 = vunpack.c.h.b16 %v4252
        %v6803 = vunpack.c.l.b16 %v4253
        %v6804 = vunpack.c.h.b16 %v4253
        %v6805 = vunpack.c.l.b16 %v4254
        %v6806 = vunpack.c.h.b16 %v4254
        %v6807 = vunpack.c.l.b16 %v4255
        %v6808 = vunpack.c.h.b16 %v4255
        %v6809 = vunpack.c.l.b16 %v4256
        %v6810 = vunpack.c.h.b16 %v4256
        %v6811 = vunpack.c.l.b16 %v4257
        %v6812 = vunpack.c.h.b16 %v4257
        %v6813 = vunpack.c.l.b16 %v4258
        %v6814 = vunpack.c.h.b16 %v4258
        %v6815 = vunpack.c.l.b16 %v4259
        %v6816 = vunpack.c.h.b16 %v4259
        %v6817 = vunpack.c.l.b16 %v4260
        %v6818 = vunpack.c.h.b16 %v4260
        %v6819 = vunpack.c.l.b16 %v4261
        %v6820 = vunpack.c.h.b16 %v4261
        %v6821 = vunpack.c.l.b16 %v4262
        %v6822 = vunpack.c.h.b16 %v4262
        %v6823 = vunpack.c.l.b16 %v4263
        %v6824 = vunpack.c.h.b16 %v4263
        %v6825 = vunpack.c.l.b16 %v4264
        %v6826 = vunpack.c.h.b16 %v4264
        %v6827 = vunpack.c.l.b16 %v4265
        %v6828 = vunpack.c.h.b16 %v4265
        %v6829 = vunpack.c.l.b16 %v4266
        %v6830 = vunpack.c.h.b16 %v4266
        %v6831 = vunpack.c.l.b16 %v4267
        %v6832 = vunpack.c.h.b16 %v4267
        %v6833 = vunpack.c.l.b16 %v4268
        %v6834 = vunpack.c.h.b16 %v4268
        %v6835 = vunpack.c.l.b16 %v4269
        %v6836 = vunpack.c.h.b16 %v4269
        %v6837 = vunpack.c.l.b16 %v4270
        %v6838 = vunpack.c.h.b16 %v4270
        %v6839 = vunpack.c.l.b16 %v4271
        %v6840 = vunpack.c.h.b16 %v4271
        %v6841 = vunpack.c.l.b16 %v4272
        %v6842 = vunpack.c.h.b16 %v4272
        %v6843 = vunpack.c.l.b16 %v4273
        %v6844 = vunpack.c.h.b16 %v4273
        %v6845 = vunpack.c.l.b16 %v4274
        %v6846 = vunpack.c.h.b16 %v4274
        %v6847 = vunpack.c.l.b16 %v4275
        %v6848 = vunpack.c.h.b16 %v4275
        %v6849 = vunpack.c.l.b16 %v4276
        %v6850 = vunpack.c.h.b16 %v4276
        %v6851 = vunpack.c.l.b16 %v4277
        %v6852 = vunpack.c.h.b16 %v4277
        %v6853 = vunpack.c.l.b16 %v4278
        %v6854 = vunpack.c.h.b16 %v4278
        %v6855 = vunpack.c.l.b16 %v4279
        %v6856 = vunpack.c.h.b16 %v4279
        %v6857 = vunpack.c.l.b16 %v4280
        %v6858 = vunpack.c.h.b16 %v4280
        %v6859 = vunpack.c.l.b16 %v4281
        %v6860 = vunpack.c.h.b16 %v4281
        %v6861 = vunpack.c.l.b16 %v4282
        %v6862 = vunpack.c.h.b16 %v4282
        %v6863 = vunpack.c.l.b16 %v4283
        %v6864 = vunpack.c.h.b16 %v4283
        %v6865 = vunpack.c.l.b16 %v4284
        %v6866 = vunpack.c.h.b16 %v4284
        %v6867 = vunpack.c.l.b16 %v4285
        %v6868 = vunpack.c.h.b16 %v4285
        %v6869 = vunpack.c.l.b16 %v4286
        %v6870 = vunpack.c.h.b16 %v4286
        %v6871 = vunpack.c.l.b16 %v4287
        %v6872 = vunpack.c.h.b16 %v4287
        %v6873 = vunpack.c.l.b16 %v4288
        %v6874 = vunpack.c.h.b16 %v4288
        %v6875 = vunpack.c.l.b16 %v4289
        %v6876 = vunpack.c.h.b16 %v4289
        %v6877 = vunpack.c.l.b16 %v4290
        %v6878 = vunpack.c.h.b16 %v4290
        %v6879 = vunpack.c.l.b16 %v4291
        %v6880 = vunpack.c.h.b16 %v4291
        %v6881 = vunpack.c.l.b16 %v4292
        %v6882 = vunpack.c.h.b16 %v4292
        %v6883 = vunpack.c.l.b16 %v4293
        %v6884 = vunpack.c.h.b16 %v4293
        %v6885 = vunpack.c.l.b16 %v4294
        %v6886 = vunpack.c.h.b16 %v4294
        %v6887 = vunpack.c.l.b16 %v4295
        %v6888 = vunpack.c.h.b16 %v4295
        %v6889 = vunpack.c.l.b16 %v4296
        %v6890 = vunpack.c.h.b16 %v4296
        %v6891 = vunpack.c.l.b16 %v4297
        %v6892 = vunpack.c.h.b16 %v4297
        %v6893 = vunpack.c.l.b16 %v4298
        %v6894 = vunpack.c.h.b16 %v4298
        %v6895 = vunpack.c.l.b16 %v4299
        %v6896 = vunpack.c.h.b16 %v4299
        %v6897 = vunpack.c.l.b16 %v4300
        %v6898 = vunpack.c.h.b16 %v4300
        %v6899 = vunpack.c.l.b16 %v4301
        %v6900 = vunpack.c.h.b16 %v4301
        %v6901 = vunpack.c.l.b16 %v4302
        %v6902 = vunpack.c.h.b16 %v4302
        %v6903 = vunpack.c.l.b16 %v4303
        %v6904 = vunpack.c.h.b16 %v4303
        %v6905 = vunpack.c.l.b16 %v4304
        %v6906 = vunpack.c.h.b16 %v4304
        %v6907 = vunpack.c.l.b16 %v4305
        %v6908 = vunpack.c.h.b16 %v4305
        %v6909 = vunpack.c.l.b16 %v4306
        %v6910 = vunpack.c.h.b16 %v4306
        %v6911 = vunpack.c.l.b16 %v4307
        %v6912 = vunpack.c.h.b16 %v4307
        %v6913 = vunpack.c.l.b16 %v4308
        %v6914 = vunpack.c.h.b16 %v4308
        %v6915 = vunpack.c.l.b16 %v4309
        %v6916 = vunpack.c.h.b16 %v4309
        %v6917 = vunpack.c.l.b16 %v4310
        %v6918 = vunpack.c.h.b16 %v4310
        %v6919 = vunpack.c.l.b16 %v4311
        %v6920 = vunpack.c.h.b16 %v4311
        %v6921 = vunpack.c.l.b16 %v4312
        %v6922 = vunpack.c.h.b16 %v4312
        %v6923 = vunpack.c.l.b16 %v4313
        %v6924 = vunpack.c.h.b16 %v4313
        %v6925 = vunpack.c.l.b16 %v4314
        %v6926 = vunpack.c.h.b16 %v4314
        %v6927 = vunpack.c.l.b16 %v4315
        %v6928 = vunpack.c.h.b16 %v4315
        %v6929 = vunpack.c.l.b16 %v4316
        %v6930 = vunpack.c.h.b16 %v4316
        %v6931 = vunpack.c.l.b16 %v4317
        %v6932 = vunpack.c.h.b16 %v4317
        %v6933 = vunpack.c.l.b16 %v4318
        %v6934 = vunpack.c.h.b16 %v4318
        %v6935 = vunpack.c.l.b16 %v4319
        %v6936 = vunpack.c.h.b16 %v4319
        %v6937 = vunpack.c.l.b16 %v4320
        %v6938 = vunpack.c.h.b16 %v4320
        %v6939 = vunpack.c.l.b16 %v4321
        %v6940 = vunpack.c.h.b16 %v4321
        %v6941 = vunpack.c.l.b16 %v4322
        %v6942 = vunpack.c.h.b16 %v4322
        %v6943 = vunpack.c.l.b16 %v4323
        %v6944 = vunpack.c.h.b16 %v4323
        %v6945 = vunpack.c.l.b16 %v4324
        %v6946 = vunpack.c.h.b16 %v4324
        %v6947 = vunpack.c.l.b16 %v4325
        %v6948 = vunpack.c.h.b16 %v4325
        %v6949 = vunpack.c.l.b16 %v4326
        %v6950 = vunpack.c.h.b16 %v4326
        %v6951 = vunpack.c.l.b16 %v4327
        %v6952 = vunpack.c.h.b16 %v4327
        %v6953 = vunpack.c.l.b16 %v4328
        %v6954 = vunpack.c.h.b16 %v4328
        %v6955 = vunpack.c.l.b16 %v4329
        %v6956 = vunpack.c.h.b16 %v4329
        %v6957 = vunpack.c.l.b16 %v4330
        %v6958 = vunpack.c.h.b16 %v4330
        %v6959 = vunpack.c.l.b16 %v4331
        %v6960 = vunpack.c.h.b16 %v4331
        %v6961 = vunpack.c.l.b16 %v4332
        %v6962 = vunpack.c.h.b16 %v4332
        %v6963 = vunpack.c.l.b16 %v4333
        %v6964 = vunpack.c.h.b16 %v4333
        %v6965 = vunpack.c.l.b16 %v4334
        %v6966 = vunpack.c.h.b16 %v4334
        %v6967 = vunpack.c.l.b16 %v4335
        %v6968 = vunpack.c.h.b16 %v4335
        %v6969 = vunpack.c.l.b16 %v4336
        %v6970 = vunpack.c.h.b16 %v4336
        %v6971 = vunpack.c.l.b16 %v4337
        %v6972 = vunpack.c.h.b16 %v4337
        %v6973 = vunpack.c.l.b16 %v4338
        %v6974 = vunpack.c.h.b16 %v4338
        %v6975 = vunpack.c.l.b16 %v4339
        %v6976 = vunpack.c.h.b16 %v4339
        %v6977 = vunpack.c.l.b16 %v4340
        %v6978 = vunpack.c.h.b16 %v4340
        %v6979 = vunpack.c.l.b16 %v4341
        %v6980 = vunpack.c.h.b16 %v4341
        %v6981 = vunpack.c.l.b16 %v4342
        %v6982 = vunpack.c.h.b16 %v4342
        %v6983 = vunpack.c.l.b16 %v4343
        %v6984 = vunpack.c.h.b16 %v4343
        %v6985 = vunpack.c.l.b16 %v4344
        %v6986 = vunpack.c.h.b16 %v4344
        %v6987 = vunpack.c.l.b16 %v4345
        %v6988 = vunpack.c.h.b16 %v4345
        %v6989 = vunpack.c.l.b16 %v4346
        %v6990 = vunpack.c.h.b16 %v4346
        %v6991 = vunpack.c.l.b16 %v4347
        %v6992 = vunpack.c.h.b16 %v4347
        %v6993 = vunpack.c.l.b16 %v4348
        %v6994 = vunpack.c.h.b16 %v4348
        %v6995 = vunpack.c.l.b16 %v4349
        %v6996 = vunpack.c.h.b16 %v4349
        %v6997 = vunpack.c.l.b16 %v4350
        %v6998 = vunpack.c.h.b16 %v4350
        %v6999 = vunpack.c.l.b16 %v4351
        %v7000 = vunpack.c.h.b16 %v4351
        %v7001 = vunpack.c.l.b16 %v4352
        %v7002 = vunpack.c.h.b16 %v4352
        %v7003 = vunpack.c.l.b16 %v4353
        %v7004 = vunpack.c.h.b16 %v4353
        %v7005 = vunpack.c.l.b16 %v4354
        %v7006 = vunpack.c.h.b16 %v4354
        %v7007 = vunpack.c.l.b16 %v4355
        %v7008 = vunpack.c.h.b16 %v4355
        %v7009 = vunpack.c.l.b16 %v4356
        %v7010 = vunpack.c.h.b16 %v4356
        %v7011 = vunpack.c.l.b16 %v4357
        %v7012 = vunpack.c.h.b16 %v4357
        %v7013 = vunpack.c.l.b16 %v4358
        %v7014 = vunpack.c.h.b16 %v4358
        %v7015 = vunpack.c.l.b16 %v4359
        %v7016 = vunpack.c.h.b16 %v4359
        %v7017 = vunpack.c.l.b16 %v4360
        %v7018 = vunpack.c.h.b16 %v4360
        %v7019 = vunpack.c.l.b16 %v4361
        %v7020 = vunpack.c.h.b16 %v4361
        %v7021 = vunpack.c.l.b16 %v4362
        %v7022 = vunpack.c.h.b16 %v4362
        %v7023 = vunpack.c.l.b16 %v4363
        %v7024 = vunpack.c.h.b16 %v4363
        %v7025 = vunpack.c.l.b16 %v4364
        %v7026 = vunpack.c.h.b16 %v4364
        %v7027 = vunpack.c.l.b16 %v4365
        %v7028 = vunpack.c.h.b16 %v4365
        %v7029 = vunpack.c.l.b16 %v4366
        %v7030 = vunpack.c.h.b16 %v4366
        %v7031 = vunpack.c.l.b16 %v4367
        %v7032 = vunpack.c.h.b16 %v4367
        %v7033 = vunpack.c.l.b16 %v4368
        %v7034 = vunpack.c.h.b16 %v4368
        %v7035 = vunpack.c.l.b16 %v4369
        %v7036 = vunpack.c.h.b16 %v4369
        %v7037 = vunpack.c.l.b16 %v4370
        %v7038 = vunpack.c.h.b16 %v4370
        %v7039 = vunpack.c.l.b16 %v4371
        %v7040 = vunpack.c.h.b16 %v4371
        %v7041 = vunpack.c.l.b16 %v4372
        %v7042 = vunpack.c.h.b16 %v4372
        %v7043 = vunpack.c.l.b16 %v4373
        %v7044 = vunpack.c.h.b16 %v4373
        %v7045 = vunpack.c.l.b16 %v4374
        %v7046 = vunpack.c.h.b16 %v4374
        %v7047 = vunpack.c.l.b16 %v4375
        %v7048 = vunpack.c.h.b16 %v4375
        %v7049 = vunpack.c.l.b16 %v4376
        %v7050 = vunpack.c.h.b16 %v4376
        %v7051 = vunpack.c.l.b16 %v4377
        %v7052 = vunpack.c.h.b16 %v4377
        %v7053 = vunpack.c.l.b16 %v4378
        %v7054 = vunpack.c.h.b16 %v4378
        %v7055 = vunpack.c.l.b16 %v4379
        %v7056 = vunpack.c.h.b16 %v4379
        %v7057 = vunpack.c.l.b16 %v4380
        %v7058 = vunpack.c.h.b16 %v4380
        %v7059 = vunpack.c.l.b16 %v4381
        %v7060 = vunpack.c.h.b16 %v4381
        %v7061 = vunpack.c.l.b16 %v4382
        %v7062 = vunpack.c.h.b16 %v4382
        %v7063 = vunpack.c.l.b16 %v4383
        %v7064 = vunpack.c.h.b16 %v4383
        %v7065 = vunpack.c.l.b16 %v4384
        %v7066 = vunpack.c.h.b16 %v4384
        %v7067 = vunpack.c.l.b16 %v4385
        %v7068 = vunpack.c.h.b16 %v4385
        %v7069 = vunpack.c.l.b16 %v4386
        %v7070 = vunpack.c.h.b16 %v4386
        %v7071 = vunpack.c.l.b16 %v4387
        %v7072 = vunpack.c.h.b16 %v4387
        %v7073 = vunpack.c.l.b16 %v4388
        %v7074 = vunpack.c.h.b16 %v4388
        %v7075 = vunpack.c.l.b16 %v4389
        %v7076 = vunpack.c.h.b16 %v4389
        %v7077 = vunpack.c.l.b16 %v4390
        %v7078 = vunpack.c.h.b16 %v4390
        %v7079 = vunpack.c.l.b16 %v4391
        %v7080 = vunpack.c.h.b16 %v4391
        %v7081 = vunpack.c.l.b16 %v4392
        %v7082 = vunpack.c.h.b16 %v4392
        %v7083 = vunpack.c.l.b16 %v4393
        %v7084 = vunpack.c.h.b16 %v4393
        %v7085 = vunpack.c.l.b16 %v4394
        %v7086 = vunpack.c.h.b16 %v4394
        %v7087 = vunpack.c.l.b16 %v4395
        %v7088 = vunpack.c.h.b16 %v4395
        %v7089 = vunpack.c.l.b16 %v4396
        %v7090 = vunpack.c.h.b16 %v4396
        %v7091 = vunpack.c.l.b16 %v4397
        %v7092 = vunpack.c.h.b16 %v4397
        %v7093 = vunpack.c.l.b16 %v4398
        %v7094 = vunpack.c.h.b16 %v4398
        %v7095 = vunpack.c.l.b16 %v4399
        %v7096 = vunpack.c.h.b16 %v4399
        %v7097 = vunpack.c.l.b16 %v4400
        %v7098 = vunpack.c.h.b16 %v4400
        %v7099 = vunpack.c.l.b16 %v4401
        %v7100 = vunpack.c.h.b16 %v4401
        %v7101 = vunpack.c.l.b16 %v4402
        %v7102 = vunpack.c.h.b16 %v4402
        %v7103 = vunpack.c.l.b16 %v4403
        %v7104 = vunpack.c.h.b16 %v4403
        %v7105 = vunpack.c.l.b16 %v4404
        %v7106 = vunpack.c.h.b16 %v4404
        %v7107 = vunpack.c.l.b16 %v4405
        %v7108 = vunpack.c.h.b16 %v4405
        %v7109 = vunpack.c.l.b16 %v4406
        %v7110 = vunpack.c.h.b16 %v4406
        %v7111 = vunpack.c.l.b16 %v4407
        %v7112 = vunpack.c.h.b16 %v4407
        %v7113 = vunpack.c.l.b16 %v4408
        %v7114 = vunpack.c.h.b16 %v4408
        %v7115 = vunpack.c.l.b16 %v4409
        %v7116 = vunpack.c.h.b16 %v4409
        %v7117 = vunpack.c.l.b16 %v4410
        %v7118 = vunpack.c.h.b16 %v4410
        %v7119 = vunpack.c.l.b16 %v4411
        %v7120 = vunpack.c.h.b16 %v4411
        %v7121 = vunpack.c.l.b16 %v4412
        %v7122 = vunpack.c.h.b16 %v4412
        %v7123 = vunpack.c.l.b16 %v4413
        %v7124 = vunpack.c.h.b16 %v4413
        %v7125 = vunpack.c.l.b16 %v4414
        %v7126 = vunpack.c.h.b16 %v4414
        %v7127 = vunpack.c.l.b16 %v4415
        %v7128 = vunpack.c.h.b16 %v4415
        %v7129 = vunpack.c.l.b16 %v4416
        %v7130 = vunpack.c.h.b16 %v4416
        %v7131 = vunpack.c.l.b16 %v4417
        %v7132 = vunpack.c.h.b16 %v4417
        %v7133 = vunpack.c.l.b16 %v4418
        %v7134 = vunpack.c.h.b16 %v4418
        %v7135 = vunpack.c.l.b16 %v4419
        %v7136 = vunpack.c.h.b16 %v4419
        %v7137 = vunpack.c.l.b16 %v4420
        %v7138 = vunpack.c.h.b16 %v4420
        %v7139 = vunpack.c.l.b16 %v4421
        %v7140 = vunpack.c.h.b16 %v4421
        %v7141 = vunpack.c.l.b16 %v4422
        %v7142 = vunpack.c.h.b16 %v4422
        %v7143 = vunpack.c.l.b16 %v4423
        %v7144 = vunpack.c.h.b16 %v4423
        %v7145 = vunpack.c.l.b16 %v4424
        %v7146 = vunpack.c.h.b16 %v4424
        %v7147 = vunpack.c.l.b16 %v4425
        %v7148 = vunpack.c.h.b16 %v4425
        %v7149 = vunpack.c.l.b16 %v4426
        %v7150 = vunpack.c.h.b16 %v4426
        %v7151 = vunpack.c.l.b16 %v4427
        %v7152 = vunpack.c.h.b16 %v4427
        %v7153 = vunpack.c.l.b16 %v4428
        %v7154 = vunpack.c.h.b16 %v4428
        %v7155 = vunpack.c.l.b16 %v4429
        %v7156 = vunpack.c.h.b16 %v4429
        %v7157 = vunpack.c.l.b16 %v4430
        %v7158 = vunpack.c.h.b16 %v4430
        %v7159 = vunpack.c.l.b16 %v4431
        %v7160 = vunpack.c.h.b16 %v4431
        %v7161 = vunpack.c.l.b16 %v4432
        %v7162 = vunpack.c.h.b16 %v4432
        %v7163 = vunpack.c.l.b16 %v4433
        %v7164 = vunpack.c.h.b16 %v4433
        %v7165 = vunpack.c.l.b16 %v4434
        %v7166 = vunpack.c.h.b16 %v4434
        %v7167 = vunpack.c.l.b16 %v4435
        %v7168 = vunpack.c.h.b16 %v4435
        %v7169 = vunpack.c.l.b16 %v4436
        %v7170 = vunpack.c.h.b16 %v4436
        %v7171 = vunpack.c.l.b16 %v4437
        %v7172 = vunpack.c.h.b16 %v4437
        %v7173 = vunpack.c.l.b16 %v4438
        %v7174 = vunpack.c.h.b16 %v4438
        %v7175 = vunpack.c.l.b16 %v4439
        %v7176 = vunpack.c.h.b16 %v4439
        %v7177 = vunpack.c.l.b16 %v4440
        %v7178 = vunpack.c.h.b16 %v4440
        %v7179 = vunpack.c.l.b16 %v4441
        %v7180 = vunpack.c.h.b16 %v4441
        %v7181 = vunpack.c.l.b16 %v4442
        %v7182 = vunpack.c.h.b16 %v4442
        %v7183 = vunpack.c.l.b16 %v4443
        %v7184 = vunpack.c.h.b16 %v4443
        %v7185 = vunpack.c.l.b16 %v4444
        %v7186 = vunpack.c.h.b16 %v4444
        %v7187 = vunpack.c.l.b16 %v4445
        %v7188 = vunpack.c.h.b16 %v4445
        %v7189 = vunpack.c.l.b16 %v4446
        %v7190 = vunpack.c.h.b16 %v4446
        %v7191 = vunpack.c.l.b16 %v4447
        %v7192 = vunpack.c.h.b16 %v4447
        %v7193 = vunpack.c.l.b16 %v4448
        %v7194 = vunpack.c.h.b16 %v4448
        %v7195 = vunpack.c.l.b16 %v4449
        %v7196 = vunpack.c.h.b16 %v4449
        %v7197 = vunpack.c.l.b16 %v4450
        %v7198 = vunpack.c.h.b16 %v4450
        %v7199 = vunpack.c.l.b16 %v4451
        %v7200 = vunpack.c.h.b16 %v4451
        %v7201 = vunpack.c.l.b16 %v4452
        %v7202 = vunpack.c.h.b16 %v4452
        %v7203 = vunpack.c.l.b16 %v4453
        %v7204 = vunpack.c.h.b16 %v4453
        %v7205 = vunpack.c.l.b16 %v4454
        %v7206 = vunpack.c.h.b16 %v4454
        %v7207 = vunpack.c.l.b16 %v4455
        %v7208 = vunpack.c.h.b16 %v4455
        %v7209 = vunpack.c.l.b16 %v4456
        %v7210 = vunpack.c.h.b16 %v4456
        %v7211 = vunpack.c.l.b16 %v4457
        %v7212 = vunpack.c.h.b16 %v4457
        %v7213 = vunpack.c.l.b16 %v4458
        %v7214 = vunpack.c.h.b16 %v4458
        %v7215 = vunpack.c.l.b16 %v4459
        %v7216 = vunpack.c.h.b16 %v4459
        %v7217 = vunpack.c.l.b16 %v4460
        %v7218 = vunpack.c.h.b16 %v4460
        %v7219 = vunpack.c.l.b16 %v4461
        %v7220 = vunpack.c.h.b16 %v4461
        %v7221 = vunpack.c.l.b16 %v4462
        %v7222 = vunpack.c.h.b16 %v4462
        %v7223 = vunpack.c.l.b16 %v4463
        %v7224 = vunpack.c.h.b16 %v4463
        %v7225 = vunpack.c.l.b16 %v4464
        %v7226 = vunpack.c.h.b16 %v4464
        %v7227 = vunpack.c.l.b16 %v4465
        %v7228 = vunpack.c.h.b16 %v4465
        %v7229 = vunpack.c.l.b16 %v4466
        %v7230 = vunpack.c.h.b16 %v4466
        %v7231 = vunpack.c.l.b16 %v4467
        %v7232 = vunpack.c.h.b16 %v4467
        %v7233 = vunpack.c.l.b16 %v4468
        %v7234 = vunpack.c.h.b16 %v4468
        %v7235 = vunpack.c.l.b16 %v4469
        %v7236 = vunpack.c.h.b16 %v4469
        %v7237 = vunpack.c.l.b16 %v4470
        %v7238 = vunpack.c.h.b16 %v4470
        %v7239 = vunpack.c.l.b16 %v4471
        %v7240 = vunpack.c.h.b16 %v4471
        %v7241 = vunpack.c.l.b16 %v4472
        %v7242 = vunpack.c.h.b16 %v4472
        %v7243 = vunpack.c.l.b16 %v4473
        %v7244 = vunpack.c.h.b16 %v4473
        %v7245 = vunpack.c.l.b16 %v4474
        %v7246 = vunpack.c.h.b16 %v4474
        %v7247 = vunpack.c.l.b16 %v4475
        %v7248 = vunpack.c.h.b16 %v4475
        %v7249 = vunpack.c.l.b16 %v4476
        %v7250 = vunpack.c.h.b16 %v4476
        %v7251 = vunpack.c.l.b16 %v4477
        %v7252 = vunpack.c.h.b16 %v4477
        %v7253 = vunpack.c.l.b16 %v4478
        %v7254 = vunpack.c.h.b16 %v4478
        %v7255 = vunpack.c.l.b16 %v4479
        %v7256 = vunpack.c.h.b16 %v4479
        %v7257 = vunpack.c.l.b16 %v4480
        %v7258 = vunpack.c.h.b16 %v4480
        %v7259 = vunpack.c.l.b16 %v4481
        %v7260 = vunpack.c.h.b16 %v4481
        %v7261 = vunpack.c.l.b16 %v4482
        %v7262 = vunpack.c.h.b16 %v4482
        %v7263 = vunpack.c.l.b16 %v4483
        %v7264 = vunpack.c.h.b16 %v4483
        %v7265 = vunpack.c.l.b16 %v4484
        %v7266 = vunpack.c.h.b16 %v4484
        %v7267 = vunpack.c.l.b16 %v4485
        %v7268 = vunpack.c.h.b16 %v4485
        %v7269 = vunpack.c.l.b16 %v4486
        %v7270 = vunpack.c.h.b16 %v4486
        %v7271 = vunpack.c.l.b16 %v4487
        %v7272 = vunpack.c.h.b16 %v4487
        %v7273 = vunpack.c.l.b16 %v4488
        %v7274 = vunpack.c.h.b16 %v4488
        %v7275 = vunpack.c.l.b16 %v4489
        %v7276 = vunpack.c.h.b16 %v4489
        %v7277 = vunpack.c.l.b16 %v4490
        %v7278 = vunpack.c.h.b16 %v4490
        %v7279 = vunpack.c.l.b16 %v4491
        %v7280 = vunpack.c.h.b16 %v4491
        %v7281 = vunpack.c.l.b16 %v4492
        %v7282 = vunpack.c.h.b16 %v4492
        %v7283 = vunpack.c.l.b16 %v4493
        %v7284 = vunpack.c.h.b16 %v4493
        %v7285 = vunpack.c.l.b16 %v4494
        %v7286 = vunpack.c.h.b16 %v4494
        %v7287 = vunpack.c.l.b16 %v4495
        %v7288 = vunpack.c.h.b16 %v4495
        %v7289 = vunpack.c.l.b16 %v4496
        %v7290 = vunpack.c.h.b16 %v4496
        %v7291 = vunpack.c.l.b16 %v4497
        %v7292 = vunpack.c.h.b16 %v4497
        %v7293 = vunpack.c.l.b16 %v4498
        %v7294 = vunpack.c.h.b16 %v4498
        %v7295 = vunpack.c.l.b16 %v4499
        %v7296 = vunpack.c.h.b16 %v4499
        %v7297 = vunpack.c.l.b16 %v4500
        %v7298 = vunpack.c.h.b16 %v4500
        %v7299 = vunpack.c.l.b16 %v4501
        %v7300 = vunpack.c.h.b16 %v4501
        %v7301 = vunpack.c.l.b16 %v4502
        %v7302 = vunpack.c.h.b16 %v4502
        %v7303 = vunpack.c.l.b16 %v4503
        %v7304 = vunpack.c.h.b16 %v4503
        %v7305 = vunpack.c.l.b16 %v4504
        %v7306 = vunpack.c.h.b16 %v4504
        %v7307 = vunpack.c.l.b16 %v4505
        %v7308 = vunpack.c.h.b16 %v4505
        %v7309 = vunpack.c.l.b16 %v4506
        %v7310 = vunpack.c.h.b16 %v4506
        %v7311 = vunpack.c.l.b16 %v4507
        %v7312 = vunpack.c.h.b16 %v4507
        %v7313 = vunpack.c.l.b16 %v4508
        %v7314 = vunpack.c.h.b16 %v4508
        %v7315 = vunpack.c.l.b16 %v4509
        %v7316 = vunpack.c.h.b16 %v4509
        %v7317 = vunpack.c.l.b16 %v4510
        %v7318 = vunpack.c.h.b16 %v4510
        %v7319 = vunpack.c.l.b16 %v4511
        %v7320 = vunpack.c.h.b16 %v4511
        %v7321 = vunpack.c.l.b16 %v4512
        %v7322 = vunpack.c.h.b16 %v4512
        %v7323 = vunpack.c.l.b16 %v4513
        %v7324 = vunpack.c.h.b16 %v4513
        %v7325 = vunpack.c.l.b16 %v4514
        %v7326 = vunpack.c.h.b16 %v4514
        %v7327 = vunpack.c.l.b16 %v4515
        %v7328 = vunpack.c.h.b16 %v4515
        %v7329 = vunpack.c.l.b16 %v4516
        %v7330 = vunpack.c.h.b16 %v4516
        %v7331 = vunpack.c.l.b16 %v4517
        %v7332 = vunpack.c.h.b16 %v4517
        %v7333 = vunpack.c.l.b16 %v4518
        %v7334 = vunpack.c.h.b16 %v4518
        %v7335 = vunpack.c.l.b16 %v4519
        %v7336 = vunpack.c.h.b16 %v4519
        %v7337 = vunpack.c.l.b16 %v4520
        %v7338 = vunpack.c.h.b16 %v4520
        %v7339 = vunpack.c.l.b16 %v4521
        %v7340 = vunpack.c.h.b16 %v4521
        %v7341 = vunpack.c.l.b16 %v4522
        %v7342 = vunpack.c.h.b16 %v4522
        %v7343 = vunpack.c.l.b16 %v4523
        %v7344 = vunpack.c.h.b16 %v4523
        %v7345 = vunpack.c.l.b16 %v4524
        %v7346 = vunpack.c.h.b16 %v4524
        %v7347 = vunpack.c.l.b16 %v4525
        %v7348 = vunpack.c.h.b16 %v4525
        %v7349 = vunpack.c.l.b16 %v4526
        %v7350 = vunpack.c.h.b16 %v4526
        %v7351 = vunpack.c.l.b16 %v4527
        %v7352 = vunpack.c.h.b16 %v4527
        %v7353 = vunpack.c.l.b16 %v4528
        %v7354 = vunpack.c.h.b16 %v4528
        %v7355 = vunpack.c.l.b16 %v4529
        %v7356 = vunpack.c.h.b16 %v4529
        %v7357 = vunpack.c.l.b16 %v4530
        %v7358 = vunpack.c.h.b16 %v4530
        %v7359 = vunpack.c.l.b16 %v4531
        %v7360 = vunpack.c.h.b16 %v4531
        %v7361 = vunpack.c.l.b16 %v4532
        %v7362 = vunpack.c.h.b16 %v4532
        %v7363 = vunpack.c.l.b16 %v4533
        %v7364 = vunpack.c.h.b16 %v4533
        %v7365 = vunpack.c.l.b16 %v4534
        %v7366 = vunpack.c.h.b16 %v4534
        %v7367 = vunpack.c.l.b16 %v4535
        %v7368 = vunpack.c.h.b16 %v4535
        %v7369 = vunpack.c.l.b16 %v4536
        %v7370 = vunpack.c.h.b16 %v4536
        %v7371 = vunpack.c.l.b16 %v4537
        %v7372 = vunpack.c.h.b16 %v4537
        %v7373 = vunpack.c.l.b16 %v4538
        %v7374 = vunpack.c.h.b16 %v4538
        %v7375 = vunpack.c.l.b16 %v4539
        %v7376 = vunpack.c.h.b16 %v4539
        %v7377 = vunpack.c.l.b16 %v4540
        %v7378 = vunpack.c.h.b16 %v4540
        %v7379 = vunpack.c.l.b16 %v4541
        %v7380 = vunpack.c.h.b16 %v4541
        %v7381 = vunpack.c.l.b16 %v4542
        %v7382 = vunpack.c.h.b16 %v4542
        %v7383 = vunpack.c.l.b16 %v4543
        %v7384 = vunpack.c.h.b16 %v4543
        %v7385 = vunpack.c.l.b16 %v4544
        %v7386 = vunpack.c.h.b16 %v4544
        %v7387 = vunpack.c.l.b16 %v4545
        %v7388 = vunpack.c.h.b16 %v4545
        %v7389 = vunpack.c.l.b16 %v4546
        %v7390 = vunpack.c.h.b16 %v4546
        %v7391 = vunpack.c.l.b16 %v4547
        %v7392 = vunpack.c.h.b16 %v4547
        %v7393 = vunpack.c.l.b16 %v4548
        %v7394 = vunpack.c.h.b16 %v4548
        %v7395 = vunpack.c.l.b16 %v4549
        %v7396 = vunpack.c.h.b16 %v4549
        %v7397 = vunpack.c.l.b16 %v4550
        %v7398 = vunpack.c.h.b16 %v4550
        %v7399 = vunpack.c.l.b16 %v4551
        %v7400 = vunpack.c.h.b16 %v4551
        %v7401 = vunpack.c.l.b16 %v4552
        %v7402 = vunpack.c.h.b16 %v4552
        %v7403 = vunpack.c.l.b16 %v4553
        %v7404 = vunpack.c.h.b16 %v4553
        %v7405 = vunpack.c.l.b16 %v4554
        %v7406 = vunpack.c.h.b16 %v4554
        %v7407 = vunpack.c.l.b16 %v4555
        %v7408 = vunpack.c.h.b16 %v4555
        %v7409 = vunpack.c.l.b16 %v4556
        %v7410 = vunpack.c.h.b16 %v4556
        %v7411 = vunpack.c.l.b16 %v4557
        %v7412 = vunpack.c.h.b16 %v4557
        %v7413 = vunpack.c.l.b16 %v4558
        %v7414 = vunpack.c.h.b16 %v4558
        %v7415 = vunpack.c.l.b16 %v4559
        %v7416 = vunpack.c.h.b16 %v4559
        %v7417 = vunpack.c.l.b16 %v4560
        %v7418 = vunpack.c.h.b16 %v4560
        %v7419 = vunpack.c.l.b16 %v4561
        %v7420 = vunpack.c.h.b16 %v4561
        %v7421 = vunpack.c.l.b16 %v4562
        %v7422 = vunpack.c.h.b16 %v4562
        %v7423 = vunpack.c.l.b16 %v4563
        %v7424 = vunpack.c.h.b16 %v4563
        %v7425 = vunpack.c.l.b16 %v4564
        %v7426 = vunpack.c.h.b16 %v4564
        %v7427 = vunpack.c.l.b16 %v4565
        %v7428 = vunpack.c.h.b16 %v4565
        %v7429 = vunpack.c.l.b16 %v4566
        %v7430 = vunpack.c.h.b16 %v4566
        %v7431 = vunpack.c.l.b16 %v4567
        %v7432 = vunpack.c.h.b16 %v4567
        %v7433 = vunpack.c.l.b16 %v4568
        %v7434 = vunpack.c.h.b16 %v4568
        %v7435 = vunpack.c.l.b16 %v4569
        %v7436 = vunpack.c.h.b16 %v4569
        %v7437 = vunpack.c.l.b16 %v4570
        %v7438 = vunpack.c.h.b16 %v4570
        %v7439 = vunpack.c.l.b16 %v4571
        %v7440 = vunpack.c.h.b16 %v4571
        %v7441 = vunpack.c.l.b16 %v4572
        %v7442 = vunpack.c.h.b16 %v4572
        %v7443 = vunpack.c.l.b16 %v4573
        %v7444 = vunpack.c.h.b16 %v4573
        %v7445 = vunpack.c.l.b16 %v4574
        %v7446 = vunpack.c.h.b16 %v4574
        %v7447 = vunpack.c.l.b16 %v4575
        %v7448 = vunpack.c.h.b16 %v4575
        %v7449 = vunpack.c.l.b16 %v4576
        %v7450 = vunpack.c.h.b16 %v4576
        %v7451 = vunpack.c.l.b16 %v4577
        %v7452 = vunpack.c.h.b16 %v4577
        %v7453 = vunpack.c.l.b16 %v4578
        %v7454 = vunpack.c.h.b16 %v4578
        %v7455 = vunpack.c.l.b16 %v4579
        %v7456 = vunpack.c.h.b16 %v4579
        %v7457 = vunpack.c.l.b16 %v4580
        %v7458 = vunpack.c.h.b16 %v4580
        %v7459 = vunpack.c.l.b16 %v4581
        %v7460 = vunpack.c.h.b16 %v4581
        %v7461 = vunpack.c.l.b16 %v4582
        %v7462 = vunpack.c.h.b16 %v4582
        %v7463 = vunpack.c.l.b16 %v4583
        %v7464 = vunpack.c.h.b16 %v4583
        %v7465 = vunpack.c.l.b16 %v4584
        %v7466 = vunpack.c.h.b16 %v4584
        %v7467 = vunpack.c.l.b16 %v4585
        %v7468 = vunpack.c.h.b16 %v4585
        %v7469 = vunpack.c.l.b16 %v4586
        %v7470 = vunpack.c.h.b16 %v4586
        %v7471 = vunpack.c.l.b16 %v4587
        %v7472 = vunpack.c.h.b16 %v4587
        %v7473 = vunpack.c.l.b16 %v4588
        %v7474 = vunpack.c.h.b16 %v4588
        %v7475 = vunpack.c.l.b16 %v4589
        %v7476 = vunpack.c.h.b16 %v4589
        %v7477 = vunpack.c.l.b16 %v4590
        %v7478 = vunpack.c.h.b16 %v4590
        %v7479 = vunpack.c.l.b16 %v4591
        %v7480 = vunpack.c.h.b16 %v4591
        %v7481 = vunpack.c.l.b16 %v4592
        %v7482 = vunpack.c.h.b16 %v4592
        %v7483 = vunpack.c.l.b16 %v4593
        %v7484 = vunpack.c.h.b16 %v4593
        %v7485 = vunpack.c.l.b16 %v4594
        %v7486 = vunpack.c.h.b16 %v4594
        %v7487 = vunpack.c.l.b16 %v4595
        %v7488 = vunpack.c.h.b16 %v4595
        %v7489 = vunpack.c.l.b16 %v4596
        %v7490 = vunpack.c.h.b16 %v4596
        %v7491 = vunpack.c.l.b16 %v4597
        %v7492 = vunpack.c.h.b16 %v4597
        %v7493 = vunpack.c.l.b16 %v4598
        %v7494 = vunpack.c.h.b16 %v4598
        %v7495 = vunpack.c.l.b16 %v4599
        %v7496 = vunpack.c.h.b16 %v4599
        %v7497 = vunpack.c.l.b16 %v4600
        %v7498 = vunpack.c.h.b16 %v4600
        %v7499 = vunpack.c.l.b16 %v4601
        %v7500 = vunpack.c.h.b16 %v4601
        %v7501 = vunpack.c.l.b16 %v4602
        %v7502 = vunpack.c.h.b16 %v4602
        %v7503 = vunpack.c.l.b16 %v4603
        %v7504 = vunpack.c.h.b16 %v4603
        %v7505 = vunpack.c.l.b16 %v4604
        %v7506 = vunpack.c.h.b16 %v4604
        %v7507 = vunpack.c.l.b16 %v4605
        %v7508 = vunpack.c.h.b16 %v4605
        %v7509 = vunpack.c.l.b16 %v4606
        %v7510 = vunpack.c.h.b16 %v4606
        %v7511 = vunpack.c.l.b16 %v4607
        %v7512 = vunpack.c.h.b16 %v4607
        %v7513 = vunpack.c.l.b16 %v4608
        %v7514 = vunpack.c.h.b16 %v4608
        %v7515 = vunpack.c.l.b16 %v4609
        %v7516 = vunpack.c.h.b16 %v4609
        %v7517 = vunpack.c.l.b16 %v4610
        %v7518 = vunpack.c.h.b16 %v4610
        %v7519 = vunpack.c.l.b16 %v4611
        %v7520 = vunpack.c.h.b16 %v4611
        %v7521 = vunpack.c.l.b16 %v4612
        %v7522 = vunpack.c.h.b16 %v4612
        %v7523 = vunpack.c.l.b16 %v4613
        %v7524 = vunpack.c.h.b16 %v4613
        %v7525 = vunpack.c.l.b16 %v4614
        %v7526 = vunpack.c.h.b16 %v4614
        %v7527 = vunpack.c.l.b16 %v4615
        %v7528 = vunpack.c.h.b16 %v4615
        %v7529 = vunpack.c.l.b16 %v4616
        %v7530 = vunpack.c.h.b16 %v4616
        %v7531 = vunpack.c.l.b16 %v4617
        %v7532 = vunpack.c.h.b16 %v4617
        %v7533 = vunpack.c.l.b16 %v4618
        %v7534 = vunpack.c.h.b16 %v4618
        %v7535 = vunpack.c.l.b16 %v4619
        %v7536 = vunpack.c.h.b16 %v4619
        %v7537 = vunpack.c.l.b16 %v4620
        %v7538 = vunpack.c.h.b16 %v4620
        %v7539 = vunpack.c.l.b16 %v4621
        %v7540 = vunpack.c.h.b16 %v4621
        %v7541 = vunpack.c.l.b16 %v4622
        %v7542 = vunpack.c.h.b16 %v4622
        %v7543 = vunpack.c.l.b16 %v4623
        %v7544 = vunpack.c.h.b16 %v4623
        %v7545 = vunpack.c.l.b16 %v4624
        %v7546 = vunpack.c.h.b16 %v4624
        %v7547 = vunpack.c.l.b16 %v4625
        %v7548 = vunpack.c.h.b16 %v4625
        %v7549 = vunpack.c.l.b16 %v4626
        %v7550 = vunpack.c.h.b16 %v4626
        %v7551 = vunpack.c.l.b16 %v4627
        %v7552 = vunpack.c.h.b16 %v4627
        %v7553 = vunpack.c.l.b16 %v4628
        %v7554 = vunpack.c.h.b16 %v4628
        %v7555 = vunpack.c.l.b16 %v4629
        %v7556 = vunpack.c.h.b16 %v4629
        %v7557 = vunpack.c.l.b16 %v4630
        %v7558 = vunpack.c.h.b16 %v4630
        %v7559 = vunpack.c.l.b16 %v4631
        %v7560 = vunpack.c.h.b16 %v4631
        %v7561 = vunpack.c.l.b16 %v4632
        %v7562 = vunpack.c.h.b16 %v4632
        %v7563 = vunpack.c.l.b16 %v4633
        %v7564 = vunpack.c.h.b16 %v4633
        %v7565 = vunpack.c.l.b16 %v4634
        %v7566 = vunpack.c.h.b16 %v4634
        %v7567 = vunpack.c.l.b16 %v4635
        %v7568 = vunpack.c.h.b16 %v4635
        %v7569 = vunpack.c.l.b16 %v4636
        %v7570 = vunpack.c.h.b16 %v4636
        %v7571 = vunpack.c.l.b16 %v4637
        %v7572 = vunpack.c.h.b16 %v4637
        %v7573 = vunpack.c.l.b16 %v4638
        %v7574 = vunpack.c.h.b16 %v4638
        %v7575 = vunpack.c.l.b16 %v4639
        %v7576 = vunpack.c.h.b16 %v4639
        %v7577 = vunpack.c.l.b16 %v4640
        %v7578 = vunpack.c.h.b16 %v4640
        %v7579 = vunpack.c.l.b16 %v4641
        %v7580 = vunpack.c.h.b16 %v4641
        %v7581 = vunpack.c.l.b16 %v4642
        %v7582 = vunpack.c.h.b16 %v4642
        %v7583 = vunpack.c.l.b16 %v4643
        %v7584 = vunpack.c.h.b16 %v4643
        %v7585 = vunpack.c.l.b16 %v4644
        %v7586 = vunpack.c.h.b16 %v4644
        %v7587 = vunpack.c.l.b16 %v4645
        %v7588 = vunpack.c.h.b16 %v4645
        %v7589 = vunpack.c.l.b16 %v4646
        %v7590 = vunpack.c.h.b16 %v4646
        %v7591 = vunpack.c.l.b16 %v4647
        %v7592 = vunpack.c.h.b16 %v4647
        %v7593 = vunpack.c.l.b16 %v4648
        %v7594 = vunpack.c.h.b16 %v4648
        %v7595 = vunpack.c.l.b16 %v4649
        %v7596 = vunpack.c.h.b16 %v4649
        %v7597 = vunpack.c.l.b16 %v4650
        %v7598 = vunpack.c.h.b16 %v4650
        %v7599 = vunpack.c.l.b16 %v4651
        %v7600 = vunpack.c.h.b16 %v4651
        %v7601 = vunpack.c.l.b16 %v4652
        %v7602 = vunpack.c.h.b16 %v4652
        %v7603 = vunpack.c.l.b16 %v4653
        %v7604 = vunpack.c.h.b16 %v4653
        %v7605 = vunpack.c.l.b16 %v4654
        %v7606 = vunpack.c.h.b16 %v4654
        %v7607 = vunpack.c.l.b16 %v4655
        %v7608 = vunpack.c.h.b16 %v4655
        %v7609 = vunpack.c.l.b16 %v4656
        %v7610 = vunpack.c.h.b16 %v4656
        %v7611 = vunpack.c.l.b16 %v4657
        %v7612 = vunpack.c.h.b16 %v4657
        %v7613 = vunpack.c.l.b16 %v4658
        %v7614 = vunpack.c.h.b16 %v4658
        %v7615 = vunpack.c.l.b16 %v4659
        %v7616 = vunpack.c.h.b16 %v4659
        %v7617 = vunpack.c.l.b16 %v4660
        %v7618 = vunpack.c.h.b16 %v4660
        %v7619 = vunpack.c.l.b16 %v4661
        %v7620 = vunpack.c.h.b16 %v4661
        %v7621 = vunpack.c.l.b16 %v4662
        %v7622 = vunpack.c.h.b16 %v4662
        %v7623 = vunpack.c.l.b16 %v4663
        %v7624 = vunpack.c.h.b16 %v4663
        %v7625 = vunpack.c.l.b16 %v4664
        %v7626 = vunpack.c.h.b16 %v4664
        %v7627 = vunpack.c.l.b16 %v4665
        %v7628 = vunpack.c.h.b16 %v4665
        %v7629 = vunpack.c.l.b16 %v4666
        %v7630 = vunpack.c.h.b16 %v4666
        %v7631 = vunpack.c.l.b16 %v4667
        %v7632 = vunpack.c.h.b16 %v4667
        %v7633 = vunpack.c.l.b16 %v4668
        %v7634 = vunpack.c.h.b16 %v4668
        %v7635 = vunpack.c.l.b16 %v4669
        %v7636 = vunpack.c.h.b16 %v4669
        %v7637 = vunpack.c.l.b16 %v4670
        %v7638 = vunpack.c.h.b16 %v4670
        %v7639 = vunpack.c.l.b16 %v4671
        %v7640 = vunpack.c.h.b16 %v4671
        %v7641 = vunpack.c.l.b16 %v4672
        %v7642 = vunpack.c.h.b16 %v4672
        %v7643 = vunpack.c.l.b16 %v4673
        %v7644 = vunpack.c.h.b16 %v4673
        %v7645 = vunpack.c.l.b16 %v4674
        %v7646 = vunpack.c.h.b16 %v4674
        %v7647 = vunpack.c.l.b16 %v4675
        %v7648 = vunpack.c.h.b16 %v4675
        %v7649 = vunpack.c.l.b16 %v4676
        %v7650 = vunpack.c.h.b16 %v4676
        %v7651 = vunpack.c.l.b16 %v4677
        %v7652 = vunpack.c.h.b16 %v4677
        %v7653 = vunpack.c.l.b16 %v4678
        %v7654 = vunpack.c.h.b16 %v4678
        %v7655 = vunpack.c.l.b16 %v4679
        %v7656 = vunpack.c.h.b16 %v4679
        %v7657 = vunpack.c.l.b16 %v4680
        %v7658 = vunpack.c.h.b16 %v4680
        %v7659 = vunpack.c.l.b16 %v4681
        %v7660 = vunpack.c.h.b16 %v4681
        %v7661 = vunpack.c.l.b16 %v4682
        %v7662 = vunpack.c.h.b16 %v4682
        %v7663 = vunpack.c.l.b16 %v4683
        %v7664 = vunpack.c.h.b16 %v4683
        %v7665 = vunpack.c.l.b16 %v4684
        %v7666 = vunpack.c.h.b16 %v4684
        %v7667 = vunpack.c.l.b16 %v4685
        %v7668 = vunpack.c.h.b16 %v4685
        %v7669 = vunpack.c.l.b16 %v4686
        %v7670 = vunpack.c.h.b16 %v4686
        %v7671 = vunpack.c.l.b16 %v4687
        %v7672 = vunpack.c.h.b16 %v4687
        %v7673 = vunpack.c.l.b16 %v4688
        %v7674 = vunpack.c.h.b16 %v4688
        %v7675 = vunpack.c.l.b16 %v4689
        %v7676 = vunpack.c.h.b16 %v4689
        %v7677 = vunpack.c.l.b16 %v4690
        %v7678 = vunpack.c.h.b16 %v4690
        %v7679 = vunpack.c.l.b16 %v4691
        %v7680 = vunpack.c.h.b16 %v4691
        %v7681 = vunpack.c.l.b16 %v4692
        %v7682 = vunpack.c.h.b16 %v4692
        %v7683 = vunpack.c.l.b16 %v4693
        %v7684 = vunpack.c.h.b16 %v4693
        %v7685 = vunpack.c.l.b16 %v4694
        %v7686 = vunpack.c.h.b16 %v4694
        %v7687 = vunpack.c.l.b16 %v4695
        %v7688 = vunpack.c.h.b16 %v4695
        %v7689 = vunpack.c.l.b16 %v4696
        %v7690 = vunpack.c.h.b16 %v4696
        %v7691 = vunpack.c.l.b16 %v4697
        %v7692 = vunpack.c.h.b16 %v4697
        %v7693 = vunpack.c.l.b16 %v4698
        %v7694 = vunpack.c.h.b16 %v4698
        %v7695 = vunpack.c.l.b16 %v4699
        %v7696 = vunpack.c.h.b16 %v4699
        %v7697 = vunpack.c.l.b16 %v4700
        %v7698 = vunpack.c.h.b16 %v4700
        %v7699 = vunpack.c.l.b16 %v4701
        %v7700 = vunpack.c.h.b16 %v4701
        %v7701 = vunpack.c.l.b16 %v4702
        %v7702 = vunpack.c.h.b16 %v4702
        %v7703 = vunpack.c.l.b16 %v4703
        %v7704 = vunpack.c.h.b16 %v4703
        %v7705 = vunpack.c.l.b16 %v4704
        %v7706 = vunpack.c.h.b16 %v4704
        %v7707 = vunpack.c.l.b16 %v4705
        %v7708 = vunpack.c.h.b16 %v4705
        %v7709 = vunpack.c.l.b16 %v4706
        %v7710 = vunpack.c.h.b16 %v4706
        %v7711 = vunpack.c.l.b16 %v4707
        %v7712 = vunpack.c.h.b16 %v4707
        %v7713 = vunpack.c.l.b16 %v4708
        %v7714 = vunpack.c.h.b16 %v4708
        %v7715 = vunpack.c.l.b16 %v4709
        %v7716 = vunpack.c.h.b16 %v4709
        %v7717 = vunpack.c.l.b16 %v4710
        %v7718 = vunpack.c.h.b16 %v4710
        %v7719 = vunpack.c.l.b16 %v4711
        %v7720 = vunpack.c.h.b16 %v4711
        %v7721 = vunpack.c.l.b16 %v4712
        %v7722 = vunpack.c.h.b16 %v4712
        %v7723 = vunpack.c.l.b16 %v4713
        %v7724 = vunpack.c.h.b16 %v4713
        %v7725 = vunpack.c.l.b16 %v4714
        %v7726 = vunpack.c.h.b16 %v4714
        %v7727 = vunpack.c.l.b16 %v4715
        %v7728 = vunpack.c.h.b16 %v4715
        %v7729 = vunpack.c.l.b16 %v4716
        %v7730 = vunpack.c.h.b16 %v4716
        %v7731 = vunpack.c.l.b16 %v4717
        %v7732 = vunpack.c.h.b16 %v4717
        %v7733 = vunpack.c.l.b16 %v4718
        %v7734 = vunpack.c.h.b16 %v4718
        %v7735 = vunpack.c.l.b16 %v4719
        %v7736 = vunpack.c.h.b16 %v4719
        %v7737 = vunpack.c.l.b16 %v4720
        %v7738 = vunpack.c.h.b16 %v4720
        %v7739 = vunpack.c.l.b16 %v4721
        %v7740 = vunpack.c.h.b16 %v4721
        %v7741 = vunpack.c.l.b16 %v4722
        %v7742 = vunpack.c.h.b16 %v4722
        %v7743 = vunpack.c.l.b16 %v4723
        %v7744 = vunpack.c.h.b16 %v4723
        %v7745 = vunpack.c.l.b16 %v4724
        %v7746 = vunpack.c.h.b16 %v4724
        %v7747 = vunpack.c.l.b16 %v4725
        %v7748 = vunpack.c.h.b16 %v4725
        %v7749 = vunpack.c.l.b16 %v4726
        %v7750 = vunpack.c.h.b16 %v4726
        %v7751 = vunpack.c.l.b16 %v4727
        %v7752 = vunpack.c.h.b16 %v4727
        %v7753 = vunpack.c.l.b16 %v4728
        %v7754 = vunpack.c.h.b16 %v4728
        %v7755 = vunpack.c.l.b16 %v4729
        %v7756 = vunpack.c.h.b16 %v4729
        %v7757 = vunpack.c.l.b16 %v4730
        %v7758 = vunpack.c.h.b16 %v4730
        %v7759 = vunpack.c.l.b16 %v4731
        %v7760 = vunpack.c.h.b16 %v4731
        %v7761 = vunpack.c.l.b16 %v4732
        %v7762 = vunpack.c.h.b16 %v4732
        %v7763 = vunpack.c.l.b16 %v4733
        %v7764 = vunpack.c.h.b16 %v4733
        %v7765 = vunpack.c.l.b16 %v4734
        %v7766 = vunpack.c.h.b16 %v4734
        %v7767 = vunpack.c.l.b16 %v4735
        %v7768 = vunpack.c.h.b16 %v4735
        %v7769 = vunpack.c.l.b16 %v4736
        %v7770 = vunpack.c.h.b16 %v4736
        %v7771 = vunpack.c.l.b16 %v4737
        %v7772 = vunpack.c.h.b16 %v4737
        %v7773 = vunpack.c.l.b16 %v4738
        %v7774 = vunpack.c.h.b16 %v4738
        %v7775 = vunpack.c.l.b16 %v4739
        %v7776 = vunpack.c.h.b16 %v4739
        %v7777 = vunpack.c.l.b16 %v4740
        %v7778 = vunpack.c.h.b16 %v4740
        %v7779 = vunpack.c.l.b16 %v4741
        %v7780 = vunpack.c.h.b16 %v4741
        %v7781 = vunpack.c.l.b16 %v4742
        %v7782 = vunpack.c.h.b16 %v4742
        %v7783 = vunpack.c.l.b16 %v4743
        %v7784 = vunpack.c.h.b16 %v4743
        %v7785 = vunpack.c.l.b16 %v4744
        %v7786 = vunpack.c.h.b16 %v4744
        %v7787 = vunpack.c.l.b16 %v4745
        %v7788 = vunpack.c.h.b16 %v4745
        %v7789 = vunpack.c.l.b16 %v4746
        %v7790 = vunpack.c.h.b16 %v4746
        %v7791 = vunpack.c.l.b16 %v4747
        %v7792 = vunpack.c.h.b16 %v4747
        %v7793 = vunpack.c.l.b16 %v4748
        %v7794 = vunpack.c.h.b16 %v4748
        %v7795 = vunpack.c.l.b16 %v4749
        %v7796 = vunpack.c.h.b16 %v4749
        %v7797 = vunpack.c.l.b16 %v4750
        %v7798 = vunpack.c.h.b16 %v4750
        %v7799 = vunpack.c.l.b16 %v4751
        %v7800 = vunpack.c.h.b16 %v4751
        %v7801 = vunpack.c.l.b16 %v4752
        %v7802 = vunpack.c.h.b16 %v4752
        %v7803 = vunpack.c.l.b16 %v4753
        %v7804 = vunpack.c.h.b16 %v4753
        %v7805 = vunpack.c.l.b16 %v4754
        %v7806 = vunpack.c.h.b16 %v4754
        %v7807 = vunpack.c.l.b16 %v4755
        %v7808 = vunpack.c.h.b16 %v4755
        %v7809 = vunpack.c.l.b16 %v4756
        %v7810 = vunpack.c.h.b16 %v4756
        %v7811 = vunpack.c.l.b16 %v4757
        %v7812 = vunpack.c.h.b16 %v4757
        %v7813 = vunpack.c.l.b16 %v4758
        %v7814 = vunpack.c.h.b16 %v4758
        %v7815 = vunpack.c.l.b16 %v4759
        %v7816 = vunpack.c.h.b16 %v4759
        %v7817 = vunpack.c.l.b16 %v4760
        %v7818 = vunpack.c.h.b16 %v4760
        %v7819 = vunpack.c.l.b16 %v4761
        %v7820 = vunpack.c.h.b16 %v4761
        %v7821 = vunpack.c.l.b16 %v4762
        %v7822 = vunpack.c.h.b16 %v4762
        %v7823 = vunpack.c.l.b16 %v4763
        %v7824 = vunpack.c.h.b16 %v4763
        %v7825 = vunpack.c.l.b16 %v4764
        %v7826 = vunpack.c.h.b16 %v4764
        %v7827 = vunpack.c.l.b16 %v4765
        %v7828 = vunpack.c.h.b16 %v4765
        %v7829 = vunpack.c.l.b16 %v4766
        %v7830 = vunpack.c.h.b16 %v4766
        %v7831 = vunpack.c.l.b16 %v4767
        %v7832 = vunpack.c.h.b16 %v4767
        %v7833 = vunpack.c.l.b16 %v4768
        %v7834 = vunpack.c.h.b16 %v4768
        %v7835 = vunpack.c.l.b16 %v4769
        %v7836 = vunpack.c.h.b16 %v4769
        %v7837 = vunpack.c.l.b16 %v4770
        %v7838 = vunpack.c.h.b16 %v4770
        %v7839 = vunpack.c.l.b16 %v4771
        %v7840 = vunpack.c.h.b16 %v4771
        %v7841 = vunpack.c.l.b16 %v4772
        %v7842 = vunpack.c.h.b16 %v4772
        %v7843 = vunpack.c.l.b16 %v4773
        %v7844 = vunpack.c.h.b16 %v4773
        %v7845 = vunpack.c.l.b16 %v4774
        %v7846 = vunpack.c.h.b16 %v4774
        %v7847 = vunpack.c.l.b16 %v4775
        %v7848 = vunpack.c.h.b16 %v4775
        %v7849 = vunpack.c.l.b16 %v4776
        %v7850 = vunpack.c.h.b16 %v4776
        %v7851 = vunpack.c.l.b16 %v4777
        %v7852 = vunpack.c.h.b16 %v4777
        %v7853 = vunpack.c.l.b16 %v4778
        %v7854 = vunpack.c.h.b16 %v4778
        %v7855 = vunpack.c.l.b16 %v4779
        %v7856 = vunpack.c.h.b16 %v4779
        %v7857 = vunpack.c.l.b16 %v4780
        %v7858 = vunpack.c.h.b16 %v4780
        %v7859 = vunpack.c.l.b16 %v4781
        %v7860 = vunpack.c.h.b16 %v4781
        %v7861 = vunpack.c.l.b16 %v4782
        %v7862 = vunpack.c.h.b16 %v4782
        %v7863 = vunpack.c.l.b16 %v4783
        %v7864 = vunpack.c.h.b16 %v4783
        %v7865 = vunpack.c.l.b16 %v4784
        %v7866 = vunpack.c.h.b16 %v4784
        %v7867 = vunpack.c.l.b16 %v4785
        %v7868 = vunpack.c.h.b16 %v4785
        %v7869 = vunpack.c.l.b16 %v4786
        %v7870 = vunpack.c.h.b16 %v4786
        %v7871 = vunpack.c.l.b16 %v4787
        %v7872 = vunpack.c.h.b16 %v4787
        %v7873 = vunpack.c.l.b16 %v4788
        %v7874 = vunpack.c.h.b16 %v4788
        %v7875 = vunpack.c.l.b16 %v4789
        %v7876 = vunpack.c.h.b16 %v4789
        %v7877 = vunpack.c.l.b16 %v4790
        %v7878 = vunpack.c.h.b16 %v4790
        %v7879 = vunpack.c.l.b16 %v4791
        %v7880 = vunpack.c.h.b16 %v4791
        %v7881 = vunpack.c.l.b16 %v4792
        %v7882 = vunpack.c.h.b16 %v4792
        %v7883 = vunpack.c.l.b16 %v4793
        %v7884 = vunpack.c.h.b16 %v4793
        %v7885 = vunpack.c.l.b16 %v4794
        %v7886 = vunpack.c.h.b16 %v4794
        %v7887 = vunpack.c.l.b16 %v4795
        %v7888 = vunpack.c.h.b16 %v4795
        %v7889 = vunpack.c.l.b16 %v4796
        %v7890 = vunpack.c.h.b16 %v4796
        %v7891 = vunpack.c.l.b16 %v4797
        %v7892 = vunpack.c.h.b16 %v4797
        %v7893 = vunpack.c.l.b16 %v4798
        %v7894 = vunpack.c.h.b16 %v4798
        %v7895 = vunpack.c.l.b16 %v4799
        %v7896 = vunpack.c.h.b16 %v4799
        %v7897 = vunpack.c.l.b16 %v4800
        %v7898 = vunpack.c.h.b16 %v4800
        %v7899 = vunpack.c.l.b16 %v4801
        %v7900 = vunpack.c.h.b16 %v4801
        %v7901 = vunpack.c.l.b16 %v4802
        %v7902 = vunpack.c.h.b16 %v4802
        %v7903 = vunpack.c.l.b16 %v4803
        %v7904 = vunpack.c.h.b16 %v4803
        %v7905 = vunpack.c.l.b16 %v4804
        %v7906 = vunpack.c.h.b16 %v4804
        %v7907 = vunpack.c.l.b16 %v4805
        %v7908 = vunpack.c.h.b16 %v4805
        %v7909 = vunpack.c.l.b16 %v4806
        %v7910 = vunpack.c.h.b16 %v4806
        %v7911 = vunpack.c.l.b16 %v4807
        %v7912 = vunpack.c.h.b16 %v4807
        %v7913 = vunpack.c.l.b16 %v4808
        %v7914 = vunpack.c.h.b16 %v4808
        %v7915 = vunpack.c.l.b16 %v4809
        %v7916 = vunpack.c.h.b16 %v4809
        %v7917 = vunpack.c.l.b16 %v4810
        %v7918 = vunpack.c.h.b16 %v4810
        %v7919 = vunpack.c.l.b16 %v4811
        %v7920 = vunpack.c.h.b16 %v4811
        %v7921 = vunpack.c.l.b16 %v4812
        %v7922 = vunpack.c.h.b16 %v4812
        %v7923 = vunpack.c.l.b16 %v4813
        %v7924 = vunpack.c.h.b16 %v4813
        %v7925 = vunpack.c.l.b16 %v4814
        %v7926 = vunpack.c.h.b16 %v4814
        %v7927 = vunpack.c.l.b16 %v4815
        %v7928 = vunpack.c.h.b16 %v4815
        %v7929 = vunpack.c.l.b16 %v4816
        %v7930 = vunpack.c.h.b16 %v4816
        %v7931 = vpack.c.b16 %v5891, %v5883
        %v7932 = vpack.c.b16 %v5892, %v5884
        %v7933 = vpack.c.b16 %v5893, %v5885
        %v7934 = vpack.c.b16 %v5894, %v5886
        %v7935 = vpack.c.b16 %v5895, %v5887
        %v7936 = vpack.c.b16 %v5896, %v5888
        %v7937 = vpack.c.b16 %v5897, %v5889
        %v7938 = vpack.c.b16 %v5898, %v5890
        %v7939 = vpack.c.b16 %v5907, %v5899
        %v7940 = vpack.c.b16 %v5908, %v5900
        %v7941 = vpack.c.b16 %v5909, %v5901
        %v7942 = vpack.c.b16 %v5910, %v5902
        %v7943 = vpack.c.b16 %v5911, %v5903
        %v7944 = vpack.c.b16 %v5912, %v5904
        %v7945 = vpack.c.b16 %v5913, %v5905
        %v7946 = vpack.c.b16 %v5914, %v5906
        %v7947 = vpack.c.b16 %v5923, %v5915
        %v7948 = vpack.c.b16 %v5924, %v5916
        %v7949 = vpack.c.b16 %v5925, %v5917
        %v7950 = vpack.c.b16 %v5926, %v5918
        %v7951 = vpack.c.b16 %v5927, %v5919
        %v7952 = vpack.c.b16 %v5928, %v5920
        %v7953 = vpack.c.b16 %v5929, %v5921
        %v7954 = vpack.c.b16 %v5930, %v5922
        %v7955 = vpack.c.b16 %v5939, %v5931
        %v7956 = vpack.c.b16 %v5940, %v5932
        %v7957 = vpack.c.b16 %v5941, %v5933
        %v7958 = vpack.c.b16 %v5942, %v5934
        %v7959 = vpack.c.b16 %v5943, %v5935
        %v7960 = vpack.c.b16 %v5944, %v5936
        %v7961 = vpack.c.b16 %v5945, %v5937
        %v7962 = vpack.c.b16 %v5946, %v5938
        %v7963 = vpack.c.b16 %v5955, %v5947
        %v7964 = vpack.c.b16 %v5956, %v5948
        %v7965 = vpack.c.b16 %v5957, %v5949
        %v7966 = vpack.c.b16 %v5958, %v5950
        %v7967 = vpack.c.b16 %v5959, %v5951
        %v7968 = vpack.c.b16 %v5960, %v5952
        %v7969 = vpack.c.b16 %v5961, %v5953
        %v7970 = vpack.c.b16 %v5962, %v5954
        %v7971 = vpack.c.b16 %v5971, %v5963
        %v7972 = vpack.c.b16 %v5972, %v5964
        %v7973 = vpack.c.b16 %v5973, %v5965
        %v7974 = vpack.c.b16 %v5974, %v5966
        %v7975 = vpack.c.b16 %v5975, %v5967
        %v7976 = vpack.c.b16 %v5976, %v5968
        %v7977 = vpack.c.b16 %v5977, %v5969
        %v7978 = vpack.c.b16 %v5978, %v5970
        %v7979 = vpack.c.b16 %v5987, %v5979
        %v7980 = vpack.c.b16 %v5988, %v5980
        %v7981 = vpack.c.b16 %v5989, %v5981
        %v7982 = vpack.c.b16 %v5990, %v5982
        %v7983 = vpack.c.b16 %v5991, %v5983
        %v7984 = vpack.c.b16 %v5992, %v5984
        %v7985 = vpack.c.b16 %v5993, %v5985
        %v7986 = vpack.c.b16 %v5994, %v5986
        %v7987 = vpack.c.b16 %v6003, %v5995
        %v7988 = vpack.c.b16 %v6004, %v5996
        %v7989 = vpack.c.b16 %v6005, %v5997
        %v7990 = vpack.c.b16 %v6006, %v5998
        %v7991 = vpack.c.b16 %v6007, %v5999
        %v7992 = vpack.c.b16 %v6008, %v6000
        %v7993 = vpack.c.b16 %v6009, %v6001
        %v7994 = vpack.c.b16 %v6010, %v6002
        %v7995 = vpack.c.b16 %v6019, %v6011
        %v7996 = vpack.c.b16 %v6020, %v6012
        %v7997 = vpack.c.b16 %v6021, %v6013
        %v7998 = vpack.c.b16 %v6022, %v6014
        %v7999 = vpack.c.b16 %v6023, %v6015
        %v8000 = vpack.c.b16 %v6024, %v6016
        %v8001 = vpack.c.b16 %v6025, %v6017
        %v8002 = vpack.c.b16 %v6026, %v6018
        %v8003 = vpack.c.b16 %v6035, %v6027
        %v8004 = vpack.c.b16 %v6036, %v6028
        %v8005 = vpack.c.b16 %v6037, %v6029
        %v8006 = vpack.c.b16 %v6038, %v6030
        %v8007 = vpack.c.b16 %v6039, %v6031
        %v8008 = vpack.c.b16 %v6040, %v6032
        %v8009 = vpack.c.b16 %v6041, %v6033
        %v8010 = vpack.c.b16 %v6042, %v6034
        %v8011 = vpack.c.b16 %v6051, %v6043
        %v8012 = vpack.c.b16 %v6052, %v6044
        %v8013 = vpack.c.b16 %v6053, %v6045
        %v8014 = vpack.c.b16 %v6054, %v6046
        %v8015 = vpack.c.b16 %v6055, %v6047
        %v8016 = vpack.c.b16 %v6056, %v6048
        %v8017 = vpack.c.b16 %v6057, %v6049
        %v8018 = vpack.c.b16 %v6058, %v6050
        %v8019 = vpack.c.b16 %v6067, %v6059
        %v8020 = vpack.c.b16 %v6068, %v6060
        %v8021 = vpack.c.b16 %v6069, %v6061
        %v8022 = vpack.c.b16 %v6070, %v6062
        %v8023 = vpack.c.b16 %v6071, %v6063
        %v8024 = vpack.c.b16 %v6072, %v6064
        %v8025 = vpack.c.b16 %v6073, %v6065
        %v8026 = vpack.c.b16 %v6074, %v6066
        %v8027 = vpack.c.b16 %v6083, %v6075
        %v8028 = vpack.c.b16 %v6084, %v6076
        %v8029 = vpack.c.b16 %v6085, %v6077
        %v8030 = vpack.c.b16 %v6086, %v6078
        %v8031 = vpack.c.b16 %v6087, %v6079
        %v8032 = vpack.c.b16 %v6088, %v6080
        %v8033 = vpack.c.b16 %v6089, %v6081
        %v8034 = vpack.c.b16 %v6090, %v6082
        %v8035 = vpack.c.b16 %v6099, %v6091
        %v8036 = vpack.c.b16 %v6100, %v6092
        %v8037 = vpack.c.b16 %v6101, %v6093
        %v8038 = vpack.c.b16 %v6102, %v6094
        %v8039 = vpack.c.b16 %v6103, %v6095
        %v8040 = vpack.c.b16 %v6104, %v6096
        %v8041 = vpack.c.b16 %v6105, %v6097
        %v8042 = vpack.c.b16 %v6106, %v6098
        %v8043 = vpack.c.b16 %v6115, %v6107
        %v8044 = vpack.c.b16 %v6116, %v6108
        %v8045 = vpack.c.b16 %v6117, %v6109
        %v8046 = vpack.c.b16 %v6118, %v6110
        %v8047 = vpack.c.b16 %v6119, %v6111
        %v8048 = vpack.c.b16 %v6120, %v6112
        %v8049 = vpack.c.b16 %v6121, %v6113
        %v8050 = vpack.c.b16 %v6122, %v6114
        %v8051 = vpack.c.b16 %v6131, %v6123
        %v8052 = vpack.c.b16 %v6132, %v6124
        %v8053 = vpack.c.b16 %v6133, %v6125
        %v8054 = vpack.c.b16 %v6134, %v6126
        %v8055 = vpack.c.b16 %v6135, %v6127
        %v8056 = vpack.c.b16 %v6136, %v6128
        %v8057 = vpack.c.b16 %v6137, %v6129
        %v8058 = vpack.c.b16 %v6138, %v6130
        %v8059 = vpack.c.b16 %v6147, %v6139
        %v8060 = vpack.c.b16 %v6148, %v6140
        %v8061 = vpack.c.b16 %v6149, %v6141
        %v8062 = vpack.c.b16 %v6150, %v6142
        %v8063 = vpack.c.b16 %v6151, %v6143
        %v8064 = vpack.c.b16 %v6152, %v6144
        %v8065 = vpack.c.b16 %v6153, %v6145
        %v8066 = vpack.c.b16 %v6154, %v6146
        %v8067 = vpack.c.b16 %v6163, %v6155
        %v8068 = vpack.c.b16 %v6164, %v6156
        %v8069 = vpack.c.b16 %v6165, %v6157
        %v8070 = vpack.c.b16 %v6166, %v6158
        %v8071 = vpack.c.b16 %v6167, %v6159
        %v8072 = vpack.c.b16 %v6168, %v6160
        %v8073 = vpack.c.b16 %v6169, %v6161
        %v8074 = vpack.c.b16 %v6170, %v6162
        %v8075 = vpack.c.b16 %v6179, %v6171
        %v8076 = vpack.c.b16 %v6180, %v6172
        %v8077 = vpack.c.b16 %v6181, %v6173
        %v8078 = vpack.c.b16 %v6182, %v6174
        %v8079 = vpack.c.b16 %v6183, %v6175
        %v8080 = vpack.c.b16 %v6184, %v6176
        %v8081 = vpack.c.b16 %v6185, %v6177
        %v8082 = vpack.c.b16 %v6186, %v6178
        %v8083 = vpack.c.b16 %v6195, %v6187
        %v8084 = vpack.c.b16 %v6196, %v6188
        %v8085 = vpack.c.b16 %v6197, %v6189
        %v8086 = vpack.c.b16 %v6198, %v6190
        %v8087 = vpack.c.b16 %v6199, %v6191
        %v8088 = vpack.c.b16 %v6200, %v6192
        %v8089 = vpack.c.b16 %v6201, %v6193
        %v8090 = vpack.c.b16 %v6202, %v6194
        %v8091 = vpack.c.b16 %v6211, %v6203
        %v8092 = vpack.c.b16 %v6212, %v6204
        %v8093 = vpack.c.b16 %v6213, %v6205
        %v8094 = vpack.c.b16 %v6214, %v6206
        %v8095 = vpack.c.b16 %v6215, %v6207
        %v8096 = vpack.c.b16 %v6216, %v6208
        %v8097 = vpack.c.b16 %v6217, %v6209
        %v8098 = vpack.c.b16 %v6218, %v6210
        %v8099 = vpack.c.b16 %v6227, %v6219
        %v8100 = vpack.c.b16 %v6228, %v6220
        %v8101 = vpack.c.b16 %v6229, %v6221
        %v8102 = vpack.c.b16 %v6230, %v6222
        %v8103 = vpack.c.b16 %v6231, %v6223
        %v8104 = vpack.c.b16 %v6232, %v6224
        %v8105 = vpack.c.b16 %v6233, %v6225
        %v8106 = vpack.c.b16 %v6234, %v6226
        %v8107 = vpack.c.b16 %v6243, %v6235
        %v8108 = vpack.c.b16 %v6244, %v6236
        %v8109 = vpack.c.b16 %v6245, %v6237
        %v8110 = vpack.c.b16 %v6246, %v6238
        %v8111 = vpack.c.b16 %v6247, %v6239
        %v8112 = vpack.c.b16 %v6248, %v6240
        %v8113 = vpack.c.b16 %v6249, %v6241
        %v8114 = vpack.c.b16 %v6250, %v6242
        %v8115 = vpack.c.b16 %v6259, %v6251
        %v8116 = vpack.c.b16 %v6260, %v6252
        %v8117 = vpack.c.b16 %v6261, %v6253
        %v8118 = vpack.c.b16 %v6262, %v6254
        %v8119 = vpack.c.b16 %v6263, %v6255
        %v8120 = vpack.c.b16 %v6264, %v6256
        %v8121 = vpack.c.b16 %v6265, %v6257
        %v8122 = vpack.c.b16 %v6266, %v6258
        %v8123 = vpack.c.b16 %v6275, %v6267
        %v8124 = vpack.c.b16 %v6276, %v6268
        %v8125 = vpack.c.b16 %v6277, %v6269
        %v8126 = vpack.c.b16 %v6278, %v6270
        %v8127 = vpack.c.b16 %v6279, %v6271
        %v8128 = vpack.c.b16 %v6280, %v6272
        %v8129 = vpack.c.b16 %v6281, %v6273
        %v8130 = vpack.c.b16 %v6282, %v6274
        %v8131 = vpack.c.b16 %v6291, %v6283
        %v8132 = vpack.c.b16 %v6292, %v6284
        %v8133 = vpack.c.b16 %v6293, %v6285
        %v8134 = vpack.c.b16 %v6294, %v6286
        %v8135 = vpack.c.b16 %v6295, %v6287
        %v8136 = vpack.c.b16 %v6296, %v6288
        %v8137 = vpack.c.b16 %v6297, %v6289
        %v8138 = vpack.c.b16 %v6298, %v6290
        %v8139 = vpack.c.b16 %v6307, %v6299
        %v8140 = vpack.c.b16 %v6308, %v6300
        %v8141 = vpack.c.b16 %v6309, %v6301
        %v8142 = vpack.c.b16 %v6310, %v6302
        %v8143 = vpack.c.b16 %v6311, %v6303
        %v8144 = vpack.c.b16 %v6312, %v6304
        %v8145 = vpack.c.b16 %v6313, %v6305
        %v8146 = vpack.c.b16 %v6314, %v6306
        %v8147 = vpack.c.b16 %v6323, %v6315
        %v8148 = vpack.c.b16 %v6324, %v6316
        %v8149 = vpack.c.b16 %v6325, %v6317
        %v8150 = vpack.c.b16 %v6326, %v6318
        %v8151 = vpack.c.b16 %v6327, %v6319
        %v8152 = vpack.c.b16 %v6328, %v6320
        %v8153 = vpack.c.b16 %v6329, %v6321
        %v8154 = vpack.c.b16 %v6330, %v6322
        %v8155 = vpack.c.b16 %v6339, %v6331
        %v8156 = vpack.c.b16 %v6340, %v6332
        %v8157 = vpack.c.b16 %v6341, %v6333
        %v8158 = vpack.c.b16 %v6342, %v6334
        %v8159 = vpack.c.b16 %v6343, %v6335
        %v8160 = vpack.c.b16 %v6344, %v6336
        %v8161 = vpack.c.b16 %v6345, %v6337
        %v8162 = vpack.c.b16 %v6346, %v6338
        %v8163 = vpack.c.b16 %v6355, %v6347
        %v8164 = vpack.c.b16 %v6356, %v6348
        %v8165 = vpack.c.b16 %v6357, %v6349
        %v8166 = vpack.c.b16 %v6358, %v6350
        %v8167 = vpack.c.b16 %v6359, %v6351
        %v8168 = vpack.c.b16 %v6360, %v6352
        %v8169 = vpack.c.b16 %v6361, %v6353
        %v8170 = vpack.c.b16 %v6362, %v6354
        %v8171 = vpack.c.b16 %v6371, %v6363
        %v8172 = vpack.c.b16 %v6372, %v6364
        %v8173 = vpack.c.b16 %v6373, %v6365
        %v8174 = vpack.c.b16 %v6374, %v6366
        %v8175 = vpack.c.b16 %v6375, %v6367
        %v8176 = vpack.c.b16 %v6376, %v6368
        %v8177 = vpack.c.b16 %v6377, %v6369
        %v8178 = vpack.c.b16 %v6378, %v6370
        %v8179 = vpack.c.b16 %v6387, %v6379
        %v8180 = vpack.c.b16 %v6388, %v6380
        %v8181 = vpack.c.b16 %v6389, %v6381
        %v8182 = vpack.c.b16 %v6390, %v6382
        %v8183 = vpack.c.b16 %v6391, %v6383
        %v8184 = vpack.c.b16 %v6392, %v6384
        %v8185 = vpack.c.b16 %v6393, %v6385
        %v8186 = vpack.c.b16 %v6394, %v6386
        %v8187 = vpack.c.b16 %v6403, %v6395
        %v8188 = vpack.c.b16 %v6404, %v6396
        %v8189 = vpack.c.b16 %v6405, %v6397
        %v8190 = vpack.c.b16 %v6406, %v6398
        %v8191 = vpack.c.b16 %v6407, %v6399
        %v8192 = vpack.c.b16 %v6408, %v6400
        %v8193 = vpack.c.b16 %v6409, %v6401
        %v8194 = vpack.c.b16 %v6410, %v6402
        %v8195 = vpack.c.b16 %v6419, %v6411
        %v8196 = vpack.c.b16 %v6420, %v6412
        %v8197 = vpack.c.b16 %v6421, %v6413
        %v8198 = vpack.c.b16 %v6422, %v6414
        %v8199 = vpack.c.b16 %v6423, %v6415
        %v8200 = vpack.c.b16 %v6424, %v6416
        %v8201 = vpack.c.b16 %v6425, %v6417
        %v8202 = vpack.c.b16 %v6426, %v6418
        %v8203 = vpack.c.b16 %v6435, %v6427
        %v8204 = vpack.c.b16 %v6436, %v6428
        %v8205 = vpack.c.b16 %v6437, %v6429
        %v8206 = vpack.c.b16 %v6438, %v6430
        %v8207 = vpack.c.b16 %v6439, %v6431
        %v8208 = vpack.c.b16 %v6440, %v6432
        %v8209 = vpack.c.b16 %v6441, %v6433
        %v8210 = vpack.c.b16 %v6442, %v6434
        %v8211 = vpack.c.b16 %v6451, %v6443
        %v8212 = vpack.c.b16 %v6452, %v6444
        %v8213 = vpack.c.b16 %v6453, %v6445
        %v8214 = vpack.c.b16 %v6454, %v6446
        %v8215 = vpack.c.b16 %v6455, %v6447
        %v8216 = vpack.c.b16 %v6456, %v6448
        %v8217 = vpack.c.b16 %v6457, %v6449
        %v8218 = vpack.c.b16 %v6458, %v6450
        %v8219 = vpack.c.b16 %v6467, %v6459
        %v8220 = vpack.c.b16 %v6468, %v6460
        %v8221 = vpack.c.b16 %v6469, %v6461
        %v8222 = vpack.c.b16 %v6470, %v6462
        %v8223 = vpack.c.b16 %v6471, %v6463
        %v8224 = vpack.c.b16 %v6472, %v6464
        %v8225 = vpack.c.b16 %v6473, %v6465
        %v8226 = vpack.c.b16 %v6474, %v6466
        %v8227 = vpack.c.b16 %v6483, %v6475
        %v8228 = vpack.c.b16 %v6484, %v6476
        %v8229 = vpack.c.b16 %v6485, %v6477
        %v8230 = vpack.c.b16 %v6486, %v6478
        %v8231 = vpack.c.b16 %v6487, %v6479
        %v8232 = vpack.c.b16 %v6488, %v6480
        %v8233 = vpack.c.b16 %v6489, %v6481
        %v8234 = vpack.c.b16 %v6490, %v6482
        %v8235 = vpack.c.b16 %v6499, %v6491
        %v8236 = vpack.c.b16 %v6500, %v6492
        %v8237 = vpack.c.b16 %v6501, %v6493
        %v8238 = vpack.c.b16 %v6502, %v6494
        %v8239 = vpack.c.b16 %v6503, %v6495
        %v8240 = vpack.c.b16 %v6504, %v6496
        %v8241 = vpack.c.b16 %v6505, %v6497
        %v8242 = vpack.c.b16 %v6506, %v6498
        %v8243 = vpack.c.b16 %v6515, %v6507
        %v8244 = vpack.c.b16 %v6516, %v6508
        %v8245 = vpack.c.b16 %v6517, %v6509
        %v8246 = vpack.c.b16 %v6518, %v6510
        %v8247 = vpack.c.b16 %v6519, %v6511
        %v8248 = vpack.c.b16 %v6520, %v6512
        %v8249 = vpack.c.b16 %v6521, %v6513
        %v8250 = vpack.c.b16 %v6522, %v6514
        %v8251 = vpack.c.b16 %v6531, %v6523
        %v8252 = vpack.c.b16 %v6532, %v6524
        %v8253 = vpack.c.b16 %v6533, %v6525
        %v8254 = vpack.c.b16 %v6534, %v6526
        %v8255 = vpack.c.b16 %v6535, %v6527
        %v8256 = vpack.c.b16 %v6536, %v6528
        %v8257 = vpack.c.b16 %v6537, %v6529
        %v8258 = vpack.c.b16 %v6538, %v6530
        %v8259 = vpack.c.b16 %v6547, %v6539
        %v8260 = vpack.c.b16 %v6548, %v6540
        %v8261 = vpack.c.b16 %v6549, %v6541
        %v8262 = vpack.c.b16 %v6550, %v6542
        %v8263 = vpack.c.b16 %v6551, %v6543
        %v8264 = vpack.c.b16 %v6552, %v6544
        %v8265 = vpack.c.b16 %v6553, %v6545
        %v8266 = vpack.c.b16 %v6554, %v6546
        %v8267 = vpack.c.b16 %v6563, %v6555
        %v8268 = vpack.c.b16 %v6564, %v6556
        %v8269 = vpack.c.b16 %v6565, %v6557
        %v8270 = vpack.c.b16 %v6566, %v6558
        %v8271 = vpack.c.b16 %v6567, %v6559
        %v8272 = vpack.c.b16 %v6568, %v6560
        %v8273 = vpack.c.b16 %v6569, %v6561
        %v8274 = vpack.c.b16 %v6570, %v6562
        %v8275 = vpack.c.b16 %v6579, %v6571
        %v8276 = vpack.c.b16 %v6580, %v6572
        %v8277 = vpack.c.b16 %v6581, %v6573
        %v8278 = vpack.c.b16 %v6582, %v6574
        %v8279 = vpack.c.b16 %v6583, %v6575
        %v8280 = vpack.c.b16 %v6584, %v6576
        %v8281 = vpack.c.b16 %v6585, %v6577
        %v8282 = vpack.c.b16 %v6586, %v6578
        %v8283 = vpack.c.b16 %v6595, %v6587
        %v8284 = vpack.c.b16 %v6596, %v6588
        %v8285 = vpack.c.b16 %v6597, %v6589
        %v8286 = vpack.c.b16 %v6598, %v6590
        %v8287 = vpack.c.b16 %v6599, %v6591
        %v8288 = vpack.c.b16 %v6600, %v6592
        %v8289 = vpack.c.b16 %v6601, %v6593
        %v8290 = vpack.c.b16 %v6602, %v6594
        %v8291 = vpack.c.b16 %v6611, %v6603
        %v8292 = vpack.c.b16 %v6612, %v6604
        %v8293 = vpack.c.b16 %v6613, %v6605
        %v8294 = vpack.c.b16 %v6614, %v6606
        %v8295 = vpack.c.b16 %v6615, %v6607
        %v8296 = vpack.c.b16 %v6616, %v6608
        %v8297 = vpack.c.b16 %v6617, %v6609
        %v8298 = vpack.c.b16 %v6618, %v6610
        %v8299 = vpack.c.b16 %v6627, %v6619
        %v8300 = vpack.c.b16 %v6628, %v6620
        %v8301 = vpack.c.b16 %v6629, %v6621
        %v8302 = vpack.c.b16 %v6630, %v6622
        %v8303 = vpack.c.b16 %v6631, %v6623
        %v8304 = vpack.c.b16 %v6632, %v6624
        %v8305 = vpack.c.b16 %v6633, %v6625
        %v8306 = vpack.c.b16 %v6634, %v6626
        %v8307 = vpack.c.b16 %v6643, %v6635
        %v8308 = vpack.c.b16 %v6644, %v6636
        %v8309 = vpack.c.b16 %v6645, %v6637
        %v8310 = vpack.c.b16 %v6646, %v6638
        %v8311 = vpack.c.b16 %v6647, %v6639
        %v8312 = vpack.c.b16 %v6648, %v6640
        %v8313 = vpack.c.b16 %v6649, %v6641
        %v8314 = vpack.c.b16 %v6650, %v6642
        %v8315 = vpack.c.b16 %v6659, %v6651
        %v8316 = vpack.c.b16 %v6660, %v6652
        %v8317 = vpack.c.b16 %v6661, %v6653
        %v8318 = vpack.c.b16 %v6662, %v6654
        %v8319 = vpack.c.b16 %v6663, %v6655
        %v8320 = vpack.c.b16 %v6664, %v6656
        %v8321 = vpack.c.b16 %v6665, %v6657
        %v8322 = vpack.c.b16 %v6666, %v6658
        %v8323 = vpack.c.b16 %v6675, %v6667
        %v8324 = vpack.c.b16 %v6676, %v6668
        %v8325 = vpack.c.b16 %v6677, %v6669
        %v8326 = vpack.c.b16 %v6678, %v6670
        %v8327 = vpack.c.b16 %v6679, %v6671
        %v8328 = vpack.c.b16 %v6680, %v6672
        %v8329 = vpack.c.b16 %v6681, %v6673
        %v8330 = vpack.c.b16 %v6682, %v6674
        %v8331 = vpack.c.b16 %v6691, %v6683
        %v8332 = vpack.c.b16 %v6692, %v6684
        %v8333 = vpack.c.b16 %v6693, %v6685
        %v8334 = vpack.c.b16 %v6694, %v6686
        %v8335 = vpack.c.b16 %v6695, %v6687
        %v8336 = vpack.c.b16 %v6696, %v6688
        %v8337 = vpack.c.b16 %v6697, %v6689
        %v8338 = vpack.c.b16 %v6698, %v6690
        %v8339 = vpack.c.b16 %v6707, %v6699
        %v8340 = vpack.c.b16 %v6708, %v6700
        %v8341 = vpack.c.b16 %v6709, %v6701
        %v8342 = vpack.c.b16 %v6710, %v6702
        %v8343 = vpack.c.b16 %v6711, %v6703
        %v8344 = vpack.c.b16 %v6712, %v6704
        %v8345 = vpack.c.b16 %v6713, %v6705
        %v8346 = vpack.c.b16 %v6714, %v6706
        %v8347 = vpack.c.b16 %v6723, %v6715
        %v8348 = vpack.c.b16 %v6724, %v6716
        %v8349 = vpack.c.b16 %v6725, %v6717
        %v8350 = vpack.c.b16 %v6726, %v6718
        %v8351 = vpack.c.b16 %v6727, %v6719
        %v8352 = vpack.c.b16 %v6728, %v6720
        %v8353 = vpack.c.b16 %v6729, %v6721
        %v8354 = vpack.c.b16 %v6730, %v6722
        %v8355 = vpack.c.b16 %v6739, %v6731
        %v8356 = vpack.c.b16 %v6740, %v6732
        %v8357 = vpack.c.b16 %v6741, %v6733
        %v8358 = vpack.c.b16 %v6742, %v6734
        %v8359 = vpack.c.b16 %v6743, %v6735
        %v8360 = vpack.c.b16 %v6744, %v6736
        %v8361 = vpack.c.b16 %v6745, %v6737
        %v8362 = vpack.c.b16 %v6746, %v6738
        %v8363 = vpack.c.b16 %v6755, %v6747
        %v8364 = vpack.c.b16 %v6756, %v6748
        %v8365 = vpack.c.b16 %v6757, %v6749
        %v8366 = vpack.c.b16 %v6758, %v6750
        %v8367 = vpack.c.b16 %v6759, %v6751
        %v8368 = vpack.c.b16 %v6760, %v6752
        %v8369 = vpack.c.b16 %v6761, %v6753
        %v8370 = vpack.c.b16 %v6762, %v6754
        %v8371 = vpack.c.b16 %v6771, %v6763
        %v8372 = vpack.c.b16 %v6772, %v6764
        %v8373 = vpack.c.b16 %v6773, %v6765
        %v8374 = vpack.c.b16 %v6774, %v6766
        %v8375 = vpack.c.b16 %v6775, %v6767
        %v8376 = vpack.c.b16 %v6776, %v6768
        %v8377 = vpack.c.b16 %v6777, %v6769
        %v8378 = vpack.c.b16 %v6778, %v6770
        %v8379 = vpack.c.b16 %v6787, %v6779
        %v8380 = vpack.c.b16 %v6788, %v6780
        %v8381 = vpack.c.b16 %v6789, %v6781
        %v8382 = vpack.c.b16 %v6790, %v6782
        %v8383 = vpack.c.b16 %v6791, %v6783
        %v8384 = vpack.c.b16 %v6792, %v6784
        %v8385 = vpack.c.b16 %v6793, %v6785
        %v8386 = vpack.c.b16 %v6794, %v6786
        %v8387 = vpack.c.b16 %v6803, %v6795
        %v8388 = vpack.c.b16 %v6804, %v6796
        %v8389 = vpack.c.b16 %v6805, %v6797
        %v8390 = vpack.c.b16 %v6806, %v6798
        %v8391 = vpack.c.b16 %v6807, %v6799
        %v8392 = vpack.c.b16 %v6808, %v6800
        %v8393 = vpack.c.b16 %v6809, %v6801
        %v8394 = vpack.c.b16 %v6810, %v6802
        %v8395 = vpack.c.b16 %v6819, %v6811
        %v8396 = vpack.c.b16 %v6820, %v6812
        %v8397 = vpack.c.b16 %v6821, %v6813
        %v8398 = vpack.c.b16 %v6822, %v6814
        %v8399 = vpack.c.b16 %v6823, %v6815
        %v8400 = vpack.c.b16 %v6824, %v6816
        %v8401 = vpack.c.b16 %v6825, %v6817
        %v8402 = vpack.c.b16 %v6826, %v6818
        %v8403 = vpack.c.b16 %v6835, %v6827
        %v8404 = vpack.c.b16 %v6836, %v6828
        %v8405 = vpack.c.b16 %v6837, %v6829
        %v8406 = vpack.c.b16 %v6838, %v6830
        %v8407 = vpack.c.b16 %v6839, %v6831
        %v8408 = vpack.c.b16 %v6840, %v6832
        %v8409 = vpack.c.b16 %v6841, %v6833
        %v8410 = vpack.c.b16 %v6842, %v6834
        %v8411 = vpack.c.b16 %v6851, %v6843
        %v8412 = vpack.c.b16 %v6852, %v6844
        %v8413 = vpack.c.b16 %v6853, %v6845
        %v8414 = vpack.c.b16 %v6854, %v6846
        %v8415 = vpack.c.b16 %v6855, %v6847
        %v8416 = vpack.c.b16 %v6856, %v6848
        %v8417 = vpack.c.b16 %v6857, %v6849
        %v8418 = vpack.c.b16 %v6858, %v6850
        %v8419 = vpack.c.b16 %v6867, %v6859
        %v8420 = vpack.c.b16 %v6868, %v6860
        %v8421 = vpack.c.b16 %v6869, %v6861
        %v8422 = vpack.c.b16 %v6870, %v6862
        %v8423 = vpack.c.b16 %v6871, %v6863
        %v8424 = vpack.c.b16 %v6872, %v6864
        %v8425 = vpack.c.b16 %v6873, %v6865
        %v8426 = vpack.c.b16 %v6874, %v6866
        %v8427 = vpack.c.b16 %v6883, %v6875
        %v8428 = vpack.c.b16 %v6884, %v6876
        %v8429 = vpack.c.b16 %v6885, %v6877
        %v8430 = vpack.c.b16 %v6886, %v6878
        %v8431 = vpack.c.b16 %v6887, %v6879
        %v8432 = vpack.c.b16 %v6888, %v6880
        %v8433 = vpack.c.b16 %v6889, %v6881
        %v8434 = vpack.c.b16 %v6890, %v6882
        %v8435 = vpack.c.b16 %v6899, %v6891
        %v8436 = vpack.c.b16 %v6900, %v6892
        %v8437 = vpack.c.b16 %v6901, %v6893
        %v8438 = vpack.c.b16 %v6902, %v6894
        %v8439 = vpack.c.b16 %v6903, %v6895
        %v8440 = vpack.c.b16 %v6904, %v6896
        %v8441 = vpack.c.b16 %v6905, %v6897
        %v8442 = vpack.c.b16 %v6906, %v6898
        %v8443 = vpack.c.b16 %v6915, %v6907
        %v8444 = vpack.c.b16 %v6916, %v6908
        %v8445 = vpack.c.b16 %v6917, %v6909
        %v8446 = vpack.c.b16 %v6918, %v6910
        %v8447 = vpack.c.b16 %v6919, %v6911
        %v8448 = vpack.c.b16 %v6920, %v6912
        %v8449 = vpack.c.b16 %v6921, %v6913
        %v8450 = vpack.c.b16 %v6922, %v6914
        %v8451 = vpack.c.b16 %v6931, %v6923
        %v8452 = vpack.c.b16 %v6932, %v6924
        %v8453 = vpack.c.b16 %v6933, %v6925
        %v8454 = vpack.c.b16 %v6934, %v6926
        %v8455 = vpack.c.b16 %v6935, %v6927
        %v8456 = vpack.c.b16 %v6936, %v6928
        %v8457 = vpack.c.b16 %v6937, %v6929
        %v8458 = vpack.c.b16 %v6938, %v6930
        %v8459 = vpack.c.b16 %v6947, %v6939
        %v8460 = vpack.c.b16 %v6948, %v6940
        %v8461 = vpack.c.b16 %v6949, %v6941
        %v8462 = vpack.c.b16 %v6950, %v6942
        %v8463 = vpack.c.b16 %v6951, %v6943
        %v8464 = vpack.c.b16 %v6952, %v6944
        %v8465 = vpack.c.b16 %v6953, %v6945
        %v8466 = vpack.c.b16 %v6954, %v6946
        %v8467 = vpack.c.b16 %v6963, %v6955
        %v8468 = vpack.c.b16 %v6964, %v6956
        %v8469 = vpack.c.b16 %v6965, %v6957
        %v8470 = vpack.c.b16 %v6966, %v6958
        %v8471 = vpack.c.b16 %v6967, %v6959
        %v8472 = vpack.c.b16 %v6968, %v6960
        %v8473 = vpack.c.b16 %v6969, %v6961
        %v8474 = vpack.c.b16 %v6970, %v6962
        %v8475 = vpack.c.b16 %v6979, %v6971
        %v8476 = vpack.c.b16 %v6980, %v6972
        %v8477 = vpack.c.b16 %v6981, %v6973
        %v8478 = vpack.c.b16 %v6982, %v6974
        %v8479 = vpack.c.b16 %v6983, %v6975
        %v8480 = vpack.c.b16 %v6984, %v6976
        %v8481 = vpack.c.b16 %v6985, %v6977
        %v8482 = vpack.c.b16 %v6986, %v6978
        %v8483 = vpack.c.b16 %v6995, %v6987
        %v8484 = vpack.c.b16 %v6996, %v6988
        %v8485 = vpack.c.b16 %v6997, %v6989
        %v8486 = vpack.c.b16 %v6998, %v6990
        %v8487 = vpack.c.b16 %v6999, %v6991
        %v8488 = vpack.c.b16 %v7000, %v6992
        %v8489 = vpack.c.b16 %v7001, %v6993
        %v8490 = vpack.c.b16 %v7002, %v6994
        %v8491 = vpack.c.b16 %v7011, %v7003
        %v8492 = vpack.c.b16 %v7012, %v7004
        %v8493 = vpack.c.b16 %v7013, %v7005
        %v8494 = vpack.c.b16 %v7014, %v7006
        %v8495 = vpack.c.b16 %v7015, %v7007
        %v8496 = vpack.c.b16 %v7016, %v7008
        %v8497 = vpack.c.b16 %v7017, %v7009
        %v8498 = vpack.c.b16 %v7018, %v7010
        %v8499 = vpack.c.b16 %v7027, %v7019
        %v8500 = vpack.c.b16 %v7028, %v7020
        %v8501 = vpack.c.b16 %v7029, %v7021
        %v8502 = vpack.c.b16 %v7030, %v7022
        %v8503 = vpack.c.b16 %v7031, %v7023
        %v8504 = vpack.c.b16 %v7032, %v7024
        %v8505 = vpack.c.b16 %v7033, %v7025
        %v8506 = vpack.c.b16 %v7034, %v7026
        %v8507 = vpack.c.b16 %v7043, %v7035
        %v8508 = vpack.c.b16 %v7044, %v7036
        %v8509 = vpack.c.b16 %v7045, %v7037
        %v8510 = vpack.c.b16 %v7046, %v7038
        %v8511 = vpack.c.b16 %v7047, %v7039
        %v8512 = vpack.c.b16 %v7048, %v7040
        %v8513 = vpack.c.b16 %v7049, %v7041
        %v8514 = vpack.c.b16 %v7050, %v7042
        %v8515 = vpack.c.b16 %v7059, %v7051
        %v8516 = vpack.c.b16 %v7060, %v7052
        %v8517 = vpack.c.b16 %v7061, %v7053
        %v8518 = vpack.c.b16 %v7062, %v7054
        %v8519 = vpack.c.b16 %v7063, %v7055
        %v8520 = vpack.c.b16 %v7064, %v7056
        %v8521 = vpack.c.b16 %v7065, %v7057
        %v8522 = vpack.c.b16 %v7066, %v7058
        %v8523 = vpack.c.b16 %v7075, %v7067
        %v8524 = vpack.c.b16 %v7076, %v7068
        %v8525 = vpack.c.b16 %v7077, %v7069
        %v8526 = vpack.c.b16 %v7078, %v7070
        %v8527 = vpack.c.b16 %v7079, %v7071
        %v8528 = vpack.c.b16 %v7080, %v7072
        %v8529 = vpack.c.b16 %v7081, %v7073
        %v8530 = vpack.c.b16 %v7082, %v7074
        %v8531 = vpack.c.b16 %v7091, %v7083
        %v8532 = vpack.c.b16 %v7092, %v7084
        %v8533 = vpack.c.b16 %v7093, %v7085
        %v8534 = vpack.c.b16 %v7094, %v7086
        %v8535 = vpack.c.b16 %v7095, %v7087
        %v8536 = vpack.c.b16 %v7096, %v7088
        %v8537 = vpack.c.b16 %v7097, %v7089
        %v8538 = vpack.c.b16 %v7098, %v7090
        %v8539 = vpack.c.b16 %v7107, %v7099
        %v8540 = vpack.c.b16 %v7108, %v7100
        %v8541 = vpack.c.b16 %v7109, %v7101
        %v8542 = vpack.c.b16 %v7110, %v7102
        %v8543 = vpack.c.b16 %v7111, %v7103
        %v8544 = vpack.c.b16 %v7112, %v7104
        %v8545 = vpack.c.b16 %v7113, %v7105
        %v8546 = vpack.c.b16 %v7114, %v7106
        %v8547 = vpack.c.b16 %v7123, %v7115
        %v8548 = vpack.c.b16 %v7124, %v7116
        %v8549 = vpack.c.b16 %v7125, %v7117
        %v8550 = vpack.c.b16 %v7126, %v7118
        %v8551 = vpack.c.b16 %v7127, %v7119
        %v8552 = vpack.c.b16 %v7128, %v7120
        %v8553 = vpack.c.b16 %v7129, %v7121
        %v8554 = vpack.c.b16 %v7130, %v7122
        %v8555 = vpack.c.b16 %v7139, %v7131
        %v8556 = vpack.c.b16 %v7140, %v7132
        %v8557 = vpack.c.b16 %v7141, %v7133
        %v8558 = vpack.c.b16 %v7142, %v7134
        %v8559 = vpack.c.b16 %v7143, %v7135
        %v8560 = vpack.c.b16 %v7144, %v7136
        %v8561 = vpack.c.b16 %v7145, %v7137
        %v8562 = vpack.c.b16 %v7146, %v7138
        %v8563 = vpack.c.b16 %v7155, %v7147
        %v8564 = vpack.c.b16 %v7156, %v7148
        %v8565 = vpack.c.b16 %v7157, %v7149
        %v8566 = vpack.c.b16 %v7158, %v7150
        %v8567 = vpack.c.b16 %v7159, %v7151
        %v8568 = vpack.c.b16 %v7160, %v7152
        %v8569 = vpack.c.b16 %v7161, %v7153
        %v8570 = vpack.c.b16 %v7162, %v7154
        %v8571 = vpack.c.b16 %v7171, %v7163
        %v8572 = vpack.c.b16 %v7172, %v7164
        %v8573 = vpack.c.b16 %v7173, %v7165
        %v8574 = vpack.c.b16 %v7174, %v7166
        %v8575 = vpack.c.b16 %v7175, %v7167
        %v8576 = vpack.c.b16 %v7176, %v7168
        %v8577 = vpack.c.b16 %v7177, %v7169
        %v8578 = vpack.c.b16 %v7178, %v7170
        %v8579 = vpack.c.b16 %v7187, %v7179
        %v8580 = vpack.c.b16 %v7188, %v7180
        %v8581 = vpack.c.b16 %v7189, %v7181
        %v8582 = vpack.c.b16 %v7190, %v7182
        %v8583 = vpack.c.b16 %v7191, %v7183
        %v8584 = vpack.c.b16 %v7192, %v7184
        %v8585 = vpack.c.b16 %v7193, %v7185
        %v8586 = vpack.c.b16 %v7194, %v7186
        %v8587 = vpack.c.b16 %v7203, %v7195
        %v8588 = vpack.c.b16 %v7204, %v7196
        %v8589 = vpack.c.b16 %v7205, %v7197
        %v8590 = vpack.c.b16 %v7206, %v7198
        %v8591 = vpack.c.b16 %v7207, %v7199
        %v8592 = vpack.c.b16 %v7208, %v7200
        %v8593 = vpack.c.b16 %v7209, %v7201
        %v8594 = vpack.c.b16 %v7210, %v7202
        %v8595 = vpack.c.b16 %v7219, %v7211
        %v8596 = vpack.c.b16 %v7220, %v7212
        %v8597 = vpack.c.b16 %v7221, %v7213
        %v8598 = vpack.c.b16 %v7222, %v7214
        %v8599 = vpack.c.b16 %v7223, %v7215
        %v8600 = vpack.c.b16 %v7224, %v7216
        %v8601 = vpack.c.b16 %v7225, %v7217
        %v8602 = vpack.c.b16 %v7226, %v7218
        %v8603 = vpack.c.b16 %v7235, %v7227
        %v8604 = vpack.c.b16 %v7236, %v7228
        %v8605 = vpack.c.b16 %v7237, %v7229
        %v8606 = vpack.c.b16 %v7238, %v7230
        %v8607 = vpack.c.b16 %v7239, %v7231
        %v8608 = vpack.c.b16 %v7240, %v7232
        %v8609 = vpack.c.b16 %v7241, %v7233
        %v8610 = vpack.c.b16 %v7242, %v7234
        %v8611 = vpack.c.b16 %v7251, %v7243
        %v8612 = vpack.c.b16 %v7252, %v7244
        %v8613 = vpack.c.b16 %v7253, %v7245
        %v8614 = vpack.c.b16 %v7254, %v7246
        %v8615 = vpack.c.b16 %v7255, %v7247
        %v8616 = vpack.c.b16 %v7256, %v7248
        %v8617 = vpack.c.b16 %v7257, %v7249
        %v8618 = vpack.c.b16 %v7258, %v7250
        %v8619 = vpack.c.b16 %v7267, %v7259
        %v8620 = vpack.c.b16 %v7268, %v7260
        %v8621 = vpack.c.b16 %v7269, %v7261
        %v8622 = vpack.c.b16 %v7270, %v7262
        %v8623 = vpack.c.b16 %v7271, %v7263
        %v8624 = vpack.c.b16 %v7272, %v7264
        %v8625 = vpack.c.b16 %v7273, %v7265
        %v8626 = vpack.c.b16 %v7274, %v7266
        %v8627 = vpack.c.b16 %v7283, %v7275
        %v8628 = vpack.c.b16 %v7284, %v7276
        %v8629 = vpack.c.b16 %v7285, %v7277
        %v8630 = vpack.c.b16 %v7286, %v7278
        %v8631 = vpack.c.b16 %v7287, %v7279
        %v8632 = vpack.c.b16 %v7288, %v7280
        %v8633 = vpack.c.b16 %v7289, %v7281
        %v8634 = vpack.c.b16 %v7290, %v7282
        %v8635 = vpack.c.b16 %v7299, %v7291
        %v8636 = vpack.c.b16 %v7300, %v7292
        %v8637 = vpack.c.b16 %v7301, %v7293
        %v8638 = vpack.c.b16 %v7302, %v7294
        %v8639 = vpack.c.b16 %v7303, %v7295
        %v8640 = vpack.c.b16 %v7304, %v7296
        %v8641 = vpack.c.b16 %v7305, %v7297
        %v8642 = vpack.c.b16 %v7306, %v7298
        %v8643 = vpack.c.b16 %v7315, %v7307
        %v8644 = vpack.c.b16 %v7316, %v7308
        %v8645 = vpack.c.b16 %v7317, %v7309
        %v8646 = vpack.c.b16 %v7318, %v7310
        %v8647 = vpack.c.b16 %v7319, %v7311
        %v8648 = vpack.c.b16 %v7320, %v7312
        %v8649 = vpack.c.b16 %v7321, %v7313
        %v8650 = vpack.c.b16 %v7322, %v7314
        %v8651 = vpack.c.b16 %v7331, %v7323
        %v8652 = vpack.c.b16 %v7332, %v7324
        %v8653 = vpack.c.b16 %v7333, %v7325
        %v8654 = vpack.c.b16 %v7334, %v7326
        %v8655 = vpack.c.b16 %v7335, %v7327
        %v8656 = vpack.c.b16 %v7336, %v7328
        %v8657 = vpack.c.b16 %v7337, %v7329
        %v8658 = vpack.c.b16 %v7338, %v7330
        %v8659 = vpack.c.b16 %v7347, %v7339
        %v8660 = vpack.c.b16 %v7348, %v7340
        %v8661 = vpack.c.b16 %v7349, %v7341
        %v8662 = vpack.c.b16 %v7350, %v7342
        %v8663 = vpack.c.b16 %v7351, %v7343
        %v8664 = vpack.c.b16 %v7352, %v7344
        %v8665 = vpack.c.b16 %v7353, %v7345
        %v8666 = vpack.c.b16 %v7354, %v7346
        %v8667 = vpack.c.b16 %v7363, %v7355
        %v8668 = vpack.c.b16 %v7364, %v7356
        %v8669 = vpack.c.b16 %v7365, %v7357
        %v8670 = vpack.c.b16 %v7366, %v7358
        %v8671 = vpack.c.b16 %v7367, %v7359
        %v8672 = vpack.c.b16 %v7368, %v7360
        %v8673 = vpack.c.b16 %v7369, %v7361
        %v8674 = vpack.c.b16 %v7370, %v7362
        %v8675 = vpack.c.b16 %v7379, %v7371
        %v8676 = vpack.c.b16 %v7380, %v7372
        %v8677 = vpack.c.b16 %v7381, %v7373
        %v8678 = vpack.c.b16 %v7382, %v7374
        %v8679 = vpack.c.b16 %v7383, %v7375
        %v8680 = vpack.c.b16 %v7384, %v7376
        %v8681 = vpack.c.b16 %v7385, %v7377
        %v8682 = vpack.c.b16 %v7386, %v7378
        %v8683 = vpack.c.b16 %v7395, %v7387
        %v8684 = vpack.c.b16 %v7396, %v7388
        %v8685 = vpack.c.b16 %v7397, %v7389
        %v8686 = vpack.c.b16 %v7398, %v7390
        %v8687 = vpack.c.b16 %v7399, %v7391
        %v8688 = vpack.c.b16 %v7400, %v7392
        %v8689 = vpack.c.b16 %v7401, %v7393
        %v8690 = vpack.c.b16 %v7402, %v7394
        %v8691 = vpack.c.b16 %v7411, %v7403
        %v8692 = vpack.c.b16 %v7412, %v7404
        %v8693 = vpack.c.b16 %v7413, %v7405
        %v8694 = vpack.c.b16 %v7414, %v7406
        %v8695 = vpack.c.b16 %v7415, %v7407
        %v8696 = vpack.c.b16 %v7416, %v7408
        %v8697 = vpack.c.b16 %v7417, %v7409
        %v8698 = vpack.c.b16 %v7418, %v7410
        %v8699 = vpack.c.b16 %v7427, %v7419
        %v8700 = vpack.c.b16 %v7428, %v7420
        %v8701 = vpack.c.b16 %v7429, %v7421
        %v8702 = vpack.c.b16 %v7430, %v7422
        %v8703 = vpack.c.b16 %v7431, %v7423
        %v8704 = vpack.c.b16 %v7432, %v7424
        %v8705 = vpack.c.b16 %v7433, %v7425
        %v8706 = vpack.c.b16 %v7434, %v7426
        %v8707 = vpack.c.b16 %v7443, %v7435
        %v8708 = vpack.c.b16 %v7444, %v7436
        %v8709 = vpack.c.b16 %v7445, %v7437
        %v8710 = vpack.c.b16 %v7446, %v7438
        %v8711 = vpack.c.b16 %v7447, %v7439
        %v8712 = vpack.c.b16 %v7448, %v7440
        %v8713 = vpack.c.b16 %v7449, %v7441
        %v8714 = vpack.c.b16 %v7450, %v7442
        %v8715 = vpack.c.b16 %v7459, %v7451
        %v8716 = vpack.c.b16 %v7460, %v7452
        %v8717 = vpack.c.b16 %v7461, %v7453
        %v8718 = vpack.c.b16 %v7462, %v7454
        %v8719 = vpack.c.b16 %v7463, %v7455
        %v8720 = vpack.c.b16 %v7464, %v7456
        %v8721 = vpack.c.b16 %v7465, %v7457
        %v8722 = vpack.c.b16 %v7466, %v7458
        %v8723 = vpack.c.b16 %v7475, %v7467
        %v8724 = vpack.c.b16 %v7476, %v7468
        %v8725 = vpack.c.b16 %v7477, %v7469
        %v8726 = vpack.c.b16 %v7478, %v7470
        %v8727 = vpack.c.b16 %v7479, %v7471
        %v8728 = vpack.c.b16 %v7480, %v7472
        %v8729 = vpack.c.b16 %v7481, %v7473
        %v8730 = vpack.c.b16 %v7482, %v7474
        %v8731 = vpack.c.b16 %v7491, %v7483
        %v8732 = vpack.c.b16 %v7492, %v7484
        %v8733 = vpack.c.b16 %v7493, %v7485
        %v8734 = vpack.c.b16 %v7494, %v7486
        %v8735 = vpack.c.b16 %v7495, %v7487
        %v8736 = vpack.c.b16 %v7496, %v7488
        %v8737 = vpack.c.b16 %v7497, %v7489
        %v8738 = vpack.c.b16 %v7498, %v7490
        %v8739 = vpack.c.b16 %v7507, %v7499
        %v8740 = vpack.c.b16 %v7508, %v7500
        %v8741 = vpack.c.b16 %v7509, %v7501
        %v8742 = vpack.c.b16 %v7510, %v7502
        %v8743 = vpack.c.b16 %v7511, %v7503
        %v8744 = vpack.c.b16 %v7512, %v7504
        %v8745 = vpack.c.b16 %v7513, %v7505
        %v8746 = vpack.c.b16 %v7514, %v7506
        %v8747 = vpack.c.b16 %v7523, %v7515
        %v8748 = vpack.c.b16 %v7524, %v7516
        %v8749 = vpack.c.b16 %v7525, %v7517
        %v8750 = vpack.c.b16 %v7526, %v7518
        %v8751 = vpack.c.b16 %v7527, %v7519
        %v8752 = vpack.c.b16 %v7528, %v7520
        %v8753 = vpack.c.b16 %v7529, %v7521
        %v8754 = vpack.c.b16 %v7530, %v7522
        %v8755 = vpack.c.b16 %v7539, %v7531
        %v8756 = vpack.c.b16 %v7540, %v7532
        %v8757 = vpack.c.b16 %v7541, %v7533
        %v8758 = vpack.c.b16 %v7542, %v7534
        %v8759 = vpack.c.b16 %v7543, %v7535
        %v8760 = vpack.c.b16 %v7544, %v7536
        %v8761 = vpack.c.b16 %v7545, %v7537
        %v8762 = vpack.c.b16 %v7546, %v7538
        %v8763 = vpack.c.b16 %v7555, %v7547
        %v8764 = vpack.c.b16 %v7556, %v7548
        %v8765 = vpack.c.b16 %v7557, %v7549
        %v8766 = vpack.c.b16 %v7558, %v7550
        %v8767 = vpack.c.b16 %v7559, %v7551
        %v8768 = vpack.c.b16 %v7560, %v7552
        %v8769 = vpack.c.b16 %v7561, %v7553
        %v8770 = vpack.c.b16 %v7562, %v7554
        %v8771 = vpack.c.b16 %v7571, %v7563
        %v8772 = vpack.c.b16 %v7572, %v7564
        %v8773 = vpack.c.b16 %v7573, %v7565
        %v8774 = vpack.c.b16 %v7574, %v7566
        %v8775 = vpack.c.b16 %v7575, %v7567
        %v8776 = vpack.c.b16 %v7576, %v7568
        %v8777 = vpack.c.b16 %v7577, %v7569
        %v8778 = vpack.c.b16 %v7578, %v7570
        %v8779 = vpack.c.b16 %v7587, %v7579
        %v8780 = vpack.c.b16 %v7588, %v7580
        %v8781 = vpack.c.b16 %v7589, %v7581
        %v8782 = vpack.c.b16 %v7590, %v7582
        %v8783 = vpack.c.b16 %v7591, %v7583
        %v8784 = vpack.c.b16 %v7592, %v7584
        %v8785 = vpack.c.b16 %v7593, %v7585
        %v8786 = vpack.c.b16 %v7594, %v7586
        %v8787 = vpack.c.b16 %v7603, %v7595
        %v8788 = vpack.c.b16 %v7604, %v7596
        %v8789 = vpack.c.b16 %v7605, %v7597
        %v8790 = vpack.c.b16 %v7606, %v7598
        %v8791 = vpack.c.b16 %v7607, %v7599
        %v8792 = vpack.c.b16 %v7608, %v7600
        %v8793 = vpack.c.b16 %v7609, %v7601
        %v8794 = vpack.c.b16 %v7610, %v7602
        %v8795 = vpack.c.b16 %v7619, %v7611
        %v8796 = vpack.c.b16 %v7620, %v7612
        %v8797 = vpack.c.b16 %v7621, %v7613
        %v8798 = vpack.c.b16 %v7622, %v7614
        %v8799 = vpack.c.b16 %v7623, %v7615
        %v8800 = vpack.c.b16 %v7624, %v7616
        %v8801 = vpack.c.b16 %v7625, %v7617
        %v8802 = vpack.c.b16 %v7626, %v7618
        %v8803 = vpack.c.b16 %v7635, %v7627
        %v8804 = vpack.c.b16 %v7636, %v7628
        %v8805 = vpack.c.b16 %v7637, %v7629
        %v8806 = vpack.c.b16 %v7638, %v7630
        %v8807 = vpack.c.b16 %v7639, %v7631
        %v8808 = vpack.c.b16 %v7640, %v7632
        %v8809 = vpack.c.b16 %v7641, %v7633
        %v8810 = vpack.c.b16 %v7642, %v7634
        %v8811 = vpack.c.b16 %v7651, %v7643
        %v8812 = vpack.c.b16 %v7652, %v7644
        %v8813 = vpack.c.b16 %v7653, %v7645
        %v8814 = vpack.c.b16 %v7654, %v7646
        %v8815 = vpack.c.b16 %v7655, %v7647
        %v8816 = vpack.c.b16 %v7656, %v7648
        %v8817 = vpack.c.b16 %v7657, %v7649
        %v8818 = vpack.c.b16 %v7658, %v7650
        %v8819 = vpack.c.b16 %v7667, %v7659
        %v8820 = vpack.c.b16 %v7668, %v7660
        %v8821 = vpack.c.b16 %v7669, %v7661
        %v8822 = vpack.c.b16 %v7670, %v7662
        %v8823 = vpack.c.b16 %v7671, %v7663
        %v8824 = vpack.c.b16 %v7672, %v7664
        %v8825 = vpack.c.b16 %v7673, %v7665
        %v8826 = vpack.c.b16 %v7674, %v7666
        %v8827 = vpack.c.b16 %v7683, %v7675
        %v8828 = vpack.c.b16 %v7684, %v7676
        %v8829 = vpack.c.b16 %v7685, %v7677
        %v8830 = vpack.c.b16 %v7686, %v7678
        %v8831 = vpack.c.b16 %v7687, %v7679
        %v8832 = vpack.c.b16 %v7688, %v7680
        %v8833 = vpack.c.b16 %v7689, %v7681
        %v8834 = vpack.c.b16 %v7690, %v7682
        %v8835 = vpack.c.b16 %v7699, %v7691
        %v8836 = vpack.c.b16 %v7700, %v7692
        %v8837 = vpack.c.b16 %v7701, %v7693
        %v8838 = vpack.c.b16 %v7702, %v7694
        %v8839 = vpack.c.b16 %v7703, %v7695
        %v8840 = vpack.c.b16 %v7704, %v7696
        %v8841 = vpack.c.b16 %v7705, %v7697
        %v8842 = vpack.c.b16 %v7706, %v7698
        %v8843 = vpack.c.b16 %v7715, %v7707
        %v8844 = vpack.c.b16 %v7716, %v7708
        %v8845 = vpack.c.b16 %v7717, %v7709
        %v8846 = vpack.c.b16 %v7718, %v7710
        %v8847 = vpack.c.b16 %v7719, %v7711
        %v8848 = vpack.c.b16 %v7720, %v7712
        %v8849 = vpack.c.b16 %v7721, %v7713
        %v8850 = vpack.c.b16 %v7722, %v7714
        %v8851 = vpack.c.b16 %v7731, %v7723
        %v8852 = vpack.c.b16 %v7732, %v7724
        %v8853 = vpack.c.b16 %v7733, %v7725
        %v8854 = vpack.c.b16 %v7734, %v7726
        %v8855 = vpack.c.b16 %v7735, %v7727
        %v8856 = vpack.c.b16 %v7736, %v7728
        %v8857 = vpack.c.b16 %v7737, %v7729
        %v8858 = vpack.c.b16 %v7738, %v7730
        %v8859 = vpack.c.b16 %v7747, %v7739
        %v8860 = vpack.c.b16 %v7748, %v7740
        %v8861 = vpack.c.b16 %v7749, %v7741
        %v8862 = vpack.c.b16 %v7750, %v7742
        %v8863 = vpack.c.b16 %v7751, %v7743
        %v8864 = vpack.c.b16 %v7752, %v7744
        %v8865 = vpack.c.b16 %v7753, %v7745
        %v8866 = vpack.c.b16 %v7754, %v7746
        %v8867 = vpack.c.b16 %v7763, %v7755
        %v8868 = vpack.c.b16 %v7764, %v7756
        %v8869 = vpack.c.b16 %v7765, %v7757
        %v8870 = vpack.c.b16 %v7766, %v7758
        %v8871 = vpack.c.b16 %v7767, %v7759
        %v8872 = vpack.c.b16 %v7768, %v7760
        %v8873 = vpack.c.b16 %v7769, %v7761
        %v8874 = vpack.c.b16 %v7770, %v7762
        %v8875 = vpack.c.b16 %v7779, %v7771
        %v8876 = vpack.c.b16 %v7780, %v7772
        %v8877 = vpack.c.b16 %v7781, %v7773
        %v8878 = vpack.c.b16 %v7782, %v7774
        %v8879 = vpack.c.b16 %v7783, %v7775
        %v8880 = vpack.c.b16 %v7784, %v7776
        %v8881 = vpack.c.b16 %v7785, %v7777
        %v8882 = vpack.c.b16 %v7786, %v7778
        %v8883 = vpack.c.b16 %v7795, %v7787
        %v8884 = vpack.c.b16 %v7796, %v7788
        %v8885 = vpack.c.b16 %v7797, %v7789
        %v8886 = vpack.c.b16 %v7798, %v7790
        %v8887 = vpack.c.b16 %v7799, %v7791
        %v8888 = vpack.c.b16 %v7800, %v7792
        %v8889 = vpack.c.b16 %v7801, %v7793
        %v8890 = vpack.c.b16 %v7802, %v7794
        %v8891 = vpack.c.b16 %v7811, %v7803
        %v8892 = vpack.c.b16 %v7812, %v7804
        %v8893 = vpack.c.b16 %v7813, %v7805
        %v8894 = vpack.c.b16 %v7814, %v7806
        %v8895 = vpack.c.b16 %v7815, %v7807
        %v8896 = vpack.c.b16 %v7816, %v7808
        %v8897 = vpack.c.b16 %v7817, %v7809
        %v8898 = vpack.c.b16 %v7818, %v7810
        %v8899 = vpack.c.b16 %v7827, %v7819
        %v8900 = vpack.c.b16 %v7828, %v7820
        %v8901 = vpack.c.b16 %v7829, %v7821
        %v8902 = vpack.c.b16 %v7830, %v7822
        %v8903 = vpack.c.b16 %v7831, %v7823
        %v8904 = vpack.c.b16 %v7832, %v7824
        %v8905 = vpack.c.b16 %v7833, %v7825
        %v8906 = vpack.c.b16 %v7834, %v7826
        %v8907 = vpack.c.b16 %v7843, %v7835
        %v8908 = vpack.c.b16 %v7844, %v7836
        %v8909 = vpack.c.b16 %v7845, %v7837
        %v8910 = vpack.c.b16 %v7846, %v7838
        %v8911 = vpack.c.b16 %v7847, %v7839
        %v8912 = vpack.c.b16 %v7848, %v7840
        %v8913 = vpack.c.b16 %v7849, %v7841
        %v8914 = vpack.c.b16 %v7850, %v7842
        %v8915 = vpack.c.b16 %v7859, %v7851
        %v8916 = vpack.c.b16 %v7860, %v7852
        %v8917 = vpack.c.b16 %v7861, %v7853
        %v8918 = vpack.c.b16 %v7862, %v7854
        %v8919 = vpack.c.b16 %v7863, %v7855
        %v8920 = vpack.c.b16 %v7864, %v7856
        %v8921 = vpack.c.b16 %v7865, %v7857
        %v8922 = vpack.c.b16 %v7866, %v7858
        %v8923 = vpack.c.b16 %v7875, %v7867
        %v8924 = vpack.c.b16 %v7876, %v7868
        %v8925 = vpack.c.b16 %v7877, %v7869
        %v8926 = vpack.c.b16 %v7878, %v7870
        %v8927 = vpack.c.b16 %v7879, %v7871
        %v8928 = vpack.c.b16 %v7880, %v7872
        %v8929 = vpack.c.b16 %v7881, %v7873
        %v8930 = vpack.c.b16 %v7882, %v7874
        %v8931 = vpack.c.b16 %v7891, %v7883
        %v8932 = vpack.c.b16 %v7892, %v7884
        %v8933 = vpack.c.b16 %v7893, %v7885
        %v8934 = vpack.c.b16 %v7894, %v7886
        %v8935 = vpack.c.b16 %v7895, %v7887
        %v8936 = vpack.c.b16 %v7896, %v7888
        %v8937 = vpack.c.b16 %v7897, %v7889
        %v8938 = vpack.c.b16 %v7898, %v7890
        %v8939 = vpack.c.b16 %v7907, %v7899
        %v8940 = vpack.c.b16 %v7908, %v7900
        %v8941 = vpack.c.b16 %v7909, %v7901
        %v8942 = vpack.c.b16 %v7910, %v7902
        %v8943 = vpack.c.b16 %v7911, %v7903
        %v8944 = vpack.c.b16 %v7912, %v7904
        %v8945 = vpack.c.b16 %v7913, %v7905
        %v8946 = vpack.c.b16 %v7914, %v7906
        %v8947 = vpack.c.b16 %v7923, %v7915
        %v8948 = vpack.c.b16 %v7924, %v7916
        %v8949 = vpack.c.b16 %v7925, %v7917
        %v8950 = vpack.c.b16 %v7926, %v7918
        %v8951 = vpack.c.b16 %v7927, %v7919
        %v8952 = vpack.c.b16 %v7928, %v7920
        %v8953 = vpack.c.b16 %v7929, %v7921
        %v8954 = vpack.c.b16 %v7930, %v7922
        %9979 = vmatprep.subr.bf16.mxu0 %v7932
        %9980 = vmatpush1.bf16.msra.mxu0 %v7931
        %9981 = vmatprep.subr.bf16.mxu0 %v7940
        %9982 = vmatpush1.bf16.msra.mxu0 %v7939
        %9983 = vmatprep.subr.bf16.mxu0 %v7948
        %9984 = vmatpush1.bf16.msra.mxu0 %v7947
        %9985 = vmatprep.subr.bf16.mxu0 %v7956
        %9986 = vmatpush1.bf16.msra.mxu0 %v7955
        %9987 = vmatprep.subr.bf16.mxu0 %v7964
        %9988 = vmatpush1.bf16.msra.mxu0 %v7963
        %9989 = vmatprep.subr.bf16.mxu0 %v7972
        %9990 = vmatpush1.bf16.msra.mxu0 %v7971
        %9991 = vmatprep.subr.bf16.mxu0 %v7980
        %9992 = vmatpush1.bf16.msra.mxu0 %v7979
        %9993 = vmatprep.subr.bf16.mxu0 %v7988
        %9994 = vmatpush1.bf16.msra.mxu0 %v7987
        %9995 = vmatprep.subr.bf16.mxu0 %v7996
        %9996 = vmatpush1.bf16.msra.mxu0 %v7995
        %9997 = vmatprep.subr.bf16.mxu0 %v8004
        %9998 = vmatpush1.bf16.msra.mxu0 %v8003
        %9999 = vmatprep.subr.bf16.mxu0 %v8012
        %10000 = vmatpush1.bf16.msra.mxu0 %v8011
        %10001 = vmatprep.subr.bf16.mxu0 %v8020
        %10002 = vmatpush1.bf16.msra.mxu0 %v8019
        %10003 = vmatprep.subr.bf16.mxu0 %v8028
        %10004 = vmatpush1.bf16.msra.mxu0 %v8027
        %10005 = vmatprep.subr.bf16.mxu0 %v8036
        %10006 = vmatpush1.bf16.msra.mxu0 %v8035
        %10007 = vmatprep.subr.bf16.mxu0 %v8044
        %10008 = vmatpush1.bf16.msra.mxu0 %v8043
        %10009 = vmatprep.subr.bf16.mxu0 %v8052
        %10010 = vmatpush1.bf16.msra.mxu0 %v8051
        %10011 = vmatprep.mubr.bf16.mxu0 %v3778
        %10012 = vmatmul.mubr.bf16.gmra.mrb[0].mxu0 %v3777
        %v10013 = vpop.f32.mrb[0].mxu0
        %v10014 = vadd.f32 %v4822, %v10013
        %v10015 = vpop.f32.mrb[0].mxu0
        %v10016 = vadd.f32 %v4826, %v10015
        %v10017 = vpop.f32.mrb[0].mxu0
        %v10018 = vadd.f32 %v4822, %v10017
        %v10019 = vpop.f32.mrb[0].mxu0
        %v10020 = vadd.f32 %v4826, %v10019
        %10021 = vdwg.mxu0
        %10022 = vmatprep.subr.bf16.mxu0 %v8060
        %10023 = vmatpush1.bf16.msra.mxu0 %v8059
        %10024 = vmatprep.subr.bf16.mxu0 %v8068
        %10025 = vmatpush1.bf16.msra.mxu0 %v8067
        %10026 = vmatprep.subr.bf16.mxu0 %v8076
        %10027 = vmatpush1.bf16.msra.mxu0 %v8075
        %10028 = vmatprep.subr.bf16.mxu0 %v8084
        %10029 = vmatpush1.bf16.msra.mxu0 %v8083
        %10030 = vmatprep.subr.bf16.mxu0 %v8092
        %10031 = vmatpush1.bf16.msra.mxu0 %v8091
        %10032 = vmatprep.subr.bf16.mxu0 %v8100
        %10033 = vmatpush1.bf16.msra.mxu0 %v8099
        %10034 = vmatprep.subr.bf16.mxu0 %v8108
        %10035 = vmatpush1.bf16.msra.mxu0 %v8107
        %10036 = vmatprep.subr.bf16.mxu0 %v8116
        %10037 = vmatpush1.bf16.msra.mxu0 %v8115
        %10038 = vmatprep.subr.bf16.mxu0 %v8124
        %10039 = vmatpush1.bf16.msra.mxu0 %v8123
        %10040 = vmatprep.subr.bf16.mxu0 %v8132
        %10041 = vmatpush1.bf16.msra.mxu0 %v8131
        %10042 = vmatprep.subr.bf16.mxu0 %v8140
        %10043 = vmatpush1.bf16.msra.mxu0 %v8139
        %10044 = vmatprep.subr.bf16.mxu0 %v8148
        %10045 = vmatpush1.bf16.msra.mxu0 %v8147
        %10046 = vmatprep.subr.bf16.mxu0 %v8156
        %10047 = vmatpush1.bf16.msra.mxu0 %v8155
        %10048 = vmatprep.subr.bf16.mxu0 %v8164
        %10049 = vmatpush1.bf16.msra.mxu0 %v8163
        %10050 = vmatprep.subr.bf16.mxu0 %v8172
        %10051 = vmatpush1.bf16.msra.mxu0 %v8171
        %10052 = vmatprep.subr.bf16.mxu0 %v8180
        %10053 = vmatpush1.bf16.msra.mxu0 %v8179
        %10054 = vmatprep.mubr.bf16.mxu0 %v3780
        %10055 = vmatmul.mubr.bf16.gmra.mrb[0].mxu0 %v3779
        %v10056 = vpop.f32.mrb[0].mxu0
        %v10057 = vadd.f32 %v10014, %v10056
        %v10058 = vpop.f32.mrb[0].mxu0
        %v10059 = vadd.f32 %v10016, %v10058
        %v10060 = vpop.f32.mrb[0].mxu0
        %v10061 = vadd.f32 %v10018, %v10060
        %v10062 = vpop.f32.mrb[0].mxu0
        %v10063 = vadd.f32 %v10020, %v10062
        %10064 = vdwg.mxu0
        %10065 = vmatprep.subr.bf16.mxu0 %v8188
        %10066 = vmatpush1.bf16.msra.mxu0 %v8187
        %10067 = vmatprep.subr.bf16.mxu0 %v8196
        %10068 = vmatpush1.bf16.msra.mxu0 %v8195
        %10069 = vmatprep.subr.bf16.mxu0 %v8204
        %10070 = vmatpush1.bf16.msra.mxu0 %v8203
        %10071 = vmatprep.subr.bf16.mxu0 %v8212
        %10072 = vmatpush1.bf16.msra.mxu0 %v8211
        %10073 = vmatprep.subr.bf16.mxu0 %v8220
        %10074 = vmatpush1.bf16.msra.mxu0 %v8219
        %10075 = vmatprep.subr.bf16.mxu0 %v8228
        %10076 = vmatpush1.bf16.msra.mxu0 %v8227
        %10077 = vmatprep.subr.bf16.mxu0 %v8236
        %10078 = vmatpush1.bf16.msra.mxu0 %v8235
        %10079 = vmatprep.subr.bf16.mxu0 %v8244
        %10080 = vmatpush1.bf16.msra.mxu0 %v8243
        %10081 = vmatprep.subr.bf16.mxu0 %v8252
        %10082 = vmatpush1.bf16.msra.mxu0 %v8251
        %10083 = vmatprep.subr.bf16.mxu0 %v8260
        %10084 = vmatpush1.bf16.msra.mxu0 %v8259
        %10085 = vmatprep.subr.bf16.mxu0 %v8268
        %10086 = vmatpush1.bf16.msra.mxu0 %v8267
        %10087 = vmatprep.subr.bf16.mxu0 %v8276
        %10088 = vmatpush1.bf16.msra.mxu0 %v8275
        %10089 = vmatprep.subr.bf16.mxu0 %v8284
        %10090 = vmatpush1.bf16.msra.mxu0 %v8283
        %10091 = vmatprep.subr.bf16.mxu0 %v8292
        %10092 = vmatpush1.bf16.msra.mxu0 %v8291
        %10093 = vmatprep.subr.bf16.mxu0 %v8300
        %10094 = vmatpush1.bf16.msra.mxu0 %v8299
        %10095 = vmatprep.subr.bf16.mxu0 %v8308
        %10096 = vmatpush1.bf16.msra.mxu0 %v8307
        %10097 = vmatprep.mubr.bf16.mxu0 %v3782
        %10098 = vmatmul.mubr.bf16.gmra.mrb[0].mxu0 %v3781
        %v10099 = vpop.f32.mrb[0].mxu0
        %v10100 = vadd.f32 %v10057, %v10099
        %v10101 = vpop.f32.mrb[0].mxu0
        %v10102 = vadd.f32 %v10059, %v10101
        %v10103 = vpop.f32.mrb[0].mxu0
        %v10104 = vadd.f32 %v10061, %v10103
        %v10105 = vpop.f32.mrb[0].mxu0
        %v10106 = vadd.f32 %v10063, %v10105
        %10107 = vdwg.mxu0
        %10108 = vmatprep.subr.bf16.mxu0 %v8316
        %10109 = vmatpush1.bf16.msra.mxu0 %v8315
        %10110 = vmatprep.subr.bf16.mxu0 %v8324
        %10111 = vmatpush1.bf16.msra.mxu0 %v8323
        %10112 = vmatprep.subr.bf16.mxu0 %v8332
        %10113 = vmatpush1.bf16.msra.mxu0 %v8331
        %10114 = vmatprep.subr.bf16.mxu0 %v8340
        %10115 = vmatpush1.bf16.msra.mxu0 %v8339
        %10116 = vmatprep.subr.bf16.mxu0 %v8348
        %10117 = vmatpush1.bf16.msra.mxu0 %v8347
        %10118 = vmatprep.subr.bf16.mxu0 %v8356
        %10119 = vmatpush1.bf16.msra.mxu0 %v8355
        %10120 = vmatprep.subr.bf16.mxu0 %v8364
        %10121 = vmatpush1.bf16.msra.mxu0 %v8363
        %10122 = vmatprep.subr.bf16.mxu0 %v8372
        %10123 = vmatpush1.bf16.msra.mxu0 %v8371
        %10124 = vmatprep.subr.bf16.mxu0 %v8380
        %10125 = vmatpush1.bf16.msra.mxu0 %v8379
        %10126 = vmatprep.subr.bf16.mxu0 %v8388
        %10127 = vmatpush1.bf16.msra.mxu0 %v8387
        %10128 = vmatprep.subr.bf16.mxu0 %v8396
        %10129 = vmatpush1.bf16.msra.mxu0 %v8395
        %10130 = vmatprep.subr.bf16.mxu0 %v8404
        %10131 = vmatpush1.bf16.msra.mxu0 %v8403
        %10132 = vmatprep.subr.bf16.mxu0 %v8412
        %10133 = vmatpush1.bf16.msra.mxu0 %v8411
        %10134 = vmatprep.subr.bf16.mxu0 %v8420
        %10135 = vmatpush1.bf16.msra.mxu0 %v8419
        %10136 = vmatprep.subr.bf16.mxu0 %v8428
        %10137 = vmatpush1.bf16.msra.mxu0 %v8427
        %10138 = vmatprep.subr.bf16.mxu0 %v8436
        %10139 = vmatpush1.bf16.msra.mxu0 %v8435
        %10140 = vmatprep.mubr.bf16.mxu0 %v3784
        %10141 = vmatmul.mubr.bf16.gmra.mrb[0].mxu0 %v3783
        %v10142 = vpop.f32.mrb[0].mxu0
        %v10143 = vadd.f32 %v10100, %v10142
        %v10144 = vpop.f32.mrb[0].mxu0
        %v10145 = vadd.f32 %v10102, %v10144
        %v10146 = vpop.f32.mrb[0].mxu0
        %v10147 = vadd.f32 %v10104, %v10146
        %v10148 = vpop.f32.mrb[0].mxu0
        %v10149 = vadd.f32 %v10106, %v10148
        %10150 = vdwg.mxu0
        %10151 = vmatprep.subr.bf16.mxu0 %v8444
        %10152 = vmatpush1.bf16.msra.mxu0 %v8443
        %10153 = vmatprep.subr.bf16.mxu0 %v8452
        %10154 = vmatpush1.bf16.msra.mxu0 %v8451
        %10155 = vmatprep.subr.bf16.mxu0 %v8460
        %10156 = vmatpush1.bf16.msra.mxu0 %v8459
        %10157 = vmatprep.subr.bf16.mxu0 %v8468
        %10158 = vmatpush1.bf16.msra.mxu0 %v8467
        %10159 = vmatprep.subr.bf16.mxu0 %v8476
        %10160 = vmatpush1.bf16.msra.mxu0 %v8475
        %10161 = vmatprep.subr.bf16.mxu0 %v8484
        %10162 = vmatpush1.bf16.msra.mxu0 %v8483
        %10163 = vmatprep.subr.bf16.mxu0 %v8492
        %10164 = vmatpush1.bf16.msra.mxu0 %v8491
        %10165 = vmatprep.subr.bf16.mxu0 %v8500
        %10166 = vmatpush1.bf16.msra.mxu0 %v8499
        %10167 = vmatprep.subr.bf16.mxu0 %v8508
        %10168 = vmatpush1.bf16.msra.mxu0 %v8507
        %10169 = vmatprep.subr.bf16.mxu0 %v8516
        %10170 = vmatpush1.bf16.msra.mxu0 %v8515
        %10171 = vmatprep.subr.bf16.mxu0 %v8524
        %10172 = vmatpush1.bf16.msra.mxu0 %v8523
        %10173 = vmatprep.subr.bf16.mxu0 %v8532
        %10174 = vmatpush1.bf16.msra.mxu0 %v8531
        %10175 = vmatprep.subr.bf16.mxu0 %v8540
        %10176 = vmatpush1.bf16.msra.mxu0 %v8539
        %10177 = vmatprep.subr.bf16.mxu0 %v8548
        %10178 = vmatpush1.bf16.msra.mxu0 %v8547
        %10179 = vmatprep.subr.bf16.mxu0 %v8556
        %10180 = vmatpush1.bf16.msra.mxu0 %v8555
        %10181 = vmatprep.subr.bf16.mxu0 %v8564
        %10182 = vmatpush1.bf16.msra.mxu0 %v8563
        %10183 = vmatprep.mubr.bf16.mxu0 %v3786
        %10184 = vmatmul.mubr.bf16.gmra.mrb[0].mxu0 %v3785
        %v10185 = vpop.f32.mrb[0].mxu0
        %v10186 = vadd.f32 %v10143, %v10185
        %v10187 = vpop.f32.mrb[0].mxu0
        %v10188 = vadd.f32 %v10145, %v10187
        %v10189 = vpop.f32.mrb[0].mxu0
        %v10190 = vadd.f32 %v10147, %v10189
        %v10191 = vpop.f32.mrb[0].mxu0
        %v10192 = vadd.f32 %v10149, %v10191
        %10193 = vdwg.mxu0
        %10194 = vmatprep.subr.bf16.mxu0 %v8572
        %10195 = vmatpush1.bf16.msra.mxu0 %v8571
        %10196 = vmatprep.subr.bf16.mxu0 %v8580
        %10197 = vmatpush1.bf16.msra.mxu0 %v8579
        %10198 = vmatprep.subr.bf16.mxu0 %v8588
        %10199 = vmatpush1.bf16.msra.mxu0 %v8587
        %10200 = vmatprep.subr.bf16.mxu0 %v8596
        %10201 = vmatpush1.bf16.msra.mxu0 %v8595
        %10202 = vmatprep.subr.bf16.mxu0 %v8604
        %10203 = vmatpush1.bf16.msra.mxu0 %v8603
        %10204 = vmatprep.subr.bf16.mxu0 %v8612
        %10205 = vmatpush1.bf16.msra.mxu0 %v8611
        %10206 = vmatprep.subr.bf16.mxu0 %v8620
        %10207 = vmatpush1.bf16.msra.mxu0 %v8619
        %10208 = vmatprep.subr.bf16.mxu0 %v8628
        %10209 = vmatpush1.bf16.msra.mxu0 %v8627
        %10210 = vmatprep.subr.bf16.mxu0 %v8636
        %10211 = vmatpush1.bf16.msra.mxu0 %v8635
        %10212 = vmatprep.subr.bf16.mxu0 %v8644
        %10213 = vmatpush1.bf16.msra.mxu0 %v8643
        %10214 = vmatprep.subr.bf16.mxu0 %v8652
        %10215 = vmatpush1.bf16.msra.mxu0 %v8651
        %10216 = vmatprep.subr.bf16.mxu0 %v8660
        %10217 = vmatpush1.bf16.msra.mxu0 %v8659
        %10218 = vmatprep.subr.bf16.mxu0 %v8668
        %10219 = vmatpush1.bf16.msra.mxu0 %v8667
        %10220 = vmatprep.subr.bf16.mxu0 %v8676
        %10221 = vmatpush1.bf16.msra.mxu0 %v8675
        %10222 = vmatprep.subr.bf16.mxu0 %v8684
        %10223 = vmatpush1.bf16.msra.mxu0 %v8683
        %10224 = vmatprep.subr.bf16.mxu0 %v8692
        %10225 = vmatpush1.bf16.msra.mxu0 %v8691
        %10226 = vmatprep.mubr.bf16.mxu0 %v3788
        %10227 = vmatmul.mubr.bf16.gmra.mrb[0].mxu0 %v3787
        %v10228 = vpop.f32.mrb[0].mxu0
        %v10229 = vadd.f32 %v10186, %v10228
        %v10230 = vpop.f32.mrb[0].mxu0
        %v10231 = vadd.f32 %v10188, %v10230
        %v10232 = vpop.f32.mrb[0].mxu0
        %v10233 = vadd.f32 %v10190, %v10232
        %v10234 = vpop.f32.mrb[0].mxu0
        %v10235 = vadd.f32 %v10192, %v10234
        %10236 = vdwg.mxu0
        %10237 = vmatprep.subr.bf16.mxu0 %v8700
        %10238 = vmatpush1.bf16.msra.mxu0 %v8699
        %10239 = vmatprep.subr.bf16.mxu0 %v8708
        %10240 = vmatpush1.bf16.msra.mxu0 %v8707
        %10241 = vmatprep.subr.bf16.mxu0 %v8716
        %10242 = vmatpush1.bf16.msra.mxu0 %v8715
        %10243 = vmatprep.subr.bf16.mxu0 %v8724
        %10244 = vmatpush1.bf16.msra.mxu0 %v8723
        %10245 = vmatprep.subr.bf16.mxu0 %v8732
        %10246 = vmatpush1.bf16.msra.mxu0 %v8731
        %10247 = vmatprep.subr.bf16.mxu0 %v8740
        %10248 = vmatpush1.bf16.msra.mxu0 %v8739
        %10249 = vmatprep.subr.bf16.mxu0 %v8748
        %10250 = vmatpush1.bf16.msra.mxu0 %v8747
        %10251 = vmatprep.subr.bf16.mxu0 %v8756
        %10252 = vmatpush1.bf16.msra.mxu0 %v8755
        %10253 = vmatprep.subr.bf16.mxu0 %v8764
        %10254 = vmatpush1.bf16.msra.mxu0 %v8763
        %10255 = vmatprep.subr.bf16.mxu0 %v8772
        %10256 = vmatpush1.bf16.msra.mxu0 %v8771
        %10257 = vmatprep.subr.bf16.mxu0 %v8780
        %10258 = vmatpush1.bf16.msra.mxu0 %v8779
        %10259 = vmatprep.subr.bf16.mxu0 %v8788
        %10260 = vmatpush1.bf16.msra.mxu0 %v8787
        %10261 = vmatprep.subr.bf16.mxu0 %v8796
        %10262 = vmatpush1.bf16.msra.mxu0 %v8795
        %10263 = vmatprep.subr.bf16.mxu0 %v8804
        %10264 = vmatpush1.bf16.msra.mxu0 %v8803
        %10265 = vmatprep.subr.bf16.mxu0 %v8812
        %10266 = vmatpush1.bf16.msra.mxu0 %v8811
        %10267 = vmatprep.subr.bf16.mxu0 %v8820
        %10268 = vmatpush1.bf16.msra.mxu0 %v8819
        %10269 = vmatprep.mubr.bf16.mxu0 %v3790
        %10270 = vmatmul.mubr.bf16.gmra.mrb[0].mxu0 %v3789
        %v10271 = vpop.f32.mrb[0].mxu0
        %v10272 = vadd.f32 %v10229, %v10271
        %v10273 = vpop.f32.mrb[0].mxu0
        %v10274 = vadd.f32 %v10231, %v10273
        %v10275 = vpop.f32.mrb[0].mxu0
        %v10276 = vadd.f32 %v10233, %v10275
        %v10277 = vpop.f32.mrb[0].mxu0
        %v10278 = vadd.f32 %v10235, %v10277
        %10279 = vdwg.mxu0
        %10280 = vmatprep.subr.bf16.mxu0 %v8828
        %10281 = vmatpush1.bf16.msra.mxu0 %v8827
        %10282 = vmatprep.subr.bf16.mxu0 %v8836
        %10283 = vmatpush1.bf16.msra.mxu0 %v8835
        %10284 = vmatprep.subr.bf16.mxu0 %v8844
        %10285 = vmatpush1.bf16.msra.mxu0 %v8843
        %10286 = vmatprep.subr.bf16.mxu0 %v8852
        %10287 = vmatpush1.bf16.msra.mxu0 %v8851
        %10288 = vmatprep.subr.bf16.mxu0 %v8860
        %10289 = vmatpush1.bf16.msra.mxu0 %v8859
        %10290 = vmatprep.subr.bf16.mxu0 %v8868
        %10291 = vmatpush1.bf16.msra.mxu0 %v8867
        %10292 = vmatprep.subr.bf16.mxu0 %v8876
        %10293 = vmatpush1.bf16.msra.mxu0 %v8875
        %10294 = vmatprep.subr.bf16.mxu0 %v8884
        %10295 = vmatpush1.bf16.msra.mxu0 %v8883
        %10296 = vmatprep.subr.bf16.mxu0 %v8892
        %10297 = vmatpush1.bf16.msra.mxu0 %v8891
        %10298 = vmatprep.subr.bf16.mxu0 %v8900
        %10299 = vmatpush1.bf16.msra.mxu0 %v8899
        %10300 = vmatprep.subr.bf16.mxu0 %v8908
        %10301 = vmatpush1.bf16.msra.mxu0 %v8907
        %10302 = vmatprep.subr.bf16.mxu0 %v8916
        %10303 = vmatpush1.bf16.msra.mxu0 %v8915
        %10304 = vmatprep.subr.bf16.mxu0 %v8924
        %10305 = vmatpush1.bf16.msra.mxu0 %v8923
        %10306 = vmatprep.subr.bf16.mxu0 %v8932
        %10307 = vmatpush1.bf16.msra.mxu0 %v8931
        %10308 = vmatprep.subr.bf16.mxu0 %v8940
        %10309 = vmatpush1.bf16.msra.mxu0 %v8939
        %10310 = vmatprep.subr.bf16.mxu0 %v8948
        %10311 = vmatpush1.bf16.msra.mxu0 %v8947
        %10312 = vmatprep.mubr.bf16.mxu0 %v3792
        %10313 = vmatmul.mubr.bf16.gmra.mrb[0].mxu0 %v3791
        %v10314 = vpop.f32.mrb[0].mxu0
        %v10315 = vadd.f32 %v10272, %v10314
        %v10316 = vpop.f32.mrb[0].mxu0
        %v10317 = vadd.f32 %v10274, %v10316
        %v10318 = vpop.f32.mrb[0].mxu0
        %v10319 = vadd.f32 %v10276, %v10318
        %v10320 = vpop.f32.mrb[0].mxu0
        %v10321 = vadd.f32 %v10278, %v10320
        %10322 = vdwg.mxu0
        %10323 = vmatprep.subr.bf16.mxu0 %v7934
        %10324 = vmatpush1.bf16.msra.mxu0 %v7933
        %10325 = vmatprep.subr.bf16.mxu0 %v7942
        %10326 = vmatpush1.bf16.msra.mxu0 %v7941
        %10327 = vmatprep.subr.bf16.mxu0 %v7950
        %10328 = vmatpush1.bf16.msra.mxu0 %v7949
        %10329 = vmatprep.subr.bf16.mxu0 %v7958
        %10330 = vmatpush1.bf16.msra.mxu0 %v7957
        %10331 = vmatprep.subr.bf16.mxu0 %v7966
        %10332 = vmatpush1.bf16.msra.mxu0 %v7965
        %10333 = vmatprep.subr.bf16.mxu0 %v7974
        %10334 = vmatpush1.bf16.msra.mxu0 %v7973
        %10335 = vmatprep.subr.bf16.mxu0 %v7982
        %10336 = vmatpush1.bf16.msra.mxu0 %v7981
        %10337 = vmatprep.subr.bf16.mxu0 %v7990
        %10338 = vmatpush1.bf16.msra.mxu0 %v7989
        %10339 = vmatprep.subr.bf16.mxu0 %v7998
        %10340 = vmatpush1.bf16.msra.mxu0 %v7997
        %10341 = vmatprep.subr.bf16.mxu0 %v8006
        %10342 = vmatpush1.bf16.msra.mxu0 %v8005
        %10343 = vmatprep.subr.bf16.mxu0 %v8014
        %10344 = vmatpush1.bf16.msra.mxu0 %v8013
        %10345 = vmatprep.subr.bf16.mxu0 %v8022
        %10346 = vmatpush1.bf16.msra.mxu0 %v8021
        %10347 = vmatprep.subr.bf16.mxu0 %v8030
        %10348 = vmatpush1.bf16.msra.mxu0 %v8029
        %10349 = vmatprep.subr.bf16.mxu0 %v8038
        %10350 = vmatpush1.bf16.msra.mxu0 %v8037
        %10351 = vmatprep.subr.bf16.mxu0 %v8046
        %10352 = vmatpush1.bf16.msra.mxu0 %v8045
        %10353 = vmatprep.subr.bf16.mxu0 %v8054
        %10354 = vmatpush1.bf16.msra.mxu0 %v8053
        %10355 = vmatprep.mubr.bf16.mxu0 %v3778
        %10356 = vmatmul.mubr.bf16.gmra.mrb[0].mxu0 %v3777
        %v10357 = vpop.f32.mrb[0].mxu0
        %v10358 = vadd.f32 %v4830, %v10357
        %v10359 = vpop.f32.mrb[0].mxu0
        %v10360 = vadd.f32 %v4834, %v10359
        %v10361 = vpop.f32.mrb[0].mxu0
        %v10362 = vadd.f32 %v4830, %v10361
        %v10363 = vpop.f32.mrb[0].mxu0
        %v10364 = vadd.f32 %v4834, %v10363
        %10365 = vdwg.mxu0
        %10366 = vmatprep.subr.bf16.mxu0 %v8062
        %10367 = vmatpush1.bf16.msra.mxu0 %v8061
        %10368 = vmatprep.subr.bf16.mxu0 %v8070
        %10369 = vmatpush1.bf16.msra.mxu0 %v8069
        %10370 = vmatprep.subr.bf16.mxu0 %v8078
        %10371 = vmatpush1.bf16.msra.mxu0 %v8077
        %10372 = vmatprep.subr.bf16.mxu0 %v8086
        %10373 = vmatpush1.bf16.msra.mxu0 %v8085
        %10374 = vmatprep.subr.bf16.mxu0 %v8094
        %10375 = vmatpush1.bf16.msra.mxu0 %v8093
        %10376 = vmatprep.subr.bf16.mxu0 %v8102
        %10377 = vmatpush1.bf16.msra.mxu0 %v8101
        %10378 = vmatprep.subr.bf16.mxu0 %v8110
        %10379 = vmatpush1.bf16.msra.mxu0 %v8109
        %10380 = vmatprep.subr.bf16.mxu0 %v8118
        %10381 = vmatpush1.bf16.msra.mxu0 %v8117
        %10382 = vmatprep.subr.bf16.mxu0 %v8126
        %10383 = vmatpush1.bf16.msra.mxu0 %v8125
        %10384 = vmatprep.subr.bf16.mxu0 %v8134
        %10385 = vmatpush1.bf16.msra.mxu0 %v8133
        %10386 = vmatprep.subr.bf16.mxu0 %v8142
        %10387 = vmatpush1.bf16.msra.mxu0 %v8141
        %10388 = vmatprep.subr.bf16.mxu0 %v8150
        %10389 = vmatpush1.bf16.msra.mxu0 %v8149
        %10390 = vmatprep.subr.bf16.mxu0 %v8158
        %10391 = vmatpush1.bf16.msra.mxu0 %v8157
        %10392 = vmatprep.subr.bf16.mxu0 %v8166
        %10393 = vmatpush1.bf16.msra.mxu0 %v8165
        %10394 = vmatprep.subr.bf16.mxu0 %v8174
        %10395 = vmatpush1.bf16.msra.mxu0 %v8173
        %10396 = vmatprep.subr.bf16.mxu0 %v8182
        %10397 = vmatpush1.bf16.msra.mxu0 %v8181
        %10398 = vmatprep.mubr.bf16.mxu0 %v3780
        %10399 = vmatmul.mubr.bf16.gmra.mrb[0].mxu0 %v3779
        %v10400 = vpop.f32.mrb[0].mxu0
        %v10401 = vadd.f32 %v10358, %v10400
        %v10402 = vpop.f32.mrb[0].mxu0
        %v10403 = vadd.f32 %v10360, %v10402
        %v10404 = vpop.f32.mrb[0].mxu0
        %v10405 = vadd.f32 %v10362, %v10404
        %v10406 = vpop.f32.mrb[0].mxu0
        %v10407 = vadd.f32 %v10364, %v10406
        %10408 = vdwg.mxu0
        %10409 = vmatprep.subr.bf16.mxu0 %v8190
        %10410 = vmatpush1.bf16.msra.mxu0 %v8189
        %10411 = vmatprep.subr.bf16.mxu0 %v8198
        %10412 = vmatpush1.bf16.msra.mxu0 %v8197
        %10413 = vmatprep.subr.bf16.mxu0 %v8206
        %10414 = vmatpush1.bf16.msra.mxu0 %v8205
        %10415 = vmatprep.subr.bf16.mxu0 %v8214
        %10416 = vmatpush1.bf16.msra.mxu0 %v8213
        %10417 = vmatprep.subr.bf16.mxu0 %v8222
        %10418 = vmatpush1.bf16.msra.mxu0 %v8221
        %10419 = vmatprep.subr.bf16.mxu0 %v8230
        %10420 = vmatpush1.bf16.msra.mxu0 %v8229
        %10421 = vmatprep.subr.bf16.mxu0 %v8238
        %10422 = vmatpush1.bf16.msra.mxu0 %v8237
        %10423 = vmatprep.subr.bf16.mxu0 %v8246
        %10424 = vmatpush1.bf16.msra.mxu0 %v8245
        %10425 = vmatprep.subr.bf16.mxu0 %v8254
        %10426 = vmatpush1.bf16.msra.mxu0 %v8253
        %10427 = vmatprep.subr.bf16.mxu0 %v8262
        %10428 = vmatpush1.bf16.msra.mxu0 %v8261
        %10429 = vmatprep.subr.bf16.mxu0 %v8270
        %10430 = vmatpush1.bf16.msra.mxu0 %v8269
        %10431 = vmatprep.subr.bf16.mxu0 %v8278
        %10432 = vmatpush1.bf16.msra.mxu0 %v8277
        %10433 = vmatprep.subr.bf16.mxu0 %v8286
        %10434 = vmatpush1.bf16.msra.mxu0 %v8285
        %10435 = vmatprep.subr.bf16.mxu0 %v8294
        %10436 = vmatpush1.bf16.msra.mxu0 %v8293
        %10437 = vmatprep.subr.bf16.mxu0 %v8302
        %10438 = vmatpush1.bf16.msra.mxu0 %v8301
        %10439 = vmatprep.subr.bf16.mxu0 %v8310
        %10440 = vmatpush1.bf16.msra.mxu0 %v8309
        %10441 = vmatprep.mubr.bf16.mxu0 %v3782
        %10442 = vmatmul.mubr.bf16.gmra.mrb[0].mxu0 %v3781
        %v10443 = vpop.f32.mrb[0].mxu0
        %v10444 = vadd.f32 %v10401, %v10443
        %v10445 = vpop.f32.mrb[0].mxu0
        %v10446 = vadd.f32 %v10403, %v10445
        %v10447 = vpop.f32.mrb[0].mxu0
        %v10448 = vadd.f32 %v10405, %v10447
        %v10449 = vpop.f32.mrb[0].mxu0
        %v10450 = vadd.f32 %v10407, %v10449
        %10451 = vdwg.mxu0
        %10452 = vmatprep.subr.bf16.mxu0 %v8318
        %10453 = vmatpush1.bf16.msra.mxu0 %v8317
        %10454 = vmatprep.subr.bf16.mxu0 %v8326
        %10455 = vmatpush1.bf16.msra.mxu0 %v8325
        %10456 = vmatprep.subr.bf16.mxu0 %v8334
        %10457 = vmatpush1.bf16.msra.mxu0 %v8333
        %10458 = vmatprep.subr.bf16.mxu0 %v8342
        %10459 = vmatpush1.bf16.msra.mxu0 %v8341
        %10460 = vmatprep.subr.bf16.mxu0 %v8350
        %10461 = vmatpush1.bf16.msra.mxu0 %v8349
        %10462 = vmatprep.subr.bf16.mxu0 %v8358
        %10463 = vmatpush1.bf16.msra.mxu0 %v8357
        %10464 = vmatprep.subr.bf16.mxu0 %v8366
        %10465 = vmatpush1.bf16.msra.mxu0 %v8365
        %10466 = vmatprep.subr.bf16.mxu0 %v8374
        %10467 = vmatpush1.bf16.msra.mxu0 %v8373
        %10468 = vmatprep.subr.bf16.mxu0 %v8382
        %10469 = vmatpush1.bf16.msra.mxu0 %v8381
        %10470 = vmatprep.subr.bf16.mxu0 %v8390
        %10471 = vmatpush1.bf16.msra.mxu0 %v8389
        %10472 = vmatprep.subr.bf16.mxu0 %v8398
        %10473 = vmatpush1.bf16.msra.mxu0 %v8397
        %10474 = vmatprep.subr.bf16.mxu0 %v8406
        %10475 = vmatpush1.bf16.msra.mxu0 %v8405
        %10476 = vmatprep.subr.bf16.mxu0 %v8414
        %10477 = vmatpush1.bf16.msra.mxu0 %v8413
        %10478 = vmatprep.subr.bf16.mxu0 %v8422
        %10479 = vmatpush1.bf16.msra.mxu0 %v8421
        %10480 = vmatprep.subr.bf16.mxu0 %v8430
        %10481 = vmatpush1.bf16.msra.mxu0 %v8429
        %10482 = vmatprep.subr.bf16.mxu0 %v8438
        %10483 = vmatpush1.bf16.msra.mxu0 %v8437
        %10484 = vmatprep.mubr.bf16.mxu0 %v3784
        %10485 = vmatmul.mubr.bf16.gmra.mrb[0].mxu0 %v3783
        %v10486 = vpop.f32.mrb[0].mxu0
        %v10487 = vadd.f32 %v10444, %v10486
        %v10488 = vpop.f32.mrb[0].mxu0
        %v10489 = vadd.f32 %v10446, %v10488
        %v10490 = vpop.f32.mrb[0].mxu0
        %v10491 = vadd.f32 %v10448, %v10490
        %v10492 = vpop.f32.mrb[0].mxu0
        %v10493 = vadd.f32 %v10450, %v10492
        %10494 = vdwg.mxu0
        %10495 = vmatprep.subr.bf16.mxu0 %v8446
        %10496 = vmatpush1.bf16.msra.mxu0 %v8445
        %10497 = vmatprep.subr.bf16.mxu0 %v8454
        %10498 = vmatpush1.bf16.msra.mxu0 %v8453
        %10499 = vmatprep.subr.bf16.mxu0 %v8462
        %10500 = vmatpush1.bf16.msra.mxu0 %v8461
        %10501 = vmatprep.subr.bf16.mxu0 %v8470
        %10502 = vmatpush1.bf16.msra.mxu0 %v8469
        %10503 = vmatprep.subr.bf16.mxu0 %v8478
        %10504 = vmatpush1.bf16.msra.mxu0 %v8477
        %10505 = vmatprep.subr.bf16.mxu0 %v8486
        %10506 = vmatpush1.bf16.msra.mxu0 %v8485
        %10507 = vmatprep.subr.bf16.mxu0 %v8494
        %10508 = vmatpush1.bf16.msra.mxu0 %v8493
        %10509 = vmatprep.subr.bf16.mxu0 %v8502
        %10510 = vmatpush1.bf16.msra.mxu0 %v8501
        %10511 = vmatprep.subr.bf16.mxu0 %v8510
        %10512 = vmatpush1.bf16.msra.mxu0 %v8509
        %10513 = vmatprep.subr.bf16.mxu0 %v8518
        %10514 = vmatpush1.bf16.msra.mxu0 %v8517
        %10515 = vmatprep.subr.bf16.mxu0 %v8526
        %10516 = vmatpush1.bf16.msra.mxu0 %v8525
        %10517 = vmatprep.subr.bf16.mxu0 %v8534
        %10518 = vmatpush1.bf16.msra.mxu0 %v8533
        %10519 = vmatprep.subr.bf16.mxu0 %v8542
        %10520 = vmatpush1.bf16.msra.mxu0 %v8541
        %10521 = vmatprep.subr.bf16.mxu0 %v8550
        %10522 = vmatpush1.bf16.msra.mxu0 %v8549
        %10523 = vmatprep.subr.bf16.mxu0 %v8558
        %10524 = vmatpush1.bf16.msra.mxu0 %v8557
        %10525 = vmatprep.subr.bf16.mxu0 %v8566
        %10526 = vmatpush1.bf16.msra.mxu0 %v8565
        %10527 = vmatprep.mubr.bf16.mxu0 %v3786
        %10528 = vmatmul.mubr.bf16.gmra.mrb[0].mxu0 %v3785
        %v10529 = vpop.f32.mrb[0].mxu0
        %v10530 = vadd.f32 %v10487, %v10529
        %v10531 = vpop.f32.mrb[0].mxu0
        %v10532 = vadd.f32 %v10489, %v10531
        %v10533 = vpop.f32.mrb[0].mxu0
        %v10534 = vadd.f32 %v10491, %v10533
        %v10535 = vpop.f32.mrb[0].mxu0
        %v10536 = vadd.f32 %v10493, %v10535
        %10537 = vdwg.mxu0
        %10538 = vmatprep.subr.bf16.mxu0 %v8574
        %10539 = vmatpush1.bf16.msra.mxu0 %v8573
        %10540 = vmatprep.subr.bf16.mxu0 %v8582
        %10541 = vmatpush1.bf16.msra.mxu0 %v8581
        %10542 = vmatprep.subr.bf16.mxu0 %v8590
        %10543 = vmatpush1.bf16.msra.mxu0 %v8589
        %10544 = vmatprep.subr.bf16.mxu0 %v8598
        %10545 = vmatpush1.bf16.msra.mxu0 %v8597
        %10546 = vmatprep.subr.bf16.mxu0 %v8606
        %10547 = vmatpush1.bf16.msra.mxu0 %v8605
        %10548 = vmatprep.subr.bf16.mxu0 %v8614
        %10549 = vmatpush1.bf16.msra.mxu0 %v8613
        %10550 = vmatprep.subr.bf16.mxu0 %v8622
        %10551 = vmatpush1.bf16.msra.mxu0 %v8621
        %10552 = vmatprep.subr.bf16.mxu0 %v8630
        %10553 = vmatpush1.bf16.msra.mxu0 %v8629
        %10554 = vmatprep.subr.bf16.mxu0 %v8638
        %10555 = vmatpush1.bf16.msra.mxu0 %v8637
        %10556 = vmatprep.subr.bf16.mxu0 %v8646
        %10557 = vmatpush1.bf16.msra.mxu0 %v8645
        %10558 = vmatprep.subr.bf16.mxu0 %v8654
        %10559 = vmatpush1.bf16.msra.mxu0 %v8653
        %10560 = vmatprep.subr.bf16.mxu0 %v8662
        %10561 = vmatpush1.bf16.msra.mxu0 %v8661
        %10562 = vmatprep.subr.bf16.mxu0 %v8670
        %10563 = vmatpush1.bf16.msra.mxu0 %v8669
        %10564 = vmatprep.subr.bf16.mxu0 %v8678
        %10565 = vmatpush1.bf16.msra.mxu0 %v8677
        %10566 = vmatprep.subr.bf16.mxu0 %v8686
        %10567 = vmatpush1.bf16.msra.mxu0 %v8685
        %10568 = vmatprep.subr.bf16.mxu0 %v8694
        %10569 = vmatpush1.bf16.msra.mxu0 %v8693
        %10570 = vmatprep.mubr.bf16.mxu0 %v3788
        %10571 = vmatmul.mubr.bf16.gmra.mrb[0].mxu0 %v3787
        %v10572 = vpop.f32.mrb[0].mxu0
        %v10573 = vadd.f32 %v10530, %v10572
        %v10574 = vpop.f32.mrb[0].mxu0
        %v10575 = vadd.f32 %v10532, %v10574
        %v10576 = vpop.f32.mrb[0].mxu0
        %v10577 = vadd.f32 %v10534, %v10576
        %v10578 = vpop.f32.mrb[0].mxu0
        %v10579 = vadd.f32 %v10536, %v10578
        %10580 = vdwg.mxu0
        %10581 = vmatprep.subr.bf16.mxu0 %v8702
        %10582 = vmatpush1.bf16.msra.mxu0 %v8701
        %10583 = vmatprep.subr.bf16.mxu0 %v8710
        %10584 = vmatpush1.bf16.msra.mxu0 %v8709
        %10585 = vmatprep.subr.bf16.mxu0 %v8718
        %10586 = vmatpush1.bf16.msra.mxu0 %v8717
        %10587 = vmatprep.subr.bf16.mxu0 %v8726
        %10588 = vmatpush1.bf16.msra.mxu0 %v8725
        %10589 = vmatprep.subr.bf16.mxu0 %v8734
        %10590 = vmatpush1.bf16.msra.mxu0 %v8733
        %10591 = vmatprep.subr.bf16.mxu0 %v8742
        %10592 = vmatpush1.bf16.msra.mxu0 %v8741
        %10593 = vmatprep.subr.bf16.mxu0 %v8750
        %10594 = vmatpush1.bf16.msra.mxu0 %v8749
        %10595 = vmatprep.subr.bf16.mxu0 %v8758
        %10596 = vmatpush1.bf16.msra.mxu0 %v8757
        %10597 = vmatprep.subr.bf16.mxu0 %v8766
        %10598 = vmatpush1.bf16.msra.mxu0 %v8765
        %10599 = vmatprep.subr.bf16.mxu0 %v8774
        %10600 = vmatpush1.bf16.msra.mxu0 %v8773
        %10601 = vmatprep.subr.bf16.mxu0 %v8782
        %10602 = vmatpush1.bf16.msra.mxu0 %v8781
        %10603 = vmatprep.subr.bf16.mxu0 %v8790
        %10604 = vmatpush1.bf16.msra.mxu0 %v8789
        %10605 = vmatprep.subr.bf16.mxu0 %v8798
        %10606 = vmatpush1.bf16.msra.mxu0 %v8797
        %10607 = vmatprep.subr.bf16.mxu0 %v8806
        %10608 = vmatpush1.bf16.msra.mxu0 %v8805
        %10609 = vmatprep.subr.bf16.mxu0 %v8814
        %10610 = vmatpush1.bf16.msra.mxu0 %v8813
        %10611 = vmatprep.subr.bf16.mxu0 %v8822
        %10612 = vmatpush1.bf16.msra.mxu0 %v8821
        %10613 = vmatprep.mubr.bf16.mxu0 %v3790
        %10614 = vmatmul.mubr.bf16.gmra.mrb[0].mxu0 %v3789
        %v10615 = vpop.f32.mrb[0].mxu0
        %v10616 = vadd.f32 %v10573, %v10615
        %v10617 = vpop.f32.mrb[0].mxu0
        %v10618 = vadd.f32 %v10575, %v10617
        %v10619 = vpop.f32.mrb[0].mxu0
        %v10620 = vadd.f32 %v10577, %v10619
        %v10621 = vpop.f32.mrb[0].mxu0
        %v10622 = vadd.f32 %v10579, %v10621
        %10623 = vdwg.mxu0
        %10624 = vmatprep.subr.bf16.mxu0 %v8830
        %10625 = vmatpush1.bf16.msra.mxu0 %v8829
        %10626 = vmatprep.subr.bf16.mxu0 %v8838
        %10627 = vmatpush1.bf16.msra.mxu0 %v8837
        %10628 = vmatprep.subr.bf16.mxu0 %v8846
        %10629 = vmatpush1.bf16.msra.mxu0 %v8845
        %10630 = vmatprep.subr.bf16.mxu0 %v8854
        %10631 = vmatpush1.bf16.msra.mxu0 %v8853
        %10632 = vmatprep.subr.bf16.mxu0 %v8862
        %10633 = vmatpush1.bf16.msra.mxu0 %v8861
        %10634 = vmatprep.subr.bf16.mxu0 %v8870
        %10635 = vmatpush1.bf16.msra.mxu0 %v8869
        %10636 = vmatprep.subr.bf16.mxu0 %v8878
        %10637 = vmatpush1.bf16.msra.mxu0 %v8877
        %10638 = vmatprep.subr.bf16.mxu0 %v8886
        %10639 = vmatpush1.bf16.msra.mxu0 %v8885
        %10640 = vmatprep.subr.bf16.mxu0 %v8894
        %10641 = vmatpush1.bf16.msra.mxu0 %v8893
        %10642 = vmatprep.subr.bf16.mxu0 %v8902
        %10643 = vmatpush1.bf16.msra.mxu0 %v8901
        %10644 = vmatprep.subr.bf16.mxu0 %v8910
        %10645 = vmatpush1.bf16.msra.mxu0 %v8909
        %10646 = vmatprep.subr.bf16.mxu0 %v8918
        %10647 = vmatpush1.bf16.msra.mxu0 %v8917
        %10648 = vmatprep.subr.bf16.mxu0 %v8926
        %10649 = vmatpush1.bf16.msra.mxu0 %v8925
        %10650 = vmatprep.subr.bf16.mxu0 %v8934
        %10651 = vmatpush1.bf16.msra.mxu0 %v8933
        %10652 = vmatprep.subr.bf16.mxu0 %v8942
        %10653 = vmatpush1.bf16.msra.mxu0 %v8941
        %10654 = vmatprep.subr.bf16.mxu0 %v8950
        %10655 = vmatpush1.bf16.msra.mxu0 %v8949
        %10656 = vmatprep.mubr.bf16.mxu0 %v3792
        %10657 = vmatmul.mubr.bf16.gmra.mrb[0].mxu0 %v3791
        %v10658 = vpop.f32.mrb[0].mxu0
        %v10659 = vadd.f32 %v10616, %v10658
        %v10660 = vpop.f32.mrb[0].mxu0
        %v10661 = vadd.f32 %v10618, %v10660
        %v10662 = vpop.f32.mrb[0].mxu0
        %v10663 = vadd.f32 %v10620, %v10662
        %v10664 = vpop.f32.mrb[0].mxu0
        %v10665 = vadd.f32 %v10622, %v10664
        %10666 = vdwg.mxu0
        %10667 = vmatprep.subr.bf16.mxu0 %v7936
        %10668 = vmatpush1.bf16.msra.mxu0 %v7935
        %10669 = vmatprep.subr.bf16.mxu0 %v7944
        %10670 = vmatpush1.bf16.msra.mxu0 %v7943
        %10671 = vmatprep.subr.bf16.mxu0 %v7952
        %10672 = vmatpush1.bf16.msra.mxu0 %v7951
        %10673 = vmatprep.subr.bf16.mxu0 %v7960
        %10674 = vmatpush1.bf16.msra.mxu0 %v7959
        %10675 = vmatprep.subr.bf16.mxu0 %v7968
        %10676 = vmatpush1.bf16.msra.mxu0 %v7967
        %10677 = vmatprep.subr.bf16.mxu0 %v7976
        %10678 = vmatpush1.bf16.msra.mxu0 %v7975
        %10679 = vmatprep.subr.bf16.mxu0 %v7984
        %10680 = vmatpush1.bf16.msra.mxu0 %v7983
        %10681 = vmatprep.subr.bf16.mxu0 %v7992
        %10682 = vmatpush1.bf16.msra.mxu0 %v7991
        %10683 = vmatprep.subr.bf16.mxu0 %v8000
        %10684 = vmatpush1.bf16.msra.mxu0 %v7999
        %10685 = vmatprep.subr.bf16.mxu0 %v8008
        %10686 = vmatpush1.bf16.msra.mxu0 %v8007
        %10687 = vmatprep.subr.bf16.mxu0 %v8016
        %10688 = vmatpush1.bf16.msra.mxu0 %v8015
        %10689 = vmatprep.subr.bf16.mxu0 %v8024
        %10690 = vmatpush1.bf16.msra.mxu0 %v8023
        %10691 = vmatprep.subr.bf16.mxu0 %v8032
        %10692 = vmatpush1.bf16.msra.mxu0 %v8031
        %10693 = vmatprep.subr.bf16.mxu0 %v8040
        %10694 = vmatpush1.bf16.msra.mxu0 %v8039
        %10695 = vmatprep.subr.bf16.mxu0 %v8048
        %10696 = vmatpush1.bf16.msra.mxu0 %v8047
        %10697 = vmatprep.subr.bf16.mxu0 %v8056
        %10698 = vmatpush1.bf16.msra.mxu0 %v8055
        %10699 = vmatprep.mubr.bf16.mxu0 %v3778
        %10700 = vmatmul.mubr.bf16.gmra.mrb[0].mxu0 %v3777
        %v10701 = vpop.f32.mrb[0].mxu0
        %v10702 = vadd.f32 %v4838, %v10701
        %v10703 = vpop.f32.mrb[0].mxu0
        %v10704 = vadd.f32 %v4842, %v10703
        %v10705 = vpop.f32.mrb[0].mxu0
        %v10706 = vadd.f32 %v4838, %v10705
        %v10707 = vpop.f32.mrb[0].mxu0
        %v10708 = vadd.f32 %v4842, %v10707
        %10709 = vdwg.mxu0
        %10710 = vmatprep.subr.bf16.mxu0 %v8064
        %10711 = vmatpush1.bf16.msra.mxu0 %v8063
        %10712 = vmatprep.subr.bf16.mxu0 %v8072
        %10713 = vmatpush1.bf16.msra.mxu0 %v8071
        %10714 = vmatprep.subr.bf16.mxu0 %v8080
        %10715 = vmatpush1.bf16.msra.mxu0 %v8079
        %10716 = vmatprep.subr.bf16.mxu0 %v8088
        %10717 = vmatpush1.bf16.msra.mxu0 %v8087
        %10718 = vmatprep.subr.bf16.mxu0 %v8096
        %10719 = vmatpush1.bf16.msra.mxu0 %v8095
        %10720 = vmatprep.subr.bf16.mxu0 %v8104
        %10721 = vmatpush1.bf16.msra.mxu0 %v8103
        %10722 = vmatprep.subr.bf16.mxu0 %v8112
        %10723 = vmatpush1.bf16.msra.mxu0 %v8111
        %10724 = vmatprep.subr.bf16.mxu0 %v8120
        %10725 = vmatpush1.bf16.msra.mxu0 %v8119
        %10726 = vmatprep.subr.bf16.mxu0 %v8128
        %10727 = vmatpush1.bf16.msra.mxu0 %v8127
        %10728 = vmatprep.subr.bf16.mxu0 %v8136
        %10729 = vmatpush1.bf16.msra.mxu0 %v8135
        %10730 = vmatprep.subr.bf16.mxu0 %v8144
        %10731 = vmatpush1.bf16.msra.mxu0 %v8143
        %10732 = vmatprep.subr.bf16.mxu0 %v8152
        %10733 = vmatpush1.bf16.msra.mxu0 %v8151
        %10734 = vmatprep.subr.bf16.mxu0 %v8160
        %10735 = vmatpush1.bf16.msra.mxu0 %v8159
        %10736 = vmatprep.subr.bf16.mxu0 %v8168
        %10737 = vmatpush1.bf16.msra.mxu0 %v8167
        %10738 = vmatprep.subr.bf16.mxu0 %v8176
        %10739 = vmatpush1.bf16.msra.mxu0 %v8175
        %10740 = vmatprep.subr.bf16.mxu0 %v8184
        %10741 = vmatpush1.bf16.msra.mxu0 %v8183
        %10742 = vmatprep.mubr.bf16.mxu0 %v3780
        %10743 = vmatmul.mubr.bf16.gmra.mrb[0].mxu0 %v3779
        %v10744 = vpop.f32.mrb[0].mxu0
        %v10745 = vadd.f32 %v10702, %v10744
        %v10746 = vpop.f32.mrb[0].mxu0
        %v10747 = vadd.f32 %v10704, %v10746
        %v10748 = vpop.f32.mrb[0].mxu0
        %v10749 = vadd.f32 %v10706, %v10748
        %v10750 = vpop.f32.mrb[0].mxu0
        %v10751 = vadd.f32 %v10708, %v10750
        %10752 = vdwg.mxu0
        %10753 = vmatprep.subr.bf16.mxu0 %v8192
        %10754 = vmatpush1.bf16.msra.mxu0 %v8191
        %10755 = vmatprep.subr.bf16.mxu0 %v8200
        %10756 = vmatpush1.bf16.msra.mxu0 %v8199
        %10757 = vmatprep.subr.bf16.mxu0 %v8208
        %10758 = vmatpush1.bf16.msra.mxu0 %v8207
        %10759 = vmatprep.subr.bf16.mxu0 %v8216
        %10760 = vmatpush1.bf16.msra.mxu0 %v8215
        %10761 = vmatprep.subr.bf16.mxu0 %v8224
        %10762 = vmatpush1.bf16.msra.mxu0 %v8223
        %10763 = vmatprep.subr.bf16.mxu0 %v8232
        %10764 = vmatpush1.bf16.msra.mxu0 %v8231
        %10765 = vmatprep.subr.bf16.mxu0 %v8240
        %10766 = vmatpush1.bf16.msra.mxu0 %v8239
        %10767 = vmatprep.subr.bf16.mxu0 %v8248
        %10768 = vmatpush1.bf16.msra.mxu0 %v8247
        %10769 = vmatprep.subr.bf16.mxu0 %v8256
        %10770 = vmatpush1.bf16.msra.mxu0 %v8255
        %10771 = vmatprep.subr.bf16.mxu0 %v8264
        %10772 = vmatpush1.bf16.msra.mxu0 %v8263
        %10773 = vmatprep.subr.bf16.mxu0 %v8272
        %10774 = vmatpush1.bf16.msra.mxu0 %v8271
        %10775 = vmatprep.subr.bf16.mxu0 %v8280
        %10776 = vmatpush1.bf16.msra.mxu0 %v8279
        %10777 = vmatprep.subr.bf16.mxu0 %v8288
        %10778 = vmatpush1.bf16.msra.mxu0 %v8287
        %10779 = vmatprep.subr.bf16.mxu0 %v8296
        %10780 = vmatpush1.bf16.msra.mxu0 %v8295
        %10781 = vmatprep.subr.bf16.mxu0 %v8304
        %10782 = vmatpush1.bf16.msra.mxu0 %v8303
        %10783 = vmatprep.subr.bf16.mxu0 %v8312
        %10784 = vmatpush1.bf16.msra.mxu0 %v8311
        %10785 = vmatprep.mubr.bf16.mxu0 %v3782
        %10786 = vmatmul.mubr.bf16.gmra.mrb[0].mxu0 %v3781
        %v10787 = vpop.f32.mrb[0].mxu0
        %v10788 = vadd.f32 %v10745, %v10787
        %v10789 = vpop.f32.mrb[0].mxu0
        %v10790 = vadd.f32 %v10747, %v10789
        %v10791 = vpop.f32.mrb[0].mxu0
        %v10792 = vadd.f32 %v10749, %v10791
        %v10793 = vpop.f32.mrb[0].mxu0
        %v10794 = vadd.f32 %v10751, %v10793
        %10795 = vdwg.mxu0
        %10796 = vmatprep.subr.bf16.mxu0 %v8320
        %10797 = vmatpush1.bf16.msra.mxu0 %v8319
        %10798 = vmatprep.subr.bf16.mxu0 %v8328
        %10799 = vmatpush1.bf16.msra.mxu0 %v8327
        %10800 = vmatprep.subr.bf16.mxu0 %v8336
        %10801 = vmatpush1.bf16.msra.mxu0 %v8335
        %10802 = vmatprep.subr.bf16.mxu0 %v8344
        %10803 = vmatpush1.bf16.msra.mxu0 %v8343
        %10804 = vmatprep.subr.bf16.mxu0 %v8352
        %10805 = vmatpush1.bf16.msra.mxu0 %v8351
        %10806 = vmatprep.subr.bf16.mxu0 %v8360
        %10807 = vmatpush1.bf16.msra.mxu0 %v8359
        %10808 = vmatprep.subr.bf16.mxu0 %v8368
        %10809 = vmatpush1.bf16.msra.mxu0 %v8367
        %10810 = vmatprep.subr.bf16.mxu0 %v8376
        %10811 = vmatpush1.bf16.msra.mxu0 %v8375
        %10812 = vmatprep.subr.bf16.mxu0 %v8384
        %10813 = vmatpush1.bf16.msra.mxu0 %v8383
        %10814 = vmatprep.subr.bf16.mxu0 %v8392
        %10815 = vmatpush1.bf16.msra.mxu0 %v8391
        %10816 = vmatprep.subr.bf16.mxu0 %v8400
        %10817 = vmatpush1.bf16.msra.mxu0 %v8399
        %10818 = vmatprep.subr.bf16.mxu0 %v8408
        %10819 = vmatpush1.bf16.msra.mxu0 %v8407
        %10820 = vmatprep.subr.bf16.mxu0 %v8416
        %10821 = vmatpush1.bf16.msra.mxu0 %v8415
        %10822 = vmatprep.subr.bf16.mxu0 %v8424
        %10823 = vmatpush1.bf16.msra.mxu0 %v8423
        %10824 = vmatprep.subr.bf16.mxu0 %v8432
        %10825 = vmatpush1.bf16.msra.mxu0 %v8431
        %10826 = vmatprep.subr.bf16.mxu0 %v8440
        %10827 = vmatpush1.bf16.msra.mxu0 %v8439
        %10828 = vmatprep.mubr.bf16.mxu0 %v3784
        %10829 = vmatmul.mubr.bf16.gmra.mrb[0].mxu0 %v3783
        %v10830 = vpop.f32.mrb[0].mxu0
        %v10831 = vadd.f32 %v10788, %v10830
        %v10832 = vpop.f32.mrb[0].mxu0
        %v10833 = vadd.f32 %v10790, %v10832
        %v10834 = vpop.f32.mrb[0].mxu0
        %v10835 = vadd.f32 %v10792, %v10834
        %v10836 = vpop.f32.mrb[0].mxu0
        %v10837 = vadd.f32 %v10794, %v10836
        %10838 = vdwg.mxu0
        %10839 = vmatprep.subr.bf16.mxu0 %v8448
        %10840 = vmatpush1.bf16.msra.mxu0 %v8447
        %10841 = vmatprep.subr.bf16.mxu0 %v8456
        %10842 = vmatpush1.bf16.msra.mxu0 %v8455
        %10843 = vmatprep.subr.bf16.mxu0 %v8464
        %10844 = vmatpush1.bf16.msra.mxu0 %v8463
        %10845 = vmatprep.subr.bf16.mxu0 %v8472
        %10846 = vmatpush1.bf16.msra.mxu0 %v8471
        %10847 = vmatprep.subr.bf16.mxu0 %v8480
        %10848 = vmatpush1.bf16.msra.mxu0 %v8479
        %10849 = vmatprep.subr.bf16.mxu0 %v8488
        %10850 = vmatpush1.bf16.msra.mxu0 %v8487
        %10851 = vmatprep.subr.bf16.mxu0 %v8496
        %10852 = vmatpush1.bf16.msra.mxu0 %v8495
        %10853 = vmatprep.subr.bf16.mxu0 %v8504
        %10854 = vmatpush1.bf16.msra.mxu0 %v8503
        %10855 = vmatprep.subr.bf16.mxu0 %v8512
        %10856 = vmatpush1.bf16.msra.mxu0 %v8511
        %10857 = vmatprep.subr.bf16.mxu0 %v8520
        %10858 = vmatpush1.bf16.msra.mxu0 %v8519
        %10859 = vmatprep.subr.bf16.mxu0 %v8528
        %10860 = vmatpush1.bf16.msra.mxu0 %v8527
        %10861 = vmatprep.subr.bf16.mxu0 %v8536
        %10862 = vmatpush1.bf16.msra.mxu0 %v8535
        %10863 = vmatprep.subr.bf16.mxu0 %v8544
        %10864 = vmatpush1.bf16.msra.mxu0 %v8543
        %10865 = vmatprep.subr.bf16.mxu0 %v8552
        %10866 = vmatpush1.bf16.msra.mxu0 %v8551
        %10867 = vmatprep.subr.bf16.mxu0 %v8560
        %10868 = vmatpush1.bf16.msra.mxu0 %v8559
        %10869 = vmatprep.subr.bf16.mxu0 %v8568
        %10870 = vmatpush1.bf16.msra.mxu0 %v8567
        %10871 = vmatprep.mubr.bf16.mxu0 %v3786
        %10872 = vmatmul.mubr.bf16.gmra.mrb[0].mxu0 %v3785
        %v10873 = vpop.f32.mrb[0].mxu0
        %v10874 = vadd.f32 %v10831, %v10873
        %v10875 = vpop.f32.mrb[0].mxu0
        %v10876 = vadd.f32 %v10833, %v10875
        %v10877 = vpop.f32.mrb[0].mxu0
        %v10878 = vadd.f32 %v10835, %v10877
        %v10879 = vpop.f32.mrb[0].mxu0
        %v10880 = vadd.f32 %v10837, %v10879
        %10881 = vdwg.mxu0
        %10882 = vmatprep.subr.bf16.mxu0 %v8576
        %10883 = vmatpush1.bf16.msra.mxu0 %v8575
        %10884 = vmatprep.subr.bf16.mxu0 %v8584
        %10885 = vmatpush1.bf16.msra.mxu0 %v8583
        %10886 = vmatprep.subr.bf16.mxu0 %v8592
        %10887 = vmatpush1.bf16.msra.mxu0 %v8591
        %10888 = vmatprep.subr.bf16.mxu0 %v8600
        %10889 = vmatpush1.bf16.msra.mxu0 %v8599
        %10890 = vmatprep.subr.bf16.mxu0 %v8608
        %10891 = vmatpush1.bf16.msra.mxu0 %v8607
        %10892 = vmatprep.subr.bf16.mxu0 %v8616
        %10893 = vmatpush1.bf16.msra.mxu0 %v8615
        %10894 = vmatprep.subr.bf16.mxu0 %v8624
        %10895 = vmatpush1.bf16.msra.mxu0 %v8623
        %10896 = vmatprep.subr.bf16.mxu0 %v8632
        %10897 = vmatpush1.bf16.msra.mxu0 %v8631
        %10898 = vmatprep.subr.bf16.mxu0 %v8640
        %10899 = vmatpush1.bf16.msra.mxu0 %v8639
        %10900 = vmatprep.subr.bf16.mxu0 %v8648
        %10901 = vmatpush1.bf16.msra.mxu0 %v8647
        %10902 = vmatprep.subr.bf16.mxu0 %v8656
        %10903 = vmatpush1.bf16.msra.mxu0 %v8655
        %10904 = vmatprep.subr.bf16.mxu0 %v8664
        %10905 = vmatpush1.bf16.msra.mxu0 %v8663
        %10906 = vmatprep.subr.bf16.mxu0 %v8672
        %10907 = vmatpush1.bf16.msra.mxu0 %v8671
        %10908 = vmatprep.subr.bf16.mxu0 %v8680
        %10909 = vmatpush1.bf16.msra.mxu0 %v8679
        %10910 = vmatprep.subr.bf16.mxu0 %v8688
        %10911 = vmatpush1.bf16.msra.mxu0 %v8687
        %10912 = vmatprep.subr.bf16.mxu0 %v8696
        %10913 = vmatpush1.bf16.msra.mxu0 %v8695
        %10914 = vmatprep.mubr.bf16.mxu0 %v3788
        %10915 = vmatmul.mubr.bf16.gmra.mrb[0].mxu0 %v3787
        %v10916 = vpop.f32.mrb[0].mxu0
        %v10917 = vadd.f32 %v10874, %v10916
        %v10918 = vpop.f32.mrb[0].mxu0
        %v10919 = vadd.f32 %v10876, %v10918
        %v10920 = vpop.f32.mrb[0].mxu0
        %v10921 = vadd.f32 %v10878, %v10920
        %v10922 = vpop.f32.mrb[0].mxu0
        %v10923 = vadd.f32 %v10880, %v10922
        %10924 = vdwg.mxu0
        %10925 = vmatprep.subr.bf16.mxu0 %v8704
        %10926 = vmatpush1.bf16.msra.mxu0 %v8703
        %10927 = vmatprep.subr.bf16.mxu0 %v8712
        %10928 = vmatpush1.bf16.msra.mxu0 %v8711
        %10929 = vmatprep.subr.bf16.mxu0 %v8720
        %10930 = vmatpush1.bf16.msra.mxu0 %v8719
        %10931 = vmatprep.subr.bf16.mxu0 %v8728
        %10932 = vmatpush1.bf16.msra.mxu0 %v8727
        %10933 = vmatprep.subr.bf16.mxu0 %v8736
        %10934 = vmatpush1.bf16.msra.mxu0 %v8735
        %10935 = vmatprep.subr.bf16.mxu0 %v8744
        %10936 = vmatpush1.bf16.msra.mxu0 %v8743
        %10937 = vmatprep.subr.bf16.mxu0 %v8752
        %10938 = vmatpush1.bf16.msra.mxu0 %v8751
        %10939 = vmatprep.subr.bf16.mxu0 %v8760
        %10940 = vmatpush1.bf16.msra.mxu0 %v8759
        %10941 = vmatprep.subr.bf16.mxu0 %v8768
        %10942 = vmatpush1.bf16.msra.mxu0 %v8767
        %10943 = vmatprep.subr.bf16.mxu0 %v8776
        %10944 = vmatpush1.bf16.msra.mxu0 %v8775
        %10945 = vmatprep.subr.bf16.mxu0 %v8784
        %10946 = vmatpush1.bf16.msra.mxu0 %v8783
        %10947 = vmatprep.subr.bf16.mxu0 %v8792
        %10948 = vmatpush1.bf16.msra.mxu0 %v8791
        %10949 = vmatprep.subr.bf16.mxu0 %v8800
        %10950 = vmatpush1.bf16.msra.mxu0 %v8799
        %10951 = vmatprep.subr.bf16.mxu0 %v8808
        %10952 = vmatpush1.bf16.msra.mxu0 %v8807
        %10953 = vmatprep.subr.bf16.mxu0 %v8816
        %10954 = vmatpush1.bf16.msra.mxu0 %v8815
        %10955 = vmatprep.subr.bf16.mxu0 %v8824
        %10956 = vmatpush1.bf16.msra.mxu0 %v8823
        %10957 = vmatprep.mubr.bf16.mxu0 %v3790
        %10958 = vmatmul.mubr.bf16.gmra.mrb[0].mxu0 %v3789
        %v10959 = vpop.f32.mrb[0].mxu0
        %v10960 = vadd.f32 %v10917, %v10959
        %v10961 = vpop.f32.mrb[0].mxu0
        %v10962 = vadd.f32 %v10919, %v10961
        %v10963 = vpop.f32.mrb[0].mxu0
        %v10964 = vadd.f32 %v10921, %v10963
        %v10965 = vpop.f32.mrb[0].mxu0
        %v10966 = vadd.f32 %v10923, %v10965
        %10967 = vdwg.mxu0
        %10968 = vmatprep.subr.bf16.mxu0 %v8832
        %10969 = vmatpush1.bf16.msra.mxu0 %v8831
        %10970 = vmatprep.subr.bf16.mxu0 %v8840
        %10971 = vmatpush1.bf16.msra.mxu0 %v8839
        %10972 = vmatprep.subr.bf16.mxu0 %v8848
        %10973 = vmatpush1.bf16.msra.mxu0 %v8847
        %10974 = vmatprep.subr.bf16.mxu0 %v8856
        %10975 = vmatpush1.bf16.msra.mxu0 %v8855
        %10976 = vmatprep.subr.bf16.mxu0 %v8864
        %10977 = vmatpush1.bf16.msra.mxu0 %v8863
        %10978 = vmatprep.subr.bf16.mxu0 %v8872
        %10979 = vmatpush1.bf16.msra.mxu0 %v8871
        %10980 = vmatprep.subr.bf16.mxu0 %v8880
        %10981 = vmatpush1.bf16.msra.mxu0 %v8879
        %10982 = vmatprep.subr.bf16.mxu0 %v8888
        %10983 = vmatpush1.bf16.msra.mxu0 %v8887
        %10984 = vmatprep.subr.bf16.mxu0 %v8896
        %10985 = vmatpush1.bf16.msra.mxu0 %v8895
        %10986 = vmatprep.subr.bf16.mxu0 %v8904
        %10987 = vmatpush1.bf16.msra.mxu0 %v8903
        %10988 = vmatprep.subr.bf16.mxu0 %v8912
        %10989 = vmatpush1.bf16.msra.mxu0 %v8911
        %10990 = vmatprep.subr.bf16.mxu0 %v8920
        %10991 = vmatpush1.bf16.msra.mxu0 %v8919
        %10992 = vmatprep.subr.bf16.mxu0 %v8928
        %10993 = vmatpush1.bf16.msra.mxu0 %v8927
        %10994 = vmatprep.subr.bf16.mxu0 %v8936
        %10995 = vmatpush1.bf16.msra.mxu0 %v8935
        %10996 = vmatprep.subr.bf16.mxu0 %v8944
        %10997 = vmatpush1.bf16.msra.mxu0 %v8943
        %10998 = vmatprep.subr.bf16.mxu0 %v8952
        %10999 = vmatpush1.bf16.msra.mxu0 %v8951
        %11000 = vmatprep.mubr.bf16.mxu0 %v3792
        %11001 = vmatmul.mubr.bf16.gmra.mrb[0].mxu0 %v3791
        %v11002 = vpop.f32.mrb[0].mxu0
        %v11003 = vadd.f32 %v10960, %v11002
        %v11004 = vpop.f32.mrb[0].mxu0
        %v11005 = vadd.f32 %v10962, %v11004
        %v11006 = vpop.f32.mrb[0].mxu0
        %v11007 = vadd.f32 %v10964, %v11006
        %v11008 = vpop.f32.mrb[0].mxu0
        %v11009 = vadd.f32 %v10966, %v11008
        %11010 = vdwg.mxu0
        %11011 = vmatprep.subr.bf16.mxu0 %v7938
        %11012 = vmatpush1.bf16.msra.mxu0 %v7937
        %11013 = vmatprep.subr.bf16.mxu0 %v7946
        %11014 = vmatpush1.bf16.msra.mxu0 %v7945
        %11015 = vmatprep.subr.bf16.mxu0 %v7954
        %11016 = vmatpush1.bf16.msra.mxu0 %v7953
        %11017 = vmatprep.subr.bf16.mxu0 %v7962
        %11018 = vmatpush1.bf16.msra.mxu0 %v7961
        %11019 = vmatprep.subr.bf16.mxu0 %v7970
        %11020 = vmatpush1.bf16.msra.mxu0 %v7969
        %11021 = vmatprep.subr.bf16.mxu0 %v7978
        %11022 = vmatpush1.bf16.msra.mxu0 %v7977
        %11023 = vmatprep.subr.bf16.mxu0 %v7986
        %11024 = vmatpush1.bf16.msra.mxu0 %v7985
        %11025 = vmatprep.subr.bf16.mxu0 %v7994
        %11026 = vmatpush1.bf16.msra.mxu0 %v7993
        %11027 = vmatprep.subr.bf16.mxu0 %v8002
        %11028 = vmatpush1.bf16.msra.mxu0 %v8001
        %11029 = vmatprep.subr.bf16.mxu0 %v8010
        %11030 = vmatpush1.bf16.msra.mxu0 %v8009
        %11031 = vmatprep.subr.bf16.mxu0 %v8018
        %11032 = vmatpush1.bf16.msra.mxu0 %v8017
        %11033 = vmatprep.subr.bf16.mxu0 %v8026
        %11034 = vmatpush1.bf16.msra.mxu0 %v8025
        %11035 = vmatprep.subr.bf16.mxu0 %v8034
        %11036 = vmatpush1.bf16.msra.mxu0 %v8033
        %11037 = vmatprep.subr.bf16.mxu0 %v8042
        %11038 = vmatpush1.bf16.msra.mxu0 %v8041
        %11039 = vmatprep.subr.bf16.mxu0 %v8050
        %11040 = vmatpush1.bf16.msra.mxu0 %v8049
        %11041 = vmatprep.subr.bf16.mxu0 %v8058
        %11042 = vmatpush1.bf16.msra.mxu0 %v8057
        %11043 = vmatprep.mubr.bf16.mxu0 %v3778
        %11044 = vmatmul.mubr.bf16.gmra.mrb[0].mxu0 %v3777
        %v11045 = vpop.f32.mrb[0].mxu0
        %v11046 = vadd.f32 %v4846, %v11045
        %v11047 = vpop.f32.mrb[0].mxu0
        %v11048 = vadd.f32 %v4850, %v11047
        %v11049 = vpop.f32.mrb[0].mxu0
        %v11050 = vadd.f32 %v4846, %v11049
        %v11051 = vpop.f32.mrb[0].mxu0
        %v11052 = vadd.f32 %v4850, %v11051
        %11053 = vdwg.mxu0
        %11054 = vmatprep.subr.bf16.mxu0 %v8066
        %11055 = vmatpush1.bf16.msra.mxu0 %v8065
        %11056 = vmatprep.subr.bf16.mxu0 %v8074
        %11057 = vmatpush1.bf16.msra.mxu0 %v8073
        %11058 = vmatprep.subr.bf16.mxu0 %v8082
        %11059 = vmatpush1.bf16.msra.mxu0 %v8081
        %11060 = vmatprep.subr.bf16.mxu0 %v8090
        %11061 = vmatpush1.bf16.msra.mxu0 %v8089
        %11062 = vmatprep.subr.bf16.mxu0 %v8098
        %11063 = vmatpush1.bf16.msra.mxu0 %v8097
        %11064 = vmatprep.subr.bf16.mxu0 %v8106
        %11065 = vmatpush1.bf16.msra.mxu0 %v8105
        %11066 = vmatprep.subr.bf16.mxu0 %v8114
        %11067 = vmatpush1.bf16.msra.mxu0 %v8113
        %11068 = vmatprep.subr.bf16.mxu0 %v8122
        %11069 = vmatpush1.bf16.msra.mxu0 %v8121
        %11070 = vmatprep.subr.bf16.mxu0 %v8130
        %11071 = vmatpush1.bf16.msra.mxu0 %v8129
        %11072 = vmatprep.subr.bf16.mxu0 %v8138
        %11073 = vmatpush1.bf16.msra.mxu0 %v8137
        %11074 = vmatprep.subr.bf16.mxu0 %v8146
        %11075 = vmatpush1.bf16.msra.mxu0 %v8145
        %11076 = vmatprep.subr.bf16.mxu0 %v8154
        %11077 = vmatpush1.bf16.msra.mxu0 %v8153
        %11078 = vmatprep.subr.bf16.mxu0 %v8162
        %11079 = vmatpush1.bf16.msra.mxu0 %v8161
        %11080 = vmatprep.subr.bf16.mxu0 %v8170
        %11081 = vmatpush1.bf16.msra.mxu0 %v8169
        %11082 = vmatprep.subr.bf16.mxu0 %v8178
        %11083 = vmatpush1.bf16.msra.mxu0 %v8177
        %11084 = vmatprep.subr.bf16.mxu0 %v8186
        %11085 = vmatpush1.bf16.msra.mxu0 %v8185
        %11086 = vmatprep.mubr.bf16.mxu0 %v3780
        %11087 = vmatmul.mubr.bf16.gmra.mrb[0].mxu0 %v3779
        %v11088 = vpop.f32.mrb[0].mxu0
        %v11089 = vadd.f32 %v11046, %v11088
        %v11090 = vpop.f32.mrb[0].mxu0
        %v11091 = vadd.f32 %v11048, %v11090
        %v11092 = vpop.f32.mrb[0].mxu0
        %v11093 = vadd.f32 %v11050, %v11092
        %v11094 = vpop.f32.mrb[0].mxu0
        %v11095 = vadd.f32 %v11052, %v11094
        %11096 = vdwg.mxu0
        %11097 = vmatprep.subr.bf16.mxu0 %v8194
        %11098 = vmatpush1.bf16.msra.mxu0 %v8193
        %11099 = vmatprep.subr.bf16.mxu0 %v8202
        %11100 = vmatpush1.bf16.msra.mxu0 %v8201
        %11101 = vmatprep.subr.bf16.mxu0 %v8210
        %11102 = vmatpush1.bf16.msra.mxu0 %v8209
        %11103 = vmatprep.subr.bf16.mxu0 %v8218
        %11104 = vmatpush1.bf16.msra.mxu0 %v8217
        %11105 = vmatprep.subr.bf16.mxu0 %v8226
        %11106 = vmatpush1.bf16.msra.mxu0 %v8225
        %11107 = vmatprep.subr.bf16.mxu0 %v8234
        %11108 = vmatpush1.bf16.msra.mxu0 %v8233
        %11109 = vmatprep.subr.bf16.mxu0 %v8242
        %11110 = vmatpush1.bf16.msra.mxu0 %v8241
        %11111 = vmatprep.subr.bf16.mxu0 %v8250
        %11112 = vmatpush1.bf16.msra.mxu0 %v8249
        %11113 = vmatprep.subr.bf16.mxu0 %v8258
        %11114 = vmatpush1.bf16.msra.mxu0 %v8257
        %11115 = vmatprep.subr.bf16.mxu0 %v8266
        %11116 = vmatpush1.bf16.msra.mxu0 %v8265
        %11117 = vmatprep.subr.bf16.mxu0 %v8274
        %11118 = vmatpush1.bf16.msra.mxu0 %v8273
        %11119 = vmatprep.subr.bf16.mxu0 %v8282
        %11120 = vmatpush1.bf16.msra.mxu0 %v8281
        %11121 = vmatprep.subr.bf16.mxu0 %v8290
        %11122 = vmatpush1.bf16.msra.mxu0 %v8289
        %11123 = vmatprep.subr.bf16.mxu0 %v8298
        %11124 = vmatpush1.bf16.msra.mxu0 %v8297
        %11125 = vmatprep.subr.bf16.mxu0 %v8306
        %11126 = vmatpush1.bf16.msra.mxu0 %v8305
        %11127 = vmatprep.subr.bf16.mxu0 %v8314
        %11128 = vmatpush1.bf16.msra.mxu0 %v8313
        %11129 = vmatprep.mubr.bf16.mxu0 %v3782
        %11130 = vmatmul.mubr.bf16.gmra.mrb[0].mxu0 %v3781
        %v11131 = vpop.f32.mrb[0].mxu0
        %v11132 = vadd.f32 %v11089, %v11131
        %v11133 = vpop.f32.mrb[0].mxu0
        %v11134 = vadd.f32 %v11091, %v11133
        %v11135 = vpop.f32.mrb[0].mxu0
        %v11136 = vadd.f32 %v11093, %v11135
        %v11137 = vpop.f32.mrb[0].mxu0
        %v11138 = vadd.f32 %v11095, %v11137
        %11139 = vdwg.mxu0
        %11140 = vmatprep.subr.bf16.mxu0 %v8322
        %11141 = vmatpush1.bf16.msra.mxu0 %v8321
        %11142 = vmatprep.subr.bf16.mxu0 %v8330
        %11143 = vmatpush1.bf16.msra.mxu0 %v8329
        %11144 = vmatprep.subr.bf16.mxu0 %v8338
        %11145 = vmatpush1.bf16.msra.mxu0 %v8337
        %11146 = vmatprep.subr.bf16.mxu0 %v8346
        %11147 = vmatpush1.bf16.msra.mxu0 %v8345
        %11148 = vmatprep.subr.bf16.mxu0 %v8354
        %11149 = vmatpush1.bf16.msra.mxu0 %v8353
        %11150 = vmatprep.subr.bf16.mxu0 %v8362
        %11151 = vmatpush1.bf16.msra.mxu0 %v8361
        %11152 = vmatprep.subr.bf16.mxu0 %v8370
        %11153 = vmatpush1.bf16.msra.mxu0 %v8369
        %11154 = vmatprep.subr.bf16.mxu0 %v8378
        %11155 = vmatpush1.bf16.msra.mxu0 %v8377
        %11156 = vmatprep.subr.bf16.mxu0 %v8386
        %11157 = vmatpush1.bf16.msra.mxu0 %v8385
        %11158 = vmatprep.subr.bf16.mxu0 %v8394
        %11159 = vmatpush1.bf16.msra.mxu0 %v8393
        %11160 = vmatprep.subr.bf16.mxu0 %v8402
        %11161 = vmatpush1.bf16.msra.mxu0 %v8401
        %11162 = vmatprep.subr.bf16.mxu0 %v8410
        %11163 = vmatpush1.bf16.msra.mxu0 %v8409
        %11164 = vmatprep.subr.bf16.mxu0 %v8418
        %11165 = vmatpush1.bf16.msra.mxu0 %v8417
        %11166 = vmatprep.subr.bf16.mxu0 %v8426
        %11167 = vmatpush1.bf16.msra.mxu0 %v8425
        %11168 = vmatprep.subr.bf16.mxu0 %v8434
        %11169 = vmatpush1.bf16.msra.mxu0 %v8433
        %11170 = vmatprep.subr.bf16.mxu0 %v8442
        %11171 = vmatpush1.bf16.msra.mxu0 %v8441
        %11172 = vmatprep.mubr.bf16.mxu0 %v3784
        %11173 = vmatmul.mubr.bf16.gmra.mrb[0].mxu0 %v3783
        %v11174 = vpop.f32.mrb[0].mxu0
        %v11175 = vadd.f32 %v11132, %v11174
        %v11176 = vpop.f32.mrb[0].mxu0
        %v11177 = vadd.f32 %v11134, %v11176
        %v11178 = vpop.f32.mrb[0].mxu0
        %v11179 = vadd.f32 %v11136, %v11178
        %v11180 = vpop.f32.mrb[0].mxu0
        %v11181 = vadd.f32 %v11138, %v11180
        %11182 = vdwg.mxu0
        %11183 = vmatprep.subr.bf16.mxu0 %v8450
        %11184 = vmatpush1.bf16.msra.mxu0 %v8449
        %11185 = vmatprep.subr.bf16.mxu0 %v8458
        %11186 = vmatpush1.bf16.msra.mxu0 %v8457
        %11187 = vmatprep.subr.bf16.mxu0 %v8466
        %11188 = vmatpush1.bf16.msra.mxu0 %v8465
        %11189 = vmatprep.subr.bf16.mxu0 %v8474
        %11190 = vmatpush1.bf16.msra.mxu0 %v8473
        %11191 = vmatprep.subr.bf16.mxu0 %v8482
        %11192 = vmatpush1.bf16.msra.mxu0 %v8481
        %11193 = vmatprep.subr.bf16.mxu0 %v8490
        %11194 = vmatpush1.bf16.msra.mxu0 %v8489
        %11195 = vmatprep.subr.bf16.mxu0 %v8498
        %11196 = vmatpush1.bf16.msra.mxu0 %v8497
        %11197 = vmatprep.subr.bf16.mxu0 %v8506
        %11198 = vmatpush1.bf16.msra.mxu0 %v8505
        %11199 = vmatprep.subr.bf16.mxu0 %v8514
        %11200 = vmatpush1.bf16.msra.mxu0 %v8513
        %11201 = vmatprep.subr.bf16.mxu0 %v8522
        %11202 = vmatpush1.bf16.msra.mxu0 %v8521
        %11203 = vmatprep.subr.bf16.mxu0 %v8530
        %11204 = vmatpush1.bf16.msra.mxu0 %v8529
        %11205 = vmatprep.subr.bf16.mxu0 %v8538
        %11206 = vmatpush1.bf16.msra.mxu0 %v8537
        %11207 = vmatprep.subr.bf16.mxu0 %v8546
        %11208 = vmatpush1.bf16.msra.mxu0 %v8545
        %11209 = vmatprep.subr.bf16.mxu0 %v8554
        %11210 = vmatpush1.bf16.msra.mxu0 %v8553
        %11211 = vmatprep.subr.bf16.mxu0 %v8562
        %11212 = vmatpush1.bf16.msra.mxu0 %v8561
        %11213 = vmatprep.subr.bf16.mxu0 %v8570
        %11214 = vmatpush1.bf16.msra.mxu0 %v8569
        %11215 = vmatprep.mubr.bf16.mxu0 %v3786
        %11216 = vmatmul.mubr.bf16.gmra.mrb[0].mxu0 %v3785
        %v11217 = vpop.f32.mrb[0].mxu0
        %v11218 = vadd.f32 %v11175, %v11217
        %v11219 = vpop.f32.mrb[0].mxu0
        %v11220 = vadd.f32 %v11177, %v11219
        %v11221 = vpop.f32.mrb[0].mxu0
        %v11222 = vadd.f32 %v11179, %v11221
        %v11223 = vpop.f32.mrb[0].mxu0
        %v11224 = vadd.f32 %v11181, %v11223
        %11225 = vdwg.mxu0
        %11226 = vmatprep.subr.bf16.mxu0 %v8578
        %11227 = vmatpush1.bf16.msra.mxu0 %v8577
        %11228 = vmatprep.subr.bf16.mxu0 %v8586
        %11229 = vmatpush1.bf16.msra.mxu0 %v8585
        %11230 = vmatprep.subr.bf16.mxu0 %v8594
        %11231 = vmatpush1.bf16.msra.mxu0 %v8593
        %11232 = vmatprep.subr.bf16.mxu0 %v8602
        %11233 = vmatpush1.bf16.msra.mxu0 %v8601
        %11234 = vmatprep.subr.bf16.mxu0 %v8610
        %11235 = vmatpush1.bf16.msra.mxu0 %v8609
        %11236 = vmatprep.subr.bf16.mxu0 %v8618
        %11237 = vmatpush1.bf16.msra.mxu0 %v8617
        %11238 = vmatprep.subr.bf16.mxu0 %v8626
        %11239 = vmatpush1.bf16.msra.mxu0 %v8625
        %11240 = vmatprep.subr.bf16.mxu0 %v8634
        %11241 = vmatpush1.bf16.msra.mxu0 %v8633
        %11242 = vmatprep.subr.bf16.mxu0 %v8642
        %11243 = vmatpush1.bf16.msra.mxu0 %v8641
        %11244 = vmatprep.subr.bf16.mxu0 %v8650
        %11245 = vmatpush1.bf16.msra.mxu0 %v8649
        %11246 = vmatprep.subr.bf16.mxu0 %v8658
        %11247 = vmatpush1.bf16.msra.mxu0 %v8657
        %11248 = vmatprep.subr.bf16.mxu0 %v8666
        %11249 = vmatpush1.bf16.msra.mxu0 %v8665
        %11250 = vmatprep.subr.bf16.mxu0 %v8674
        %11251 = vmatpush1.bf16.msra.mxu0 %v8673
        %11252 = vmatprep.subr.bf16.mxu0 %v8682
        %11253 = vmatpush1.bf16.msra.mxu0 %v8681
        %11254 = vmatprep.subr.bf16.mxu0 %v8690
        %11255 = vmatpush1.bf16.msra.mxu0 %v8689
        %11256 = vmatprep.subr.bf16.mxu0 %v8698
        %11257 = vmatpush1.bf16.msra.mxu0 %v8697
        %11258 = vmatprep.mubr.bf16.mxu0 %v3788
        %11259 = vmatmul.mubr.bf16.gmra.mrb[0].mxu0 %v3787
        %v11260 = vpop.f32.mrb[0].mxu0
        %v11261 = vadd.f32 %v11218, %v11260
        %v11262 = vpop.f32.mrb[0].mxu0
        %v11263 = vadd.f32 %v11220, %v11262
        %v11264 = vpop.f32.mrb[0].mxu0
        %v11265 = vadd.f32 %v11222, %v11264
        %v11266 = vpop.f32.mrb[0].mxu0
        %v11267 = vadd.f32 %v11224, %v11266
        %11268 = vdwg.mxu0
        %11269 = vmatprep.subr.bf16.mxu0 %v8706
        %11270 = vmatpush1.bf16.msra.mxu0 %v8705
        %11271 = vmatprep.subr.bf16.mxu0 %v8714
        %11272 = vmatpush1.bf16.msra.mxu0 %v8713
        %11273 = vmatprep.subr.bf16.mxu0 %v8722
        %11274 = vmatpush1.bf16.msra.mxu0 %v8721
        %11275 = vmatprep.subr.bf16.mxu0 %v8730
        %11276 = vmatpush1.bf16.msra.mxu0 %v8729
        %11277 = vmatprep.subr.bf16.mxu0 %v8738
        %11278 = vmatpush1.bf16.msra.mxu0 %v8737
        %11279 = vmatprep.subr.bf16.mxu0 %v8746
        %11280 = vmatpush1.bf16.msra.mxu0 %v8745
        %11281 = vmatprep.subr.bf16.mxu0 %v8754
        %11282 = vmatpush1.bf16.msra.mxu0 %v8753
        %11283 = vmatprep.subr.bf16.mxu0 %v8762
        %11284 = vmatpush1.bf16.msra.mxu0 %v8761
        %11285 = vmatprep.subr.bf16.mxu0 %v8770
        %11286 = vmatpush1.bf16.msra.mxu0 %v8769
        %11287 = vmatprep.subr.bf16.mxu0 %v8778
        %11288 = vmatpush1.bf16.msra.mxu0 %v8777
        %11289 = vmatprep.subr.bf16.mxu0 %v8786
        %11290 = vmatpush1.bf16.msra.mxu0 %v8785
        %11291 = vmatprep.subr.bf16.mxu0 %v8794
        %11292 = vmatpush1.bf16.msra.mxu0 %v8793
        %11293 = vmatprep.subr.bf16.mxu0 %v8802
        %11294 = vmatpush1.bf16.msra.mxu0 %v8801
        %11295 = vmatprep.subr.bf16.mxu0 %v8810
        %11296 = vmatpush1.bf16.msra.mxu0 %v8809
        %11297 = vmatprep.subr.bf16.mxu0 %v8818
        %11298 = vmatpush1.bf16.msra.mxu0 %v8817
        %11299 = vmatprep.subr.bf16.mxu0 %v8826
        %11300 = vmatpush1.bf16.msra.mxu0 %v8825
        %11301 = vmatprep.mubr.bf16.mxu0 %v3790
        %11302 = vmatmul.mubr.bf16.gmra.mrb[0].mxu0 %v3789
        %v11303 = vpop.f32.mrb[0].mxu0
        %v11304 = vadd.f32 %v11261, %v11303
        %v11305 = vpop.f32.mrb[0].mxu0
        %v11306 = vadd.f32 %v11263, %v11305
        %v11307 = vpop.f32.mrb[0].mxu0
        %v11308 = vadd.f32 %v11265, %v11307
        %v11309 = vpop.f32.mrb[0].mxu0
        %v11310 = vadd.f32 %v11267, %v11309
        %11311 = vdwg.mxu0
        %11312 = vmatprep.subr.bf16.mxu0 %v8834
        %11313 = vmatpush1.bf16.msra.mxu0 %v8833
        %11314 = vmatprep.subr.bf16.mxu0 %v8842
        %11315 = vmatpush1.bf16.msra.mxu0 %v8841
        %11316 = vmatprep.subr.bf16.mxu0 %v8850
        %11317 = vmatpush1.bf16.msra.mxu0 %v8849
        %11318 = vmatprep.subr.bf16.mxu0 %v8858
        %11319 = vmatpush1.bf16.msra.mxu0 %v8857
        %11320 = vmatprep.subr.bf16.mxu0 %v8866
        %11321 = vmatpush1.bf16.msra.mxu0 %v8865
        %11322 = vmatprep.subr.bf16.mxu0 %v8874
        %11323 = vmatpush1.bf16.msra.mxu0 %v8873
        %11324 = vmatprep.subr.bf16.mxu0 %v8882
        %11325 = vmatpush1.bf16.msra.mxu0 %v8881
        %11326 = vmatprep.subr.bf16.mxu0 %v8890
        %11327 = vmatpush1.bf16.msra.mxu0 %v8889
        %11328 = vmatprep.subr.bf16.mxu0 %v8898
        %11329 = vmatpush1.bf16.msra.mxu0 %v8897
        %11330 = vmatprep.subr.bf16.mxu0 %v8906
        %11331 = vmatpush1.bf16.msra.mxu0 %v8905
        %11332 = vmatprep.subr.bf16.mxu0 %v8914
        %11333 = vmatpush1.bf16.msra.mxu0 %v8913
        %11334 = vmatprep.subr.bf16.mxu0 %v8922
        %11335 = vmatpush1.bf16.msra.mxu0 %v8921
        %11336 = vmatprep.subr.bf16.mxu0 %v8930
        %11337 = vmatpush1.bf16.msra.mxu0 %v8929
        %11338 = vmatprep.subr.bf16.mxu0 %v8938
        %11339 = vmatpush1.bf16.msra.mxu0 %v8937
        %11340 = vmatprep.subr.bf16.mxu0 %v8946
        %11341 = vmatpush1.bf16.msra.mxu0 %v8945
        %11342 = vmatprep.subr.bf16.mxu0 %v8954
        %11343 = vmatpush1.bf16.msra.mxu0 %v8953
        %11344 = vmatprep.mubr.bf16.mxu0 %v3792
        %11345 = vmatmul.mubr.bf16.gmra.mrb[0].mxu0 %v3791
        %v11346 = vpop.f32.mrb[0].mxu0
        %v11347 = vadd.f32 %v11304, %v11346
        %v11348 = vpop.f32.mrb[0].mxu0
        %v11349 = vadd.f32 %v11306, %v11348
        %v11350 = vpop.f32.mrb[0].mxu0
        %v11351 = vadd.f32 %v11308, %v11350
        %v11352 = vpop.f32.mrb[0].mxu0
        %v11353 = vadd.f32 %v11310, %v11352
        %11354 = vdwg.mxu0
        %v11355 = vmax.f32 %v10315, 0.0
        %v11356 = vmax.f32 %v10317, 0.0
        %v11357 = vmax.f32 %v10659, 0.0
        %v11358 = vmax.f32 %v10661, 0.0
        %v11359 = vmax.f32 %v11003, 0.0
        %v11360 = vmax.f32 %v11005, 0.0
        %v11361 = vmax.f32 %v11347, 0.0
        %v11362 = vmax.f32 %v11349, 0.0
        %v11363 = vmax.f32 %v10319, 0.0
        %v11364 = vmax.f32 %v10321, 0.0
        %v11365 = vmax.f32 %v10663, 0.0
        %v11366 = vmax.f32 %v10665, 0.0
        %v11367 = vmax.f32 %v11007, 0.0
        %v11368 = vmax.f32 %v11009, 0.0
        %v11369 = vmax.f32 %v11351, 0.0
        %v11370 = vmax.f32 %v11353, 0.0
        %v11371 = vpack.c.bf16 %v11363, %v11355
        %v11372 = vpack.c.bf16 %v11364, %v11356
        %v11373 = vpack.c.bf16 %v11365, %v11357
        %v11374 = vpack.c.bf16 %v11366, %v11358
        %v11375 = vpack.c.bf16 %v11367, %v11359
        %v11376 = vpack.c.bf16 %v11368, %v11360
        %v11377 = vpack.c.bf16 %v11369, %v11361
        %v11378 = vpack.c.bf16 %v11370, %v11362
        %v11379 = vld [vmem:[#allocation12] sm:$0xf]
        %v11380 = vld [vmem:[#allocation12 + $0x4] sm:$0xf]
        %v11381 = vld [vmem:[#allocation12 + $0x8] sm:$0xf]
        %v11382 = vld [vmem:[#allocation12 + $0xc] sm:$0xf]
        %v11383 = vld [vmem:[#allocation12 + $0x10] sm:$0xf]
        %v11384 = vld [vmem:[#allocation12 + $0x14] sm:$0xf]
        %v11385 = vld [vmem:[#allocation12 + $0x18] sm:$0xf]
        %v11386 = vld [vmem:[#allocation12 + $0x1c] sm:$0xf]
        %v11387 = vld [vmem:[#allocation12 + $0x20] sm:$0xf]
        %v11388 = vld [vmem:[#allocation12 + $0x24] sm:$0xf]
        %v11389 = vld [vmem:[#allocation12 + $0x28] sm:$0xf]
        %v11390 = vld [vmem:[#allocation12 + $0x2c] sm:$0xf]
        %v11391 = vld [vmem:[#allocation12 + $0x30] sm:$0xf]
        %v11392 = vld [vmem:[#allocation12 + $0x34] sm:$0xf]
        %v11393 = vld [vmem:[#allocation12 + $0x38] sm:$0xf]
        %v11394 = vld [vmem:[#allocation12 + $0x3c] sm:$0xf]
        %v11395 = vld [vmem:[#allocation12 + $0x40] sm:$0xf]
        %v11396 = vld [vmem:[#allocation12 + $0x44] sm:$0xf]
        %v11397 = vld [vmem:[#allocation12 + $0x48] sm:$0xf]
        %v11398 = vld [vmem:[#allocation12 + $0x4c] sm:$0xf]
        %v11399 = vld [vmem:[#allocation12 + $0x50] sm:$0xf]
        %v11400 = vld [vmem:[#allocation12 + $0x54] sm:$0xf]
        %v11401 = vld [vmem:[#allocation12 + $0x58] sm:$0xf]
        %v11402 = vld [vmem:[#allocation12 + $0x5c] sm:$0xf]
        %v11403 = vld [vmem:[#allocation12 + $0x60] sm:$0xf]
        %v11404 = vld [vmem:[#allocation12 + $0x64] sm:$0xf]
        %v11405 = vld [vmem:[#allocation12 + $0x68] sm:$0xf]
        %v11406 = vld [vmem:[#allocation12 + $0x6c] sm:$0xf]
        %v11407 = vld [vmem:[#allocation12 + $0x70] sm:$0xf]
        %v11408 = vld [vmem:[#allocation12 + $0x74] sm:$0xf]
        %v11409 = vld [vmem:[#allocation12 + $0x78] sm:$0xf]
        %v11410 = vld [vmem:[#allocation12 + $0x7c] sm:$0xf]
        %v11411 = vld [vmem:[#allocation12 + $0x80] sm:$0xf]
        %v11412 = vld [vmem:[#allocation12 + $0x84] sm:$0xf]
        %v11413 = vld [vmem:[#allocation12 + $0x88] sm:$0xf]
        %v11414 = vld [vmem:[#allocation12 + $0x8c] sm:$0xf]
        %v11415 = vld [vmem:[#allocation12 + $0x90] sm:$0xf]
        %v11416 = vld [vmem:[#allocation12 + $0x94] sm:$0xf]
        %v11417 = vld [vmem:[#allocation12 + $0x98] sm:$0xf]
        %v11418 = vld [vmem:[#allocation12 + $0x9c] sm:$0xf]
        %v11419 = vld [vmem:[#allocation12 + $0xa0] sm:$0xf]
        %v11420 = vld [vmem:[#allocation12 + $0xa4] sm:$0xf]
        %v11421 = vld [vmem:[#allocation12 + $0xa8] sm:$0xf]
        %v11422 = vld [vmem:[#allocation12 + $0xac] sm:$0xf]
        %v11423 = vld [vmem:[#allocation12 + $0xb0] sm:$0xf]
        %v11424 = vld [vmem:[#allocation12 + $0xb4] sm:$0xf]
        %v11425 = vld [vmem:[#allocation12 + $0xb8] sm:$0xf]
        %v11426 = vld [vmem:[#allocation12 + $0xbc] sm:$0xf]
        %v11427 = vld [vmem:[#allocation12 + $0xc0] sm:$0xf]
        %v11428 = vld [vmem:[#allocation12 + $0xc4] sm:$0xf]
        %v11429 = vld [vmem:[#allocation12 + $0xc8] sm:$0xf]
        %v11430 = vld [vmem:[#allocation12 + $0xcc] sm:$0xf]
        %v11431 = vld [vmem:[#allocation12 + $0xd0] sm:$0xf]
        %v11432 = vld [vmem:[#allocation12 + $0xd4] sm:$0xf]
        %v11433 = vld [vmem:[#allocation12 + $0xd8] sm:$0xf]
        %v11434 = vld [vmem:[#allocation12 + $0xdc] sm:$0xf]
        %v11435 = vld [vmem:[#allocation12 + $0xe0] sm:$0xf]
        %v11436 = vld [vmem:[#allocation12 + $0xe4] sm:$0xf]
        %v11437 = vld [vmem:[#allocation12 + $0xe8] sm:$0xf]
        %v11438 = vld [vmem:[#allocation12 + $0xec] sm:$0xf]
        %v11439 = vld [vmem:[#allocation12 + $0xf0] sm:$0xf]
        %v11440 = vld [vmem:[#allocation12 + $0xf4] sm:$0xf]
        %v11441 = vld [vmem:[#allocation12 + $0xf8] sm:$0xf]
        %v11442 = vld [vmem:[#allocation12 + $0xfc] sm:$0xf]
        %v11443 = vld [vmem:[#allocation12 + $0x100] sm:$0xf]
        %v11444 = vld [vmem:[#allocation12 + $0x104] sm:$0xf]
        %v11445 = vld [vmem:[#allocation12 + $0x108] sm:$0xf]
        %v11446 = vld [vmem:[#allocation12 + $0x10c] sm:$0xf]
        %v11447 = vld [vmem:[#allocation12 + $0x110] sm:$0xf]
        %v11448 = vld [vmem:[#allocation12 + $0x114] sm:$0xf]
        %v11449 = vld [vmem:[#allocation12 + $0x118] sm:$0xf]
        %v11450 = vld [vmem:[#allocation12 + $0x11c] sm:$0xf]
        %v11451 = vld [vmem:[#allocation12 + $0x120] sm:$0xf]
        %v11452 = vld [vmem:[#allocation12 + $0x124] sm:$0xf]
        %v11453 = vld [vmem:[#allocation12 + $0x128] sm:$0xf]
        %v11454 = vld [vmem:[#allocation12 + $0x12c] sm:$0xf]
        %v11455 = vld [vmem:[#allocation12 + $0x130] sm:$0xf]
        %v11456 = vld [vmem:[#allocation12 + $0x134] sm:$0xf]
        %v11457 = vld [vmem:[#allocation12 + $0x138] sm:$0xf]
        %v11458 = vld [vmem:[#allocation12 + $0x13c] sm:$0xf]
        %v11459 = vld [vmem:[#allocation12 + $0x140] sm:$0xf]
        %v11460 = vld [vmem:[#allocation12 + $0x144] sm:$0xf]
        %v11461 = vld [vmem:[#allocation12 + $0x148] sm:$0xf]
        %v11462 = vld [vmem:[#allocation12 + $0x14c] sm:$0xf]
        %v11463 = vld [vmem:[#allocation12 + $0x150] sm:$0xf]
        %v11464 = vld [vmem:[#allocation12 + $0x154] sm:$0xf]
        %v11465 = vld [vmem:[#allocation12 + $0x158] sm:$0xf]
        %v11466 = vld [vmem:[#allocation12 + $0x15c] sm:$0xf]
        %v11467 = vld [vmem:[#allocation12 + $0x160] sm:$0xf]
        %v11468 = vld [vmem:[#allocation12 + $0x164] sm:$0xf]
        %v11469 = vld [vmem:[#allocation12 + $0x168] sm:$0xf]
        %v11470 = vld [vmem:[#allocation12 + $0x16c] sm:$0xf]
        %v11471 = vld [vmem:[#allocation12 + $0x170] sm:$0xf]
        %v11472 = vld [vmem:[#allocation12 + $0x174] sm:$0xf]
        %v11473 = vld [vmem:[#allocation12 + $0x178] sm:$0xf]
        %v11474 = vld [vmem:[#allocation12 + $0x17c] sm:$0xf]
        %v11475 = vld [vmem:[#allocation12 + $0x180] sm:$0xf]
        %v11476 = vld [vmem:[#allocation12 + $0x184] sm:$0xf]
        %v11477 = vld [vmem:[#allocation12 + $0x188] sm:$0xf]
        %v11478 = vld [vmem:[#allocation12 + $0x18c] sm:$0xf]
        %v11479 = vld [vmem:[#allocation12 + $0x190] sm:$0xf]
        %v11480 = vld [vmem:[#allocation12 + $0x194] sm:$0xf]
        %v11481 = vld [vmem:[#allocation12 + $0x198] sm:$0xf]
        %v11482 = vld [vmem:[#allocation12 + $0x19c] sm:$0xf]
        %v11483 = vld [vmem:[#allocation12 + $0x1a0] sm:$0xf]
        %v11484 = vld [vmem:[#allocation12 + $0x1a4] sm:$0xf]
        %v11485 = vld [vmem:[#allocation12 + $0x1a8] sm:$0xf]
        %v11486 = vld [vmem:[#allocation12 + $0x1ac] sm:$0xf]
        %v11487 = vld [vmem:[#allocation12 + $0x1b0] sm:$0xf]
        %v11488 = vld [vmem:[#allocation12 + $0x1b4] sm:$0xf]
        %v11489 = vld [vmem:[#allocation12 + $0x1b8] sm:$0xf]
        %v11490 = vld [vmem:[#allocation12 + $0x1bc] sm:$0xf]
        %v11491 = vld [vmem:[#allocation12 + $0x1c0] sm:$0xf]
        %v11492 = vld [vmem:[#allocation12 + $0x1c4] sm:$0xf]
        %v11493 = vld [vmem:[#allocation12 + $0x1c8] sm:$0xf]
        %v11494 = vld [vmem:[#allocation12 + $0x1cc] sm:$0xf]
        %v11495 = vld [vmem:[#allocation12 + $0x1d0] sm:$0xf]
        %v11496 = vld [vmem:[#allocation12 + $0x1d4] sm:$0xf]
        %v11497 = vld [vmem:[#allocation12 + $0x1d8] sm:$0xf]
        %v11498 = vld [vmem:[#allocation12 + $0x1dc] sm:$0xf]
        %v11499 = vld [vmem:[#allocation12 + $0x1e0] sm:$0xf]
        %v11500 = vld [vmem:[#allocation12 + $0x1e4] sm:$0xf]
        %v11501 = vld [vmem:[#allocation12 + $0x1e8] sm:$0xf]
        %v11502 = vld [vmem:[#allocation12 + $0x1ec] sm:$0xf]
        %v11503 = vld [vmem:[#allocation12 + $0x1f0] sm:$0xf]
        %v11504 = vld [vmem:[#allocation12 + $0x1f4] sm:$0xf]
        %v11505 = vld [vmem:[#allocation12 + $0x1f8] sm:$0xf]
        %v11506 = vld [vmem:[#allocation12 + $0x1fc] sm:$0xf]
        %v11507 = vld [vmem:[#allocation14] sm:$0x1]
        %v11509 = vlaneseq
        %v11510 = vshrl.u32 %v11509, 7
        %v11511 = vsub.s32 0, %v11510
        %v11512 = vrot.slane %v11507, %v11511
        %v11642 = vunpack.c.l.b16 %v11379
        %v11643 = vunpack.c.l.b16 %v11380
        %v11644 = vunpack.c.l.b16 %v11381
        %v11645 = vunpack.c.l.b16 %v11382
        %v11646 = vunpack.c.l.b16 %v11383
        %v11647 = vunpack.c.l.b16 %v11384
        %v11648 = vunpack.c.l.b16 %v11385
        %v11649 = vunpack.c.l.b16 %v11386
        %v11650 = vunpack.c.l.b16 %v11387
        %v11651 = vunpack.c.l.b16 %v11388
        %v11652 = vunpack.c.l.b16 %v11389
        %v11653 = vunpack.c.l.b16 %v11390
        %v11654 = vunpack.c.l.b16 %v11391
        %v11655 = vunpack.c.l.b16 %v11392
        %v11656 = vunpack.c.l.b16 %v11393
        %v11657 = vunpack.c.l.b16 %v11394
        %v11658 = vunpack.c.l.b16 %v11395
        %v11659 = vunpack.c.l.b16 %v11396
        %v11660 = vunpack.c.l.b16 %v11397
        %v11661 = vunpack.c.l.b16 %v11398
        %v11662 = vunpack.c.l.b16 %v11399
        %v11663 = vunpack.c.l.b16 %v11400
        %v11664 = vunpack.c.l.b16 %v11401
        %v11665 = vunpack.c.l.b16 %v11402
        %v11666 = vunpack.c.l.b16 %v11403
        %v11667 = vunpack.c.l.b16 %v11404
        %v11668 = vunpack.c.l.b16 %v11405
        %v11669 = vunpack.c.l.b16 %v11406
        %v11670 = vunpack.c.l.b16 %v11407
        %v11671 = vunpack.c.l.b16 %v11408
        %v11672 = vunpack.c.l.b16 %v11409
        %v11673 = vunpack.c.l.b16 %v11410
        %v11674 = vunpack.c.l.b16 %v11411
        %v11675 = vunpack.c.l.b16 %v11412
        %v11676 = vunpack.c.l.b16 %v11413
        %v11677 = vunpack.c.l.b16 %v11414
        %v11678 = vunpack.c.l.b16 %v11415
        %v11679 = vunpack.c.l.b16 %v11416
        %v11680 = vunpack.c.l.b16 %v11417
        %v11681 = vunpack.c.l.b16 %v11418
        %v11682 = vunpack.c.l.b16 %v11419
        %v11683 = vunpack.c.l.b16 %v11420
        %v11684 = vunpack.c.l.b16 %v11421
        %v11685 = vunpack.c.l.b16 %v11422
        %v11686 = vunpack.c.l.b16 %v11423
        %v11687 = vunpack.c.l.b16 %v11424
        %v11688 = vunpack.c.l.b16 %v11425
        %v11689 = vunpack.c.l.b16 %v11426
        %v11690 = vunpack.c.l.b16 %v11427
        %v11691 = vunpack.c.l.b16 %v11428
        %v11692 = vunpack.c.l.b16 %v11429
        %v11693 = vunpack.c.l.b16 %v11430
        %v11694 = vunpack.c.l.b16 %v11431
        %v11695 = vunpack.c.l.b16 %v11432
        %v11696 = vunpack.c.l.b16 %v11433
        %v11697 = vunpack.c.l.b16 %v11434
        %v11698 = vunpack.c.l.b16 %v11435
        %v11699 = vunpack.c.l.b16 %v11436
        %v11700 = vunpack.c.l.b16 %v11437
        %v11701 = vunpack.c.l.b16 %v11438
        %v11702 = vunpack.c.l.b16 %v11439
        %v11703 = vunpack.c.l.b16 %v11440
        %v11704 = vunpack.c.l.b16 %v11441
        %v11705 = vunpack.c.l.b16 %v11442
        %v11706 = vunpack.c.l.b16 %v11443
        %v11707 = vunpack.c.l.b16 %v11444
        %v11708 = vunpack.c.l.b16 %v11445
        %v11709 = vunpack.c.l.b16 %v11446
        %v11710 = vunpack.c.l.b16 %v11447
        %v11711 = vunpack.c.l.b16 %v11448
        %v11712 = vunpack.c.l.b16 %v11449
        %v11713 = vunpack.c.l.b16 %v11450
        %v11714 = vunpack.c.l.b16 %v11451
        %v11715 = vunpack.c.l.b16 %v11452
        %v11716 = vunpack.c.l.b16 %v11453
        %v11717 = vunpack.c.l.b16 %v11454
        %v11718 = vunpack.c.l.b16 %v11455
        %v11719 = vunpack.c.l.b16 %v11456
        %v11720 = vunpack.c.l.b16 %v11457
        %v11721 = vunpack.c.l.b16 %v11458
        %v11722 = vunpack.c.l.b16 %v11459
        %v11723 = vunpack.c.l.b16 %v11460
        %v11724 = vunpack.c.l.b16 %v11461
        %v11725 = vunpack.c.l.b16 %v11462
        %v11726 = vunpack.c.l.b16 %v11463
        %v11727 = vunpack.c.l.b16 %v11464
        %v11728 = vunpack.c.l.b16 %v11465
        %v11729 = vunpack.c.l.b16 %v11466
        %v11730 = vunpack.c.l.b16 %v11467
        %v11731 = vunpack.c.l.b16 %v11468
        %v11732 = vunpack.c.l.b16 %v11469
        %v11733 = vunpack.c.l.b16 %v11470
        %v11734 = vunpack.c.l.b16 %v11471
        %v11735 = vunpack.c.l.b16 %v11472
        %v11736 = vunpack.c.l.b16 %v11473
        %v11737 = vunpack.c.l.b16 %v11474
        %v11738 = vunpack.c.l.b16 %v11475
        %v11739 = vunpack.c.l.b16 %v11476
        %v11740 = vunpack.c.l.b16 %v11477
        %v11741 = vunpack.c.l.b16 %v11478
        %v11742 = vunpack.c.l.b16 %v11479
        %v11743 = vunpack.c.l.b16 %v11480
        %v11744 = vunpack.c.l.b16 %v11481
        %v11745 = vunpack.c.l.b16 %v11482
        %v11746 = vunpack.c.l.b16 %v11483
        %v11747 = vunpack.c.l.b16 %v11484
        %v11748 = vunpack.c.l.b16 %v11485
        %v11749 = vunpack.c.l.b16 %v11486
        %v11750 = vunpack.c.l.b16 %v11487
        %v11751 = vunpack.c.l.b16 %v11488
        %v11752 = vunpack.c.l.b16 %v11489
        %v11753 = vunpack.c.l.b16 %v11490
        %v11754 = vunpack.c.l.b16 %v11491
        %v11755 = vunpack.c.l.b16 %v11492
        %v11756 = vunpack.c.l.b16 %v11493
        %v11757 = vunpack.c.l.b16 %v11494
        %v11758 = vunpack.c.l.b16 %v11495
        %v11759 = vunpack.c.l.b16 %v11496
        %v11760 = vunpack.c.l.b16 %v11497
        %v11761 = vunpack.c.l.b16 %v11498
        %v11762 = vunpack.c.l.b16 %v11499
        %v11763 = vunpack.c.l.b16 %v11500
        %v11764 = vunpack.c.l.b16 %v11501
        %v11765 = vunpack.c.l.b16 %v11502
        %v11766 = vunpack.c.l.b16 %v11503
        %v11767 = vunpack.c.l.b16 %v11504
        %v11768 = vunpack.c.l.b16 %v11505
        %v11769 = vunpack.c.l.b16 %v11506
        %v11770 = vpack.c.b16 %v11643, %v11642
        %v11771 = vpack.c.b16 %v11645, %v11644
        %v11772 = vpack.c.b16 %v11647, %v11646
        %v11773 = vpack.c.b16 %v11649, %v11648
        %v11774 = vpack.c.b16 %v11651, %v11650
        %v11775 = vpack.c.b16 %v11653, %v11652
        %v11776 = vpack.c.b16 %v11655, %v11654
        %v11777 = vpack.c.b16 %v11657, %v11656
        %v11778 = vpack.c.b16 %v11659, %v11658
        %v11779 = vpack.c.b16 %v11661, %v11660
        %v11780 = vpack.c.b16 %v11663, %v11662
        %v11781 = vpack.c.b16 %v11665, %v11664
        %v11782 = vpack.c.b16 %v11667, %v11666
        %v11783 = vpack.c.b16 %v11669, %v11668
        %v11784 = vpack.c.b16 %v11671, %v11670
        %v11785 = vpack.c.b16 %v11673, %v11672
        %v11786 = vpack.c.b16 %v11675, %v11674
        %v11787 = vpack.c.b16 %v11677, %v11676
        %v11788 = vpack.c.b16 %v11679, %v11678
        %v11789 = vpack.c.b16 %v11681, %v11680
        %v11790 = vpack.c.b16 %v11683, %v11682
        %v11791 = vpack.c.b16 %v11685, %v11684
        %v11792 = vpack.c.b16 %v11687, %v11686
        %v11793 = vpack.c.b16 %v11689, %v11688
        %v11794 = vpack.c.b16 %v11691, %v11690
        %v11795 = vpack.c.b16 %v11693, %v11692
        %v11796 = vpack.c.b16 %v11695, %v11694
        %v11797 = vpack.c.b16 %v11697, %v11696
        %v11798 = vpack.c.b16 %v11699, %v11698
        %v11799 = vpack.c.b16 %v11701, %v11700
        %v11800 = vpack.c.b16 %v11703, %v11702
        %v11801 = vpack.c.b16 %v11705, %v11704
        %v11802 = vpack.c.b16 %v11707, %v11706
        %v11803 = vpack.c.b16 %v11709, %v11708
        %v11804 = vpack.c.b16 %v11711, %v11710
        %v11805 = vpack.c.b16 %v11713, %v11712
        %v11806 = vpack.c.b16 %v11715, %v11714
        %v11807 = vpack.c.b16 %v11717, %v11716
        %v11808 = vpack.c.b16 %v11719, %v11718
        %v11809 = vpack.c.b16 %v11721, %v11720
        %v11810 = vpack.c.b16 %v11723, %v11722
        %v11811 = vpack.c.b16 %v11725, %v11724
        %v11812 = vpack.c.b16 %v11727, %v11726
        %v11813 = vpack.c.b16 %v11729, %v11728
        %v11814 = vpack.c.b16 %v11731, %v11730
        %v11815 = vpack.c.b16 %v11733, %v11732
        %v11816 = vpack.c.b16 %v11735, %v11734
        %v11817 = vpack.c.b16 %v11737, %v11736
        %v11818 = vpack.c.b16 %v11739, %v11738
        %v11819 = vpack.c.b16 %v11741, %v11740
        %v11820 = vpack.c.b16 %v11743, %v11742
        %v11821 = vpack.c.b16 %v11745, %v11744
        %v11822 = vpack.c.b16 %v11747, %v11746
        %v11823 = vpack.c.b16 %v11749, %v11748
        %v11824 = vpack.c.b16 %v11751, %v11750
        %v11825 = vpack.c.b16 %v11753, %v11752
        %v11826 = vpack.c.b16 %v11755, %v11754
        %v11827 = vpack.c.b16 %v11757, %v11756
        %v11828 = vpack.c.b16 %v11759, %v11758
        %v11829 = vpack.c.b16 %v11761, %v11760
        %v11830 = vpack.c.b16 %v11763, %v11762
        %v11831 = vpack.c.b16 %v11765, %v11764
        %v11832 = vpack.c.b16 %v11767, %v11766
        %v11833 = vpack.c.b16 %v11769, %v11768
        %11898 = vmatprep.subr.bf16.mxu0 0
        %11899 = vmatpush1.bf16.msra.mxu0 %v11770
        %11900 = vmatprep.subr.bf16.mxu0 0
        %11901 = vmatpush1.bf16.msra.mxu0 %v11771
        %11902 = vmatprep.subr.bf16.mxu0 0
        %11903 = vmatpush1.bf16.msra.mxu0 %v11772
        %11904 = vmatprep.subr.bf16.mxu0 0
        %11905 = vmatpush1.bf16.msra.mxu0 %v11773
        %11906 = vmatprep.subr.bf16.mxu0 0
        %11907 = vmatpush1.bf16.msra.mxu0 %v11774
        %11908 = vmatprep.subr.bf16.mxu0 0
        %11909 = vmatpush1.bf16.msra.mxu0 %v11775
        %11910 = vmatprep.subr.bf16.mxu0 0
        %11911 = vmatpush1.bf16.msra.mxu0 %v11776
        %11912 = vmatprep.subr.bf16.mxu0 0
        %11913 = vmatpush1.bf16.msra.mxu0 %v11777
        %11914 = vmatprep.subr.bf16.mxu0 0
        %11915 = vmatpush1.bf16.msra.mxu0 %v11778
        %11916 = vmatprep.subr.bf16.mxu0 0
        %11917 = vmatpush1.bf16.msra.mxu0 %v11779
        %11918 = vmatprep.subr.bf16.mxu0 0
        %11919 = vmatpush1.bf16.msra.mxu0 %v11780
        %11920 = vmatprep.subr.bf16.mxu0 0
        %11921 = vmatpush1.bf16.msra.mxu0 %v11781
        %11922 = vmatprep.subr.bf16.mxu0 0
        %11923 = vmatpush1.bf16.msra.mxu0 %v11782
        %11924 = vmatprep.subr.bf16.mxu0 0
        %11925 = vmatpush1.bf16.msra.mxu0 %v11783
        %11926 = vmatprep.subr.bf16.mxu0 0
        %11927 = vmatpush1.bf16.msra.mxu0 %v11784
        %11928 = vmatprep.subr.bf16.mxu0 0
        %11929 = vmatpush1.bf16.msra.mxu0 %v11785
        %11930 = vmatprep.mubr.bf16.mxu0 %v11372
        %11931 = vmatmul.mubr.bf16.gmra.mrb[0].mxu0 %v11371
        %v11932 = vpop.f32.mrb[0].mxu0
        %v11933 = vadd.f32 %v11512, %v11932
        %v11934 = vpop.f32.mrb[0].mxu0
        %v11935 = vpop.f32.mrb[0].mxu0
        %v11936 = vadd.f32 %v11512, %v11935
        %v11937 = vpop.f32.mrb[0].mxu0
        %11938 = vdwg.mxu0
        %11939 = vmatprep.subr.bf16.mxu0 0
        %11940 = vmatpush1.bf16.msra.mxu0 %v11786
        %11941 = vmatprep.subr.bf16.mxu0 0
        %11942 = vmatpush1.bf16.msra.mxu0 %v11787
        %11943 = vmatprep.subr.bf16.mxu0 0
        %11944 = vmatpush1.bf16.msra.mxu0 %v11788
        %11945 = vmatprep.subr.bf16.mxu0 0
        %11946 = vmatpush1.bf16.msra.mxu0 %v11789
        %11947 = vmatprep.subr.bf16.mxu0 0
        %11948 = vmatpush1.bf16.msra.mxu0 %v11790
        %11949 = vmatprep.subr.bf16.mxu0 0
        %11950 = vmatpush1.bf16.msra.mxu0 %v11791
        %11951 = vmatprep.subr.bf16.mxu0 0
        %11952 = vmatpush1.bf16.msra.mxu0 %v11792
        %11953 = vmatprep.subr.bf16.mxu0 0
        %11954 = vmatpush1.bf16.msra.mxu0 %v11793
        %11955 = vmatprep.subr.bf16.mxu0 0
        %11956 = vmatpush1.bf16.msra.mxu0 %v11794
        %11957 = vmatprep.subr.bf16.mxu0 0
        %11958 = vmatpush1.bf16.msra.mxu0 %v11795
        %11959 = vmatprep.subr.bf16.mxu0 0
        %11960 = vmatpush1.bf16.msra.mxu0 %v11796
        %11961 = vmatprep.subr.bf16.mxu0 0
        %11962 = vmatpush1.bf16.msra.mxu0 %v11797
        %11963 = vmatprep.subr.bf16.mxu0 0
        %11964 = vmatpush1.bf16.msra.mxu0 %v11798
        %11965 = vmatprep.subr.bf16.mxu0 0
        %11966 = vmatpush1.bf16.msra.mxu0 %v11799
        %11967 = vmatprep.subr.bf16.mxu0 0
        %11968 = vmatpush1.bf16.msra.mxu0 %v11800
        %11969 = vmatprep.subr.bf16.mxu0 0
        %11970 = vmatpush1.bf16.msra.mxu0 %v11801
        %11971 = vmatprep.mubr.bf16.mxu0 %v11374
        %11972 = vmatmul.mubr.bf16.gmra.mrb[0].mxu0 %v11373
        %v11973 = vpop.f32.mrb[0].mxu0
        %v11974 = vadd.f32 %v11933, %v11973
        %v11975 = vpop.f32.mrb[0].mxu0
        %v11976 = vpop.f32.mrb[0].mxu0
        %v11977 = vadd.f32 %v11936, %v11976
        %v11978 = vpop.f32.mrb[0].mxu0
        %11979 = vdwg.mxu0
        %11980 = vmatprep.subr.bf16.mxu0 0
        %11981 = vmatpush1.bf16.msra.mxu0 %v11802
        %11982 = vmatprep.subr.bf16.mxu0 0
        %11983 = vmatpush1.bf16.msra.mxu0 %v11803
        %11984 = vmatprep.subr.bf16.mxu0 0
        %11985 = vmatpush1.bf16.msra.mxu0 %v11804
        %11986 = vmatprep.subr.bf16.mxu0 0
        %11987 = vmatpush1.bf16.msra.mxu0 %v11805
        %11988 = vmatprep.subr.bf16.mxu0 0
        %11989 = vmatpush1.bf16.msra.mxu0 %v11806
        %11990 = vmatprep.subr.bf16.mxu0 0
        %11991 = vmatpush1.bf16.msra.mxu0 %v11807
        %11992 = vmatprep.subr.bf16.mxu0 0
        %11993 = vmatpush1.bf16.msra.mxu0 %v11808
        %11994 = vmatprep.subr.bf16.mxu0 0
        %11995 = vmatpush1.bf16.msra.mxu0 %v11809
        %11996 = vmatprep.subr.bf16.mxu0 0
        %11997 = vmatpush1.bf16.msra.mxu0 %v11810
        %11998 = vmatprep.subr.bf16.mxu0 0
        %11999 = vmatpush1.bf16.msra.mxu0 %v11811
        %12000 = vmatprep.subr.bf16.mxu0 0
        %12001 = vmatpush1.bf16.msra.mxu0 %v11812
        %12002 = vmatprep.subr.bf16.mxu0 0
        %12003 = vmatpush1.bf16.msra.mxu0 %v11813
        %12004 = vmatprep.subr.bf16.mxu0 0
        %12005 = vmatpush1.bf16.msra.mxu0 %v11814
        %12006 = vmatprep.subr.bf16.mxu0 0
        %12007 = vmatpush1.bf16.msra.mxu0 %v11815
        %12008 = vmatprep.subr.bf16.mxu0 0
        %12009 = vmatpush1.bf16.msra.mxu0 %v11816
        %12010 = vmatprep.subr.bf16.mxu0 0
        %12011 = vmatpush1.bf16.msra.mxu0 %v11817
        %12012 = vmatprep.mubr.bf16.mxu0 %v11376
        %12013 = vmatmul.mubr.bf16.gmra.mrb[0].mxu0 %v11375
        %v12014 = vpop.f32.mrb[0].mxu0
        %v12015 = vadd.f32 %v11974, %v12014
        %v12016 = vpop.f32.mrb[0].mxu0
        %v12017 = vpop.f32.mrb[0].mxu0
        %v12018 = vadd.f32 %v11977, %v12017
        %v12019 = vpop.f32.mrb[0].mxu0
        %12020 = vdwg.mxu0
        %12021 = vmatprep.subr.bf16.mxu0 0
        %12022 = vmatpush1.bf16.msra.mxu0 %v11818
        %12023 = vmatprep.subr.bf16.mxu0 0
        %12024 = vmatpush1.bf16.msra.mxu0 %v11819
        %12025 = vmatprep.subr.bf16.mxu0 0
        %12026 = vmatpush1.bf16.msra.mxu0 %v11820
        %12027 = vmatprep.subr.bf16.mxu0 0
        %12028 = vmatpush1.bf16.msra.mxu0 %v11821
        %12029 = vmatprep.subr.bf16.mxu0 0
        %12030 = vmatpush1.bf16.msra.mxu0 %v11822
        %12031 = vmatprep.subr.bf16.mxu0 0
        %12032 = vmatpush1.bf16.msra.mxu0 %v11823
        %12033 = vmatprep.subr.bf16.mxu0 0
        %12034 = vmatpush1.bf16.msra.mxu0 %v11824
        %12035 = vmatprep.subr.bf16.mxu0 0
        %12036 = vmatpush1.bf16.msra.mxu0 %v11825
        %12037 = vmatprep.subr.bf16.mxu0 0
        %12038 = vmatpush1.bf16.msra.mxu0 %v11826
        %12039 = vmatprep.subr.bf16.mxu0 0
        %12040 = vmatpush1.bf16.msra.mxu0 %v11827
        %12041 = vmatprep.subr.bf16.mxu0 0
        %12042 = vmatpush1.bf16.msra.mxu0 %v11828
        %12043 = vmatprep.subr.bf16.mxu0 0
        %12044 = vmatpush1.bf16.msra.mxu0 %v11829
        %12045 = vmatprep.subr.bf16.mxu0 0
        %12046 = vmatpush1.bf16.msra.mxu0 %v11830
        %12047 = vmatprep.subr.bf16.mxu0 0
        %12048 = vmatpush1.bf16.msra.mxu0 %v11831
        %12049 = vmatprep.subr.bf16.mxu0 0
        %12050 = vmatpush1.bf16.msra.mxu0 %v11832
        %12051 = vmatprep.subr.bf16.mxu0 0
        %12052 = vmatpush1.bf16.msra.mxu0 %v11833
        %12053 = vmatprep.mubr.bf16.mxu0 %v11378
        %12054 = vmatmul.mubr.bf16.gmra.mrb[0].mxu0 %v11377
        %v12055 = vpop.f32.mrb[0].mxu0
        %v12056 = vadd.f32 %v12015, %v12055
        %v12057 = vpop.f32.mrb[0].mxu0
        %v12058 = vpop.f32.mrb[0].mxu0
        %v12059 = vadd.f32 %v12018, %v12058
        %v12060 = vpop.f32.mrb[0].mxu0
        %12061 = vdwg.mxu0
        %12062 = vst [vmem:[%s397] sm:$0xff] %v12056
        %12063 = vst [vmem:[%s397 + $0x8] sm:$0xff] %v12059
        %s12064 = sand.u32 %s207, 1
        %s12065 = scalar_lea.sflag [#allocation5], %s12064
        %s12066 = sand.u32 %s207, 1
        %s12067 = smul.addr %s12066, 16
        %s12068 = scalar_lea.vmem [#allocation15], %s12067
        // Predicated region
        $region81: #{tpu_custom_call.1} parent=51 // pred_check
          %p12069 = pneg %p217
        $region82: #{tpu_custom_call.1} parent=51 // pred_check_branch
          %12071 = sbr.rel (%p12069) target = $region84
        $region83: #{tpu_custom_call.1} parent=51 // pred_region
          %s12072 = smul.u32 2, %s26
          %s12074 = ssub.s32 256, 256
          %12075 = vsyncadd %s12065, %s12074
          %s12076 = smul.addr %s12072, 128
          %s12077 = scalar_lea.hbm %s8, %s12076
          %s12078 = sshll.u32 %s12068, 4
          %s12079 = int_to_ptr.vmem [resolvable:$true] %s12078
          %12084 = dma.vmem_to_hbm [thread:$0]  %s12079, 256, %s12077, %s12065, 128, 128, 8
        $region84: #{tpu_custom_call.1} parent=51 // pred_fallthru
          _
      $region52: #{tpu_custom_call.1} parent=5 // pred_fallthru
        _
      %p12085 = scmp.le.s32.totalorder 2, %s21
      // Predicated region
      $region85: #{tpu_custom_call.1} parent=5 // pred_check
        %p12086 = pneg %p12085
      $region86: #{tpu_custom_call.1} parent=5 // pred_check_branch
        %12088 = sbr.rel (%p12086) target = $region88
      $region87: #{tpu_custom_call.1} parent=5 // pred_region
        %s12089 = ssub.s32 %s21, 2
        // Predicated region
        $region89: #{tpu_custom_call.1} parent=87 // pred_check
          %p12090 = pneg %p223
        $region90: #{tpu_custom_call.1} parent=87 // pred_check_branch
          %12092 = sbr.rel (%p12090) target = $region92
        $region91: #{tpu_custom_call.1} parent=87 // pred_region
          %s12093 = sand.u32 %s208, 1
          %s12094 = scalar_lea.sflag [#allocation5], %s12093
          %s12095 = sand.u32 %s208, 1
          %s12096 = smul.addr %s12095, 16
          %s12097 = scalar_lea.vmem [#allocation15], %s12096
          %12098 = dma.done %s12094, 256
        $region92: #{tpu_custom_call.1} parent=87 // pred_fallthru
          _
      $region88: #{tpu_custom_call.1} parent=5 // pred_fallthru
        _
    $region6: #{tpu_custom_call.1} parent=1 // loop_footer
      %s25 = sadd.s32 1, %s21
    $region7: #{tpu_custom_call.1} parent=1 // loop_footer_branch
      %20 = sbr.rel target = $region3
    $region8: #{tpu_custom_call.1} parent=1 // loop_exit
      _
    %12099 = vsyncpa [#allocation4], 1
    %s12100 = scalar_lea.sflag [#allocation4], 1
    %12101 = vsyncpa %s12100, 1
    %12102 = vsyncpa [#allocation7], 1
    %12103 = vsyncpa [#allocation10], 1
    %12104 = vsyncpa [#allocation13], 1
    %12105 = vsyncpa [#allocation5], 1
    %s12106 = scalar_lea.sflag [#allocation5], 1
    %12107 = vsyncpa %s12106, 1

</llo_original>
